<compile_context>
chip_gen: v5e
topology: v5e:2x2
jax: 0.10.0
libtpu: 0.0.40
codegen_flags: <defaults>
</compile_context>

<pallas_src>
import functools

import numpy as np

import jax
import jax.numpy as jnp
from jax.experimental import pallas as pl
from jax.experimental.pallas import tpu as pltpu


# ---------------- Pallas kernels ----------------

def _conv_band_kernel(x_ref, w_ref, b_ref, o_ref, *, k):
    """Fused 'valid' kxk conv + bias + ReLU over a block of image rows.

    x_ref: (1, BT*H + k-1, W*Cin)   NHWC rows flattened to (image-line, W*Cin)
    w_ref: (k, W*Cin, Wo*Coutp)     banded weights: one matmul per row shift
    b_ref: (1, Wo*Coutp)            bias tiled over output columns (pad = 0)
    o_ref: (BT*H, Wo*Coutp)         row r holds all conv outputs of line r
    """
    R = o_ref.shape[0]
    x = x_ref[0]                       # (BT*H + k-1, W*Cin)
    mm_dtype = w_ref.dtype
    acc = jnp.dot(x[0:R, :].astype(mm_dtype), w_ref[0],
                  preferred_element_type=jnp.float32)
    for di in range(1, k):
        acc = acc + jnp.dot(x[di:di + R, :].astype(mm_dtype), w_ref[di],
                            preferred_element_type=jnp.float32)
    o_ref[...] = jnp.maximum(acc + b_ref[...], 0.0).astype(o_ref.dtype)


def _max4_kernel(a_ref, b_ref, c_ref, d_ref, o_ref):
    o_ref[...] = jnp.maximum(jnp.maximum(a_ref[...], b_ref[...]),
                             jnp.maximum(c_ref[...], d_ref[...]))


def _fc_head_kernel(x_ref, w1_ref, b1_ref, w2_ref, b2_ref, o_ref):
    """Fused fc1 + ReLU + fc2 + log_softmax (row-tiled)."""
    mm_dtype = w1_ref.dtype
    h = jnp.dot(x_ref[...].astype(mm_dtype), w1_ref[...],
                preferred_element_type=jnp.float32)
    h = jnp.maximum(h + b1_ref[...], 0.0)
    z = jnp.dot(h.astype(w2_ref.dtype), w2_ref[...],
                preferred_element_type=jnp.float32)
    z = z + b2_ref[...]                       # padded logit cols get -1e9 bias
    m = jnp.max(z, axis=1, keepdims=True)
    s = z - m
    lse = jnp.log(jnp.sum(jnp.exp(s), axis=1, keepdims=True))
    o_ref[...] = (s - lse).astype(o_ref.dtype)


# ---------------- wrappers ----------------

def _round_up(n, m):
    return ((n + m - 1) // m) * m


def _pick_bt(n):
    for bt in (16, 8):
        if n % bt == 0:
            return bt
    return n  # fall back to a single block


def conv_block(x, wband, bband, k, coutp):
    """Fused conv(kxk, valid) + bias + ReLU.

    x: (N, H, W, Cin) f32.  Returns (N, H, Wo, coutp) f32; rows h >= Ho are
    junk (never read downstream), channels >= real Cout are exactly zero.
    """
    N, H, W, Cin = x.shape
    WC = W * Cin
    _, _, NN = wband.shape
    Wo = NN // coutp
    BT = _pick_bt(N)
    NB = N // BT
    R = BT * H
    # (k-1) zero pad rows per batch block so the shifted row windows stay in-bounds.
    x3 = jnp.pad(x.reshape(NB, R, WC), ((0, 0), (0, k - 1), (0, 0)))

    out = pl.pallas_call(
        functools.partial(_conv_band_kernel, k=k),
        out_shape=jax.ShapeDtypeStruct((N * H, NN), jnp.float32),
        grid_spec=pltpu.PrefetchScalarGridSpec(
            num_scalar_prefetch=0,
            grid=(NB,),
            in_specs=[
                pl.BlockSpec((1, R + k - 1, WC), lambda i: (i, 0, 0)),
                pl.BlockSpec((k, WC, NN), lambda i: (0, 0, 0)),
                pl.BlockSpec((1, NN), lambda i: (0, 0)),
            ],
            out_specs=pl.BlockSpec((R, NN), lambda i: (i, 0)),
        ),
        compiler_params=pltpu.CompilerParams(
            dimension_semantics=("parallel",)),
    )(x3, wband, bband)
    return out.reshape(N, H, Wo, coutp)


def maxpool2x2(y, Ho):
    """2x2 / stride-2 max pool over the valid region y[:, :Ho, :, :] (NHWC)."""
    N, _, Wo, C = y.shape
    Hp, Wp = Ho // 2, Wo // 2
    quads = [y[:, i:Ho:2, j:Wo:2, :] for i in (0, 1) for j in (0, 1)]
    total = N * Hp * Wp * C
    # pure elementwise -> any common reshape is legal; pick a lane-dense one.
    lane = 512 if total % 512 == 0 else (128 if total % 128 == 0 else C)
    rows = total // lane
    quads = [q.reshape(rows, lane) for q in quads]
    TR = min(rows, 2048)

    out = pl.pallas_call(
        _max4_kernel,
        out_shape=jax.ShapeDtypeStruct((rows, lane), y.dtype),
        grid_spec=pltpu.PrefetchScalarGridSpec(
            num_scalar_prefetch=0,
            grid=(pl.cdiv(rows, TR),),
            in_specs=[pl.BlockSpec((TR, lane), lambda i: (i, 0))] * 4,
            out_specs=pl.BlockSpec((TR, lane), lambda i: (i, 0)),
        ),
        compiler_params=pltpu.CompilerParams(
            dimension_semantics=("parallel",)),
    )(*quads)
    return out.reshape(N, Hp, Wp, C)


def fc_head(x, w1, b1, w2, b2):
    """y = log_softmax(relu(x @ w1 + b1) @ w2 + b2) (all dims pre-padded)."""
    N, K = x.shape
    NN = w2.shape[1]
    TM = N if N <= 256 else 256
    return pl.pallas_call(
        _fc_head_kernel,
        out_shape=jax.ShapeDtypeStruct((N, NN), jnp.float32),
        grid_spec=pltpu.PrefetchScalarGridSpec(
            num_scalar_prefetch=0,
            grid=(pl.cdiv(N, TM),),
            in_specs=[
                pl.BlockSpec((TM, K), lambda i: (i, 0)),
                pl.BlockSpec(w1.shape, lambda i: (0, 0)),
                pl.BlockSpec(b1.shape, lambda i: (0, 0)),
                pl.BlockSpec(w2.shape, lambda i: (0, 0)),
                pl.BlockSpec(b2.shape, lambda i: (0, 0)),
            ],
            out_specs=pl.BlockSpec((TM, NN), lambda i: (i, 0)),
        ),
        compiler_params=pltpu.CompilerParams(
            dimension_semantics=("parallel",)),
    )(x, w1, b1, w2, b2)


# ---------------- parameters ----------------

def init_params(key):
    ks = jax.random.split(key, 8)

    def u(k, shape, fan_in):
        bound = 1.0 / jnp.sqrt(jnp.float32(fan_in))
        return jax.random.uniform(k, shape, jnp.float32, -bound, bound)

    return {
        "conv1_w": u(ks[0], (20, 1, 5, 5), 1 * 5 * 5),
        "conv1_b": u(ks[1], (20,), 1 * 5 * 5),
        "conv2_w": u(ks[2], (50, 20, 5, 5), 20 * 5 * 5),
        "conv2_b": u(ks[3], (50,), 20 * 5 * 5),
        "fc1_w":   u(ks[4], (500, 800), 800),   # torch Linear layout: (out, in)
        "fc1_b":   u(ks[5], (500,), 800),
        "fc2_w":   u(ks[6], (10, 500), 500),
        "fc2_b":   u(ks[7], (10,), 500),
    }


def prepare_params(params, use_bf16=False):
    """One-time weight packing: banded conv weights, permuted/padded FC weights."""
    mm_dtype = jnp.bfloat16 if use_bf16 else jnp.float32

    def band(w, w_img, w_out, coutp):
        # w: torch conv weight (Cout, Cin, k, k) ->
        # M[di, wi*Cin + c, wo*coutp + o] = w[o, c, di, wo - wi] (banded layout)
        w = np.asarray(w, np.float32)
        cout, cin, k, _ = w.shape
        m = np.zeros((k, w_img * cin, w_out * coutp), np.float32)
        for di in range(k):
            for dj in range(k):
                blk = w[:, :, di, dj].T              # (Cin, Cout)
                for wo in range(w_out):
                    wi = wo + dj
                    m[di, wi * cin:(wi + 1) * cin,
                      wo * coutp:wo * coutp + cout] = blk
        return m

    def band_bias(b, w_out, coutp):
        b = np.asarray(b, np.float32)
        out = np.zeros((w_out, coutp), np.float32)
        out[:, :b.shape[0]] = b[None, :]
        return out.reshape(1, w_out * coutp)

    # conv1: 1 -> 20 channels (padded to 32), 28x28 -> 24x24
    c1w = band(params["conv1_w"], 28, 24, 32)
    c1b = band_bias(params["conv1_b"], 24, 32)

    # conv2 consumes the 32-channel padded pooled activations: pad Cin 20->32.
    w2c = np.zeros((50, 32, 5, 5), np.float32)
    w2c[:, :20] = np.asarray(params["conv2_w"], np.float32)
    c2w = band(w2c, 12, 8, 64)                       # 20->50 ch (padded to 64)
    c2b = band_bias(params["conv2_b"], 8, 64)

    # fc1: torch flatten order is (c, h, w); ours is (h, w, c_pad64) -> 1024 rows.
    f1 = np.asarray(params["fc1_w"], np.float32).reshape(500, 50, 4, 4)
    f1 = np.transpose(f1, (2, 3, 1, 0))              # (h, w, c, o)
    W1 = np.zeros((4 * 4 * 64, 512), np.float32)
    for h in range(4):
        for w in range(4):
            base = (h * 4 + w) * 64
            W1[base:base + 50, :500] = f1[h, w]
    b1 = np.zeros((1, 512), np.float32)
    b1[0, :500] = np.asarray(params["fc1_b"], np.float32)

    # fc2: (10, 500) -> (512, 128); padded logit columns get a -1e9 bias so they
    # vanish from the in-kernel log-softmax.
    W2 = np.zeros((512, 128), np.float32)
    W2[:500, :10] = np.asarray(params["fc2_w"], np.float32).T
    b2 = np.full((1, 128), -1e9, np.float32)
    b2[0, :10] = np.asarray(params["fc2_b"], np.float32)

    return {
        "c1w": jnp.asarray(c1w, mm_dtype), "c1b": jnp.asarray(c1b),
        "c2w": jnp.asarray(c2w, mm_dtype), "c2b": jnp.asarray(c2b),
        "f1w": jnp.asarray(W1, mm_dtype),  "f1b": jnp.asarray(b1),
        "f2w": jnp.asarray(W2, mm_dtype),  "f2b": jnp.asarray(b2),
    }


# ---------------- model ----------------

def net_forward(prep, x):
    """x: (N, 1, 28, 28) float32 (same interface as the torch module)."""
    N = x.shape[0]
    Np = _round_up(N, 8)
    if Np != N:
        x = jnp.pad(x, ((0, Np - N), (0, 0), (0, 0), (0, 0)))
    xh = x.reshape(Np, 28, 28, 1)            # NCHW with C=1 -> NHWC for free

    y1 = conv_block(xh, prep["c1w"], prep["c1b"], k=5, coutp=32)   # (Np,28,24,32)
    p1 = maxpool2x2(y1, Ho=24)                                     # (Np,12,12,32)
    y2 = conv_block(p1, prep["c2w"], prep["c2b"], k=5, coutp=64)   # (Np,12, 8,64)
    p2 = maxpool2x2(y2, Ho=8)                                      # (Np, 4, 4,64)
    feats = p2.reshape(Np, 4 * 4 * 64)                             # free view
    out = fc_head(feats, prep["f1w"], prep["f1b"],
                  prep["f2w"], prep["f2b"])                        # (Np, 128)
    return out[:N, :10]


def _reference_forward(params, x):
    """Pure-JAX reference for correctness checking."""
    dn = jax.lax.conv_dimension_numbers(x.shape, params["conv1_w"].shape,
                                        ("NCHW", "OIHW", "NCHW"))
    y = jax.lax.conv_general_dilated(x, params["conv1_w"], (1, 1), "VALID",
                                     dimension_numbers=dn)
    y = jax.nn.relu(y + params["conv1_b"][None, :, None, None])
    y = jax.lax.reduce_window(y, -jnp.inf, jax.lax.max,
                              (1, 1, 2, 2), (1, 1, 2, 2), "VALID")
    dn = jax.lax.conv_dimension_numbers(y.shape, params["conv2_w"].shape,
                                        ("NCHW", "OIHW", "NCHW"))
    y = jax.lax.conv_general_dilated(y, params["conv2_w"], (1, 1), "VALID",
                                     dimension_numbers=dn)
    y = jax.nn.relu(y + params["conv2_b"][None, :, None, None])
    y = jax.lax.reduce_window(y, -jnp.inf, jax.lax.max,
                              (1, 1, 2, 2), (1, 1, 2, 2), "VALID")
    y = y.reshape(y.shape[0], -1)
    y = jax.nn.relu(y @ params["fc1_w"].T + params["fc1_b"])
    y = y @ params["fc2_w"].T + params["fc2_b"]
    return jax.nn.log_softmax(y, axis=1)


if __name__ == "__main__":
    key = jax.random.PRNGKey(0)
    kp, kx = jax.random.split(key)
    params = init_params(kp)
    # MNIST-shaped input implied by fc1 = Linear(4*4*50, 500): 28x28, 1 channel.
    x = jax.random.normal(kx, (2, 1, 28, 28), dtype=jnp.float32)

    ref = jax.block_until_ready(_reference_forward(params, x))

    fwd = jax.jit(net_forward)

    # f32 path (strict check against the pure-JAX reference).
    prep32 = prepare_params(params, use_bf16=False)
    out = jax.block_until_ready(fwd(prep32, x))
    assert out.shape == (2, 10)
    err = float(jnp.max(jnp.abs(out - ref)))
    assert err < 5e-4, f"f32 mismatch vs pure-JAX reference: {err}"

    # bf16-weight path (f32 accumulate), looser tolerance.
    prep16 = prepare_params(params, use_bf16=True)
    out16 = jax.block_until_ready(fwd(prep16, x))
    err16 = float(jnp.max(jnp.abs(out16 - ref)))
    assert err16 < 5e-2, f"bf16 mismatch vs pure-JAX reference: {err16}"

    print("KERNEL_OK")
</pallas_src>

<mosaic_0001>
module attributes {stable_mosaic.version = 11 : i64} {
  func.func @_conv_band_kernel(%arg0: i32, %arg1: memref<1x228x28xf32, #tpu.memory_space<vmem>>, %arg2: memref<5x28x768xf32, #tpu.memory_space<vmem>>, %arg3: memref<1x768xf32, #tpu.memory_space<vmem>>, %arg4: memref<224x768xf32, #tpu.memory_space<vmem>>) attributes {dimension_semantics = [#tpu.dimension_semantics<parallel>], iteration_bounds = array<i64: 1>, scalar_prefetch = 0 : i64, scratch_operands = 0 : i64, tpu.core_type = #tpu.core_type<tc>, window_params = [{transform_indices = @transform_0, window_bounds = array<i64: 1, 228, 28>}, {pipeline_mode = #tpu.pipeline_mode<synchronous>, transform_indices = @transform_1, window_bounds = array<i64: 5, 28, 768>}, {pipeline_mode = #tpu.pipeline_mode<synchronous>, transform_indices = @transform_2, window_bounds = array<i64: 1, 768>}, {transform_indices = @transform_3, window_bounds = array<i64: 224, 768>}]} {
    %c0 = arith.constant 0 : index
    %c0_0 = arith.constant 0 : index
    %c0_1 = arith.constant 0 : index
    %0 = vector.load %arg1[%c0, %c0_0, %c0_1] : memref<1x228x28xf32, #tpu.memory_space<vmem>>, vector<1x228x28xf32>
    %1 = vector.shape_cast %0 : vector<1x228x28xf32> to vector<228x28xf32>
    %2 = vector.extract_strided_slice %1 {offsets = [0, 0], sizes = [224, 28], strides = [1, 1]} : vector<228x28xf32> to vector<224x28xf32>
    %c0_2 = arith.constant 0 : index
    %c0_3 = arith.constant 0 : index
    %c0_4 = arith.constant 0 : index
    %3 = vector.load %arg2[%c0_2, %c0_3, %c0_4] : memref<5x28x768xf32, #tpu.memory_space<vmem>>, vector<1x28x768xf32>
    %4 = vector.shape_cast %3 : vector<1x28x768xf32> to vector<28x768xf32>
    %cst = arith.constant dense<0.000000e+00> : vector<224x768xf32>
    %5 = tpu.matmul %2, %4, %cst {dimension_numbers = #tpu.dot_dimension_numbers<[1], [0], [0], [1], [0, 0, 1, 1], [], []>} : vector<224x28xf32>, vector<28x768xf32>, vector<224x768xf32> -> vector<224x768xf32>
    %6 = vector.extract_strided_slice %1 {offsets = [1, 0], sizes = [224, 28], strides = [1, 1]} : vector<228x28xf32> to vector<224x28xf32>
    %c1 = arith.constant 1 : index
    %c0_5 = arith.constant 0 : index
    %c0_6 = arith.constant 0 : index
    %7 = vector.load %arg2[%c1, %c0_5, %c0_6] : memref<5x28x768xf32, #tpu.memory_space<vmem>>, vector<1x28x768xf32>
    %8 = vector.shape_cast %7 : vector<1x28x768xf32> to vector<28x768xf32>
    %cst_7 = arith.constant dense<0.000000e+00> : vector<224x768xf32>
    %9 = tpu.matmul %6, %8, %cst_7 {dimension_numbers = #tpu.dot_dimension_numbers<[1], [0], [0], [1], [0, 0, 1, 1], [], []>} : vector<224x28xf32>, vector<28x768xf32>, vector<224x768xf32> -> vector<224x768xf32>
    %10 = arith.addf %5, %9 : vector<224x768xf32>
    %11 = vector.extract_strided_slice %1 {offsets = [2, 0], sizes = [224, 28], strides = [1, 1]} : vector<228x28xf32> to vector<224x28xf32>
    %c2 = arith.constant 2 : index
    %c0_8 = arith.constant 0 : index
    %c0_9 = arith.constant 0 : index
    %12 = vector.load %arg2[%c2, %c0_8, %c0_9] : memref<5x28x768xf32, #tpu.memory_space<vmem>>, vector<1x28x768xf32>
    %13 = vector.shape_cast %12 : vector<1x28x768xf32> to vector<28x768xf32>
    %cst_10 = arith.constant dense<0.000000e+00> : vector<224x768xf32>
    %14 = tpu.matmul %11, %13, %cst_10 {dimension_numbers = #tpu.dot_dimension_numbers<[1], [0], [0], [1], [0, 0, 1, 1], [], []>} : vector<224x28xf32>, vector<28x768xf32>, vector<224x768xf32> -> vector<224x768xf32>
    %15 = arith.addf %10, %14 : vector<224x768xf32>
    %16 = vector.extract_strided_slice %1 {offsets = [3, 0], sizes = [224, 28], strides = [1, 1]} : vector<228x28xf32> to vector<224x28xf32>
    %c3 = arith.constant 3 : index
    %c0_11 = arith.constant 0 : index
    %c0_12 = arith.constant 0 : index
    %17 = vector.load %arg2[%c3, %c0_11, %c0_12] : memref<5x28x768xf32, #tpu.memory_space<vmem>>, vector<1x28x768xf32>
    %18 = vector.shape_cast %17 : vector<1x28x768xf32> to vector<28x768xf32>
    %cst_13 = arith.constant dense<0.000000e+00> : vector<224x768xf32>
    %19 = tpu.matmul %16, %18, %cst_13 {dimension_numbers = #tpu.dot_dimension_numbers<[1], [0], [0], [1], [0, 0, 1, 1], [], []>} : vector<224x28xf32>, vector<28x768xf32>, vector<224x768xf32> -> vector<224x768xf32>
    %20 = arith.addf %15, %19 : vector<224x768xf32>
    %21 = vector.extract_strided_slice %1 {offsets = [4, 0], sizes = [224, 28], strides = [1, 1]} : vector<228x28xf32> to vector<224x28xf32>
    %c4 = arith.constant 4 : index
    %c0_14 = arith.constant 0 : index
    %c0_15 = arith.constant 0 : index
    %22 = vector.load %arg2[%c4, %c0_14, %c0_15] : memref<5x28x768xf32, #tpu.memory_space<vmem>>, vector<1x28x768xf32>
    %23 = vector.shape_cast %22 : vector<1x28x768xf32> to vector<28x768xf32>
    %cst_16 = arith.constant dense<0.000000e+00> : vector<224x768xf32>
    %24 = tpu.matmul %21, %23, %cst_16 {dimension_numbers = #tpu.dot_dimension_numbers<[1], [0], [0], [1], [0, 0, 1, 1], [], []>} : vector<224x28xf32>, vector<28x768xf32>, vector<224x768xf32> -> vector<224x768xf32>
    %25 = arith.addf %20, %24 : vector<224x768xf32>
    %c0_17 = arith.constant 0 : index
    %c0_18 = arith.constant 0 : index
    %26 = vector.load %arg3[%c0_17, %c0_18] : memref<1x768xf32, #tpu.memory_space<vmem>>, vector<1x768xf32>
    %27 = vector.broadcast %26 : vector<1x768xf32> to vector<224x768xf32>
    %28 = arith.addf %25, %27 : vector<224x768xf32>
    %cst_19 = arith.constant 0.000000e+00 : f32
    %29 = vector.broadcast %cst_19 : f32 to vector<224x768xf32>
    %30 = arith.maximumf %28, %29 : vector<224x768xf32>
    %c0_20 = arith.constant 0 : index
    %c0_21 = arith.constant 0 : index
    %31 = vector.load %arg4[%c0_20, %c0_21] : memref<224x768xf32, #tpu.memory_space<vmem>>, vector<224x768xf32>
    tpu.vector_store %arg4[%c0_20, %c0_21], %30 {strides = array<i32>} : memref<224x768xf32, #tpu.memory_space<vmem>>, vector<224x768xf32>,
    return
  }
  func.func @transform_0(%arg0: i32) -> (i32, i32, i32) {
    %c0_i32 = arith.constant 0 : i32
    %c0_i32_0 = arith.constant 0 : i32
    %c0_i32_1 = arith.constant 0 : i32
    return %arg0, %c0_i32, %c0_i32_0 : i32, i32, i32
  }
  func.func @transform_1(%arg0: i32) -> (i32, i32, i32) {
    %c0_i32 = arith.constant 0 : i32
    %c0_i32_0 = arith.constant 0 : i32
    %c0_i32_1 = arith.constant 0 : i32
    %c0_i32_2 = arith.constant 0 : i32
    return %c0_i32, %c0_i32_0, %c0_i32_1 : i32, i32, i32
  }
  func.func @transform_2(%arg0: i32) -> (i32, i32) {
    %c0_i32 = arith.constant 0 : i32
    %c0_i32_0 = arith.constant 0 : i32
    %c0_i32_1 = arith.constant 0 : i32
    return %c0_i32, %c0_i32_0 : i32, i32
  }
  func.func @transform_3(%arg0: i32) -> (i32, i32) {
    %c0_i32 = arith.constant 0 : i32
    %c0_i32_0 = arith.constant 0 : i32
    return %arg0, %c0_i32 : i32, i32
  }
}

module attributes {stable_mosaic.version = 11 : i64} {
  func.func @_max4_kernel(%arg0: i32, %arg1: memref<72x512xf32, #tpu.memory_space<vmem>>, %arg2: memref<72x512xf32, #tpu.memory_space<vmem>>, %arg3: memref<72x512xf32, #tpu.memory_space<vmem>>, %arg4: memref<72x512xf32, #tpu.memory_space<vmem>>, %arg5: memref<72x512xf32, #tpu.memory_space<vmem>>) attributes {dimension_semantics = [#tpu.dimension_semantics<parallel>], iteration_bounds = array<i64: 1>, scalar_prefetch = 0 : i64, scratch_operands = 0 : i64, tpu.core_type = #tpu.core_type<tc>, window_params = [{transform_indices = @transform_0, window_bounds = array<i64: 72, 512>}, {transform_indices = @transform_1, window_bounds = array<i64: 72, 512>}, {transform_indices = @transform_2, window_bounds = array<i64: 72, 512>}, {transform_indices = @transform_3, window_bounds = array<i64: 72, 512>}, {transform_indices = @transform_4, window_bounds = array<i64: 72, 512>}]} {
    %c0 = arith.constant 0 : index
    %c0_0 = arith.constant 0 : index
    %0 = vector.load %arg1[%c0, %c0_0] : memref<72x512xf32, #tpu.memory_space<vmem>>, vector<72x512xf32>
    %c0_1 = arith.constant 0 : index
    %c0_2 = arith.constant 0 : index
    %1 = vector.load %arg2[%c0_1, %c0_2] : memref<72x512xf32, #tpu.memory_space<vmem>>, vector<72x512xf32>
    %2 = arith.maximumf %0, %1 : vector<72x512xf32>
    %c0_3 = arith.constant 0 : index
    %c0_4 = arith.constant 0 : index
    %3 = vector.load %arg3[%c0_3, %c0_4] : memref<72x512xf32, #tpu.memory_space<vmem>>, vector<72x512xf32>
    %c0_5 = arith.constant 0 : index
    %c0_6 = arith.constant 0 : index
    %4 = vector.load %arg4[%c0_5, %c0_6] : memref<72x512xf32, #tpu.memory_space<vmem>>, vector<72x512xf32>
    %5 = arith.maximumf %3, %4 : vector<72x512xf32>
    %6 = arith.maximumf %2, %5 : vector<72x512xf32>
    %c0_7 = arith.constant 0 : index
    %c0_8 = arith.constant 0 : index
    %7 = vector.load %arg5[%c0_7, %c0_8] : memref<72x512xf32, #tpu.memory_space<vmem>>, vector<72x512xf32>
    tpu.vector_store %arg5[%c0_7, %c0_8], %6 {strides = array<i32>} : memref<72x512xf32, #tpu.memory_space<vmem>>, vector<72x512xf32>,
    return
  }
  func.func @transform_0(%arg0: i32) -> (i32, i32) {
    %c0_i32 = arith.constant 0 : i32
    %c0_i32_0 = arith.constant 0 : i32
    return %arg0, %c0_i32 : i32, i32
  }
  func.func @transform_1(%arg0: i32) -> (i32, i32) {
    %c0_i32 = arith.constant 0 : i32
    %c0_i32_0 = arith.constant 0 : i32
    return %arg0, %c0_i32 : i32, i32
  }
  func.func @transform_2(%arg0: i32) -> (i32, i32) {
    %c0_i32 = arith.constant 0 : i32
    %c0_i32_0 = arith.constant 0 : i32
    return %arg0, %c0_i32 : i32, i32
  }
  func.func @transform_3(%arg0: i32) -> (i32, i32) {
    %c0_i32 = arith.constant 0 : i32
    %c0_i32_0 = arith.constant 0 : i32
    return %arg0, %c0_i32 : i32, i32
  }
  func.func @transform_4(%arg0: i32) -> (i32, i32) {
    %c0_i32 = arith.constant 0 : i32
    %c0_i32_0 = arith.constant 0 : i32
    return %arg0, %c0_i32 : i32, i32
  }
}

module attributes {stable_mosaic.version = 11 : i64} {
  func.func @_conv_band_kernel(%arg0: i32, %arg1: memref<1x100x384xf32, #tpu.memory_space<vmem>>, %arg2: memref<5x384x512xf32, #tpu.memory_space<vmem>>, %arg3: memref<1x512xf32, #tpu.memory_space<vmem>>, %arg4: memref<96x512xf32, #tpu.memory_space<vmem>>) attributes {dimension_semantics = [#tpu.dimension_semantics<parallel>], iteration_bounds = array<i64: 1>, scalar_prefetch = 0 : i64, scratch_operands = 0 : i64, tpu.core_type = #tpu.core_type<tc>, window_params = [{transform_indices = @transform_0, window_bounds = array<i64: 1, 100, 384>}, {pipeline_mode = #tpu.pipeline_mode<synchronous>, transform_indices = @transform_1, window_bounds = array<i64: 5, 384, 512>}, {pipeline_mode = #tpu.pipeline_mode<synchronous>, transform_indices = @transform_2, window_bounds = array<i64: 1, 512>}, {transform_indices = @transform_3, window_bounds = array<i64: 96, 512>}]} {
    %c0 = arith.constant 0 : index
    %c0_0 = arith.constant 0 : index
    %c0_1 = arith.constant 0 : index
    %0 = vector.load %arg1[%c0, %c0_0, %c0_1] : memref<1x100x384xf32, #tpu.memory_space<vmem>>, vector<1x100x384xf32>
    %1 = vector.shape_cast %0 : vector<1x100x384xf32> to vector<100x384xf32>
    %2 = vector.extract_strided_slice %1 {offsets = [0, 0], sizes = [96, 384], strides = [1, 1]} : vector<100x384xf32> to vector<96x384xf32>
    %c0_2 = arith.constant 0 : index
    %c0_3 = arith.constant 0 : index
    %c0_4 = arith.constant 0 : index
    %3 = vector.load %arg2[%c0_2, %c0_3, %c0_4] : memref<5x384x512xf32, #tpu.memory_space<vmem>>, vector<1x384x512xf32>
    %4 = vector.shape_cast %3 : vector<1x384x512xf32> to vector<384x512xf32>
    %cst = arith.constant dense<0.000000e+00> : vector<96x512xf32>
    %5 = tpu.matmul %2, %4, %cst {dimension_numbers = #tpu.dot_dimension_numbers<[1], [0], [0], [1], [0, 0, 1, 1], [], []>} : vector<96x384xf32>, vector<384x512xf32>, vector<96x512xf32> -> vector<96x512xf32>
    %6 = vector.extract_strided_slice %1 {offsets = [1, 0], sizes = [96, 384], strides = [1, 1]} : vector<100x384xf32> to vector<96x384xf32>
    %c1 = arith.constant 1 : index
    %c0_5 = arith.constant 0 : index
    %c0_6 = arith.constant 0 : index
    %7 = vector.load %arg2[%c1, %c0_5, %c0_6] : memref<5x384x512xf32, #tpu.memory_space<vmem>>, vector<1x384x512xf32>
    %8 = vector.shape_cast %7 : vector<1x384x512xf32> to vector<384x512xf32>
    %cst_7 = arith.constant dense<0.000000e+00> : vector<96x512xf32>
    %9 = tpu.matmul %6, %8, %cst_7 {dimension_numbers = #tpu.dot_dimension_numbers<[1], [0], [0], [1], [0, 0, 1, 1], [], []>} : vector<96x384xf32>, vector<384x512xf32>, vector<96x512xf32> -> vector<96x512xf32>
    %10 = arith.addf %5, %9 : vector<96x512xf32>
    %11 = vector.extract_strided_slice %1 {offsets = [2, 0], sizes = [96, 384], strides = [1, 1]} : vector<100x384xf32> to vector<96x384xf32>
    %c2 = arith.constant 2 : index
    %c0_8 = arith.constant 0 : index
    %c0_9 = arith.constant 0 : index
    %12 = vector.load %arg2[%c2, %c0_8, %c0_9] : memref<5x384x512xf32, #tpu.memory_space<vmem>>, vector<1x384x512xf32>
    %13 = vector.shape_cast %12 : vector<1x384x512xf32> to vector<384x512xf32>
    %cst_10 = arith.constant dense<0.000000e+00> : vector<96x512xf32>
    %14 = tpu.matmul %11, %13, %cst_10 {dimension_numbers = #tpu.dot_dimension_numbers<[1], [0], [0], [1], [0, 0, 1, 1], [], []>} : vector<96x384xf32>, vector<384x512xf32>, vector<96x512xf32> -> vector<96x512xf32>
    %15 = arith.addf %10, %14 : vector<96x512xf32>
    %16 = vector.extract_strided_slice %1 {offsets = [3, 0], sizes = [96, 384], strides = [1, 1]} : vector<100x384xf32> to vector<96x384xf32>
    %c3 = arith.constant 3 : index
    %c0_11 = arith.constant 0 : index
    %c0_12 = arith.constant 0 : index
    %17 = vector.load %arg2[%c3, %c0_11, %c0_12] : memref<5x384x512xf32, #tpu.memory_space<vmem>>, vector<1x384x512xf32>
    %18 = vector.shape_cast %17 : vector<1x384x512xf32> to vector<384x512xf32>
    %cst_13 = arith.constant dense<0.000000e+00> : vector<96x512xf32>
    %19 = tpu.matmul %16, %18, %cst_13 {dimension_numbers = #tpu.dot_dimension_numbers<[1], [0], [0], [1], [0, 0, 1, 1], [], []>} : vector<96x384xf32>, vector<384x512xf32>, vector<96x512xf32> -> vector<96x512xf32>
    %20 = arith.addf %15, %19 : vector<96x512xf32>
    %21 = vector.extract_strided_slice %1 {offsets = [4, 0], sizes = [96, 384], strides = [1, 1]} : vector<100x384xf32> to vector<96x384xf32>
    %c4 = arith.constant 4 : index
    %c0_14 = arith.constant 0 : index
    %c0_15 = arith.constant 0 : index
    %22 = vector.load %arg2[%c4, %c0_14, %c0_15] : memref<5x384x512xf32, #tpu.memory_space<vmem>>, vector<1x384x512xf32>
    %23 = vector.shape_cast %22 : vector<1x384x512xf32> to vector<384x512xf32>
    %cst_16 = arith.constant dense<0.000000e+00> : vector<96x512xf32>
    %24 = tpu.matmul %21, %23, %cst_16 {dimension_numbers = #tpu.dot_dimension_numbers<[1], [0], [0], [1], [0, 0, 1, 1], [], []>} : vector<96x384xf32>, vector<384x512xf32>, vector<96x512xf32> -> vector<96x512xf32>
    %25 = arith.addf %20, %24 : vector<96x512xf32>
    %c0_17 = arith.constant 0 : index
    %c0_18 = arith.constant 0 : index
    %26 = vector.load %arg3[%c0_17, %c0_18] : memref<1x512xf32, #tpu.memory_space<vmem>>, vector<1x512xf32>
    %27 = vector.broadcast %26 : vector<1x512xf32> to vector<96x512xf32>
    %28 = arith.addf %25, %27 : vector<96x512xf32>
    %cst_19 = arith.constant 0.000000e+00 : f32
    %29 = vector.broadcast %cst_19 : f32 to vector<96x512xf32>
    %30 = arith.maximumf %28, %29 : vector<96x512xf32>
    %c0_20 = arith.constant 0 : index
    %c0_21 = arith.constant 0 : index
    %31 = vector.load %arg4[%c0_20, %c0_21] : memref<96x512xf32, #tpu.memory_space<vmem>>, vector<96x512xf32>
    tpu.vector_store %arg4[%c0_20, %c0_21], %30 {strides = array<i32>} : memref<96x512xf32, #tpu.memory_space<vmem>>, vector<96x512xf32>,
    return
  }
  func.func @transform_0(%arg0: i32) -> (i32, i32, i32) {
    %c0_i32 = arith.constant 0 : i32
    %c0_i32_0 = arith.constant 0 : i32
    %c0_i32_1 = arith.constant 0 : i32
    return %arg0, %c0_i32, %c0_i32_0 : i32, i32, i32
  }
  func.func @transform_1(%arg0: i32) -> (i32, i32, i32) {
    %c0_i32 = arith.constant 0 : i32
    %c0_i32_0 = arith.constant 0 : i32
    %c0_i32_1 = arith.constant 0 : i32
    %c0_i32_2 = arith.constant 0 : i32
    return %c0_i32, %c0_i32_0, %c0_i32_1 : i32, i32, i32
  }
  func.func @transform_2(%arg0: i32) -> (i32, i32) {
    %c0_i32 = arith.constant 0 : i32
    %c0_i32_0 = arith.constant 0 : i32
    %c0_i32_1 = arith.constant 0 : i32
    return %c0_i32, %c0_i32_0 : i32, i32
  }
  func.func @transform_3(%arg0: i32) -> (i32, i32) {
    %c0_i32 = arith.constant 0 : i32
    %c0_i32_0 = arith.constant 0 : i32
    return %arg0, %c0_i32 : i32, i32
  }
}

module attributes {stable_mosaic.version = 11 : i64} {
  func.func @_max4_kernel(%arg0: i32, %arg1: memref<16x512xf32, #tpu.memory_space<vmem>>, %arg2: memref<16x512xf32, #tpu.memory_space<vmem>>, %arg3: memref<16x512xf32, #tpu.memory_space<vmem>>, %arg4: memref<16x512xf32, #tpu.memory_space<vmem>>, %arg5: memref<16x512xf32, #tpu.memory_space<vmem>>) attributes {dimension_semantics = [#tpu.dimension_semantics<parallel>], iteration_bounds = array<i64: 1>, scalar_prefetch = 0 : i64, scratch_operands = 0 : i64, tpu.core_type = #tpu.core_type<tc>, window_params = [{transform_indices = @transform_0, window_bounds = array<i64: 16, 512>}, {transform_indices = @transform_1, window_bounds = array<i64: 16, 512>}, {transform_indices = @transform_2, window_bounds = array<i64: 16, 512>}, {transform_indices = @transform_3, window_bounds = array<i64: 16, 512>}, {transform_indices = @transform_4, window_bounds = array<i64: 16, 512>}]} {
    %c0 = arith.constant 0 : index
    %c0_0 = arith.constant 0 : index
    %0 = vector.load %arg1[%c0, %c0_0] : memref<16x512xf32, #tpu.memory_space<vmem>>, vector<16x512xf32>
    %c0_1 = arith.constant 0 : index
    %c0_2 = arith.constant 0 : index
    %1 = vector.load %arg2[%c0_1, %c0_2] : memref<16x512xf32, #tpu.memory_space<vmem>>, vector<16x512xf32>
    %2 = arith.maximumf %0, %1 : vector<16x512xf32>
    %c0_3 = arith.constant 0 : index
    %c0_4 = arith.constant 0 : index
    %3 = vector.load %arg3[%c0_3, %c0_4] : memref<16x512xf32, #tpu.memory_space<vmem>>, vector<16x512xf32>
    %c0_5 = arith.constant 0 : index
    %c0_6 = arith.constant 0 : index
    %4 = vector.load %arg4[%c0_5, %c0_6] : memref<16x512xf32, #tpu.memory_space<vmem>>, vector<16x512xf32>
    %5 = arith.maximumf %3, %4 : vector<16x512xf32>
    %6 = arith.maximumf %2, %5 : vector<16x512xf32>
    %c0_7 = arith.constant 0 : index
    %c0_8 = arith.constant 0 : index
    %7 = vector.load %arg5[%c0_7, %c0_8] : memref<16x512xf32, #tpu.memory_space<vmem>>, vector<16x512xf32>
    tpu.vector_store %arg5[%c0_7, %c0_8], %6 {strides = array<i32>} : memref<16x512xf32, #tpu.memory_space<vmem>>, vector<16x512xf32>,
    return
  }
  func.func @transform_0(%arg0: i32) -> (i32, i32) {
    %c0_i32 = arith.constant 0 : i32
    %c0_i32_0 = arith.constant 0 : i32
    return %arg0, %c0_i32 : i32, i32
  }
  func.func @transform_1(%arg0: i32) -> (i32, i32) {
    %c0_i32 = arith.constant 0 : i32
    %c0_i32_0 = arith.constant 0 : i32
    return %arg0, %c0_i32 : i32, i32
  }
  func.func @transform_2(%arg0: i32) -> (i32, i32) {
    %c0_i32 = arith.constant 0 : i32
    %c0_i32_0 = arith.constant 0 : i32
    return %arg0, %c0_i32 : i32, i32
  }
  func.func @transform_3(%arg0: i32) -> (i32, i32) {
    %c0_i32 = arith.constant 0 : i32
    %c0_i32_0 = arith.constant 0 : i32
    return %arg0, %c0_i32 : i32, i32
  }
  func.func @transform_4(%arg0: i32) -> (i32, i32) {
    %c0_i32 = arith.constant 0 : i32
    %c0_i32_0 = arith.constant 0 : i32
    return %arg0, %c0_i32 : i32, i32
  }
}

module attributes {stable_mosaic.version = 11 : i64} {
  func.func @_fc_head_kernel(%arg0: i32, %arg1: memref<8x1024xf32, #tpu.memory_space<vmem>>, %arg2: memref<1024x512xf32, #tpu.memory_space<vmem>>, %arg3: memref<1x512xf32, #tpu.memory_space<vmem>>, %arg4: memref<512x128xf32, #tpu.memory_space<vmem>>, %arg5: memref<1x128xf32, #tpu.memory_space<vmem>>, %arg6: memref<8x128xf32, #tpu.memory_space<vmem>>) attributes {dimension_semantics = [#tpu.dimension_semantics<parallel>], iteration_bounds = array<i64: 1>, scalar_prefetch = 0 : i64, scratch_operands = 0 : i64, tpu.core_type = #tpu.core_type<tc>, window_params = [{transform_indices = @transform_0, window_bounds = array<i64: 8, 1024>}, {pipeline_mode = #tpu.pipeline_mode<synchronous>, transform_indices = @transform_1, window_bounds = array<i64: 1024, 512>}, {pipeline_mode = #tpu.pipeline_mode<synchronous>, transform_indices = @transform_2, window_bounds = array<i64: 1, 512>}, {pipeline_mode = #tpu.pipeline_mode<synchronous>, transform_indices = @transform_3, window_bounds = array<i64: 512, 128>}, {pipeline_mode = #tpu.pipeline_mode<synchronous>, transform_indices = @transform_4, window_bounds = array<i64: 1, 128>}, {transform_indices = @transform_5, window_bounds = array<i64: 8, 128>}]} {
    %c0 = arith.constant 0 : index
    %c0_0 = arith.constant 0 : index
    %0 = vector.load %arg1[%c0, %c0_0] : memref<8x1024xf32, #tpu.memory_space<vmem>>, vector<8x1024xf32>
    %c0_1 = arith.constant 0 : index
    %c0_2 = arith.constant 0 : index
    %1 = vector.load %arg2[%c0_1, %c0_2] : memref<1024x512xf32, #tpu.memory_space<vmem>>, vector<1024x512xf32>
    %cst = arith.constant dense<0.000000e+00> : vector<8x512xf32>
    %2 = tpu.matmul %0, %1, %cst {dimension_numbers = #tpu.dot_dimension_numbers<[1], [0], [0], [1], [0, 0, 1, 1], [], []>} : vector<8x1024xf32>, vector<1024x512xf32>, vector<8x512xf32> -> vector<8x512xf32>
    %c0_3 = arith.constant 0 : index
    %c0_4 = arith.constant 0 : index
    %3 = vector.load %arg3[%c0_3, %c0_4] : memref<1x512xf32, #tpu.memory_space<vmem>>, vector<1x512xf32>
    %4 = vector.broadcast %3 : vector<1x512xf32> to vector<8x512xf32>
    %5 = arith.addf %2, %4 : vector<8x512xf32>
    %cst_5 = arith.constant 0.000000e+00 : f32
    %6 = vector.broadcast %cst_5 : f32 to vector<8x512xf32>
    %7 = arith.maximumf %5, %6 : vector<8x512xf32>
    %c0_6 = arith.constant 0 : index
    %c0_7 = arith.constant 0 : index
    %8 = vector.load %arg4[%c0_6, %c0_7] : memref<512x128xf32, #tpu.memory_space<vmem>>, vector<512x128xf32>
    %cst_8 = arith.constant dense<0.000000e+00> : vector<8x128xf32>
    %9 = tpu.matmul %7, %8, %cst_8 {dimension_numbers = #tpu.dot_dimension_numbers<[1], [0], [0], [1], [0, 0, 1, 1], [], []>} : vector<8x512xf32>, vector<512x128xf32>, vector<8x128xf32> -> vector<8x128xf32>
    %c0_9 = arith.constant 0 : index
    %c0_10 = arith.constant 0 : index
    %10 = vector.load %arg5[%c0_9, %c0_10] : memref<1x128xf32, #tpu.memory_space<vmem>>, vector<1x128xf32>
    %11 = vector.broadcast %10 : vector<1x128xf32> to vector<8x128xf32>
    %12 = arith.addf %9, %11 : vector<8x128xf32>
    %cst_11 = arith.constant dense<0xFF800000> : vector<8xf32>
    %13 = vector.multi_reduction <maximumf>, %12, %cst_11 [1] : vector<8x128xf32> to vector<8xf32>
    %14 = vector.shape_cast %13 : vector<8xf32> to vector<8x1xf32>
    %15 = vector.broadcast %14 : vector<8x1xf32> to vector<8x128xf32>
    %16 = arith.subf %12, %15 : vector<8x128xf32>
    %17 = math.exp %16 : vector<8x128xf32>
    %cst_12 = arith.constant dense<0.000000e+00> : vector<8xf32>
    %18 = vector.multi_reduction <add>, %17, %cst_12 [1] : vector<8x128xf32> to vector<8xf32>
    %19 = vector.shape_cast %18 : vector<8xf32> to vector<8x1xf32>
    %20 = math.log %19 : vector<8x1xf32>
    %21 = vector.broadcast %20 : vector<8x1xf32> to vector<8x128xf32>
    %22 = arith.subf %16, %21 : vector<8x128xf32>
    %c0_13 = arith.constant 0 : index
    %c0_14 = arith.constant 0 : index
    %23 = vector.load %arg6[%c0_13, %c0_14] : memref<8x128xf32, #tpu.memory_space<vmem>>, vector<8x128xf32>
    tpu.vector_store %arg6[%c0_13, %c0_14], %22 {strides = array<i32>} : memref<8x128xf32, #tpu.memory_space<vmem>>, vector<8x128xf32>,
    return
  }
  func.func @transform_0(%arg0: i32) -> (i32, i32) {
    %c0_i32 = arith.constant 0 : i32
    %c0_i32_0 = arith.constant 0 : i32
    return %arg0, %c0_i32 : i32, i32
  }
  func.func @transform_1(%arg0: i32) -> (i32, i32) {
    %c0_i32 = arith.constant 0 : i32
    %c0_i32_0 = arith.constant 0 : i32
    %c0_i32_1 = arith.constant 0 : i32
    return %c0_i32, %c0_i32_0 : i32, i32
  }
  func.func @transform_2(%arg0: i32) -> (i32, i32) {
    %c0_i32 = arith.constant 0 : i32
    %c0_i32_0 = arith.constant 0 : i32
    %c0_i32_1 = arith.constant 0 : i32
    return %c0_i32, %c0_i32_0 : i32, i32
  }
  func.func @transform_3(%arg0: i32) -> (i32, i32) {
    %c0_i32 = arith.constant 0 : i32
    %c0_i32_0 = arith.constant 0 : i32
    %c0_i32_1 = arith.constant 0 : i32
    return %c0_i32, %c0_i32_0 : i32, i32
  }
  func.func @transform_4(%arg0: i32) -> (i32, i32) {
    %c0_i32 = arith.constant 0 : i32
    %c0_i32_0 = arith.constant 0 : i32
    %c0_i32_1 = arith.constant 0 : i32
    return %c0_i32, %c0_i32_0 : i32, i32
  }
  func.func @transform_5(%arg0: i32) -> (i32, i32) {
    %c0_i32 = arith.constant 0 : i32
    %c0_i32_0 = arith.constant 0 : i32
    return %arg0, %c0_i32 : i32, i32
  }
}

</mosaic_0001>

<llo_original>
// kernel: net_forward.6
$region0: #{net_forward.6}
  #allocation0 [shape = 'u32[]', space=smem, size = 0x4, offset = 0x4, fixed_abs, tag = 'smem constant byte address 0x4 - core index']
  #allocation1 [shape = 'u32[72,128]{1,0:T(1,128)}', space=vmem, size = 0x9000, scoped, tag = 'internal scratch']
  %s0 = inlined_call_operand.vmem [shape: f32[72,512], index: 0, kind: input, shape index: {}]
  %s1 = inlined_call_operand.vmem [shape: f32[72,512], index: 1, kind: input, shape index: {}]
  %s2 = inlined_call_operand.vmem [shape: f32[72,512], index: 2, kind: input, shape index: {}]
  %s3 = inlined_call_operand.vmem [shape: f32[72,512], index: 3, kind: input, shape index: {}]
  %s4 = inlined_call_operand.vmem [shape: f32[72,512], index: 4, kind: output, shape index: {}]
  %s5 = sld [smem:[#allocation0]]
  $region26: #{net_forward.6} parent=0
    _
  %s7 = ssub.s32 1, %s5
  %s8 = scalar_select 0, %s7, %s5
  // Predicated region
  $region2: #{net_forward.6} parent=0 // pred_check
    _
  $region3: #{net_forward.6} parent=0 // pred_check_branch
    %10 = sbr.rel (0) target = $region5
  $region4: #{net_forward.6} parent=0 // pred_region
    _
  $region5: #{net_forward.6} parent=0 // pred_fallthru
    _
  // Predicated region
  $region6: #{net_forward.6} parent=0 // pred_check
    _
  $region7: #{net_forward.6} parent=0 // pred_check_branch
    %12 = sbr.rel (0) target = $region9
  $region8: #{net_forward.6} parent=0 // pred_region
    _
  $region9: #{net_forward.6} parent=0 // pred_fallthru
    _
  // Predicated region
  $region10: #{net_forward.6} parent=0 // pred_check
    _
  $region11: #{net_forward.6} parent=0 // pred_check_branch
    %14 = sbr.rel (0) target = $region13
  $region12: #{net_forward.6} parent=0 // pred_region
    _
  $region13: #{net_forward.6} parent=0 // pred_fallthru
    _
  // Predicated region
  $region14: #{net_forward.6} parent=0 // pred_check
    _
  $region15: #{net_forward.6} parent=0 // pred_check_branch
    %16 = sbr.rel (0) target = $region17
  $region16: #{net_forward.6} parent=0 // pred_region
    _
  $region17: #{net_forward.6} parent=0 // pred_fallthru
    _
  %v17 = vld [vmem:[%s0] sm:$0xff]
  %v18 = vld [vmem:[%s0 + $0x8] sm:$0xff]
  %v19 = vld [vmem:[%s0 + $0x10] sm:$0xff]
  %v20 = vld [vmem:[%s0 + $0x18] sm:$0xff]
  %v21 = vld [vmem:[%s0 + $0x20] sm:$0xff]
  %v22 = vld [vmem:[%s0 + $0x28] sm:$0xff]
  %v23 = vld [vmem:[%s0 + $0x30] sm:$0xff]
  %v24 = vld [vmem:[%s0 + $0x38] sm:$0xff]
  %v25 = vld [vmem:[%s0 + $0x40] sm:$0xff]
  %v26 = vld [vmem:[%s0 + $0x48] sm:$0xff]
  %v27 = vld [vmem:[%s0 + $0x50] sm:$0xff]
  %v28 = vld [vmem:[%s0 + $0x58] sm:$0xff]
  %v29 = vld [vmem:[%s0 + $0x60] sm:$0xff]
  %v30 = vld [vmem:[%s0 + $0x68] sm:$0xff]
  %v31 = vld [vmem:[%s0 + $0x70] sm:$0xff]
  %v32 = vld [vmem:[%s0 + $0x78] sm:$0xff]
  %v33 = vld [vmem:[%s0 + $0x80] sm:$0xff]
  %v34 = vld [vmem:[%s0 + $0x88] sm:$0xff]
  %v35 = vld [vmem:[%s0 + $0x90] sm:$0xff]
  %v36 = vld [vmem:[%s0 + $0x98] sm:$0xff]
  %v37 = vld [vmem:[%s0 + $0xa0] sm:$0xff]
  %v38 = vld [vmem:[%s0 + $0xa8] sm:$0xff]
  %v39 = vld [vmem:[%s0 + $0xb0] sm:$0xff]
  %v40 = vld [vmem:[%s0 + $0xb8] sm:$0xff]
  %v41 = vld [vmem:[%s0 + $0xc0] sm:$0xff]
  %v42 = vld [vmem:[%s0 + $0xc8] sm:$0xff]
  %v43 = vld [vmem:[%s0 + $0xd0] sm:$0xff]
  %v44 = vld [vmem:[%s0 + $0xd8] sm:$0xff]
  %v45 = vld [vmem:[%s0 + $0xe0] sm:$0xff]
  %v46 = vld [vmem:[%s0 + $0xe8] sm:$0xff]
  %v47 = vld [vmem:[%s0 + $0xf0] sm:$0xff]
  %v48 = vld [vmem:[%s0 + $0xf8] sm:$0xff]
  %v49 = vld [vmem:[%s0 + $0x100] sm:$0xff]
  %v50 = vld [vmem:[%s0 + $0x108] sm:$0xff]
  %v51 = vld [vmem:[%s0 + $0x110] sm:$0xff]
  %v52 = vld [vmem:[%s0 + $0x118] sm:$0xff]
  %v53 = vld [vmem:[%s1] sm:$0xff]
  %v54 = vld [vmem:[%s1 + $0x8] sm:$0xff]
  %v55 = vld [vmem:[%s1 + $0x10] sm:$0xff]
  %v56 = vld [vmem:[%s1 + $0x18] sm:$0xff]
  %v57 = vld [vmem:[%s1 + $0x20] sm:$0xff]
  %v58 = vld [vmem:[%s1 + $0x28] sm:$0xff]
  %v59 = vld [vmem:[%s1 + $0x30] sm:$0xff]
  %v60 = vld [vmem:[%s1 + $0x38] sm:$0xff]
  %v61 = vld [vmem:[%s1 + $0x40] sm:$0xff]
  %v62 = vld [vmem:[%s1 + $0x48] sm:$0xff]
  %v63 = vld [vmem:[%s1 + $0x50] sm:$0xff]
  %v64 = vld [vmem:[%s1 + $0x58] sm:$0xff]
  %v65 = vld [vmem:[%s1 + $0x60] sm:$0xff]
  %v66 = vld [vmem:[%s1 + $0x68] sm:$0xff]
  %v67 = vld [vmem:[%s1 + $0x70] sm:$0xff]
  %v68 = vld [vmem:[%s1 + $0x78] sm:$0xff]
  %v69 = vld [vmem:[%s1 + $0x80] sm:$0xff]
  %v70 = vld [vmem:[%s1 + $0x88] sm:$0xff]
  %v71 = vld [vmem:[%s1 + $0x90] sm:$0xff]
  %v72 = vld [vmem:[%s1 + $0x98] sm:$0xff]
  %v73 = vld [vmem:[%s1 + $0xa0] sm:$0xff]
  %v74 = vld [vmem:[%s1 + $0xa8] sm:$0xff]
  %v75 = vld [vmem:[%s1 + $0xb0] sm:$0xff]
  %v76 = vld [vmem:[%s1 + $0xb8] sm:$0xff]
  %v77 = vld [vmem:[%s1 + $0xc0] sm:$0xff]
  %v78 = vld [vmem:[%s1 + $0xc8] sm:$0xff]
  %v79 = vld [vmem:[%s1 + $0xd0] sm:$0xff]
  %v80 = vld [vmem:[%s1 + $0xd8] sm:$0xff]
  %v81 = vld [vmem:[%s1 + $0xe0] sm:$0xff]
  %v82 = vld [vmem:[%s1 + $0xe8] sm:$0xff]
  %v83 = vld [vmem:[%s1 + $0xf0] sm:$0xff]
  %v84 = vld [vmem:[%s1 + $0xf8] sm:$0xff]
  %v85 = vld [vmem:[%s1 + $0x100] sm:$0xff]
  %v86 = vld [vmem:[%s1 + $0x108] sm:$0xff]
  %v87 = vld [vmem:[%s1 + $0x110] sm:$0xff]
  %v88 = vld [vmem:[%s1 + $0x118] sm:$0xff]
  %v89 = vmax.f32 %v17, %v53
  %v90 = vmax.f32 %v18, %v54
  %v91 = vmax.f32 %v19, %v55
  %v92 = vmax.f32 %v20, %v56
  %v93 = vmax.f32 %v21, %v57
  %v94 = vmax.f32 %v22, %v58
  %v95 = vmax.f32 %v23, %v59
  %v96 = vmax.f32 %v24, %v60
  %v97 = vmax.f32 %v25, %v61
  %v98 = vmax.f32 %v26, %v62
  %v99 = vmax.f32 %v27, %v63
  %v100 = vmax.f32 %v28, %v64
  %v101 = vmax.f32 %v29, %v65
  %v102 = vmax.f32 %v30, %v66
  %v103 = vmax.f32 %v31, %v67
  %v104 = vmax.f32 %v32, %v68
  %v105 = vmax.f32 %v33, %v69
  %v106 = vmax.f32 %v34, %v70
  %v107 = vmax.f32 %v35, %v71
  %v108 = vmax.f32 %v36, %v72
  %v109 = vmax.f32 %v37, %v73
  %v110 = vmax.f32 %v38, %v74
  %v111 = vmax.f32 %v39, %v75
  %v112 = vmax.f32 %v40, %v76
  %v113 = vmax.f32 %v41, %v77
  %v114 = vmax.f32 %v42, %v78
  %v115 = vmax.f32 %v43, %v79
  %v116 = vmax.f32 %v44, %v80
  %v117 = vmax.f32 %v45, %v81
  %v118 = vmax.f32 %v46, %v82
  %v119 = vmax.f32 %v47, %v83
  %v120 = vmax.f32 %v48, %v84
  %v121 = vmax.f32 %v49, %v85
  %v122 = vmax.f32 %v50, %v86
  %v123 = vmax.f32 %v51, %v87
  %v124 = vmax.f32 %v52, %v88
  %v125 = vld [vmem:[%s2] sm:$0xff]
  %v126 = vld [vmem:[%s2 + $0x8] sm:$0xff]
  %v127 = vld [vmem:[%s2 + $0x10] sm:$0xff]
  %v128 = vld [vmem:[%s2 + $0x18] sm:$0xff]
  %v129 = vld [vmem:[%s2 + $0x20] sm:$0xff]
  %v130 = vld [vmem:[%s2 + $0x28] sm:$0xff]
  %v131 = vld [vmem:[%s2 + $0x30] sm:$0xff]
  %v132 = vld [vmem:[%s2 + $0x38] sm:$0xff]
  %v133 = vld [vmem:[%s2 + $0x40] sm:$0xff]
  %v134 = vld [vmem:[%s2 + $0x48] sm:$0xff]
  %v135 = vld [vmem:[%s2 + $0x50] sm:$0xff]
  %v136 = vld [vmem:[%s2 + $0x58] sm:$0xff]
  %v137 = vld [vmem:[%s2 + $0x60] sm:$0xff]
  %v138 = vld [vmem:[%s2 + $0x68] sm:$0xff]
  %v139 = vld [vmem:[%s2 + $0x70] sm:$0xff]
  %v140 = vld [vmem:[%s2 + $0x78] sm:$0xff]
  %v141 = vld [vmem:[%s2 + $0x80] sm:$0xff]
  %v142 = vld [vmem:[%s2 + $0x88] sm:$0xff]
  %v143 = vld [vmem:[%s2 + $0x90] sm:$0xff]
  %v144 = vld [vmem:[%s2 + $0x98] sm:$0xff]
  %v145 = vld [vmem:[%s2 + $0xa0] sm:$0xff]
  %v146 = vld [vmem:[%s2 + $0xa8] sm:$0xff]
  %v147 = vld [vmem:[%s2 + $0xb0] sm:$0xff]
  %v148 = vld [vmem:[%s2 + $0xb8] sm:$0xff]
  %v149 = vld [vmem:[%s2 + $0xc0] sm:$0xff]
  %v150 = vld [vmem:[%s2 + $0xc8] sm:$0xff]
  %v151 = vld [vmem:[%s2 + $0xd0] sm:$0xff]
  %v152 = vld [vmem:[%s2 + $0xd8] sm:$0xff]
  %v153 = vld [vmem:[%s2 + $0xe0] sm:$0xff]
  %v154 = vld [vmem:[%s2 + $0xe8] sm:$0xff]
  %v155 = vld [vmem:[%s2 + $0xf0] sm:$0xff]
  %v156 = vld [vmem:[%s2 + $0xf8] sm:$0xff]
  %v157 = vld [vmem:[%s2 + $0x100] sm:$0xff]
  %v158 = vld [vmem:[%s2 + $0x108] sm:$0xff]
  %v159 = vld [vmem:[%s2 + $0x110] sm:$0xff]
  %v160 = vld [vmem:[%s2 + $0x118] sm:$0xff]
  %v161 = vld [vmem:[%s3] sm:$0xff]
  %v162 = vld [vmem:[%s3 + $0x8] sm:$0xff]
  %v163 = vld [vmem:[%s3 + $0x10] sm:$0xff]
  %v164 = vld [vmem:[%s3 + $0x18] sm:$0xff]
  %v165 = vld [vmem:[%s3 + $0x20] sm:$0xff]
  %v166 = vld [vmem:[%s3 + $0x28] sm:$0xff]
  %v167 = vld [vmem:[%s3 + $0x30] sm:$0xff]
  %v168 = vld [vmem:[%s3 + $0x38] sm:$0xff]
  %v169 = vld [vmem:[%s3 + $0x40] sm:$0xff]
  %v170 = vld [vmem:[%s3 + $0x48] sm:$0xff]
  %v171 = vld [vmem:[%s3 + $0x50] sm:$0xff]
  %v172 = vld [vmem:[%s3 + $0x58] sm:$0xff]
  %v173 = vld [vmem:[%s3 + $0x60] sm:$0xff]
  %v174 = vld [vmem:[%s3 + $0x68] sm:$0xff]
  %v175 = vld [vmem:[%s3 + $0x70] sm:$0xff]
  %v176 = vld [vmem:[%s3 + $0x78] sm:$0xff]
  %v177 = vld [vmem:[%s3 + $0x80] sm:$0xff]
  %v178 = vld [vmem:[%s3 + $0x88] sm:$0xff]
  %v179 = vld [vmem:[%s3 + $0x90] sm:$0xff]
  %v180 = vld [vmem:[%s3 + $0x98] sm:$0xff]
  %v181 = vld [vmem:[%s3 + $0xa0] sm:$0xff]
  %v182 = vld [vmem:[%s3 + $0xa8] sm:$0xff]
  %v183 = vld [vmem:[%s3 + $0xb0] sm:$0xff]
  %v184 = vld [vmem:[%s3 + $0xb8] sm:$0xff]
  %v185 = vld [vmem:[%s3 + $0xc0] sm:$0xff]
  %v186 = vld [vmem:[%s3 + $0xc8] sm:$0xff]
  %v187 = vld [vmem:[%s3 + $0xd0] sm:$0xff]
  %v188 = vld [vmem:[%s3 + $0xd8] sm:$0xff]
  %v189 = vld [vmem:[%s3 + $0xe0] sm:$0xff]
  %v190 = vld [vmem:[%s3 + $0xe8] sm:$0xff]
  %v191 = vld [vmem:[%s3 + $0xf0] sm:$0xff]
  %v192 = vld [vmem:[%s3 + $0xf8] sm:$0xff]
  %v193 = vld [vmem:[%s3 + $0x100] sm:$0xff]
  %v194 = vld [vmem:[%s3 + $0x108] sm:$0xff]
  %v195 = vld [vmem:[%s3 + $0x110] sm:$0xff]
  %v196 = vld [vmem:[%s3 + $0x118] sm:$0xff]
  %v197 = vmax.f32 %v125, %v161
  %v198 = vmax.f32 %v126, %v162
  %v199 = vmax.f32 %v127, %v163
  %v200 = vmax.f32 %v128, %v164
  %v201 = vmax.f32 %v129, %v165
  %v202 = vmax.f32 %v130, %v166
  %v203 = vmax.f32 %v131, %v167
  %v204 = vmax.f32 %v132, %v168
  %v205 = vmax.f32 %v133, %v169
  %v206 = vmax.f32 %v134, %v170
  %v207 = vmax.f32 %v135, %v171
  %v208 = vmax.f32 %v136, %v172
  %v209 = vmax.f32 %v137, %v173
  %v210 = vmax.f32 %v138, %v174
  %v211 = vmax.f32 %v139, %v175
  %v212 = vmax.f32 %v140, %v176
  %v213 = vmax.f32 %v141, %v177
  %v214 = vmax.f32 %v142, %v178
  %v215 = vmax.f32 %v143, %v179
  %v216 = vmax.f32 %v144, %v180
  %v217 = vmax.f32 %v145, %v181
  %v218 = vmax.f32 %v146, %v182
  %v219 = vmax.f32 %v147, %v183
  %v220 = vmax.f32 %v148, %v184
  %v221 = vmax.f32 %v149, %v185
  %v222 = vmax.f32 %v150, %v186
  %v223 = vmax.f32 %v151, %v187
  %v224 = vmax.f32 %v152, %v188
  %v225 = vmax.f32 %v153, %v189
  %v226 = vmax.f32 %v154, %v190
  %v227 = vmax.f32 %v155, %v191
  %v228 = vmax.f32 %v156, %v192
  %v229 = vmax.f32 %v157, %v193
  %v230 = vmax.f32 %v158, %v194
  %v231 = vmax.f32 %v159, %v195
  %v232 = vmax.f32 %v160, %v196
  %v233 = vmax.f32 %v89, %v197
  %v234 = vmax.f32 %v90, %v198
  %v235 = vmax.f32 %v91, %v199
  %v236 = vmax.f32 %v92, %v200
  %v237 = vmax.f32 %v93, %v201
  %v238 = vmax.f32 %v94, %v202
  %v239 = vmax.f32 %v95, %v203
  %v240 = vmax.f32 %v96, %v204
  %v241 = vmax.f32 %v97, %v205
  %v242 = vmax.f32 %v98, %v206
  %v243 = vmax.f32 %v99, %v207
  %v244 = vmax.f32 %v100, %v208
  %v245 = vmax.f32 %v101, %v209
  %v246 = vmax.f32 %v102, %v210
  %v247 = vmax.f32 %v103, %v211
  %v248 = vmax.f32 %v104, %v212
  %v249 = vmax.f32 %v105, %v213
  %v250 = vmax.f32 %v106, %v214
  %v251 = vmax.f32 %v107, %v215
  %v252 = vmax.f32 %v108, %v216
  %v253 = vmax.f32 %v109, %v217
  %v254 = vmax.f32 %v110, %v218
  %v255 = vmax.f32 %v111, %v219
  %v256 = vmax.f32 %v112, %v220
  %v257 = vmax.f32 %v113, %v221
  %v258 = vmax.f32 %v114, %v222
  %v259 = vmax.f32 %v115, %v223
  %v260 = vmax.f32 %v116, %v224
  %v261 = vmax.f32 %v117, %v225
  %v262 = vmax.f32 %v118, %v226
  %v263 = vmax.f32 %v119, %v227
  %v264 = vmax.f32 %v120, %v228
  %v265 = vmax.f32 %v121, %v229
  %v266 = vmax.f32 %v122, %v230
  %v267 = vmax.f32 %v123, %v231
  %v268 = vmax.f32 %v124, %v232
  %269 = vst [vmem:[%s4] sm:$0xff] %v233
  %270 = vst [vmem:[%s4 + $0x8] sm:$0xff] %v234
  %271 = vst [vmem:[%s4 + $0x10] sm:$0xff] %v235
  %272 = vst [vmem:[%s4 + $0x18] sm:$0xff] %v236
  %273 = vst [vmem:[%s4 + $0x20] sm:$0xff] %v237
  %274 = vst [vmem:[%s4 + $0x28] sm:$0xff] %v238
  %275 = vst [vmem:[%s4 + $0x30] sm:$0xff] %v239
  %276 = vst [vmem:[%s4 + $0x38] sm:$0xff] %v240
  %277 = vst [vmem:[%s4 + $0x40] sm:$0xff] %v241
  %278 = vst [vmem:[%s4 + $0x48] sm:$0xff] %v242
  %279 = vst [vmem:[%s4 + $0x50] sm:$0xff] %v243
  %280 = vst [vmem:[%s4 + $0x58] sm:$0xff] %v244
  %281 = vst [vmem:[%s4 + $0x60] sm:$0xff] %v245
  %282 = vst [vmem:[%s4 + $0x68] sm:$0xff] %v246
  %283 = vst [vmem:[%s4 + $0x70] sm:$0xff] %v247
  %284 = vst [vmem:[%s4 + $0x78] sm:$0xff] %v248
  %285 = vst [vmem:[%s4 + $0x80] sm:$0xff] %v249
  %286 = vst [vmem:[%s4 + $0x88] sm:$0xff] %v250
  %287 = vst [vmem:[%s4 + $0x90] sm:$0xff] %v251
  %288 = vst [vmem:[%s4 + $0x98] sm:$0xff] %v252
  %289 = vst [vmem:[%s4 + $0xa0] sm:$0xff] %v253
  %290 = vst [vmem:[%s4 + $0xa8] sm:$0xff] %v254
  %291 = vst [vmem:[%s4 + $0xb0] sm:$0xff] %v255
  %292 = vst [vmem:[%s4 + $0xb8] sm:$0xff] %v256
  %293 = vst [vmem:[%s4 + $0xc0] sm:$0xff] %v257
  %294 = vst [vmem:[%s4 + $0xc8] sm:$0xff] %v258
  %295 = vst [vmem:[%s4 + $0xd0] sm:$0xff] %v259
  %296 = vst [vmem:[%s4 + $0xd8] sm:$0xff] %v260
  %297 = vst [vmem:[%s4 + $0xe0] sm:$0xff] %v261
  %298 = vst [vmem:[%s4 + $0xe8] sm:$0xff] %v262
  %299 = vst [vmem:[%s4 + $0xf0] sm:$0xff] %v263
  %300 = vst [vmem:[%s4 + $0xf8] sm:$0xff] %v264
  %301 = vst [vmem:[%s4 + $0x100] sm:$0xff] %v265
  %302 = vst [vmem:[%s4 + $0x108] sm:$0xff] %v266
  %303 = vst [vmem:[%s4 + $0x110] sm:$0xff] %v267
  %304 = vst [vmem:[%s4 + $0x118] sm:$0xff] %v268
  // Predicated region
  $region18: #{net_forward.6} parent=0 // pred_check
    _
  $region19: #{net_forward.6} parent=0 // pred_check_branch
    %306 = sbr.rel (0) target = $region21
  $region20: #{net_forward.6} parent=0 // pred_region
    _
  $region21: #{net_forward.6} parent=0 // pred_fallthru
    _
  // Predicated region
  $region22: #{net_forward.6} parent=0 // pred_check
    _
  $region23: #{net_forward.6} parent=0 // pred_check_branch
    %308 = sbr.rel (0) target = $region25
  $region24: #{net_forward.6} parent=0 // pred_region
    _
  $region25: #{net_forward.6} parent=0 // pred_fallthru
    _

// kernel: net_forward.5
$region0: #{net_forward.5}
  #allocation0 [shape = 'u32[]', space=smem, size = 0x4, offset = 0x4, fixed_abs, tag = 'smem constant byte address 0x4 - core index']
  #allocation1 [shape = 'u32[72,128]{1,0:T(1,128)}', space=vmem, size = 0x9000, scoped, tag = 'internal scratch']
  %s0 = inlined_call_operand.vmem [shape: f32[1,228,28], index: 0, kind: input, shape index: {}]
  %s1 = inlined_call_operand.hbm [shape: f32[5,28,768], index: 1, kind: input, shape index: {}]
  %s2 = inlined_call_operand.hbm [shape: f32[1,768], index: 2, kind: input, shape index: {}]
  %s3 = inlined_call_operand.vmem [shape: f32[224,768], index: 3, kind: output, shape index: {}]
  %s4 = sld [smem:[#allocation0]]
  $region30: #{net_forward.5} parent=0
    _
  %s6 = ssub.s32 1, %s4
  %s7 = scalar_select 0, %s6, %s4
  $region1: #{net_forward.5} parent=0
    #allocation2 [shape = 'u8[491520]{0}', space=vmem, size = 0x78000, scoped, tag = 'input window, operand 1, single buffered']
    #allocation3 [shape = 's32[1]{0}', space=sflag, size = 0x4, scoped, tag = 'scoped memory for net_forward.5']
    #allocation4 [shape = 'u8[3072]{0}', space=vmem, size = 0xc00, scoped, tag = 'input window, operand 2, single buffered']
    #allocation5 [shape = 's32[1]{0}', space=sflag, size = 0x4, scoped, tag = 'scoped memory for net_forward.5']
    %8 = vsyncpa [#allocation3], 0
    %9 = vsyncpa [#allocation5], 0
    // Predicated region
    $region2: #{net_forward.5} parent=1 // pred_check
      _
    $region3: #{net_forward.5} parent=1 // pred_check_branch
      %11 = sbr.rel (0) target = $region5
    $region4: #{net_forward.5} parent=1 // pred_region
      _
    $region5: #{net_forward.5} parent=1 // pred_fallthru
      _
    // Predicated region
    $region6: #{net_forward.5} parent=1 // pred_check
      _
    $region7: #{net_forward.5} parent=1 // pred_check_branch
      %13 = sbr.rel (0) target = $region9
    $region8: #{net_forward.5} parent=1 // pred_region
      %15 = vsyncadd [#allocation3], 0
      %s16 = sshll.u32 %s1, 4
      %s17 = int_to_ptr.hbm [resolvable:$true] %s16
      %s18 = sshll.u32 [#allocation2], 4
      %s19 = int_to_ptr.vmem [resolvable:$true] %s18
      %24 = dma.hbm_to_vmem [thread:$0]  %s17, 15360, %s19, [#allocation3], 768, 768, 48
    $region9: #{net_forward.5} parent=1 // pred_fallthru
      _
    // Predicated region
    $region10: #{net_forward.5} parent=1 // pred_check
      _
    $region11: #{net_forward.5} parent=1 // pred_check_branch
      %26 = sbr.rel (0) target = $region13
    $region12: #{net_forward.5} parent=1 // pred_region
      %28 = vsyncadd [#allocation5], 0
      %s30 = sshll.u32 %s2, 4
      %s31 = int_to_ptr.hbm [resolvable:$true] %s30
      %s32 = sshll.u32 [#allocation4], 4
      %s33 = int_to_ptr.vmem [resolvable:$true] %s32
      %35 = dma.hbm_to_vmem [thread:$0]  %s31, 96, %s33, [#allocation5]
    $region13: #{net_forward.5} parent=1 // pred_fallthru
      _
    // Predicated region
    $region14: #{net_forward.5} parent=1 // pred_check
      _
    $region15: #{net_forward.5} parent=1 // pred_check_branch
      %37 = sbr.rel (0) target = $region17
    $region16: #{net_forward.5} parent=1 // pred_region
      %39 = dma.done [#allocation3], 15360
    $region17: #{net_forward.5} parent=1 // pred_fallthru
      _
    // Predicated region
    $region18: #{net_forward.5} parent=1 // pred_check
      _
    $region19: #{net_forward.5} parent=1 // pred_check_branch
      %41 = sbr.rel (0) target = $region21
    $region20: #{net_forward.5} parent=1 // pred_region
      %43 = dma.done [#allocation5], 96
    $region21: #{net_forward.5} parent=1 // pred_fallthru
      _
    %v44 = vld [vmem:[%s0] sm:$0xff]
    %v45 = vld [vmem:[%s0 + $0x8] sm:$0xff]
    %v46 = vld [vmem:[%s0 + $0x10] sm:$0xff]
    %v47 = vld [vmem:[%s0 + $0x18] sm:$0xff]
    %v48 = vld [vmem:[%s0 + $0x20] sm:$0xff]
    %v49 = vld [vmem:[%s0 + $0x28] sm:$0xff]
    %v50 = vld [vmem:[%s0 + $0x30] sm:$0xff]
    %v51 = vld [vmem:[%s0 + $0x38] sm:$0xff]
    %v52 = vld [vmem:[%s0 + $0x40] sm:$0xff]
    %v53 = vld [vmem:[%s0 + $0x48] sm:$0xff]
    %v54 = vld [vmem:[%s0 + $0x50] sm:$0xff]
    %v55 = vld [vmem:[%s0 + $0x58] sm:$0xff]
    %v56 = vld [vmem:[%s0 + $0x60] sm:$0xff]
    %v57 = vld [vmem:[%s0 + $0x68] sm:$0xff]
    %v58 = vld [vmem:[%s0 + $0x70] sm:$0xff]
    %v59 = vld [vmem:[%s0 + $0x78] sm:$0xff]
    %v60 = vld [vmem:[%s0 + $0x80] sm:$0xff]
    %v61 = vld [vmem:[%s0 + $0x88] sm:$0xff]
    %v62 = vld [vmem:[%s0 + $0x90] sm:$0xff]
    %v63 = vld [vmem:[%s0 + $0x98] sm:$0xff]
    %v64 = vld [vmem:[%s0 + $0xa0] sm:$0xff]
    %v65 = vld [vmem:[%s0 + $0xa8] sm:$0xff]
    %v66 = vld [vmem:[%s0 + $0xb0] sm:$0xff]
    %v67 = vld [vmem:[%s0 + $0xb8] sm:$0xff]
    %v68 = vld [vmem:[%s0 + $0xc0] sm:$0xff]
    %v69 = vld [vmem:[%s0 + $0xc8] sm:$0xff]
    %v70 = vld [vmem:[%s0 + $0xd0] sm:$0xff]
    %v71 = vld [vmem:[%s0 + $0xd8] sm:$0xff]
    %v72 = vld [vmem:[%s0 + $0xe0] sm:$0xf]
    %v73 = vld [vmem:[#allocation2] sm:$0xff]
    %v74 = vld [vmem:[#allocation2 + $0x8] sm:$0xff]
    %v75 = vld [vmem:[#allocation2 + $0x10] sm:$0xff]
    %v76 = vld [vmem:[#allocation2 + $0x18] sm:$0xff]
    %v77 = vld [vmem:[#allocation2 + $0x20] sm:$0xff]
    %v78 = vld [vmem:[#allocation2 + $0x28] sm:$0xff]
    %v79 = vld [vmem:[#allocation2 + $0x30] sm:$0xff]
    %v80 = vld [vmem:[#allocation2 + $0x38] sm:$0xff]
    %v81 = vld [vmem:[#allocation2 + $0x40] sm:$0xff]
    %v82 = vld [vmem:[#allocation2 + $0x48] sm:$0xff]
    %v83 = vld [vmem:[#allocation2 + $0x50] sm:$0xff]
    %v84 = vld [vmem:[#allocation2 + $0x58] sm:$0xff]
    %v85 = vld [vmem:[#allocation2 + $0x60] sm:$0xff]
    %v86 = vld [vmem:[#allocation2 + $0x68] sm:$0xff]
    %v87 = vld [vmem:[#allocation2 + $0x70] sm:$0xff]
    %v88 = vld [vmem:[#allocation2 + $0x78] sm:$0xff]
    %v89 = vld [vmem:[#allocation2 + $0x80] sm:$0xff]
    %v90 = vld [vmem:[#allocation2 + $0x88] sm:$0xff]
    %v91 = vld [vmem:[#allocation2 + $0x90] sm:$0xf]
    %v92 = vld [vmem:[#allocation2 + $0x98] sm:$0xf]
    %v93 = vld [vmem:[#allocation2 + $0xa0] sm:$0xf]
    %v94 = vld [vmem:[#allocation2 + $0xa8] sm:$0xf]
    %v95 = vld [vmem:[#allocation2 + $0xb0] sm:$0xf]
    %v96 = vld [vmem:[#allocation2 + $0xb8] sm:$0xf]
    %s97 = scalar_lea.vmem [#allocation2], 192
    %v98 = vld [vmem:[%s97] sm:$0xff]
    %v99 = vld [vmem:[%s97 + $0x8] sm:$0xff]
    %v100 = vld [vmem:[%s97 + $0x10] sm:$0xff]
    %v101 = vld [vmem:[%s97 + $0x18] sm:$0xff]
    %v102 = vld [vmem:[%s97 + $0x20] sm:$0xff]
    %v103 = vld [vmem:[%s97 + $0x28] sm:$0xff]
    %v104 = vld [vmem:[%s97 + $0x30] sm:$0xff]
    %v105 = vld [vmem:[%s97 + $0x38] sm:$0xff]
    %v106 = vld [vmem:[%s97 + $0x40] sm:$0xff]
    %v107 = vld [vmem:[%s97 + $0x48] sm:$0xff]
    %v108 = vld [vmem:[%s97 + $0x50] sm:$0xff]
    %v109 = vld [vmem:[%s97 + $0x58] sm:$0xff]
    %v110 = vld [vmem:[%s97 + $0x60] sm:$0xff]
    %v111 = vld [vmem:[%s97 + $0x68] sm:$0xff]
    %v112 = vld [vmem:[%s97 + $0x70] sm:$0xff]
    %v113 = vld [vmem:[%s97 + $0x78] sm:$0xff]
    %v114 = vld [vmem:[%s97 + $0x80] sm:$0xff]
    %v115 = vld [vmem:[%s97 + $0x88] sm:$0xff]
    %v116 = vld [vmem:[%s97 + $0x90] sm:$0xf]
    %v117 = vld [vmem:[%s97 + $0x98] sm:$0xf]
    %v118 = vld [vmem:[%s97 + $0xa0] sm:$0xf]
    %v119 = vld [vmem:[%s97 + $0xa8] sm:$0xf]
    %v120 = vld [vmem:[%s97 + $0xb0] sm:$0xf]
    %v121 = vld [vmem:[%s97 + $0xb8] sm:$0xf]
    %vm151 = vcmask 1046528
    %v152 = vrot.slane %v44, 1
    %v153 = vrot.slane %v45, 1
    %v154 = vsel %vm151, %v152, %v153
    %v155 = vrot.slane %v46, 1
    %v156 = vsel %vm151, %v153, %v155
    %v157 = vrot.slane %v47, 1
    %v158 = vsel %vm151, %v155, %v157
    %v159 = vrot.slane %v48, 1
    %v160 = vsel %vm151, %v157, %v159
    %v161 = vrot.slane %v49, 1
    %v162 = vsel %vm151, %v159, %v161
    %v163 = vrot.slane %v50, 1
    %v164 = vsel %vm151, %v161, %v163
    %v165 = vrot.slane %v51, 1
    %v166 = vsel %vm151, %v163, %v165
    %v167 = vrot.slane %v52, 1
    %v168 = vsel %vm151, %v165, %v167
    %v169 = vrot.slane %v53, 1
    %v170 = vsel %vm151, %v167, %v169
    %v171 = vrot.slane %v54, 1
    %v172 = vsel %vm151, %v169, %v171
    %v173 = vrot.slane %v55, 1
    %v174 = vsel %vm151, %v171, %v173
    %v175 = vrot.slane %v56, 1
    %v176 = vsel %vm151, %v173, %v175
    %v177 = vrot.slane %v57, 1
    %v178 = vsel %vm151, %v175, %v177
    %v179 = vrot.slane %v58, 1
    %v180 = vsel %vm151, %v177, %v179
    %v181 = vrot.slane %v59, 1
    %v182 = vsel %vm151, %v179, %v181
    %v183 = vrot.slane %v60, 1
    %v184 = vsel %vm151, %v181, %v183
    %v185 = vrot.slane %v61, 1
    %v186 = vsel %vm151, %v183, %v185
    %v187 = vrot.slane %v62, 1
    %v188 = vsel %vm151, %v185, %v187
    %v189 = vrot.slane %v63, 1
    %v190 = vsel %vm151, %v187, %v189
    %v191 = vrot.slane %v64, 1
    %v192 = vsel %vm151, %v189, %v191
    %v193 = vrot.slane %v65, 1
    %v194 = vsel %vm151, %v191, %v193
    %v195 = vrot.slane %v66, 1
    %v196 = vsel %vm151, %v193, %v195
    %v197 = vrot.slane %v67, 1
    %v198 = vsel %vm151, %v195, %v197
    %v199 = vrot.slane %v68, 1
    %v200 = vsel %vm151, %v197, %v199
    %v201 = vrot.slane %v69, 1
    %v202 = vsel %vm151, %v199, %v201
    %v203 = vrot.slane %v70, 1
    %v204 = vsel %vm151, %v201, %v203
    %v205 = vrot.slane %v71, 1
    %v206 = vsel %vm151, %v203, %v205
    %v207 = vrot.slane %v72, 1
    %v208 = vsel %vm151, %v205, %v207
    %vm209 = vcmask 228352
    %v210 = vsel %vm209, %v154, 0
    %v212 = vsel %vm209, %v156, 0
    %v214 = vsel %vm209, %v158, 0
    %v216 = vsel %vm209, %v160, 0
    %v218 = vsel %vm209, %v162, 0
    %v220 = vsel %vm209, %v164, 0
    %v222 = vsel %vm209, %v166, 0
    %v224 = vsel %vm209, %v168, 0
    %v226 = vsel %vm209, %v170, 0
    %v228 = vsel %vm209, %v172, 0
    %v230 = vsel %vm209, %v174, 0
    %v232 = vsel %vm209, %v176, 0
    %v234 = vsel %vm209, %v178, 0
    %v236 = vsel %vm209, %v180, 0
    %v238 = vsel %vm209, %v182, 0
    %v240 = vsel %vm209, %v184, 0
    %v242 = vsel %vm209, %v186, 0
    %v244 = vsel %vm209, %v188, 0
    %v246 = vsel %vm209, %v190, 0
    %v248 = vsel %vm209, %v192, 0
    %v250 = vsel %vm209, %v194, 0
    %v252 = vsel %vm209, %v196, 0
    %v254 = vsel %vm209, %v198, 0
    %v256 = vsel %vm209, %v200, 0
    %v258 = vsel %vm209, %v202, 0
    %v260 = vsel %vm209, %v204, 0
    %v262 = vsel %vm209, %v206, 0
    %v264 = vsel %vm209, %v208, 0
    %vm266 = vcmask 1043456
    %v268 = vsel %vm266, %v116, 0
    %v271 = vsel %vm266, %v117, 0
    %v274 = vsel %vm266, %v118, 0
    %v277 = vsel %vm266, %v119, 0
    %v280 = vsel %vm266, %v120, 0
    %v283 = vsel %vm266, %v121, 0
    %285 = vmatpush.msra.mxu0 0.0
    %286 = vmatpush.msra.mxu0 0.0
    %287 = vmatpush.msra.mxu0 0.0
    %288 = vmatpush.msra.mxu0 0.0
    %289 = vmatpush.msra.mxu0 0.0
    %290 = vmatpush.msra.mxu0 0.0
    %291 = vmatpush.msra.mxu0 0.0
    %292 = vmatpush.msra.mxu0 0.0
    %293 = vmatpush.msra.mxu0 0.0
    %294 = vmatpush.msra.mxu0 0.0
    %295 = vmatpush.msra.mxu0 0.0
    %296 = vmatpush.msra.mxu0 0.0
    %297 = vmatpush.msra.mxu0 %v268
    %298 = vmatpush.msra.mxu0 %v110
    %299 = vmatpush.msra.mxu0 %v104
    %300 = vmatpush.msra.mxu0 %v98
    %301 = vmatmul.f32.gmra.mxu0 %v210
    %v302 = vpop.f32.mrf.mxu0
    %v303 = vadd.f32 0.0, %v302
    %304 = vmatmul.f32.gmra.mxu0 %v212
    %v305 = vpop.f32.mrf.mxu0
    %v306 = vadd.f32 0.0, %v305
    %307 = vmatmul.f32.gmra.mxu0 %v214
    %v308 = vpop.f32.mrf.mxu0
    %v309 = vadd.f32 0.0, %v308
    %310 = vmatmul.f32.gmra.mxu0 %v216
    %v311 = vpop.f32.mrf.mxu0
    %v312 = vadd.f32 0.0, %v311
    %313 = vmatmul.f32.gmra.mxu0 %v218
    %v314 = vpop.f32.mrf.mxu0
    %v315 = vadd.f32 0.0, %v314
    %316 = vmatmul.f32.gmra.mxu0 %v220
    %v317 = vpop.f32.mrf.mxu0
    %v318 = vadd.f32 0.0, %v317
    %319 = vmatmul.f32.gmra.mxu0 %v222
    %v320 = vpop.f32.mrf.mxu0
    %v321 = vadd.f32 0.0, %v320
    %322 = vmatmul.f32.gmra.mxu0 %v224
    %v323 = vpop.f32.mrf.mxu0
    %v324 = vadd.f32 0.0, %v323
    %325 = vmatmul.f32.gmra.mxu0 %v226
    %v326 = vpop.f32.mrf.mxu0
    %v327 = vadd.f32 0.0, %v326
    %328 = vmatmul.f32.gmra.mxu0 %v228
    %v329 = vpop.f32.mrf.mxu0
    %v330 = vadd.f32 0.0, %v329
    %331 = vmatmul.f32.gmra.mxu0 %v230
    %v332 = vpop.f32.mrf.mxu0
    %v333 = vadd.f32 0.0, %v332
    %334 = vmatmul.f32.gmra.mxu0 %v232
    %v335 = vpop.f32.mrf.mxu0
    %v336 = vadd.f32 0.0, %v335
    %337 = vmatmul.f32.gmra.mxu0 %v234
    %v338 = vpop.f32.mrf.mxu0
    %v339 = vadd.f32 0.0, %v338
    %340 = vmatmul.f32.gmra.mxu0 %v236
    %v341 = vpop.f32.mrf.mxu0
    %v342 = vadd.f32 0.0, %v341
    %343 = vmatmul.f32.gmra.mxu0 %v238
    %v344 = vpop.f32.mrf.mxu0
    %v345 = vadd.f32 0.0, %v344
    %346 = vmatmul.f32.gmra.mxu0 %v240
    %v347 = vpop.f32.mrf.mxu0
    %v348 = vadd.f32 0.0, %v347
    %349 = vmatmul.f32.gmra.mxu0 %v242
    %v350 = vpop.f32.mrf.mxu0
    %v351 = vadd.f32 0.0, %v350
    %352 = vmatmul.f32.gmra.mxu0 %v244
    %v353 = vpop.f32.mrf.mxu0
    %v354 = vadd.f32 0.0, %v353
    %355 = vmatmul.f32.gmra.mxu0 %v246
    %v356 = vpop.f32.mrf.mxu0
    %v357 = vadd.f32 0.0, %v356
    %358 = vmatmul.f32.gmra.mxu0 %v248
    %v359 = vpop.f32.mrf.mxu0
    %v360 = vadd.f32 0.0, %v359
    %361 = vmatmul.f32.gmra.mxu0 %v250
    %v362 = vpop.f32.mrf.mxu0
    %v363 = vadd.f32 0.0, %v362
    %364 = vmatmul.f32.gmra.mxu0 %v252
    %v365 = vpop.f32.mrf.mxu0
    %v366 = vadd.f32 0.0, %v365
    %367 = vmatmul.f32.gmra.mxu0 %v254
    %v368 = vpop.f32.mrf.mxu0
    %v369 = vadd.f32 0.0, %v368
    %370 = vmatmul.f32.gmra.mxu0 %v256
    %v371 = vpop.f32.mrf.mxu0
    %v372 = vadd.f32 0.0, %v371
    %373 = vmatmul.f32.gmra.mxu0 %v258
    %v374 = vpop.f32.mrf.mxu0
    %v375 = vadd.f32 0.0, %v374
    %376 = vmatmul.f32.gmra.mxu0 %v260
    %v377 = vpop.f32.mrf.mxu0
    %v378 = vadd.f32 0.0, %v377
    %379 = vmatmul.f32.gmra.mxu0 %v262
    %v380 = vpop.f32.mrf.mxu0
    %v381 = vadd.f32 0.0, %v380
    %382 = vmatmul.f32.gmra.mxu0 %v264
    %v383 = vpop.f32.mrf.mxu0
    %v384 = vadd.f32 0.0, %v383
    %385 = vdwg.mxu0
    %386 = vmatpush.msra.mxu0 0.0
    %387 = vmatpush.msra.mxu0 0.0
    %388 = vmatpush.msra.mxu0 0.0
    %389 = vmatpush.msra.mxu0 0.0
    %390 = vmatpush.msra.mxu0 0.0
    %391 = vmatpush.msra.mxu0 0.0
    %392 = vmatpush.msra.mxu0 0.0
    %393 = vmatpush.msra.mxu0 0.0
    %394 = vmatpush.msra.mxu0 0.0
    %395 = vmatpush.msra.mxu0 0.0
    %396 = vmatpush.msra.mxu0 0.0
    %397 = vmatpush.msra.mxu0 0.0
    %398 = vmatpush.msra.mxu0 %v271
    %399 = vmatpush.msra.mxu0 %v111
    %400 = vmatpush.msra.mxu0 %v105
    %401 = vmatpush.msra.mxu0 %v99
    %402 = vmatmul.f32.gmra.mxu0 %v210
    %v403 = vpop.f32.mrf.mxu0
    %v404 = vadd.f32 0.0, %v403
    %405 = vmatmul.f32.gmra.mxu0 %v212
    %v406 = vpop.f32.mrf.mxu0
    %v407 = vadd.f32 0.0, %v406
    %408 = vmatmul.f32.gmra.mxu0 %v214
    %v409 = vpop.f32.mrf.mxu0
    %v410 = vadd.f32 0.0, %v409
    %411 = vmatmul.f32.gmra.mxu0 %v216
    %v412 = vpop.f32.mrf.mxu0
    %v413 = vadd.f32 0.0, %v412
    %414 = vmatmul.f32.gmra.mxu0 %v218
    %v415 = vpop.f32.mrf.mxu0
    %v416 = vadd.f32 0.0, %v415
    %417 = vmatmul.f32.gmra.mxu0 %v220
    %v418 = vpop.f32.mrf.mxu0
    %v419 = vadd.f32 0.0, %v418
    %420 = vmatmul.f32.gmra.mxu0 %v222
    %v421 = vpop.f32.mrf.mxu0
    %v422 = vadd.f32 0.0, %v421
    %423 = vmatmul.f32.gmra.mxu0 %v224
    %v424 = vpop.f32.mrf.mxu0
    %v425 = vadd.f32 0.0, %v424
    %426 = vmatmul.f32.gmra.mxu0 %v226
    %v427 = vpop.f32.mrf.mxu0
    %v428 = vadd.f32 0.0, %v427
    %429 = vmatmul.f32.gmra.mxu0 %v228
    %v430 = vpop.f32.mrf.mxu0
    %v431 = vadd.f32 0.0, %v430
    %432 = vmatmul.f32.gmra.mxu0 %v230
    %v433 = vpop.f32.mrf.mxu0
    %v434 = vadd.f32 0.0, %v433
    %435 = vmatmul.f32.gmra.mxu0 %v232
    %v436 = vpop.f32.mrf.mxu0
    %v437 = vadd.f32 0.0, %v436
    %438 = vmatmul.f32.gmra.mxu0 %v234
    %v439 = vpop.f32.mrf.mxu0
    %v440 = vadd.f32 0.0, %v439
    %441 = vmatmul.f32.gmra.mxu0 %v236
    %v442 = vpop.f32.mrf.mxu0
    %v443 = vadd.f32 0.0, %v442
    %444 = vmatmul.f32.gmra.mxu0 %v238
    %v445 = vpop.f32.mrf.mxu0
    %v446 = vadd.f32 0.0, %v445
    %447 = vmatmul.f32.gmra.mxu0 %v240
    %v448 = vpop.f32.mrf.mxu0
    %v449 = vadd.f32 0.0, %v448
    %450 = vmatmul.f32.gmra.mxu0 %v242
    %v451 = vpop.f32.mrf.mxu0
    %v452 = vadd.f32 0.0, %v451
    %453 = vmatmul.f32.gmra.mxu0 %v244
    %v454 = vpop.f32.mrf.mxu0
    %v455 = vadd.f32 0.0, %v454
    %456 = vmatmul.f32.gmra.mxu0 %v246
    %v457 = vpop.f32.mrf.mxu0
    %v458 = vadd.f32 0.0, %v457
    %459 = vmatmul.f32.gmra.mxu0 %v248
    %v460 = vpop.f32.mrf.mxu0
    %v461 = vadd.f32 0.0, %v460
    %462 = vmatmul.f32.gmra.mxu0 %v250
    %v463 = vpop.f32.mrf.mxu0
    %v464 = vadd.f32 0.0, %v463
    %465 = vmatmul.f32.gmra.mxu0 %v252
    %v466 = vpop.f32.mrf.mxu0
    %v467 = vadd.f32 0.0, %v466
    %468 = vmatmul.f32.gmra.mxu0 %v254
    %v469 = vpop.f32.mrf.mxu0
    %v470 = vadd.f32 0.0, %v469
    %471 = vmatmul.f32.gmra.mxu0 %v256
    %v472 = vpop.f32.mrf.mxu0
    %v473 = vadd.f32 0.0, %v472
    %474 = vmatmul.f32.gmra.mxu0 %v258
    %v475 = vpop.f32.mrf.mxu0
    %v476 = vadd.f32 0.0, %v475
    %477 = vmatmul.f32.gmra.mxu0 %v260
    %v478 = vpop.f32.mrf.mxu0
    %v479 = vadd.f32 0.0, %v478
    %480 = vmatmul.f32.gmra.mxu0 %v262
    %v481 = vpop.f32.mrf.mxu0
    %v482 = vadd.f32 0.0, %v481
    %483 = vmatmul.f32.gmra.mxu0 %v264
    %v484 = vpop.f32.mrf.mxu0
    %v485 = vadd.f32 0.0, %v484
    %486 = vdwg.mxu0
    %487 = vmatpush.msra.mxu0 0.0
    %488 = vmatpush.msra.mxu0 0.0
    %489 = vmatpush.msra.mxu0 0.0
    %490 = vmatpush.msra.mxu0 0.0
    %491 = vmatpush.msra.mxu0 0.0
    %492 = vmatpush.msra.mxu0 0.0
    %493 = vmatpush.msra.mxu0 0.0
    %494 = vmatpush.msra.mxu0 0.0
    %495 = vmatpush.msra.mxu0 0.0
    %496 = vmatpush.msra.mxu0 0.0
    %497 = vmatpush.msra.mxu0 0.0
    %498 = vmatpush.msra.mxu0 0.0
    %499 = vmatpush.msra.mxu0 %v274
    %500 = vmatpush.msra.mxu0 %v112
    %501 = vmatpush.msra.mxu0 %v106
    %502 = vmatpush.msra.mxu0 %v100
    %503 = vmatmul.f32.gmra.mxu0 %v210
    %v504 = vpop.f32.mrf.mxu0
    %v505 = vadd.f32 0.0, %v504
    %506 = vmatmul.f32.gmra.mxu0 %v212
    %v507 = vpop.f32.mrf.mxu0
    %v508 = vadd.f32 0.0, %v507
    %509 = vmatmul.f32.gmra.mxu0 %v214
    %v510 = vpop.f32.mrf.mxu0
    %v511 = vadd.f32 0.0, %v510
    %512 = vmatmul.f32.gmra.mxu0 %v216
    %v513 = vpop.f32.mrf.mxu0
    %v514 = vadd.f32 0.0, %v513
    %515 = vmatmul.f32.gmra.mxu0 %v218
    %v516 = vpop.f32.mrf.mxu0
    %v517 = vadd.f32 0.0, %v516
    %518 = vmatmul.f32.gmra.mxu0 %v220
    %v519 = vpop.f32.mrf.mxu0
    %v520 = vadd.f32 0.0, %v519
    %521 = vmatmul.f32.gmra.mxu0 %v222
    %v522 = vpop.f32.mrf.mxu0
    %v523 = vadd.f32 0.0, %v522
    %524 = vmatmul.f32.gmra.mxu0 %v224
    %v525 = vpop.f32.mrf.mxu0
    %v526 = vadd.f32 0.0, %v525
    %527 = vmatmul.f32.gmra.mxu0 %v226
    %v528 = vpop.f32.mrf.mxu0
    %v529 = vadd.f32 0.0, %v528
    %530 = vmatmul.f32.gmra.mxu0 %v228
    %v531 = vpop.f32.mrf.mxu0
    %v532 = vadd.f32 0.0, %v531
    %533 = vmatmul.f32.gmra.mxu0 %v230
    %v534 = vpop.f32.mrf.mxu0
    %v535 = vadd.f32 0.0, %v534
    %536 = vmatmul.f32.gmra.mxu0 %v232
    %v537 = vpop.f32.mrf.mxu0
    %v538 = vadd.f32 0.0, %v537
    %539 = vmatmul.f32.gmra.mxu0 %v234
    %v540 = vpop.f32.mrf.mxu0
    %v541 = vadd.f32 0.0, %v540
    %542 = vmatmul.f32.gmra.mxu0 %v236
    %v543 = vpop.f32.mrf.mxu0
    %v544 = vadd.f32 0.0, %v543
    %545 = vmatmul.f32.gmra.mxu0 %v238
    %v546 = vpop.f32.mrf.mxu0
    %v547 = vadd.f32 0.0, %v546
    %548 = vmatmul.f32.gmra.mxu0 %v240
    %v549 = vpop.f32.mrf.mxu0
    %v550 = vadd.f32 0.0, %v549
    %551 = vmatmul.f32.gmra.mxu0 %v242
    %v552 = vpop.f32.mrf.mxu0
    %v553 = vadd.f32 0.0, %v552
    %554 = vmatmul.f32.gmra.mxu0 %v244
    %v555 = vpop.f32.mrf.mxu0
    %v556 = vadd.f32 0.0, %v555
    %557 = vmatmul.f32.gmra.mxu0 %v246
    %v558 = vpop.f32.mrf.mxu0
    %v559 = vadd.f32 0.0, %v558
    %560 = vmatmul.f32.gmra.mxu0 %v248
    %v561 = vpop.f32.mrf.mxu0
    %v562 = vadd.f32 0.0, %v561
    %563 = vmatmul.f32.gmra.mxu0 %v250
    %v564 = vpop.f32.mrf.mxu0
    %v565 = vadd.f32 0.0, %v564
    %566 = vmatmul.f32.gmra.mxu0 %v252
    %v567 = vpop.f32.mrf.mxu0
    %v568 = vadd.f32 0.0, %v567
    %569 = vmatmul.f32.gmra.mxu0 %v254
    %v570 = vpop.f32.mrf.mxu0
    %v571 = vadd.f32 0.0, %v570
    %572 = vmatmul.f32.gmra.mxu0 %v256
    %v573 = vpop.f32.mrf.mxu0
    %v574 = vadd.f32 0.0, %v573
    %575 = vmatmul.f32.gmra.mxu0 %v258
    %v576 = vpop.f32.mrf.mxu0
    %v577 = vadd.f32 0.0, %v576
    %578 = vmatmul.f32.gmra.mxu0 %v260
    %v579 = vpop.f32.mrf.mxu0
    %v580 = vadd.f32 0.0, %v579
    %581 = vmatmul.f32.gmra.mxu0 %v262
    %v582 = vpop.f32.mrf.mxu0
    %v583 = vadd.f32 0.0, %v582
    %584 = vmatmul.f32.gmra.mxu0 %v264
    %v585 = vpop.f32.mrf.mxu0
    %v586 = vadd.f32 0.0, %v585
    %587 = vdwg.mxu0
    %588 = vmatpush.msra.mxu0 0.0
    %589 = vmatpush.msra.mxu0 0.0
    %590 = vmatpush.msra.mxu0 0.0
    %591 = vmatpush.msra.mxu0 0.0
    %592 = vmatpush.msra.mxu0 0.0
    %593 = vmatpush.msra.mxu0 0.0
    %594 = vmatpush.msra.mxu0 0.0
    %595 = vmatpush.msra.mxu0 0.0
    %596 = vmatpush.msra.mxu0 0.0
    %597 = vmatpush.msra.mxu0 0.0
    %598 = vmatpush.msra.mxu0 0.0
    %599 = vmatpush.msra.mxu0 0.0
    %600 = vmatpush.msra.mxu0 %v277
    %601 = vmatpush.msra.mxu0 %v113
    %602 = vmatpush.msra.mxu0 %v107
    %603 = vmatpush.msra.mxu0 %v101
    %604 = vmatmul.f32.gmra.mxu0 %v210
    %v605 = vpop.f32.mrf.mxu0
    %v606 = vadd.f32 0.0, %v605
    %607 = vmatmul.f32.gmra.mxu0 %v212
    %v608 = vpop.f32.mrf.mxu0
    %v609 = vadd.f32 0.0, %v608
    %610 = vmatmul.f32.gmra.mxu0 %v214
    %v611 = vpop.f32.mrf.mxu0
    %v612 = vadd.f32 0.0, %v611
    %613 = vmatmul.f32.gmra.mxu0 %v216
    %v614 = vpop.f32.mrf.mxu0
    %v615 = vadd.f32 0.0, %v614
    %616 = vmatmul.f32.gmra.mxu0 %v218
    %v617 = vpop.f32.mrf.mxu0
    %v618 = vadd.f32 0.0, %v617
    %619 = vmatmul.f32.gmra.mxu0 %v220
    %v620 = vpop.f32.mrf.mxu0
    %v621 = vadd.f32 0.0, %v620
    %622 = vmatmul.f32.gmra.mxu0 %v222
    %v623 = vpop.f32.mrf.mxu0
    %v624 = vadd.f32 0.0, %v623
    %625 = vmatmul.f32.gmra.mxu0 %v224
    %v626 = vpop.f32.mrf.mxu0
    %v627 = vadd.f32 0.0, %v626
    %628 = vmatmul.f32.gmra.mxu0 %v226
    %v629 = vpop.f32.mrf.mxu0
    %v630 = vadd.f32 0.0, %v629
    %631 = vmatmul.f32.gmra.mxu0 %v228
    %v632 = vpop.f32.mrf.mxu0
    %v633 = vadd.f32 0.0, %v632
    %634 = vmatmul.f32.gmra.mxu0 %v230
    %v635 = vpop.f32.mrf.mxu0
    %v636 = vadd.f32 0.0, %v635
    %637 = vmatmul.f32.gmra.mxu0 %v232
    %v638 = vpop.f32.mrf.mxu0
    %v639 = vadd.f32 0.0, %v638
    %640 = vmatmul.f32.gmra.mxu0 %v234
    %v641 = vpop.f32.mrf.mxu0
    %v642 = vadd.f32 0.0, %v641
    %643 = vmatmul.f32.gmra.mxu0 %v236
    %v644 = vpop.f32.mrf.mxu0
    %v645 = vadd.f32 0.0, %v644
    %646 = vmatmul.f32.gmra.mxu0 %v238
    %v647 = vpop.f32.mrf.mxu0
    %v648 = vadd.f32 0.0, %v647
    %649 = vmatmul.f32.gmra.mxu0 %v240
    %v650 = vpop.f32.mrf.mxu0
    %v651 = vadd.f32 0.0, %v650
    %652 = vmatmul.f32.gmra.mxu0 %v242
    %v653 = vpop.f32.mrf.mxu0
    %v654 = vadd.f32 0.0, %v653
    %655 = vmatmul.f32.gmra.mxu0 %v244
    %v656 = vpop.f32.mrf.mxu0
    %v657 = vadd.f32 0.0, %v656
    %658 = vmatmul.f32.gmra.mxu0 %v246
    %v659 = vpop.f32.mrf.mxu0
    %v660 = vadd.f32 0.0, %v659
    %661 = vmatmul.f32.gmra.mxu0 %v248
    %v662 = vpop.f32.mrf.mxu0
    %v663 = vadd.f32 0.0, %v662
    %664 = vmatmul.f32.gmra.mxu0 %v250
    %v665 = vpop.f32.mrf.mxu0
    %v666 = vadd.f32 0.0, %v665
    %667 = vmatmul.f32.gmra.mxu0 %v252
    %v668 = vpop.f32.mrf.mxu0
    %v669 = vadd.f32 0.0, %v668
    %670 = vmatmul.f32.gmra.mxu0 %v254
    %v671 = vpop.f32.mrf.mxu0
    %v672 = vadd.f32 0.0, %v671
    %673 = vmatmul.f32.gmra.mxu0 %v256
    %v674 = vpop.f32.mrf.mxu0
    %v675 = vadd.f32 0.0, %v674
    %676 = vmatmul.f32.gmra.mxu0 %v258
    %v677 = vpop.f32.mrf.mxu0
    %v678 = vadd.f32 0.0, %v677
    %679 = vmatmul.f32.gmra.mxu0 %v260
    %v680 = vpop.f32.mrf.mxu0
    %v681 = vadd.f32 0.0, %v680
    %682 = vmatmul.f32.gmra.mxu0 %v262
    %v683 = vpop.f32.mrf.mxu0
    %v684 = vadd.f32 0.0, %v683
    %685 = vmatmul.f32.gmra.mxu0 %v264
    %v686 = vpop.f32.mrf.mxu0
    %v687 = vadd.f32 0.0, %v686
    %688 = vdwg.mxu0
    %689 = vmatpush.msra.mxu0 0.0
    %690 = vmatpush.msra.mxu0 0.0
    %691 = vmatpush.msra.mxu0 0.0
    %692 = vmatpush.msra.mxu0 0.0
    %693 = vmatpush.msra.mxu0 0.0
    %694 = vmatpush.msra.mxu0 0.0
    %695 = vmatpush.msra.mxu0 0.0
    %696 = vmatpush.msra.mxu0 0.0
    %697 = vmatpush.msra.mxu0 0.0
    %698 = vmatpush.msra.mxu0 0.0
    %699 = vmatpush.msra.mxu0 0.0
    %700 = vmatpush.msra.mxu0 0.0
    %701 = vmatpush.msra.mxu0 %v280
    %702 = vmatpush.msra.mxu0 %v114
    %703 = vmatpush.msra.mxu0 %v108
    %704 = vmatpush.msra.mxu0 %v102
    %705 = vmatmul.f32.gmra.mxu0 %v210
    %v706 = vpop.f32.mrf.mxu0
    %v707 = vadd.f32 0.0, %v706
    %708 = vmatmul.f32.gmra.mxu0 %v212
    %v709 = vpop.f32.mrf.mxu0
    %v710 = vadd.f32 0.0, %v709
    %711 = vmatmul.f32.gmra.mxu0 %v214
    %v712 = vpop.f32.mrf.mxu0
    %v713 = vadd.f32 0.0, %v712
    %714 = vmatmul.f32.gmra.mxu0 %v216
    %v715 = vpop.f32.mrf.mxu0
    %v716 = vadd.f32 0.0, %v715
    %717 = vmatmul.f32.gmra.mxu0 %v218
    %v718 = vpop.f32.mrf.mxu0
    %v719 = vadd.f32 0.0, %v718
    %720 = vmatmul.f32.gmra.mxu0 %v220
    %v721 = vpop.f32.mrf.mxu0
    %v722 = vadd.f32 0.0, %v721
    %723 = vmatmul.f32.gmra.mxu0 %v222
    %v724 = vpop.f32.mrf.mxu0
    %v725 = vadd.f32 0.0, %v724
    %726 = vmatmul.f32.gmra.mxu0 %v224
    %v727 = vpop.f32.mrf.mxu0
    %v728 = vadd.f32 0.0, %v727
    %729 = vmatmul.f32.gmra.mxu0 %v226
    %v730 = vpop.f32.mrf.mxu0
    %v731 = vadd.f32 0.0, %v730
    %732 = vmatmul.f32.gmra.mxu0 %v228
    %v733 = vpop.f32.mrf.mxu0
    %v734 = vadd.f32 0.0, %v733
    %735 = vmatmul.f32.gmra.mxu0 %v230
    %v736 = vpop.f32.mrf.mxu0
    %v737 = vadd.f32 0.0, %v736
    %738 = vmatmul.f32.gmra.mxu0 %v232
    %v739 = vpop.f32.mrf.mxu0
    %v740 = vadd.f32 0.0, %v739
    %741 = vmatmul.f32.gmra.mxu0 %v234
    %v742 = vpop.f32.mrf.mxu0
    %v743 = vadd.f32 0.0, %v742
    %744 = vmatmul.f32.gmra.mxu0 %v236
    %v745 = vpop.f32.mrf.mxu0
    %v746 = vadd.f32 0.0, %v745
    %747 = vmatmul.f32.gmra.mxu0 %v238
    %v748 = vpop.f32.mrf.mxu0
    %v749 = vadd.f32 0.0, %v748
    %750 = vmatmul.f32.gmra.mxu0 %v240
    %v751 = vpop.f32.mrf.mxu0
    %v752 = vadd.f32 0.0, %v751
    %753 = vmatmul.f32.gmra.mxu0 %v242
    %v754 = vpop.f32.mrf.mxu0
    %v755 = vadd.f32 0.0, %v754
    %756 = vmatmul.f32.gmra.mxu0 %v244
    %v757 = vpop.f32.mrf.mxu0
    %v758 = vadd.f32 0.0, %v757
    %759 = vmatmul.f32.gmra.mxu0 %v246
    %v760 = vpop.f32.mrf.mxu0
    %v761 = vadd.f32 0.0, %v760
    %762 = vmatmul.f32.gmra.mxu0 %v248
    %v763 = vpop.f32.mrf.mxu0
    %v764 = vadd.f32 0.0, %v763
    %765 = vmatmul.f32.gmra.mxu0 %v250
    %v766 = vpop.f32.mrf.mxu0
    %v767 = vadd.f32 0.0, %v766
    %768 = vmatmul.f32.gmra.mxu0 %v252
    %v769 = vpop.f32.mrf.mxu0
    %v770 = vadd.f32 0.0, %v769
    %771 = vmatmul.f32.gmra.mxu0 %v254
    %v772 = vpop.f32.mrf.mxu0
    %v773 = vadd.f32 0.0, %v772
    %774 = vmatmul.f32.gmra.mxu0 %v256
    %v775 = vpop.f32.mrf.mxu0
    %v776 = vadd.f32 0.0, %v775
    %777 = vmatmul.f32.gmra.mxu0 %v258
    %v778 = vpop.f32.mrf.mxu0
    %v779 = vadd.f32 0.0, %v778
    %780 = vmatmul.f32.gmra.mxu0 %v260
    %v781 = vpop.f32.mrf.mxu0
    %v782 = vadd.f32 0.0, %v781
    %783 = vmatmul.f32.gmra.mxu0 %v262
    %v784 = vpop.f32.mrf.mxu0
    %v785 = vadd.f32 0.0, %v784
    %786 = vmatmul.f32.gmra.mxu0 %v264
    %v787 = vpop.f32.mrf.mxu0
    %v788 = vadd.f32 0.0, %v787
    %789 = vdwg.mxu0
    %790 = vmatpush.msra.mxu0 0.0
    %791 = vmatpush.msra.mxu0 0.0
    %792 = vmatpush.msra.mxu0 0.0
    %793 = vmatpush.msra.mxu0 0.0
    %794 = vmatpush.msra.mxu0 0.0
    %795 = vmatpush.msra.mxu0 0.0
    %796 = vmatpush.msra.mxu0 0.0
    %797 = vmatpush.msra.mxu0 0.0
    %798 = vmatpush.msra.mxu0 0.0
    %799 = vmatpush.msra.mxu0 0.0
    %800 = vmatpush.msra.mxu0 0.0
    %801 = vmatpush.msra.mxu0 0.0
    %802 = vmatpush.msra.mxu0 %v283
    %803 = vmatpush.msra.mxu0 %v115
    %804 = vmatpush.msra.mxu0 %v109
    %805 = vmatpush.msra.mxu0 %v103
    %806 = vmatmul.f32.gmra.mxu0 %v210
    %v807 = vpop.f32.mrf.mxu0
    %v808 = vadd.f32 0.0, %v807
    %809 = vmatmul.f32.gmra.mxu0 %v212
    %v810 = vpop.f32.mrf.mxu0
    %v811 = vadd.f32 0.0, %v810
    %812 = vmatmul.f32.gmra.mxu0 %v214
    %v813 = vpop.f32.mrf.mxu0
    %v814 = vadd.f32 0.0, %v813
    %815 = vmatmul.f32.gmra.mxu0 %v216
    %v816 = vpop.f32.mrf.mxu0
    %v817 = vadd.f32 0.0, %v816
    %818 = vmatmul.f32.gmra.mxu0 %v218
    %v819 = vpop.f32.mrf.mxu0
    %v820 = vadd.f32 0.0, %v819
    %821 = vmatmul.f32.gmra.mxu0 %v220
    %v822 = vpop.f32.mrf.mxu0
    %v823 = vadd.f32 0.0, %v822
    %824 = vmatmul.f32.gmra.mxu0 %v222
    %v825 = vpop.f32.mrf.mxu0
    %v826 = vadd.f32 0.0, %v825
    %827 = vmatmul.f32.gmra.mxu0 %v224
    %v828 = vpop.f32.mrf.mxu0
    %v829 = vadd.f32 0.0, %v828
    %830 = vmatmul.f32.gmra.mxu0 %v226
    %v831 = vpop.f32.mrf.mxu0
    %v832 = vadd.f32 0.0, %v831
    %833 = vmatmul.f32.gmra.mxu0 %v228
    %v834 = vpop.f32.mrf.mxu0
    %v835 = vadd.f32 0.0, %v834
    %836 = vmatmul.f32.gmra.mxu0 %v230
    %v837 = vpop.f32.mrf.mxu0
    %v838 = vadd.f32 0.0, %v837
    %839 = vmatmul.f32.gmra.mxu0 %v232
    %v840 = vpop.f32.mrf.mxu0
    %v841 = vadd.f32 0.0, %v840
    %842 = vmatmul.f32.gmra.mxu0 %v234
    %v843 = vpop.f32.mrf.mxu0
    %v844 = vadd.f32 0.0, %v843
    %845 = vmatmul.f32.gmra.mxu0 %v236
    %v846 = vpop.f32.mrf.mxu0
    %v847 = vadd.f32 0.0, %v846
    %848 = vmatmul.f32.gmra.mxu0 %v238
    %v849 = vpop.f32.mrf.mxu0
    %v850 = vadd.f32 0.0, %v849
    %851 = vmatmul.f32.gmra.mxu0 %v240
    %v852 = vpop.f32.mrf.mxu0
    %v853 = vadd.f32 0.0, %v852
    %854 = vmatmul.f32.gmra.mxu0 %v242
    %v855 = vpop.f32.mrf.mxu0
    %v856 = vadd.f32 0.0, %v855
    %857 = vmatmul.f32.gmra.mxu0 %v244
    %v858 = vpop.f32.mrf.mxu0
    %v859 = vadd.f32 0.0, %v858
    %860 = vmatmul.f32.gmra.mxu0 %v246
    %v861 = vpop.f32.mrf.mxu0
    %v862 = vadd.f32 0.0, %v861
    %863 = vmatmul.f32.gmra.mxu0 %v248
    %v864 = vpop.f32.mrf.mxu0
    %v865 = vadd.f32 0.0, %v864
    %866 = vmatmul.f32.gmra.mxu0 %v250
    %v867 = vpop.f32.mrf.mxu0
    %v868 = vadd.f32 0.0, %v867
    %869 = vmatmul.f32.gmra.mxu0 %v252
    %v870 = vpop.f32.mrf.mxu0
    %v871 = vadd.f32 0.0, %v870
    %872 = vmatmul.f32.gmra.mxu0 %v254
    %v873 = vpop.f32.mrf.mxu0
    %v874 = vadd.f32 0.0, %v873
    %875 = vmatmul.f32.gmra.mxu0 %v256
    %v876 = vpop.f32.mrf.mxu0
    %v877 = vadd.f32 0.0, %v876
    %878 = vmatmul.f32.gmra.mxu0 %v258
    %v879 = vpop.f32.mrf.mxu0
    %v880 = vadd.f32 0.0, %v879
    %881 = vmatmul.f32.gmra.mxu0 %v260
    %v882 = vpop.f32.mrf.mxu0
    %v883 = vadd.f32 0.0, %v882
    %884 = vmatmul.f32.gmra.mxu0 %v262
    %v885 = vpop.f32.mrf.mxu0
    %v886 = vadd.f32 0.0, %v885
    %887 = vmatmul.f32.gmra.mxu0 %v264
    %v888 = vpop.f32.mrf.mxu0
    %v889 = vadd.f32 0.0, %v888
    %890 = vdwg.mxu0
    %v891 = vsel %vm209, %v44, 0
    %v893 = vsel %vm209, %v45, 0
    %v895 = vsel %vm209, %v46, 0
    %v897 = vsel %vm209, %v47, 0
    %v899 = vsel %vm209, %v48, 0
    %v901 = vsel %vm209, %v49, 0
    %v903 = vsel %vm209, %v50, 0
    %v905 = vsel %vm209, %v51, 0
    %v907 = vsel %vm209, %v52, 0
    %v909 = vsel %vm209, %v53, 0
    %v911 = vsel %vm209, %v54, 0
    %v913 = vsel %vm209, %v55, 0
    %v915 = vsel %vm209, %v56, 0
    %v917 = vsel %vm209, %v57, 0
    %v919 = vsel %vm209, %v58, 0
    %v921 = vsel %vm209, %v59, 0
    %v923 = vsel %vm209, %v60, 0
    %v925 = vsel %vm209, %v61, 0
    %v927 = vsel %vm209, %v62, 0
    %v929 = vsel %vm209, %v63, 0
    %v931 = vsel %vm209, %v64, 0
    %v933 = vsel %vm209, %v65, 0
    %v935 = vsel %vm209, %v66, 0
    %v937 = vsel %vm209, %v67, 0
    %v939 = vsel %vm209, %v68, 0
    %v941 = vsel %vm209, %v69, 0
    %v943 = vsel %vm209, %v70, 0
    %v945 = vsel %vm209, %v71, 0
    %v948 = vsel %vm266, %v91, 0
    %v951 = vsel %vm266, %v92, 0
    %v954 = vsel %vm266, %v93, 0
    %v957 = vsel %vm266, %v94, 0
    %v960 = vsel %vm266, %v95, 0
    %v963 = vsel %vm266, %v96, 0
    %965 = vmatpush.msra.mxu0 0.0
    %966 = vmatpush.msra.mxu0 0.0
    %967 = vmatpush.msra.mxu0 0.0
    %968 = vmatpush.msra.mxu0 0.0
    %969 = vmatpush.msra.mxu0 0.0
    %970 = vmatpush.msra.mxu0 0.0
    %971 = vmatpush.msra.mxu0 0.0
    %972 = vmatpush.msra.mxu0 0.0
    %973 = vmatpush.msra.mxu0 0.0
    %974 = vmatpush.msra.mxu0 0.0
    %975 = vmatpush.msra.mxu0 0.0
    %976 = vmatpush.msra.mxu0 0.0
    %977 = vmatpush.msra.mxu0 %v948
    %978 = vmatpush.msra.mxu0 %v85
    %979 = vmatpush.msra.mxu0 %v79
    %980 = vmatpush.msra.mxu0 %v73
    %981 = vmatmul.f32.gmra.mxu0 %v891
    %v982 = vpop.f32.mrf.mxu0
    %v983 = vadd.f32 %v303, %v982
    %984 = vmatmul.f32.gmra.mxu0 %v893
    %v985 = vpop.f32.mrf.mxu0
    %v986 = vadd.f32 %v306, %v985
    %987 = vmatmul.f32.gmra.mxu0 %v895
    %v988 = vpop.f32.mrf.mxu0
    %v989 = vadd.f32 %v309, %v988
    %990 = vmatmul.f32.gmra.mxu0 %v897
    %v991 = vpop.f32.mrf.mxu0
    %v992 = vadd.f32 %v312, %v991
    %993 = vmatmul.f32.gmra.mxu0 %v899
    %v994 = vpop.f32.mrf.mxu0
    %v995 = vadd.f32 %v315, %v994
    %996 = vmatmul.f32.gmra.mxu0 %v901
    %v997 = vpop.f32.mrf.mxu0
    %v998 = vadd.f32 %v318, %v997
    %999 = vmatmul.f32.gmra.mxu0 %v903
    %v1000 = vpop.f32.mrf.mxu0
    %v1001 = vadd.f32 %v321, %v1000
    %1002 = vmatmul.f32.gmra.mxu0 %v905
    %v1003 = vpop.f32.mrf.mxu0
    %v1004 = vadd.f32 %v324, %v1003
    %1005 = vmatmul.f32.gmra.mxu0 %v907
    %v1006 = vpop.f32.mrf.mxu0
    %v1007 = vadd.f32 %v327, %v1006
    %1008 = vmatmul.f32.gmra.mxu0 %v909
    %v1009 = vpop.f32.mrf.mxu0
    %v1010 = vadd.f32 %v330, %v1009
    %1011 = vmatmul.f32.gmra.mxu0 %v911
    %v1012 = vpop.f32.mrf.mxu0
    %v1013 = vadd.f32 %v333, %v1012
    %1014 = vmatmul.f32.gmra.mxu0 %v913
    %v1015 = vpop.f32.mrf.mxu0
    %v1016 = vadd.f32 %v336, %v1015
    %1017 = vmatmul.f32.gmra.mxu0 %v915
    %v1018 = vpop.f32.mrf.mxu0
    %v1019 = vadd.f32 %v339, %v1018
    %1020 = vmatmul.f32.gmra.mxu0 %v917
    %v1021 = vpop.f32.mrf.mxu0
    %v1022 = vadd.f32 %v342, %v1021
    %1023 = vmatmul.f32.gmra.mxu0 %v919
    %v1024 = vpop.f32.mrf.mxu0
    %v1025 = vadd.f32 %v345, %v1024
    %1026 = vmatmul.f32.gmra.mxu0 %v921
    %v1027 = vpop.f32.mrf.mxu0
    %v1028 = vadd.f32 %v348, %v1027
    %1029 = vmatmul.f32.gmra.mxu0 %v923
    %v1030 = vpop.f32.mrf.mxu0
    %v1031 = vadd.f32 %v351, %v1030
    %1032 = vmatmul.f32.gmra.mxu0 %v925
    %v1033 = vpop.f32.mrf.mxu0
    %v1034 = vadd.f32 %v354, %v1033
    %1035 = vmatmul.f32.gmra.mxu0 %v927
    %v1036 = vpop.f32.mrf.mxu0
    %v1037 = vadd.f32 %v357, %v1036
    %1038 = vmatmul.f32.gmra.mxu0 %v929
    %v1039 = vpop.f32.mrf.mxu0
    %v1040 = vadd.f32 %v360, %v1039
    %1041 = vmatmul.f32.gmra.mxu0 %v931
    %v1042 = vpop.f32.mrf.mxu0
    %v1043 = vadd.f32 %v363, %v1042
    %1044 = vmatmul.f32.gmra.mxu0 %v933
    %v1045 = vpop.f32.mrf.mxu0
    %v1046 = vadd.f32 %v366, %v1045
    %1047 = vmatmul.f32.gmra.mxu0 %v935
    %v1048 = vpop.f32.mrf.mxu0
    %v1049 = vadd.f32 %v369, %v1048
    %1050 = vmatmul.f32.gmra.mxu0 %v937
    %v1051 = vpop.f32.mrf.mxu0
    %v1052 = vadd.f32 %v372, %v1051
    %1053 = vmatmul.f32.gmra.mxu0 %v939
    %v1054 = vpop.f32.mrf.mxu0
    %v1055 = vadd.f32 %v375, %v1054
    %1056 = vmatmul.f32.gmra.mxu0 %v941
    %v1057 = vpop.f32.mrf.mxu0
    %v1058 = vadd.f32 %v378, %v1057
    %1059 = vmatmul.f32.gmra.mxu0 %v943
    %v1060 = vpop.f32.mrf.mxu0
    %v1061 = vadd.f32 %v381, %v1060
    %1062 = vmatmul.f32.gmra.mxu0 %v945
    %v1063 = vpop.f32.mrf.mxu0
    %v1064 = vadd.f32 %v384, %v1063
    %1065 = vdwg.mxu0
    %1066 = vmatpush.msra.mxu0 0.0
    %1067 = vmatpush.msra.mxu0 0.0
    %1068 = vmatpush.msra.mxu0 0.0
    %1069 = vmatpush.msra.mxu0 0.0
    %1070 = vmatpush.msra.mxu0 0.0
    %1071 = vmatpush.msra.mxu0 0.0
    %1072 = vmatpush.msra.mxu0 0.0
    %1073 = vmatpush.msra.mxu0 0.0
    %1074 = vmatpush.msra.mxu0 0.0
    %1075 = vmatpush.msra.mxu0 0.0
    %1076 = vmatpush.msra.mxu0 0.0
    %1077 = vmatpush.msra.mxu0 0.0
    %1078 = vmatpush.msra.mxu0 %v951
    %1079 = vmatpush.msra.mxu0 %v86
    %1080 = vmatpush.msra.mxu0 %v80
    %1081 = vmatpush.msra.mxu0 %v74
    %1082 = vmatmul.f32.gmra.mxu0 %v891
    %v1083 = vpop.f32.mrf.mxu0
    %v1084 = vadd.f32 %v404, %v1083
    %1085 = vmatmul.f32.gmra.mxu0 %v893
    %v1086 = vpop.f32.mrf.mxu0
    %v1087 = vadd.f32 %v407, %v1086
    %1088 = vmatmul.f32.gmra.mxu0 %v895
    %v1089 = vpop.f32.mrf.mxu0
    %v1090 = vadd.f32 %v410, %v1089
    %1091 = vmatmul.f32.gmra.mxu0 %v897
    %v1092 = vpop.f32.mrf.mxu0
    %v1093 = vadd.f32 %v413, %v1092
    %1094 = vmatmul.f32.gmra.mxu0 %v899
    %v1095 = vpop.f32.mrf.mxu0
    %v1096 = vadd.f32 %v416, %v1095
    %1097 = vmatmul.f32.gmra.mxu0 %v901
    %v1098 = vpop.f32.mrf.mxu0
    %v1099 = vadd.f32 %v419, %v1098
    %1100 = vmatmul.f32.gmra.mxu0 %v903
    %v1101 = vpop.f32.mrf.mxu0
    %v1102 = vadd.f32 %v422, %v1101
    %1103 = vmatmul.f32.gmra.mxu0 %v905
    %v1104 = vpop.f32.mrf.mxu0
    %v1105 = vadd.f32 %v425, %v1104
    %1106 = vmatmul.f32.gmra.mxu0 %v907
    %v1107 = vpop.f32.mrf.mxu0
    %v1108 = vadd.f32 %v428, %v1107
    %1109 = vmatmul.f32.gmra.mxu0 %v909
    %v1110 = vpop.f32.mrf.mxu0
    %v1111 = vadd.f32 %v431, %v1110
    %1112 = vmatmul.f32.gmra.mxu0 %v911
    %v1113 = vpop.f32.mrf.mxu0
    %v1114 = vadd.f32 %v434, %v1113
    %1115 = vmatmul.f32.gmra.mxu0 %v913
    %v1116 = vpop.f32.mrf.mxu0
    %v1117 = vadd.f32 %v437, %v1116
    %1118 = vmatmul.f32.gmra.mxu0 %v915
    %v1119 = vpop.f32.mrf.mxu0
    %v1120 = vadd.f32 %v440, %v1119
    %1121 = vmatmul.f32.gmra.mxu0 %v917
    %v1122 = vpop.f32.mrf.mxu0
    %v1123 = vadd.f32 %v443, %v1122
    %1124 = vmatmul.f32.gmra.mxu0 %v919
    %v1125 = vpop.f32.mrf.mxu0
    %v1126 = vadd.f32 %v446, %v1125
    %1127 = vmatmul.f32.gmra.mxu0 %v921
    %v1128 = vpop.f32.mrf.mxu0
    %v1129 = vadd.f32 %v449, %v1128
    %1130 = vmatmul.f32.gmra.mxu0 %v923
    %v1131 = vpop.f32.mrf.mxu0
    %v1132 = vadd.f32 %v452, %v1131
    %1133 = vmatmul.f32.gmra.mxu0 %v925
    %v1134 = vpop.f32.mrf.mxu0
    %v1135 = vadd.f32 %v455, %v1134
    %1136 = vmatmul.f32.gmra.mxu0 %v927
    %v1137 = vpop.f32.mrf.mxu0
    %v1138 = vadd.f32 %v458, %v1137
    %1139 = vmatmul.f32.gmra.mxu0 %v929
    %v1140 = vpop.f32.mrf.mxu0
    %v1141 = vadd.f32 %v461, %v1140
    %1142 = vmatmul.f32.gmra.mxu0 %v931
    %v1143 = vpop.f32.mrf.mxu0
    %v1144 = vadd.f32 %v464, %v1143
    %1145 = vmatmul.f32.gmra.mxu0 %v933
    %v1146 = vpop.f32.mrf.mxu0
    %v1147 = vadd.f32 %v467, %v1146
    %1148 = vmatmul.f32.gmra.mxu0 %v935
    %v1149 = vpop.f32.mrf.mxu0
    %v1150 = vadd.f32 %v470, %v1149
    %1151 = vmatmul.f32.gmra.mxu0 %v937
    %v1152 = vpop.f32.mrf.mxu0
    %v1153 = vadd.f32 %v473, %v1152
    %1154 = vmatmul.f32.gmra.mxu0 %v939
    %v1155 = vpop.f32.mrf.mxu0
    %v1156 = vadd.f32 %v476, %v1155
    %1157 = vmatmul.f32.gmra.mxu0 %v941
    %v1158 = vpop.f32.mrf.mxu0
    %v1159 = vadd.f32 %v479, %v1158
    %1160 = vmatmul.f32.gmra.mxu0 %v943
    %v1161 = vpop.f32.mrf.mxu0
    %v1162 = vadd.f32 %v482, %v1161
    %1163 = vmatmul.f32.gmra.mxu0 %v945
    %v1164 = vpop.f32.mrf.mxu0
    %v1165 = vadd.f32 %v485, %v1164
    %1166 = vdwg.mxu0
    %1167 = vmatpush.msra.mxu0 0.0
    %1168 = vmatpush.msra.mxu0 0.0
    %1169 = vmatpush.msra.mxu0 0.0
    %1170 = vmatpush.msra.mxu0 0.0
    %1171 = vmatpush.msra.mxu0 0.0
    %1172 = vmatpush.msra.mxu0 0.0
    %1173 = vmatpush.msra.mxu0 0.0
    %1174 = vmatpush.msra.mxu0 0.0
    %1175 = vmatpush.msra.mxu0 0.0
    %1176 = vmatpush.msra.mxu0 0.0
    %1177 = vmatpush.msra.mxu0 0.0
    %1178 = vmatpush.msra.mxu0 0.0
    %1179 = vmatpush.msra.mxu0 %v954
    %1180 = vmatpush.msra.mxu0 %v87
    %1181 = vmatpush.msra.mxu0 %v81
    %1182 = vmatpush.msra.mxu0 %v75
    %1183 = vmatmul.f32.gmra.mxu0 %v891
    %v1184 = vpop.f32.mrf.mxu0
    %v1185 = vadd.f32 %v505, %v1184
    %1186 = vmatmul.f32.gmra.mxu0 %v893
    %v1187 = vpop.f32.mrf.mxu0
    %v1188 = vadd.f32 %v508, %v1187
    %1189 = vmatmul.f32.gmra.mxu0 %v895
    %v1190 = vpop.f32.mrf.mxu0
    %v1191 = vadd.f32 %v511, %v1190
    %1192 = vmatmul.f32.gmra.mxu0 %v897
    %v1193 = vpop.f32.mrf.mxu0
    %v1194 = vadd.f32 %v514, %v1193
    %1195 = vmatmul.f32.gmra.mxu0 %v899
    %v1196 = vpop.f32.mrf.mxu0
    %v1197 = vadd.f32 %v517, %v1196
    %1198 = vmatmul.f32.gmra.mxu0 %v901
    %v1199 = vpop.f32.mrf.mxu0
    %v1200 = vadd.f32 %v520, %v1199
    %1201 = vmatmul.f32.gmra.mxu0 %v903
    %v1202 = vpop.f32.mrf.mxu0
    %v1203 = vadd.f32 %v523, %v1202
    %1204 = vmatmul.f32.gmra.mxu0 %v905
    %v1205 = vpop.f32.mrf.mxu0
    %v1206 = vadd.f32 %v526, %v1205
    %1207 = vmatmul.f32.gmra.mxu0 %v907
    %v1208 = vpop.f32.mrf.mxu0
    %v1209 = vadd.f32 %v529, %v1208
    %1210 = vmatmul.f32.gmra.mxu0 %v909
    %v1211 = vpop.f32.mrf.mxu0
    %v1212 = vadd.f32 %v532, %v1211
    %1213 = vmatmul.f32.gmra.mxu0 %v911
    %v1214 = vpop.f32.mrf.mxu0
    %v1215 = vadd.f32 %v535, %v1214
    %1216 = vmatmul.f32.gmra.mxu0 %v913
    %v1217 = vpop.f32.mrf.mxu0
    %v1218 = vadd.f32 %v538, %v1217
    %1219 = vmatmul.f32.gmra.mxu0 %v915
    %v1220 = vpop.f32.mrf.mxu0
    %v1221 = vadd.f32 %v541, %v1220
    %1222 = vmatmul.f32.gmra.mxu0 %v917
    %v1223 = vpop.f32.mrf.mxu0
    %v1224 = vadd.f32 %v544, %v1223
    %1225 = vmatmul.f32.gmra.mxu0 %v919
    %v1226 = vpop.f32.mrf.mxu0
    %v1227 = vadd.f32 %v547, %v1226
    %1228 = vmatmul.f32.gmra.mxu0 %v921
    %v1229 = vpop.f32.mrf.mxu0
    %v1230 = vadd.f32 %v550, %v1229
    %1231 = vmatmul.f32.gmra.mxu0 %v923
    %v1232 = vpop.f32.mrf.mxu0
    %v1233 = vadd.f32 %v553, %v1232
    %1234 = vmatmul.f32.gmra.mxu0 %v925
    %v1235 = vpop.f32.mrf.mxu0
    %v1236 = vadd.f32 %v556, %v1235
    %1237 = vmatmul.f32.gmra.mxu0 %v927
    %v1238 = vpop.f32.mrf.mxu0
    %v1239 = vadd.f32 %v559, %v1238
    %1240 = vmatmul.f32.gmra.mxu0 %v929
    %v1241 = vpop.f32.mrf.mxu0
    %v1242 = vadd.f32 %v562, %v1241
    %1243 = vmatmul.f32.gmra.mxu0 %v931
    %v1244 = vpop.f32.mrf.mxu0
    %v1245 = vadd.f32 %v565, %v1244
    %1246 = vmatmul.f32.gmra.mxu0 %v933
    %v1247 = vpop.f32.mrf.mxu0
    %v1248 = vadd.f32 %v568, %v1247
    %1249 = vmatmul.f32.gmra.mxu0 %v935
    %v1250 = vpop.f32.mrf.mxu0
    %v1251 = vadd.f32 %v571, %v1250
    %1252 = vmatmul.f32.gmra.mxu0 %v937
    %v1253 = vpop.f32.mrf.mxu0
    %v1254 = vadd.f32 %v574, %v1253
    %1255 = vmatmul.f32.gmra.mxu0 %v939
    %v1256 = vpop.f32.mrf.mxu0
    %v1257 = vadd.f32 %v577, %v1256
    %1258 = vmatmul.f32.gmra.mxu0 %v941
    %v1259 = vpop.f32.mrf.mxu0
    %v1260 = vadd.f32 %v580, %v1259
    %1261 = vmatmul.f32.gmra.mxu0 %v943
    %v1262 = vpop.f32.mrf.mxu0
    %v1263 = vadd.f32 %v583, %v1262
    %1264 = vmatmul.f32.gmra.mxu0 %v945
    %v1265 = vpop.f32.mrf.mxu0
    %v1266 = vadd.f32 %v586, %v1265
    %1267 = vdwg.mxu0
    %1268 = vmatpush.msra.mxu0 0.0
    %1269 = vmatpush.msra.mxu0 0.0
    %1270 = vmatpush.msra.mxu0 0.0
    %1271 = vmatpush.msra.mxu0 0.0
    %1272 = vmatpush.msra.mxu0 0.0
    %1273 = vmatpush.msra.mxu0 0.0
    %1274 = vmatpush.msra.mxu0 0.0
    %1275 = vmatpush.msra.mxu0 0.0
    %1276 = vmatpush.msra.mxu0 0.0
    %1277 = vmatpush.msra.mxu0 0.0
    %1278 = vmatpush.msra.mxu0 0.0
    %1279 = vmatpush.msra.mxu0 0.0
    %1280 = vmatpush.msra.mxu0 %v957
    %1281 = vmatpush.msra.mxu0 %v88
    %1282 = vmatpush.msra.mxu0 %v82
    %1283 = vmatpush.msra.mxu0 %v76
    %1284 = vmatmul.f32.gmra.mxu0 %v891
    %v1285 = vpop.f32.mrf.mxu0
    %v1286 = vadd.f32 %v606, %v1285
    %1287 = vmatmul.f32.gmra.mxu0 %v893
    %v1288 = vpop.f32.mrf.mxu0
    %v1289 = vadd.f32 %v609, %v1288
    %1290 = vmatmul.f32.gmra.mxu0 %v895
    %v1291 = vpop.f32.mrf.mxu0
    %v1292 = vadd.f32 %v612, %v1291
    %1293 = vmatmul.f32.gmra.mxu0 %v897
    %v1294 = vpop.f32.mrf.mxu0
    %v1295 = vadd.f32 %v615, %v1294
    %1296 = vmatmul.f32.gmra.mxu0 %v899
    %v1297 = vpop.f32.mrf.mxu0
    %v1298 = vadd.f32 %v618, %v1297
    %1299 = vmatmul.f32.gmra.mxu0 %v901
    %v1300 = vpop.f32.mrf.mxu0
    %v1301 = vadd.f32 %v621, %v1300
    %1302 = vmatmul.f32.gmra.mxu0 %v903
    %v1303 = vpop.f32.mrf.mxu0
    %v1304 = vadd.f32 %v624, %v1303
    %1305 = vmatmul.f32.gmra.mxu0 %v905
    %v1306 = vpop.f32.mrf.mxu0
    %v1307 = vadd.f32 %v627, %v1306
    %1308 = vmatmul.f32.gmra.mxu0 %v907
    %v1309 = vpop.f32.mrf.mxu0
    %v1310 = vadd.f32 %v630, %v1309
    %1311 = vmatmul.f32.gmra.mxu0 %v909
    %v1312 = vpop.f32.mrf.mxu0
    %v1313 = vadd.f32 %v633, %v1312
    %1314 = vmatmul.f32.gmra.mxu0 %v911
    %v1315 = vpop.f32.mrf.mxu0
    %v1316 = vadd.f32 %v636, %v1315
    %1317 = vmatmul.f32.gmra.mxu0 %v913
    %v1318 = vpop.f32.mrf.mxu0
    %v1319 = vadd.f32 %v639, %v1318
    %1320 = vmatmul.f32.gmra.mxu0 %v915
    %v1321 = vpop.f32.mrf.mxu0
    %v1322 = vadd.f32 %v642, %v1321
    %1323 = vmatmul.f32.gmra.mxu0 %v917
    %v1324 = vpop.f32.mrf.mxu0
    %v1325 = vadd.f32 %v645, %v1324
    %1326 = vmatmul.f32.gmra.mxu0 %v919
    %v1327 = vpop.f32.mrf.mxu0
    %v1328 = vadd.f32 %v648, %v1327
    %1329 = vmatmul.f32.gmra.mxu0 %v921
    %v1330 = vpop.f32.mrf.mxu0
    %v1331 = vadd.f32 %v651, %v1330
    %1332 = vmatmul.f32.gmra.mxu0 %v923
    %v1333 = vpop.f32.mrf.mxu0
    %v1334 = vadd.f32 %v654, %v1333
    %1335 = vmatmul.f32.gmra.mxu0 %v925
    %v1336 = vpop.f32.mrf.mxu0
    %v1337 = vadd.f32 %v657, %v1336
    %1338 = vmatmul.f32.gmra.mxu0 %v927
    %v1339 = vpop.f32.mrf.mxu0
    %v1340 = vadd.f32 %v660, %v1339
    %1341 = vmatmul.f32.gmra.mxu0 %v929
    %v1342 = vpop.f32.mrf.mxu0
    %v1343 = vadd.f32 %v663, %v1342
    %1344 = vmatmul.f32.gmra.mxu0 %v931
    %v1345 = vpop.f32.mrf.mxu0
    %v1346 = vadd.f32 %v666, %v1345
    %1347 = vmatmul.f32.gmra.mxu0 %v933
    %v1348 = vpop.f32.mrf.mxu0
    %v1349 = vadd.f32 %v669, %v1348
    %1350 = vmatmul.f32.gmra.mxu0 %v935
    %v1351 = vpop.f32.mrf.mxu0
    %v1352 = vadd.f32 %v672, %v1351
    %1353 = vmatmul.f32.gmra.mxu0 %v937
    %v1354 = vpop.f32.mrf.mxu0
    %v1355 = vadd.f32 %v675, %v1354
    %1356 = vmatmul.f32.gmra.mxu0 %v939
    %v1357 = vpop.f32.mrf.mxu0
    %v1358 = vadd.f32 %v678, %v1357
    %1359 = vmatmul.f32.gmra.mxu0 %v941
    %v1360 = vpop.f32.mrf.mxu0
    %v1361 = vadd.f32 %v681, %v1360
    %1362 = vmatmul.f32.gmra.mxu0 %v943
    %v1363 = vpop.f32.mrf.mxu0
    %v1364 = vadd.f32 %v684, %v1363
    %1365 = vmatmul.f32.gmra.mxu0 %v945
    %v1366 = vpop.f32.mrf.mxu0
    %v1367 = vadd.f32 %v687, %v1366
    %1368 = vdwg.mxu0
    %1369 = vmatpush.msra.mxu0 0.0
    %1370 = vmatpush.msra.mxu0 0.0
    %1371 = vmatpush.msra.mxu0 0.0
    %1372 = vmatpush.msra.mxu0 0.0
    %1373 = vmatpush.msra.mxu0 0.0
    %1374 = vmatpush.msra.mxu0 0.0
    %1375 = vmatpush.msra.mxu0 0.0
    %1376 = vmatpush.msra.mxu0 0.0
    %1377 = vmatpush.msra.mxu0 0.0
    %1378 = vmatpush.msra.mxu0 0.0
    %1379 = vmatpush.msra.mxu0 0.0
    %1380 = vmatpush.msra.mxu0 0.0
    %1381 = vmatpush.msra.mxu0 %v960
    %1382 = vmatpush.msra.mxu0 %v89
    %1383 = vmatpush.msra.mxu0 %v83
    %1384 = vmatpush.msra.mxu0 %v77
    %1385 = vmatmul.f32.gmra.mxu0 %v891
    %v1386 = vpop.f32.mrf.mxu0
    %v1387 = vadd.f32 %v707, %v1386
    %1388 = vmatmul.f32.gmra.mxu0 %v893
    %v1389 = vpop.f32.mrf.mxu0
    %v1390 = vadd.f32 %v710, %v1389
    %1391 = vmatmul.f32.gmra.mxu0 %v895
    %v1392 = vpop.f32.mrf.mxu0
    %v1393 = vadd.f32 %v713, %v1392
    %1394 = vmatmul.f32.gmra.mxu0 %v897
    %v1395 = vpop.f32.mrf.mxu0
    %v1396 = vadd.f32 %v716, %v1395
    %1397 = vmatmul.f32.gmra.mxu0 %v899
    %v1398 = vpop.f32.mrf.mxu0
    %v1399 = vadd.f32 %v719, %v1398
    %1400 = vmatmul.f32.gmra.mxu0 %v901
    %v1401 = vpop.f32.mrf.mxu0
    %v1402 = vadd.f32 %v722, %v1401
    %1403 = vmatmul.f32.gmra.mxu0 %v903
    %v1404 = vpop.f32.mrf.mxu0
    %v1405 = vadd.f32 %v725, %v1404
    %1406 = vmatmul.f32.gmra.mxu0 %v905
    %v1407 = vpop.f32.mrf.mxu0
    %v1408 = vadd.f32 %v728, %v1407
    %1409 = vmatmul.f32.gmra.mxu0 %v907
    %v1410 = vpop.f32.mrf.mxu0
    %v1411 = vadd.f32 %v731, %v1410
    %1412 = vmatmul.f32.gmra.mxu0 %v909
    %v1413 = vpop.f32.mrf.mxu0
    %v1414 = vadd.f32 %v734, %v1413
    %1415 = vmatmul.f32.gmra.mxu0 %v911
    %v1416 = vpop.f32.mrf.mxu0
    %v1417 = vadd.f32 %v737, %v1416
    %1418 = vmatmul.f32.gmra.mxu0 %v913
    %v1419 = vpop.f32.mrf.mxu0
    %v1420 = vadd.f32 %v740, %v1419
    %1421 = vmatmul.f32.gmra.mxu0 %v915
    %v1422 = vpop.f32.mrf.mxu0
    %v1423 = vadd.f32 %v743, %v1422
    %1424 = vmatmul.f32.gmra.mxu0 %v917
    %v1425 = vpop.f32.mrf.mxu0
    %v1426 = vadd.f32 %v746, %v1425
    %1427 = vmatmul.f32.gmra.mxu0 %v919
    %v1428 = vpop.f32.mrf.mxu0
    %v1429 = vadd.f32 %v749, %v1428
    %1430 = vmatmul.f32.gmra.mxu0 %v921
    %v1431 = vpop.f32.mrf.mxu0
    %v1432 = vadd.f32 %v752, %v1431
    %1433 = vmatmul.f32.gmra.mxu0 %v923
    %v1434 = vpop.f32.mrf.mxu0
    %v1435 = vadd.f32 %v755, %v1434
    %1436 = vmatmul.f32.gmra.mxu0 %v925
    %v1437 = vpop.f32.mrf.mxu0
    %v1438 = vadd.f32 %v758, %v1437
    %1439 = vmatmul.f32.gmra.mxu0 %v927
    %v1440 = vpop.f32.mrf.mxu0
    %v1441 = vadd.f32 %v761, %v1440
    %1442 = vmatmul.f32.gmra.mxu0 %v929
    %v1443 = vpop.f32.mrf.mxu0
    %v1444 = vadd.f32 %v764, %v1443
    %1445 = vmatmul.f32.gmra.mxu0 %v931
    %v1446 = vpop.f32.mrf.mxu0
    %v1447 = vadd.f32 %v767, %v1446
    %1448 = vmatmul.f32.gmra.mxu0 %v933
    %v1449 = vpop.f32.mrf.mxu0
    %v1450 = vadd.f32 %v770, %v1449
    %1451 = vmatmul.f32.gmra.mxu0 %v935
    %v1452 = vpop.f32.mrf.mxu0
    %v1453 = vadd.f32 %v773, %v1452
    %1454 = vmatmul.f32.gmra.mxu0 %v937
    %v1455 = vpop.f32.mrf.mxu0
    %v1456 = vadd.f32 %v776, %v1455
    %1457 = vmatmul.f32.gmra.mxu0 %v939
    %v1458 = vpop.f32.mrf.mxu0
    %v1459 = vadd.f32 %v779, %v1458
    %1460 = vmatmul.f32.gmra.mxu0 %v941
    %v1461 = vpop.f32.mrf.mxu0
    %v1462 = vadd.f32 %v782, %v1461
    %1463 = vmatmul.f32.gmra.mxu0 %v943
    %v1464 = vpop.f32.mrf.mxu0
    %v1465 = vadd.f32 %v785, %v1464
    %1466 = vmatmul.f32.gmra.mxu0 %v945
    %v1467 = vpop.f32.mrf.mxu0
    %v1468 = vadd.f32 %v788, %v1467
    %1469 = vdwg.mxu0
    %1470 = vmatpush.msra.mxu0 0.0
    %1471 = vmatpush.msra.mxu0 0.0
    %1472 = vmatpush.msra.mxu0 0.0
    %1473 = vmatpush.msra.mxu0 0.0
    %1474 = vmatpush.msra.mxu0 0.0
    %1475 = vmatpush.msra.mxu0 0.0
    %1476 = vmatpush.msra.mxu0 0.0
    %1477 = vmatpush.msra.mxu0 0.0
    %1478 = vmatpush.msra.mxu0 0.0
    %1479 = vmatpush.msra.mxu0 0.0
    %1480 = vmatpush.msra.mxu0 0.0
    %1481 = vmatpush.msra.mxu0 0.0
    %1482 = vmatpush.msra.mxu0 %v963
    %1483 = vmatpush.msra.mxu0 %v90
    %1484 = vmatpush.msra.mxu0 %v84
    %1485 = vmatpush.msra.mxu0 %v78
    %1486 = vmatmul.f32.gmra.mxu0 %v891
    %v1487 = vpop.f32.mrf.mxu0
    %v1488 = vadd.f32 %v808, %v1487
    %1489 = vmatmul.f32.gmra.mxu0 %v893
    %v1490 = vpop.f32.mrf.mxu0
    %v1491 = vadd.f32 %v811, %v1490
    %1492 = vmatmul.f32.gmra.mxu0 %v895
    %v1493 = vpop.f32.mrf.mxu0
    %v1494 = vadd.f32 %v814, %v1493
    %1495 = vmatmul.f32.gmra.mxu0 %v897
    %v1496 = vpop.f32.mrf.mxu0
    %v1497 = vadd.f32 %v817, %v1496
    %1498 = vmatmul.f32.gmra.mxu0 %v899
    %v1499 = vpop.f32.mrf.mxu0
    %v1500 = vadd.f32 %v820, %v1499
    %1501 = vmatmul.f32.gmra.mxu0 %v901
    %v1502 = vpop.f32.mrf.mxu0
    %v1503 = vadd.f32 %v823, %v1502
    %1504 = vmatmul.f32.gmra.mxu0 %v903
    %v1505 = vpop.f32.mrf.mxu0
    %v1506 = vadd.f32 %v826, %v1505
    %1507 = vmatmul.f32.gmra.mxu0 %v905
    %v1508 = vpop.f32.mrf.mxu0
    %v1509 = vadd.f32 %v829, %v1508
    %1510 = vmatmul.f32.gmra.mxu0 %v907
    %v1511 = vpop.f32.mrf.mxu0
    %v1512 = vadd.f32 %v832, %v1511
    %1513 = vmatmul.f32.gmra.mxu0 %v909
    %v1514 = vpop.f32.mrf.mxu0
    %v1515 = vadd.f32 %v835, %v1514
    %1516 = vmatmul.f32.gmra.mxu0 %v911
    %v1517 = vpop.f32.mrf.mxu0
    %v1518 = vadd.f32 %v838, %v1517
    %1519 = vmatmul.f32.gmra.mxu0 %v913
    %v1520 = vpop.f32.mrf.mxu0
    %v1521 = vadd.f32 %v841, %v1520
    %1522 = vmatmul.f32.gmra.mxu0 %v915
    %v1523 = vpop.f32.mrf.mxu0
    %v1524 = vadd.f32 %v844, %v1523
    %1525 = vmatmul.f32.gmra.mxu0 %v917
    %v1526 = vpop.f32.mrf.mxu0
    %v1527 = vadd.f32 %v847, %v1526
    %1528 = vmatmul.f32.gmra.mxu0 %v919
    %v1529 = vpop.f32.mrf.mxu0
    %v1530 = vadd.f32 %v850, %v1529
    %1531 = vmatmul.f32.gmra.mxu0 %v921
    %v1532 = vpop.f32.mrf.mxu0
    %v1533 = vadd.f32 %v853, %v1532
    %1534 = vmatmul.f32.gmra.mxu0 %v923
    %v1535 = vpop.f32.mrf.mxu0
    %v1536 = vadd.f32 %v856, %v1535
    %1537 = vmatmul.f32.gmra.mxu0 %v925
    %v1538 = vpop.f32.mrf.mxu0
    %v1539 = vadd.f32 %v859, %v1538
    %1540 = vmatmul.f32.gmra.mxu0 %v927
    %v1541 = vpop.f32.mrf.mxu0
    %v1542 = vadd.f32 %v862, %v1541
    %1543 = vmatmul.f32.gmra.mxu0 %v929
    %v1544 = vpop.f32.mrf.mxu0
    %v1545 = vadd.f32 %v865, %v1544
    %1546 = vmatmul.f32.gmra.mxu0 %v931
    %v1547 = vpop.f32.mrf.mxu0
    %v1548 = vadd.f32 %v868, %v1547
    %1549 = vmatmul.f32.gmra.mxu0 %v933
    %v1550 = vpop.f32.mrf.mxu0
    %v1551 = vadd.f32 %v871, %v1550
    %1552 = vmatmul.f32.gmra.mxu0 %v935
    %v1553 = vpop.f32.mrf.mxu0
    %v1554 = vadd.f32 %v874, %v1553
    %1555 = vmatmul.f32.gmra.mxu0 %v937
    %v1556 = vpop.f32.mrf.mxu0
    %v1557 = vadd.f32 %v877, %v1556
    %1558 = vmatmul.f32.gmra.mxu0 %v939
    %v1559 = vpop.f32.mrf.mxu0
    %v1560 = vadd.f32 %v880, %v1559
    %1561 = vmatmul.f32.gmra.mxu0 %v941
    %v1562 = vpop.f32.mrf.mxu0
    %v1563 = vadd.f32 %v883, %v1562
    %1564 = vmatmul.f32.gmra.mxu0 %v943
    %v1565 = vpop.f32.mrf.mxu0
    %v1566 = vadd.f32 %v886, %v1565
    %1567 = vmatmul.f32.gmra.mxu0 %v945
    %v1568 = vpop.f32.mrf.mxu0
    %v1569 = vadd.f32 %v889, %v1568
    %1570 = vdwg.mxu0
    %s1571 = scalar_lea.vmem [#allocation2], 384
    %v1572 = vld [vmem:[%s1571] sm:$0xff]
    %v1573 = vld [vmem:[%s1571 + $0x8] sm:$0xff]
    %v1574 = vld [vmem:[%s1571 + $0x10] sm:$0xff]
    %v1575 = vld [vmem:[%s1571 + $0x18] sm:$0xff]
    %v1576 = vld [vmem:[%s1571 + $0x20] sm:$0xff]
    %v1577 = vld [vmem:[%s1571 + $0x28] sm:$0xff]
    %v1578 = vld [vmem:[%s1571 + $0x30] sm:$0xff]
    %v1579 = vld [vmem:[%s1571 + $0x38] sm:$0xff]
    %v1580 = vld [vmem:[%s1571 + $0x40] sm:$0xff]
    %v1581 = vld [vmem:[%s1571 + $0x48] sm:$0xff]
    %v1582 = vld [vmem:[%s1571 + $0x50] sm:$0xff]
    %v1583 = vld [vmem:[%s1571 + $0x58] sm:$0xff]
    %v1584 = vld [vmem:[%s1571 + $0x60] sm:$0xff]
    %v1585 = vld [vmem:[%s1571 + $0x68] sm:$0xff]
    %v1586 = vld [vmem:[%s1571 + $0x70] sm:$0xff]
    %v1587 = vld [vmem:[%s1571 + $0x78] sm:$0xff]
    %v1588 = vld [vmem:[%s1571 + $0x80] sm:$0xff]
    %v1589 = vld [vmem:[%s1571 + $0x88] sm:$0xff]
    %v1590 = vld [vmem:[%s1571 + $0x90] sm:$0xf]
    %v1591 = vld [vmem:[%s1571 + $0x98] sm:$0xf]
    %v1592 = vld [vmem:[%s1571 + $0xa0] sm:$0xf]
    %v1593 = vld [vmem:[%s1571 + $0xa8] sm:$0xf]
    %v1594 = vld [vmem:[%s1571 + $0xb0] sm:$0xf]
    %v1595 = vld [vmem:[%s1571 + $0xb8] sm:$0xf]
    %vm1596 = vcmask 1045504
    %v1597 = vrot.slane %v44, 2
    %v1598 = vrot.slane %v45, 2
    %v1599 = vsel %vm1596, %v1597, %v1598
    %v1600 = vrot.slane %v46, 2
    %v1601 = vsel %vm1596, %v1598, %v1600
    %v1602 = vrot.slane %v47, 2
    %v1603 = vsel %vm1596, %v1600, %v1602
    %v1604 = vrot.slane %v48, 2
    %v1605 = vsel %vm1596, %v1602, %v1604
    %v1606 = vrot.slane %v49, 2
    %v1607 = vsel %vm1596, %v1604, %v1606
    %v1608 = vrot.slane %v50, 2
    %v1609 = vsel %vm1596, %v1606, %v1608
    %v1610 = vrot.slane %v51, 2
    %v1611 = vsel %vm1596, %v1608, %v1610
    %v1612 = vrot.slane %v52, 2
    %v1613 = vsel %vm1596, %v1610, %v1612
    %v1614 = vrot.slane %v53, 2
    %v1615 = vsel %vm1596, %v1612, %v1614
    %v1616 = vrot.slane %v54, 2
    %v1617 = vsel %vm1596, %v1614, %v1616
    %v1618 = vrot.slane %v55, 2
    %v1619 = vsel %vm1596, %v1616, %v1618
    %v1620 = vrot.slane %v56, 2
    %v1621 = vsel %vm1596, %v1618, %v1620
    %v1622 = vrot.slane %v57, 2
    %v1623 = vsel %vm1596, %v1620, %v1622
    %v1624 = vrot.slane %v58, 2
    %v1625 = vsel %vm1596, %v1622, %v1624
    %v1626 = vrot.slane %v59, 2
    %v1627 = vsel %vm1596, %v1624, %v1626
    %v1628 = vrot.slane %v60, 2
    %v1629 = vsel %vm1596, %v1626, %v1628
    %v1630 = vrot.slane %v61, 2
    %v1631 = vsel %vm1596, %v1628, %v1630
    %v1632 = vrot.slane %v62, 2
    %v1633 = vsel %vm1596, %v1630, %v1632
    %v1634 = vrot.slane %v63, 2
    %v1635 = vsel %vm1596, %v1632, %v1634
    %v1636 = vrot.slane %v64, 2
    %v1637 = vsel %vm1596, %v1634, %v1636
    %v1638 = vrot.slane %v65, 2
    %v1639 = vsel %vm1596, %v1636, %v1638
    %v1640 = vrot.slane %v66, 2
    %v1641 = vsel %vm1596, %v1638, %v1640
    %v1642 = vrot.slane %v67, 2
    %v1643 = vsel %vm1596, %v1640, %v1642
    %v1644 = vrot.slane %v68, 2
    %v1645 = vsel %vm1596, %v1642, %v1644
    %v1646 = vrot.slane %v69, 2
    %v1647 = vsel %vm1596, %v1644, %v1646
    %v1648 = vrot.slane %v70, 2
    %v1649 = vsel %vm1596, %v1646, %v1648
    %v1650 = vrot.slane %v71, 2
    %v1651 = vsel %vm1596, %v1648, %v1650
    %v1652 = vrot.slane %v72, 2
    %v1653 = vsel %vm1596, %v1650, %v1652
    %v1654 = vsel %vm209, %v1599, 0
    %v1656 = vsel %vm209, %v1601, 0
    %v1658 = vsel %vm209, %v1603, 0
    %v1660 = vsel %vm209, %v1605, 0
    %v1662 = vsel %vm209, %v1607, 0
    %v1664 = vsel %vm209, %v1609, 0
    %v1666 = vsel %vm209, %v1611, 0
    %v1668 = vsel %vm209, %v1613, 0
    %v1670 = vsel %vm209, %v1615, 0
    %v1672 = vsel %vm209, %v1617, 0
    %v1674 = vsel %vm209, %v1619, 0
    %v1676 = vsel %vm209, %v1621, 0
    %v1678 = vsel %vm209, %v1623, 0
    %v1680 = vsel %vm209, %v1625, 0
    %v1682 = vsel %vm209, %v1627, 0
    %v1684 = vsel %vm209, %v1629, 0
    %v1686 = vsel %vm209, %v1631, 0
    %v1688 = vsel %vm209, %v1633, 0
    %v1690 = vsel %vm209, %v1635, 0
    %v1692 = vsel %vm209, %v1637, 0
    %v1694 = vsel %vm209, %v1639, 0
    %v1696 = vsel %vm209, %v1641, 0
    %v1698 = vsel %vm209, %v1643, 0
    %v1700 = vsel %vm209, %v1645, 0
    %v1702 = vsel %vm209, %v1647, 0
    %v1704 = vsel %vm209, %v1649, 0
    %v1706 = vsel %vm209, %v1651, 0
    %v1708 = vsel %vm209, %v1653, 0
    %v1711 = vsel %vm266, %v1590, 0
    %v1714 = vsel %vm266, %v1591, 0
    %v1717 = vsel %vm266, %v1592, 0
    %v1720 = vsel %vm266, %v1593, 0
    %v1723 = vsel %vm266, %v1594, 0
    %v1726 = vsel %vm266, %v1595, 0
    %1728 = vmatpush.msra.mxu0 0.0
    %1729 = vmatpush.msra.mxu0 0.0
    %1730 = vmatpush.msra.mxu0 0.0
    %1731 = vmatpush.msra.mxu0 0.0
    %1732 = vmatpush.msra.mxu0 0.0
    %1733 = vmatpush.msra.mxu0 0.0
    %1734 = vmatpush.msra.mxu0 0.0
    %1735 = vmatpush.msra.mxu0 0.0
    %1736 = vmatpush.msra.mxu0 0.0
    %1737 = vmatpush.msra.mxu0 0.0
    %1738 = vmatpush.msra.mxu0 0.0
    %1739 = vmatpush.msra.mxu0 0.0
    %1740 = vmatpush.msra.mxu0 %v1711
    %1741 = vmatpush.msra.mxu0 %v1584
    %1742 = vmatpush.msra.mxu0 %v1578
    %1743 = vmatpush.msra.mxu0 %v1572
    %1744 = vmatmul.f32.gmra.mxu0 %v1654
    %v1745 = vpop.f32.mrf.mxu0
    %v1746 = vadd.f32 0.0, %v1745
    %1747 = vmatmul.f32.gmra.mxu0 %v1656
    %v1748 = vpop.f32.mrf.mxu0
    %v1749 = vadd.f32 0.0, %v1748
    %1750 = vmatmul.f32.gmra.mxu0 %v1658
    %v1751 = vpop.f32.mrf.mxu0
    %v1752 = vadd.f32 0.0, %v1751
    %1753 = vmatmul.f32.gmra.mxu0 %v1660
    %v1754 = vpop.f32.mrf.mxu0
    %v1755 = vadd.f32 0.0, %v1754
    %1756 = vmatmul.f32.gmra.mxu0 %v1662
    %v1757 = vpop.f32.mrf.mxu0
    %v1758 = vadd.f32 0.0, %v1757
    %1759 = vmatmul.f32.gmra.mxu0 %v1664
    %v1760 = vpop.f32.mrf.mxu0
    %v1761 = vadd.f32 0.0, %v1760
    %1762 = vmatmul.f32.gmra.mxu0 %v1666
    %v1763 = vpop.f32.mrf.mxu0
    %v1764 = vadd.f32 0.0, %v1763
    %1765 = vmatmul.f32.gmra.mxu0 %v1668
    %v1766 = vpop.f32.mrf.mxu0
    %v1767 = vadd.f32 0.0, %v1766
    %1768 = vmatmul.f32.gmra.mxu0 %v1670
    %v1769 = vpop.f32.mrf.mxu0
    %v1770 = vadd.f32 0.0, %v1769
    %1771 = vmatmul.f32.gmra.mxu0 %v1672
    %v1772 = vpop.f32.mrf.mxu0
    %v1773 = vadd.f32 0.0, %v1772
    %1774 = vmatmul.f32.gmra.mxu0 %v1674
    %v1775 = vpop.f32.mrf.mxu0
    %v1776 = vadd.f32 0.0, %v1775
    %1777 = vmatmul.f32.gmra.mxu0 %v1676
    %v1778 = vpop.f32.mrf.mxu0
    %v1779 = vadd.f32 0.0, %v1778
    %1780 = vmatmul.f32.gmra.mxu0 %v1678
    %v1781 = vpop.f32.mrf.mxu0
    %v1782 = vadd.f32 0.0, %v1781
    %1783 = vmatmul.f32.gmra.mxu0 %v1680
    %v1784 = vpop.f32.mrf.mxu0
    %v1785 = vadd.f32 0.0, %v1784
    %1786 = vmatmul.f32.gmra.mxu0 %v1682
    %v1787 = vpop.f32.mrf.mxu0
    %v1788 = vadd.f32 0.0, %v1787
    %1789 = vmatmul.f32.gmra.mxu0 %v1684
    %v1790 = vpop.f32.mrf.mxu0
    %v1791 = vadd.f32 0.0, %v1790
    %1792 = vmatmul.f32.gmra.mxu0 %v1686
    %v1793 = vpop.f32.mrf.mxu0
    %v1794 = vadd.f32 0.0, %v1793
    %1795 = vmatmul.f32.gmra.mxu0 %v1688
    %v1796 = vpop.f32.mrf.mxu0
    %v1797 = vadd.f32 0.0, %v1796
    %1798 = vmatmul.f32.gmra.mxu0 %v1690
    %v1799 = vpop.f32.mrf.mxu0
    %v1800 = vadd.f32 0.0, %v1799
    %1801 = vmatmul.f32.gmra.mxu0 %v1692
    %v1802 = vpop.f32.mrf.mxu0
    %v1803 = vadd.f32 0.0, %v1802
    %1804 = vmatmul.f32.gmra.mxu0 %v1694
    %v1805 = vpop.f32.mrf.mxu0
    %v1806 = vadd.f32 0.0, %v1805
    %1807 = vmatmul.f32.gmra.mxu0 %v1696
    %v1808 = vpop.f32.mrf.mxu0
    %v1809 = vadd.f32 0.0, %v1808
    %1810 = vmatmul.f32.gmra.mxu0 %v1698
    %v1811 = vpop.f32.mrf.mxu0
    %v1812 = vadd.f32 0.0, %v1811
    %1813 = vmatmul.f32.gmra.mxu0 %v1700
    %v1814 = vpop.f32.mrf.mxu0
    %v1815 = vadd.f32 0.0, %v1814
    %1816 = vmatmul.f32.gmra.mxu0 %v1702
    %v1817 = vpop.f32.mrf.mxu0
    %v1818 = vadd.f32 0.0, %v1817
    %1819 = vmatmul.f32.gmra.mxu0 %v1704
    %v1820 = vpop.f32.mrf.mxu0
    %v1821 = vadd.f32 0.0, %v1820
    %1822 = vmatmul.f32.gmra.mxu0 %v1706
    %v1823 = vpop.f32.mrf.mxu0
    %v1824 = vadd.f32 0.0, %v1823
    %1825 = vmatmul.f32.gmra.mxu0 %v1708
    %v1826 = vpop.f32.mrf.mxu0
    %v1827 = vadd.f32 0.0, %v1826
    %1828 = vdwg.mxu0
    %1829 = vmatpush.msra.mxu0 0.0
    %1830 = vmatpush.msra.mxu0 0.0
    %1831 = vmatpush.msra.mxu0 0.0
    %1832 = vmatpush.msra.mxu0 0.0
    %1833 = vmatpush.msra.mxu0 0.0
    %1834 = vmatpush.msra.mxu0 0.0
    %1835 = vmatpush.msra.mxu0 0.0
    %1836 = vmatpush.msra.mxu0 0.0
    %1837 = vmatpush.msra.mxu0 0.0
    %1838 = vmatpush.msra.mxu0 0.0
    %1839 = vmatpush.msra.mxu0 0.0
    %1840 = vmatpush.msra.mxu0 0.0
    %1841 = vmatpush.msra.mxu0 %v1714
    %1842 = vmatpush.msra.mxu0 %v1585
    %1843 = vmatpush.msra.mxu0 %v1579
    %1844 = vmatpush.msra.mxu0 %v1573
    %1845 = vmatmul.f32.gmra.mxu0 %v1654
    %v1846 = vpop.f32.mrf.mxu0
    %v1847 = vadd.f32 0.0, %v1846
    %1848 = vmatmul.f32.gmra.mxu0 %v1656
    %v1849 = vpop.f32.mrf.mxu0
    %v1850 = vadd.f32 0.0, %v1849
    %1851 = vmatmul.f32.gmra.mxu0 %v1658
    %v1852 = vpop.f32.mrf.mxu0
    %v1853 = vadd.f32 0.0, %v1852
    %1854 = vmatmul.f32.gmra.mxu0 %v1660
    %v1855 = vpop.f32.mrf.mxu0
    %v1856 = vadd.f32 0.0, %v1855
    %1857 = vmatmul.f32.gmra.mxu0 %v1662
    %v1858 = vpop.f32.mrf.mxu0
    %v1859 = vadd.f32 0.0, %v1858
    %1860 = vmatmul.f32.gmra.mxu0 %v1664
    %v1861 = vpop.f32.mrf.mxu0
    %v1862 = vadd.f32 0.0, %v1861
    %1863 = vmatmul.f32.gmra.mxu0 %v1666
    %v1864 = vpop.f32.mrf.mxu0
    %v1865 = vadd.f32 0.0, %v1864
    %1866 = vmatmul.f32.gmra.mxu0 %v1668
    %v1867 = vpop.f32.mrf.mxu0
    %v1868 = vadd.f32 0.0, %v1867
    %1869 = vmatmul.f32.gmra.mxu0 %v1670
    %v1870 = vpop.f32.mrf.mxu0
    %v1871 = vadd.f32 0.0, %v1870
    %1872 = vmatmul.f32.gmra.mxu0 %v1672
    %v1873 = vpop.f32.mrf.mxu0
    %v1874 = vadd.f32 0.0, %v1873
    %1875 = vmatmul.f32.gmra.mxu0 %v1674
    %v1876 = vpop.f32.mrf.mxu0
    %v1877 = vadd.f32 0.0, %v1876
    %1878 = vmatmul.f32.gmra.mxu0 %v1676
    %v1879 = vpop.f32.mrf.mxu0
    %v1880 = vadd.f32 0.0, %v1879
    %1881 = vmatmul.f32.gmra.mxu0 %v1678
    %v1882 = vpop.f32.mrf.mxu0
    %v1883 = vadd.f32 0.0, %v1882
    %1884 = vmatmul.f32.gmra.mxu0 %v1680
    %v1885 = vpop.f32.mrf.mxu0
    %v1886 = vadd.f32 0.0, %v1885
    %1887 = vmatmul.f32.gmra.mxu0 %v1682
    %v1888 = vpop.f32.mrf.mxu0
    %v1889 = vadd.f32 0.0, %v1888
    %1890 = vmatmul.f32.gmra.mxu0 %v1684
    %v1891 = vpop.f32.mrf.mxu0
    %v1892 = vadd.f32 0.0, %v1891
    %1893 = vmatmul.f32.gmra.mxu0 %v1686
    %v1894 = vpop.f32.mrf.mxu0
    %v1895 = vadd.f32 0.0, %v1894
    %1896 = vmatmul.f32.gmra.mxu0 %v1688
    %v1897 = vpop.f32.mrf.mxu0
    %v1898 = vadd.f32 0.0, %v1897
    %1899 = vmatmul.f32.gmra.mxu0 %v1690
    %v1900 = vpop.f32.mrf.mxu0
    %v1901 = vadd.f32 0.0, %v1900
    %1902 = vmatmul.f32.gmra.mxu0 %v1692
    %v1903 = vpop.f32.mrf.mxu0
    %v1904 = vadd.f32 0.0, %v1903
    %1905 = vmatmul.f32.gmra.mxu0 %v1694
    %v1906 = vpop.f32.mrf.mxu0
    %v1907 = vadd.f32 0.0, %v1906
    %1908 = vmatmul.f32.gmra.mxu0 %v1696
    %v1909 = vpop.f32.mrf.mxu0
    %v1910 = vadd.f32 0.0, %v1909
    %1911 = vmatmul.f32.gmra.mxu0 %v1698
    %v1912 = vpop.f32.mrf.mxu0
    %v1913 = vadd.f32 0.0, %v1912
    %1914 = vmatmul.f32.gmra.mxu0 %v1700
    %v1915 = vpop.f32.mrf.mxu0
    %v1916 = vadd.f32 0.0, %v1915
    %1917 = vmatmul.f32.gmra.mxu0 %v1702
    %v1918 = vpop.f32.mrf.mxu0
    %v1919 = vadd.f32 0.0, %v1918
    %1920 = vmatmul.f32.gmra.mxu0 %v1704
    %v1921 = vpop.f32.mrf.mxu0
    %v1922 = vadd.f32 0.0, %v1921
    %1923 = vmatmul.f32.gmra.mxu0 %v1706
    %v1924 = vpop.f32.mrf.mxu0
    %v1925 = vadd.f32 0.0, %v1924
    %1926 = vmatmul.f32.gmra.mxu0 %v1708
    %v1927 = vpop.f32.mrf.mxu0
    %v1928 = vadd.f32 0.0, %v1927
    %1929 = vdwg.mxu0
    %1930 = vmatpush.msra.mxu0 0.0
    %1931 = vmatpush.msra.mxu0 0.0
    %1932 = vmatpush.msra.mxu0 0.0
    %1933 = vmatpush.msra.mxu0 0.0
    %1934 = vmatpush.msra.mxu0 0.0
    %1935 = vmatpush.msra.mxu0 0.0
    %1936 = vmatpush.msra.mxu0 0.0
    %1937 = vmatpush.msra.mxu0 0.0
    %1938 = vmatpush.msra.mxu0 0.0
    %1939 = vmatpush.msra.mxu0 0.0
    %1940 = vmatpush.msra.mxu0 0.0
    %1941 = vmatpush.msra.mxu0 0.0
    %1942 = vmatpush.msra.mxu0 %v1717
    %1943 = vmatpush.msra.mxu0 %v1586
    %1944 = vmatpush.msra.mxu0 %v1580
    %1945 = vmatpush.msra.mxu0 %v1574
    %1946 = vmatmul.f32.gmra.mxu0 %v1654
    %v1947 = vpop.f32.mrf.mxu0
    %v1948 = vadd.f32 0.0, %v1947
    %1949 = vmatmul.f32.gmra.mxu0 %v1656
    %v1950 = vpop.f32.mrf.mxu0
    %v1951 = vadd.f32 0.0, %v1950
    %1952 = vmatmul.f32.gmra.mxu0 %v1658
    %v1953 = vpop.f32.mrf.mxu0
    %v1954 = vadd.f32 0.0, %v1953
    %1955 = vmatmul.f32.gmra.mxu0 %v1660
    %v1956 = vpop.f32.mrf.mxu0
    %v1957 = vadd.f32 0.0, %v1956
    %1958 = vmatmul.f32.gmra.mxu0 %v1662
    %v1959 = vpop.f32.mrf.mxu0
    %v1960 = vadd.f32 0.0, %v1959
    %1961 = vmatmul.f32.gmra.mxu0 %v1664
    %v1962 = vpop.f32.mrf.mxu0
    %v1963 = vadd.f32 0.0, %v1962
    %1964 = vmatmul.f32.gmra.mxu0 %v1666
    %v1965 = vpop.f32.mrf.mxu0
    %v1966 = vadd.f32 0.0, %v1965
    %1967 = vmatmul.f32.gmra.mxu0 %v1668
    %v1968 = vpop.f32.mrf.mxu0
    %v1969 = vadd.f32 0.0, %v1968
    %1970 = vmatmul.f32.gmra.mxu0 %v1670
    %v1971 = vpop.f32.mrf.mxu0
    %v1972 = vadd.f32 0.0, %v1971
    %1973 = vmatmul.f32.gmra.mxu0 %v1672
    %v1974 = vpop.f32.mrf.mxu0
    %v1975 = vadd.f32 0.0, %v1974
    %1976 = vmatmul.f32.gmra.mxu0 %v1674
    %v1977 = vpop.f32.mrf.mxu0
    %v1978 = vadd.f32 0.0, %v1977
    %1979 = vmatmul.f32.gmra.mxu0 %v1676
    %v1980 = vpop.f32.mrf.mxu0
    %v1981 = vadd.f32 0.0, %v1980
    %1982 = vmatmul.f32.gmra.mxu0 %v1678
    %v1983 = vpop.f32.mrf.mxu0
    %v1984 = vadd.f32 0.0, %v1983
    %1985 = vmatmul.f32.gmra.mxu0 %v1680
    %v1986 = vpop.f32.mrf.mxu0
    %v1987 = vadd.f32 0.0, %v1986
    %1988 = vmatmul.f32.gmra.mxu0 %v1682
    %v1989 = vpop.f32.mrf.mxu0
    %v1990 = vadd.f32 0.0, %v1989
    %1991 = vmatmul.f32.gmra.mxu0 %v1684
    %v1992 = vpop.f32.mrf.mxu0
    %v1993 = vadd.f32 0.0, %v1992
    %1994 = vmatmul.f32.gmra.mxu0 %v1686
    %v1995 = vpop.f32.mrf.mxu0
    %v1996 = vadd.f32 0.0, %v1995
    %1997 = vmatmul.f32.gmra.mxu0 %v1688
    %v1998 = vpop.f32.mrf.mxu0
    %v1999 = vadd.f32 0.0, %v1998
    %2000 = vmatmul.f32.gmra.mxu0 %v1690
    %v2001 = vpop.f32.mrf.mxu0
    %v2002 = vadd.f32 0.0, %v2001
    %2003 = vmatmul.f32.gmra.mxu0 %v1692
    %v2004 = vpop.f32.mrf.mxu0
    %v2005 = vadd.f32 0.0, %v2004
    %2006 = vmatmul.f32.gmra.mxu0 %v1694
    %v2007 = vpop.f32.mrf.mxu0
    %v2008 = vadd.f32 0.0, %v2007
    %2009 = vmatmul.f32.gmra.mxu0 %v1696
    %v2010 = vpop.f32.mrf.mxu0
    %v2011 = vadd.f32 0.0, %v2010
    %2012 = vmatmul.f32.gmra.mxu0 %v1698
    %v2013 = vpop.f32.mrf.mxu0
    %v2014 = vadd.f32 0.0, %v2013
    %2015 = vmatmul.f32.gmra.mxu0 %v1700
    %v2016 = vpop.f32.mrf.mxu0
    %v2017 = vadd.f32 0.0, %v2016
    %2018 = vmatmul.f32.gmra.mxu0 %v1702
    %v2019 = vpop.f32.mrf.mxu0
    %v2020 = vadd.f32 0.0, %v2019
    %2021 = vmatmul.f32.gmra.mxu0 %v1704
    %v2022 = vpop.f32.mrf.mxu0
    %v2023 = vadd.f32 0.0, %v2022
    %2024 = vmatmul.f32.gmra.mxu0 %v1706
    %v2025 = vpop.f32.mrf.mxu0
    %v2026 = vadd.f32 0.0, %v2025
    %2027 = vmatmul.f32.gmra.mxu0 %v1708
    %v2028 = vpop.f32.mrf.mxu0
    %v2029 = vadd.f32 0.0, %v2028
    %2030 = vdwg.mxu0
    %2031 = vmatpush.msra.mxu0 0.0
    %2032 = vmatpush.msra.mxu0 0.0
    %2033 = vmatpush.msra.mxu0 0.0
    %2034 = vmatpush.msra.mxu0 0.0
    %2035 = vmatpush.msra.mxu0 0.0
    %2036 = vmatpush.msra.mxu0 0.0
    %2037 = vmatpush.msra.mxu0 0.0
    %2038 = vmatpush.msra.mxu0 0.0
    %2039 = vmatpush.msra.mxu0 0.0
    %2040 = vmatpush.msra.mxu0 0.0
    %2041 = vmatpush.msra.mxu0 0.0
    %2042 = vmatpush.msra.mxu0 0.0
    %2043 = vmatpush.msra.mxu0 %v1720
    %2044 = vmatpush.msra.mxu0 %v1587
    %2045 = vmatpush.msra.mxu0 %v1581
    %2046 = vmatpush.msra.mxu0 %v1575
    %2047 = vmatmul.f32.gmra.mxu0 %v1654
    %v2048 = vpop.f32.mrf.mxu0
    %v2049 = vadd.f32 0.0, %v2048
    %2050 = vmatmul.f32.gmra.mxu0 %v1656
    %v2051 = vpop.f32.mrf.mxu0
    %v2052 = vadd.f32 0.0, %v2051
    %2053 = vmatmul.f32.gmra.mxu0 %v1658
    %v2054 = vpop.f32.mrf.mxu0
    %v2055 = vadd.f32 0.0, %v2054
    %2056 = vmatmul.f32.gmra.mxu0 %v1660
    %v2057 = vpop.f32.mrf.mxu0
    %v2058 = vadd.f32 0.0, %v2057
    %2059 = vmatmul.f32.gmra.mxu0 %v1662
    %v2060 = vpop.f32.mrf.mxu0
    %v2061 = vadd.f32 0.0, %v2060
    %2062 = vmatmul.f32.gmra.mxu0 %v1664
    %v2063 = vpop.f32.mrf.mxu0
    %v2064 = vadd.f32 0.0, %v2063
    %2065 = vmatmul.f32.gmra.mxu0 %v1666
    %v2066 = vpop.f32.mrf.mxu0
    %v2067 = vadd.f32 0.0, %v2066
    %2068 = vmatmul.f32.gmra.mxu0 %v1668
    %v2069 = vpop.f32.mrf.mxu0
    %v2070 = vadd.f32 0.0, %v2069
    %2071 = vmatmul.f32.gmra.mxu0 %v1670
    %v2072 = vpop.f32.mrf.mxu0
    %v2073 = vadd.f32 0.0, %v2072
    %2074 = vmatmul.f32.gmra.mxu0 %v1672
    %v2075 = vpop.f32.mrf.mxu0
    %v2076 = vadd.f32 0.0, %v2075
    %2077 = vmatmul.f32.gmra.mxu0 %v1674
    %v2078 = vpop.f32.mrf.mxu0
    %v2079 = vadd.f32 0.0, %v2078
    %2080 = vmatmul.f32.gmra.mxu0 %v1676
    %v2081 = vpop.f32.mrf.mxu0
    %v2082 = vadd.f32 0.0, %v2081
    %2083 = vmatmul.f32.gmra.mxu0 %v1678
    %v2084 = vpop.f32.mrf.mxu0
    %v2085 = vadd.f32 0.0, %v2084
    %2086 = vmatmul.f32.gmra.mxu0 %v1680
    %v2087 = vpop.f32.mrf.mxu0
    %v2088 = vadd.f32 0.0, %v2087
    %2089 = vmatmul.f32.gmra.mxu0 %v1682
    %v2090 = vpop.f32.mrf.mxu0
    %v2091 = vadd.f32 0.0, %v2090
    %2092 = vmatmul.f32.gmra.mxu0 %v1684
    %v2093 = vpop.f32.mrf.mxu0
    %v2094 = vadd.f32 0.0, %v2093
    %2095 = vmatmul.f32.gmra.mxu0 %v1686
    %v2096 = vpop.f32.mrf.mxu0
    %v2097 = vadd.f32 0.0, %v2096
    %2098 = vmatmul.f32.gmra.mxu0 %v1688
    %v2099 = vpop.f32.mrf.mxu0
    %v2100 = vadd.f32 0.0, %v2099
    %2101 = vmatmul.f32.gmra.mxu0 %v1690
    %v2102 = vpop.f32.mrf.mxu0
    %v2103 = vadd.f32 0.0, %v2102
    %2104 = vmatmul.f32.gmra.mxu0 %v1692
    %v2105 = vpop.f32.mrf.mxu0
    %v2106 = vadd.f32 0.0, %v2105
    %2107 = vmatmul.f32.gmra.mxu0 %v1694
    %v2108 = vpop.f32.mrf.mxu0
    %v2109 = vadd.f32 0.0, %v2108
    %2110 = vmatmul.f32.gmra.mxu0 %v1696
    %v2111 = vpop.f32.mrf.mxu0
    %v2112 = vadd.f32 0.0, %v2111
    %2113 = vmatmul.f32.gmra.mxu0 %v1698
    %v2114 = vpop.f32.mrf.mxu0
    %v2115 = vadd.f32 0.0, %v2114
    %2116 = vmatmul.f32.gmra.mxu0 %v1700
    %v2117 = vpop.f32.mrf.mxu0
    %v2118 = vadd.f32 0.0, %v2117
    %2119 = vmatmul.f32.gmra.mxu0 %v1702
    %v2120 = vpop.f32.mrf.mxu0
    %v2121 = vadd.f32 0.0, %v2120
    %2122 = vmatmul.f32.gmra.mxu0 %v1704
    %v2123 = vpop.f32.mrf.mxu0
    %v2124 = vadd.f32 0.0, %v2123
    %2125 = vmatmul.f32.gmra.mxu0 %v1706
    %v2126 = vpop.f32.mrf.mxu0
    %v2127 = vadd.f32 0.0, %v2126
    %2128 = vmatmul.f32.gmra.mxu0 %v1708
    %v2129 = vpop.f32.mrf.mxu0
    %v2130 = vadd.f32 0.0, %v2129
    %2131 = vdwg.mxu0
    %2132 = vmatpush.msra.mxu0 0.0
    %2133 = vmatpush.msra.mxu0 0.0
    %2134 = vmatpush.msra.mxu0 0.0
    %2135 = vmatpush.msra.mxu0 0.0
    %2136 = vmatpush.msra.mxu0 0.0
    %2137 = vmatpush.msra.mxu0 0.0
    %2138 = vmatpush.msra.mxu0 0.0
    %2139 = vmatpush.msra.mxu0 0.0
    %2140 = vmatpush.msra.mxu0 0.0
    %2141 = vmatpush.msra.mxu0 0.0
    %2142 = vmatpush.msra.mxu0 0.0
    %2143 = vmatpush.msra.mxu0 0.0
    %2144 = vmatpush.msra.mxu0 %v1723
    %2145 = vmatpush.msra.mxu0 %v1588
    %2146 = vmatpush.msra.mxu0 %v1582
    %2147 = vmatpush.msra.mxu0 %v1576
    %2148 = vmatmul.f32.gmra.mxu0 %v1654
    %v2149 = vpop.f32.mrf.mxu0
    %v2150 = vadd.f32 0.0, %v2149
    %2151 = vmatmul.f32.gmra.mxu0 %v1656
    %v2152 = vpop.f32.mrf.mxu0
    %v2153 = vadd.f32 0.0, %v2152
    %2154 = vmatmul.f32.gmra.mxu0 %v1658
    %v2155 = vpop.f32.mrf.mxu0
    %v2156 = vadd.f32 0.0, %v2155
    %2157 = vmatmul.f32.gmra.mxu0 %v1660
    %v2158 = vpop.f32.mrf.mxu0
    %v2159 = vadd.f32 0.0, %v2158
    %2160 = vmatmul.f32.gmra.mxu0 %v1662
    %v2161 = vpop.f32.mrf.mxu0
    %v2162 = vadd.f32 0.0, %v2161
    %2163 = vmatmul.f32.gmra.mxu0 %v1664
    %v2164 = vpop.f32.mrf.mxu0
    %v2165 = vadd.f32 0.0, %v2164
    %2166 = vmatmul.f32.gmra.mxu0 %v1666
    %v2167 = vpop.f32.mrf.mxu0
    %v2168 = vadd.f32 0.0, %v2167
    %2169 = vmatmul.f32.gmra.mxu0 %v1668
    %v2170 = vpop.f32.mrf.mxu0
    %v2171 = vadd.f32 0.0, %v2170
    %2172 = vmatmul.f32.gmra.mxu0 %v1670
    %v2173 = vpop.f32.mrf.mxu0
    %v2174 = vadd.f32 0.0, %v2173
    %2175 = vmatmul.f32.gmra.mxu0 %v1672
    %v2176 = vpop.f32.mrf.mxu0
    %v2177 = vadd.f32 0.0, %v2176
    %2178 = vmatmul.f32.gmra.mxu0 %v1674
    %v2179 = vpop.f32.mrf.mxu0
    %v2180 = vadd.f32 0.0, %v2179
    %2181 = vmatmul.f32.gmra.mxu0 %v1676
    %v2182 = vpop.f32.mrf.mxu0
    %v2183 = vadd.f32 0.0, %v2182
    %2184 = vmatmul.f32.gmra.mxu0 %v1678
    %v2185 = vpop.f32.mrf.mxu0
    %v2186 = vadd.f32 0.0, %v2185
    %2187 = vmatmul.f32.gmra.mxu0 %v1680
    %v2188 = vpop.f32.mrf.mxu0
    %v2189 = vadd.f32 0.0, %v2188
    %2190 = vmatmul.f32.gmra.mxu0 %v1682
    %v2191 = vpop.f32.mrf.mxu0
    %v2192 = vadd.f32 0.0, %v2191
    %2193 = vmatmul.f32.gmra.mxu0 %v1684
    %v2194 = vpop.f32.mrf.mxu0
    %v2195 = vadd.f32 0.0, %v2194
    %2196 = vmatmul.f32.gmra.mxu0 %v1686
    %v2197 = vpop.f32.mrf.mxu0
    %v2198 = vadd.f32 0.0, %v2197
    %2199 = vmatmul.f32.gmra.mxu0 %v1688
    %v2200 = vpop.f32.mrf.mxu0
    %v2201 = vadd.f32 0.0, %v2200
    %2202 = vmatmul.f32.gmra.mxu0 %v1690
    %v2203 = vpop.f32.mrf.mxu0
    %v2204 = vadd.f32 0.0, %v2203
    %2205 = vmatmul.f32.gmra.mxu0 %v1692
    %v2206 = vpop.f32.mrf.mxu0
    %v2207 = vadd.f32 0.0, %v2206
    %2208 = vmatmul.f32.gmra.mxu0 %v1694
    %v2209 = vpop.f32.mrf.mxu0
    %v2210 = vadd.f32 0.0, %v2209
    %2211 = vmatmul.f32.gmra.mxu0 %v1696
    %v2212 = vpop.f32.mrf.mxu0
    %v2213 = vadd.f32 0.0, %v2212
    %2214 = vmatmul.f32.gmra.mxu0 %v1698
    %v2215 = vpop.f32.mrf.mxu0
    %v2216 = vadd.f32 0.0, %v2215
    %2217 = vmatmul.f32.gmra.mxu0 %v1700
    %v2218 = vpop.f32.mrf.mxu0
    %v2219 = vadd.f32 0.0, %v2218
    %2220 = vmatmul.f32.gmra.mxu0 %v1702
    %v2221 = vpop.f32.mrf.mxu0
    %v2222 = vadd.f32 0.0, %v2221
    %2223 = vmatmul.f32.gmra.mxu0 %v1704
    %v2224 = vpop.f32.mrf.mxu0
    %v2225 = vadd.f32 0.0, %v2224
    %2226 = vmatmul.f32.gmra.mxu0 %v1706
    %v2227 = vpop.f32.mrf.mxu0
    %v2228 = vadd.f32 0.0, %v2227
    %2229 = vmatmul.f32.gmra.mxu0 %v1708
    %v2230 = vpop.f32.mrf.mxu0
    %v2231 = vadd.f32 0.0, %v2230
    %2232 = vdwg.mxu0
    %2233 = vmatpush.msra.mxu0 0.0
    %2234 = vmatpush.msra.mxu0 0.0
    %2235 = vmatpush.msra.mxu0 0.0
    %2236 = vmatpush.msra.mxu0 0.0
    %2237 = vmatpush.msra.mxu0 0.0
    %2238 = vmatpush.msra.mxu0 0.0
    %2239 = vmatpush.msra.mxu0 0.0
    %2240 = vmatpush.msra.mxu0 0.0
    %2241 = vmatpush.msra.mxu0 0.0
    %2242 = vmatpush.msra.mxu0 0.0
    %2243 = vmatpush.msra.mxu0 0.0
    %2244 = vmatpush.msra.mxu0 0.0
    %2245 = vmatpush.msra.mxu0 %v1726
    %2246 = vmatpush.msra.mxu0 %v1589
    %2247 = vmatpush.msra.mxu0 %v1583
    %2248 = vmatpush.msra.mxu0 %v1577
    %2249 = vmatmul.f32.gmra.mxu0 %v1654
    %v2250 = vpop.f32.mrf.mxu0
    %v2251 = vadd.f32 0.0, %v2250
    %2252 = vmatmul.f32.gmra.mxu0 %v1656
    %v2253 = vpop.f32.mrf.mxu0
    %v2254 = vadd.f32 0.0, %v2253
    %2255 = vmatmul.f32.gmra.mxu0 %v1658
    %v2256 = vpop.f32.mrf.mxu0
    %v2257 = vadd.f32 0.0, %v2256
    %2258 = vmatmul.f32.gmra.mxu0 %v1660
    %v2259 = vpop.f32.mrf.mxu0
    %v2260 = vadd.f32 0.0, %v2259
    %2261 = vmatmul.f32.gmra.mxu0 %v1662
    %v2262 = vpop.f32.mrf.mxu0
    %v2263 = vadd.f32 0.0, %v2262
    %2264 = vmatmul.f32.gmra.mxu0 %v1664
    %v2265 = vpop.f32.mrf.mxu0
    %v2266 = vadd.f32 0.0, %v2265
    %2267 = vmatmul.f32.gmra.mxu0 %v1666
    %v2268 = vpop.f32.mrf.mxu0
    %v2269 = vadd.f32 0.0, %v2268
    %2270 = vmatmul.f32.gmra.mxu0 %v1668
    %v2271 = vpop.f32.mrf.mxu0
    %v2272 = vadd.f32 0.0, %v2271
    %2273 = vmatmul.f32.gmra.mxu0 %v1670
    %v2274 = vpop.f32.mrf.mxu0
    %v2275 = vadd.f32 0.0, %v2274
    %2276 = vmatmul.f32.gmra.mxu0 %v1672
    %v2277 = vpop.f32.mrf.mxu0
    %v2278 = vadd.f32 0.0, %v2277
    %2279 = vmatmul.f32.gmra.mxu0 %v1674
    %v2280 = vpop.f32.mrf.mxu0
    %v2281 = vadd.f32 0.0, %v2280
    %2282 = vmatmul.f32.gmra.mxu0 %v1676
    %v2283 = vpop.f32.mrf.mxu0
    %v2284 = vadd.f32 0.0, %v2283
    %2285 = vmatmul.f32.gmra.mxu0 %v1678
    %v2286 = vpop.f32.mrf.mxu0
    %v2287 = vadd.f32 0.0, %v2286
    %2288 = vmatmul.f32.gmra.mxu0 %v1680
    %v2289 = vpop.f32.mrf.mxu0
    %v2290 = vadd.f32 0.0, %v2289
    %2291 = vmatmul.f32.gmra.mxu0 %v1682
    %v2292 = vpop.f32.mrf.mxu0
    %v2293 = vadd.f32 0.0, %v2292
    %2294 = vmatmul.f32.gmra.mxu0 %v1684
    %v2295 = vpop.f32.mrf.mxu0
    %v2296 = vadd.f32 0.0, %v2295
    %2297 = vmatmul.f32.gmra.mxu0 %v1686
    %v2298 = vpop.f32.mrf.mxu0
    %v2299 = vadd.f32 0.0, %v2298
    %2300 = vmatmul.f32.gmra.mxu0 %v1688
    %v2301 = vpop.f32.mrf.mxu0
    %v2302 = vadd.f32 0.0, %v2301
    %2303 = vmatmul.f32.gmra.mxu0 %v1690
    %v2304 = vpop.f32.mrf.mxu0
    %v2305 = vadd.f32 0.0, %v2304
    %2306 = vmatmul.f32.gmra.mxu0 %v1692
    %v2307 = vpop.f32.mrf.mxu0
    %v2308 = vadd.f32 0.0, %v2307
    %2309 = vmatmul.f32.gmra.mxu0 %v1694
    %v2310 = vpop.f32.mrf.mxu0
    %v2311 = vadd.f32 0.0, %v2310
    %2312 = vmatmul.f32.gmra.mxu0 %v1696
    %v2313 = vpop.f32.mrf.mxu0
    %v2314 = vadd.f32 0.0, %v2313
    %2315 = vmatmul.f32.gmra.mxu0 %v1698
    %v2316 = vpop.f32.mrf.mxu0
    %v2317 = vadd.f32 0.0, %v2316
    %2318 = vmatmul.f32.gmra.mxu0 %v1700
    %v2319 = vpop.f32.mrf.mxu0
    %v2320 = vadd.f32 0.0, %v2319
    %2321 = vmatmul.f32.gmra.mxu0 %v1702
    %v2322 = vpop.f32.mrf.mxu0
    %v2323 = vadd.f32 0.0, %v2322
    %2324 = vmatmul.f32.gmra.mxu0 %v1704
    %v2325 = vpop.f32.mrf.mxu0
    %v2326 = vadd.f32 0.0, %v2325
    %2327 = vmatmul.f32.gmra.mxu0 %v1706
    %v2328 = vpop.f32.mrf.mxu0
    %v2329 = vadd.f32 0.0, %v2328
    %2330 = vmatmul.f32.gmra.mxu0 %v1708
    %v2331 = vpop.f32.mrf.mxu0
    %v2332 = vadd.f32 0.0, %v2331
    %2333 = vdwg.mxu0
    %v2334 = vadd.f32 %v983, %v1746
    %v2335 = vadd.f32 %v1084, %v1847
    %v2336 = vadd.f32 %v1185, %v1948
    %v2337 = vadd.f32 %v1286, %v2049
    %v2338 = vadd.f32 %v1387, %v2150
    %v2339 = vadd.f32 %v1488, %v2251
    %v2340 = vadd.f32 %v986, %v1749
    %v2341 = vadd.f32 %v1087, %v1850
    %v2342 = vadd.f32 %v1188, %v1951
    %v2343 = vadd.f32 %v1289, %v2052
    %v2344 = vadd.f32 %v1390, %v2153
    %v2345 = vadd.f32 %v1491, %v2254
    %v2346 = vadd.f32 %v989, %v1752
    %v2347 = vadd.f32 %v1090, %v1853
    %v2348 = vadd.f32 %v1191, %v1954
    %v2349 = vadd.f32 %v1292, %v2055
    %v2350 = vadd.f32 %v1393, %v2156
    %v2351 = vadd.f32 %v1494, %v2257
    %v2352 = vadd.f32 %v992, %v1755
    %v2353 = vadd.f32 %v1093, %v1856
    %v2354 = vadd.f32 %v1194, %v1957
    %v2355 = vadd.f32 %v1295, %v2058
    %v2356 = vadd.f32 %v1396, %v2159
    %v2357 = vadd.f32 %v1497, %v2260
    %v2358 = vadd.f32 %v995, %v1758
    %v2359 = vadd.f32 %v1096, %v1859
    %v2360 = vadd.f32 %v1197, %v1960
    %v2361 = vadd.f32 %v1298, %v2061
    %v2362 = vadd.f32 %v1399, %v2162
    %v2363 = vadd.f32 %v1500, %v2263
    %v2364 = vadd.f32 %v998, %v1761
    %v2365 = vadd.f32 %v1099, %v1862
    %v2366 = vadd.f32 %v1200, %v1963
    %v2367 = vadd.f32 %v1301, %v2064
    %v2368 = vadd.f32 %v1402, %v2165
    %v2369 = vadd.f32 %v1503, %v2266
    %v2370 = vadd.f32 %v1001, %v1764
    %v2371 = vadd.f32 %v1102, %v1865
    %v2372 = vadd.f32 %v1203, %v1966
    %v2373 = vadd.f32 %v1304, %v2067
    %v2374 = vadd.f32 %v1405, %v2168
    %v2375 = vadd.f32 %v1506, %v2269
    %v2376 = vadd.f32 %v1004, %v1767
    %v2377 = vadd.f32 %v1105, %v1868
    %v2378 = vadd.f32 %v1206, %v1969
    %v2379 = vadd.f32 %v1307, %v2070
    %v2380 = vadd.f32 %v1408, %v2171
    %v2381 = vadd.f32 %v1509, %v2272
    %v2382 = vadd.f32 %v1007, %v1770
    %v2383 = vadd.f32 %v1108, %v1871
    %v2384 = vadd.f32 %v1209, %v1972
    %v2385 = vadd.f32 %v1310, %v2073
    %v2386 = vadd.f32 %v1411, %v2174
    %v2387 = vadd.f32 %v1512, %v2275
    %v2388 = vadd.f32 %v1010, %v1773
    %v2389 = vadd.f32 %v1111, %v1874
    %v2390 = vadd.f32 %v1212, %v1975
    %v2391 = vadd.f32 %v1313, %v2076
    %v2392 = vadd.f32 %v1414, %v2177
    %v2393 = vadd.f32 %v1515, %v2278
    %v2394 = vadd.f32 %v1013, %v1776
    %v2395 = vadd.f32 %v1114, %v1877
    %v2396 = vadd.f32 %v1215, %v1978
    %v2397 = vadd.f32 %v1316, %v2079
    %v2398 = vadd.f32 %v1417, %v2180
    %v2399 = vadd.f32 %v1518, %v2281
    %v2400 = vadd.f32 %v1016, %v1779
    %v2401 = vadd.f32 %v1117, %v1880
    %v2402 = vadd.f32 %v1218, %v1981
    %v2403 = vadd.f32 %v1319, %v2082
    %v2404 = vadd.f32 %v1420, %v2183
    %v2405 = vadd.f32 %v1521, %v2284
    %v2406 = vadd.f32 %v1019, %v1782
    %v2407 = vadd.f32 %v1120, %v1883
    %v2408 = vadd.f32 %v1221, %v1984
    %v2409 = vadd.f32 %v1322, %v2085
    %v2410 = vadd.f32 %v1423, %v2186
    %v2411 = vadd.f32 %v1524, %v2287
    %v2412 = vadd.f32 %v1022, %v1785
    %v2413 = vadd.f32 %v1123, %v1886
    %v2414 = vadd.f32 %v1224, %v1987
    %v2415 = vadd.f32 %v1325, %v2088
    %v2416 = vadd.f32 %v1426, %v2189
    %v2417 = vadd.f32 %v1527, %v2290
    %v2418 = vadd.f32 %v1025, %v1788
    %v2419 = vadd.f32 %v1126, %v1889
    %v2420 = vadd.f32 %v1227, %v1990
    %v2421 = vadd.f32 %v1328, %v2091
    %v2422 = vadd.f32 %v1429, %v2192
    %v2423 = vadd.f32 %v1530, %v2293
    %v2424 = vadd.f32 %v1028, %v1791
    %v2425 = vadd.f32 %v1129, %v1892
    %v2426 = vadd.f32 %v1230, %v1993
    %v2427 = vadd.f32 %v1331, %v2094
    %v2428 = vadd.f32 %v1432, %v2195
    %v2429 = vadd.f32 %v1533, %v2296
    %v2430 = vadd.f32 %v1031, %v1794
    %v2431 = vadd.f32 %v1132, %v1895
    %v2432 = vadd.f32 %v1233, %v1996
    %v2433 = vadd.f32 %v1334, %v2097
    %v2434 = vadd.f32 %v1435, %v2198
    %v2435 = vadd.f32 %v1536, %v2299
    %v2436 = vadd.f32 %v1034, %v1797
    %v2437 = vadd.f32 %v1135, %v1898
    %v2438 = vadd.f32 %v1236, %v1999
    %v2439 = vadd.f32 %v1337, %v2100
    %v2440 = vadd.f32 %v1438, %v2201
    %v2441 = vadd.f32 %v1539, %v2302
    %v2442 = vadd.f32 %v1037, %v1800
    %v2443 = vadd.f32 %v1138, %v1901
    %v2444 = vadd.f32 %v1239, %v2002
    %v2445 = vadd.f32 %v1340, %v2103
    %v2446 = vadd.f32 %v1441, %v2204
    %v2447 = vadd.f32 %v1542, %v2305
    %v2448 = vadd.f32 %v1040, %v1803
    %v2449 = vadd.f32 %v1141, %v1904
    %v2450 = vadd.f32 %v1242, %v2005
    %v2451 = vadd.f32 %v1343, %v2106
    %v2452 = vadd.f32 %v1444, %v2207
    %v2453 = vadd.f32 %v1545, %v2308
    %v2454 = vadd.f32 %v1043, %v1806
    %v2455 = vadd.f32 %v1144, %v1907
    %v2456 = vadd.f32 %v1245, %v2008
    %v2457 = vadd.f32 %v1346, %v2109
    %v2458 = vadd.f32 %v1447, %v2210
    %v2459 = vadd.f32 %v1548, %v2311
    %v2460 = vadd.f32 %v1046, %v1809
    %v2461 = vadd.f32 %v1147, %v1910
    %v2462 = vadd.f32 %v1248, %v2011
    %v2463 = vadd.f32 %v1349, %v2112
    %v2464 = vadd.f32 %v1450, %v2213
    %v2465 = vadd.f32 %v1551, %v2314
    %v2466 = vadd.f32 %v1049, %v1812
    %v2467 = vadd.f32 %v1150, %v1913
    %v2468 = vadd.f32 %v1251, %v2014
    %v2469 = vadd.f32 %v1352, %v2115
    %v2470 = vadd.f32 %v1453, %v2216
    %v2471 = vadd.f32 %v1554, %v2317
    %v2472 = vadd.f32 %v1052, %v1815
    %v2473 = vadd.f32 %v1153, %v1916
    %v2474 = vadd.f32 %v1254, %v2017
    %v2475 = vadd.f32 %v1355, %v2118
    %v2476 = vadd.f32 %v1456, %v2219
    %v2477 = vadd.f32 %v1557, %v2320
    %v2478 = vadd.f32 %v1055, %v1818
    %v2479 = vadd.f32 %v1156, %v1919
    %v2480 = vadd.f32 %v1257, %v2020
    %v2481 = vadd.f32 %v1358, %v2121
    %v2482 = vadd.f32 %v1459, %v2222
    %v2483 = vadd.f32 %v1560, %v2323
    %v2484 = vadd.f32 %v1058, %v1821
    %v2485 = vadd.f32 %v1159, %v1922
    %v2486 = vadd.f32 %v1260, %v2023
    %v2487 = vadd.f32 %v1361, %v2124
    %v2488 = vadd.f32 %v1462, %v2225
    %v2489 = vadd.f32 %v1563, %v2326
    %v2490 = vadd.f32 %v1061, %v1824
    %v2491 = vadd.f32 %v1162, %v1925
    %v2492 = vadd.f32 %v1263, %v2026
    %v2493 = vadd.f32 %v1364, %v2127
    %v2494 = vadd.f32 %v1465, %v2228
    %v2495 = vadd.f32 %v1566, %v2329
    %v2496 = vadd.f32 %v1064, %v1827
    %v2497 = vadd.f32 %v1165, %v1928
    %v2498 = vadd.f32 %v1266, %v2029
    %v2499 = vadd.f32 %v1367, %v2130
    %v2500 = vadd.f32 %v1468, %v2231
    %v2501 = vadd.f32 %v1569, %v2332
    %s2502 = scalar_lea.vmem [#allocation2], 576
    %v2503 = vld [vmem:[%s2502] sm:$0xff]
    %v2504 = vld [vmem:[%s2502 + $0x8] sm:$0xff]
    %v2505 = vld [vmem:[%s2502 + $0x10] sm:$0xff]
    %v2506 = vld [vmem:[%s2502 + $0x18] sm:$0xff]
    %v2507 = vld [vmem:[%s2502 + $0x20] sm:$0xff]
    %v2508 = vld [vmem:[%s2502 + $0x28] sm:$0xff]
    %v2509 = vld [vmem:[%s2502 + $0x30] sm:$0xff]
    %v2510 = vld [vmem:[%s2502 + $0x38] sm:$0xff]
    %v2511 = vld [vmem:[%s2502 + $0x40] sm:$0xff]
    %v2512 = vld [vmem:[%s2502 + $0x48] sm:$0xff]
    %v2513 = vld [vmem:[%s2502 + $0x50] sm:$0xff]
    %v2514 = vld [vmem:[%s2502 + $0x58] sm:$0xff]
    %v2515 = vld [vmem:[%s2502 + $0x60] sm:$0xff]
    %v2516 = vld [vmem:[%s2502 + $0x68] sm:$0xff]
    %v2517 = vld [vmem:[%s2502 + $0x70] sm:$0xff]
    %v2518 = vld [vmem:[%s2502 + $0x78] sm:$0xff]
    %v2519 = vld [vmem:[%s2502 + $0x80] sm:$0xff]
    %v2520 = vld [vmem:[%s2502 + $0x88] sm:$0xff]
    %v2521 = vld [vmem:[%s2502 + $0x90] sm:$0xf]
    %v2522 = vld [vmem:[%s2502 + $0x98] sm:$0xf]
    %v2523 = vld [vmem:[%s2502 + $0xa0] sm:$0xf]
    %v2524 = vld [vmem:[%s2502 + $0xa8] sm:$0xf]
    %v2525 = vld [vmem:[%s2502 + $0xb0] sm:$0xf]
    %v2526 = vld [vmem:[%s2502 + $0xb8] sm:$0xf]
    %vm2527 = vcmask 1044480
    %v2528 = vrot.slane %v44, 3
    %v2529 = vrot.slane %v45, 3
    %v2530 = vsel %vm2527, %v2528, %v2529
    %v2531 = vrot.slane %v46, 3
    %v2532 = vsel %vm2527, %v2529, %v2531
    %v2533 = vrot.slane %v47, 3
    %v2534 = vsel %vm2527, %v2531, %v2533
    %v2535 = vrot.slane %v48, 3
    %v2536 = vsel %vm2527, %v2533, %v2535
    %v2537 = vrot.slane %v49, 3
    %v2538 = vsel %vm2527, %v2535, %v2537
    %v2539 = vrot.slane %v50, 3
    %v2540 = vsel %vm2527, %v2537, %v2539
    %v2541 = vrot.slane %v51, 3
    %v2542 = vsel %vm2527, %v2539, %v2541
    %v2543 = vrot.slane %v52, 3
    %v2544 = vsel %vm2527, %v2541, %v2543
    %v2545 = vrot.slane %v53, 3
    %v2546 = vsel %vm2527, %v2543, %v2545
    %v2547 = vrot.slane %v54, 3
    %v2548 = vsel %vm2527, %v2545, %v2547
    %v2549 = vrot.slane %v55, 3
    %v2550 = vsel %vm2527, %v2547, %v2549
    %v2551 = vrot.slane %v56, 3
    %v2552 = vsel %vm2527, %v2549, %v2551
    %v2553 = vrot.slane %v57, 3
    %v2554 = vsel %vm2527, %v2551, %v2553
    %v2555 = vrot.slane %v58, 3
    %v2556 = vsel %vm2527, %v2553, %v2555
    %v2557 = vrot.slane %v59, 3
    %v2558 = vsel %vm2527, %v2555, %v2557
    %v2559 = vrot.slane %v60, 3
    %v2560 = vsel %vm2527, %v2557, %v2559
    %v2561 = vrot.slane %v61, 3
    %v2562 = vsel %vm2527, %v2559, %v2561
    %v2563 = vrot.slane %v62, 3
    %v2564 = vsel %vm2527, %v2561, %v2563
    %v2565 = vrot.slane %v63, 3
    %v2566 = vsel %vm2527, %v2563, %v2565
    %v2567 = vrot.slane %v64, 3
    %v2568 = vsel %vm2527, %v2565, %v2567
    %v2569 = vrot.slane %v65, 3
    %v2570 = vsel %vm2527, %v2567, %v2569
    %v2571 = vrot.slane %v66, 3
    %v2572 = vsel %vm2527, %v2569, %v2571
    %v2573 = vrot.slane %v67, 3
    %v2574 = vsel %vm2527, %v2571, %v2573
    %v2575 = vrot.slane %v68, 3
    %v2576 = vsel %vm2527, %v2573, %v2575
    %v2577 = vrot.slane %v69, 3
    %v2578 = vsel %vm2527, %v2575, %v2577
    %v2579 = vrot.slane %v70, 3
    %v2580 = vsel %vm2527, %v2577, %v2579
    %v2581 = vrot.slane %v71, 3
    %v2582 = vsel %vm2527, %v2579, %v2581
    %v2583 = vrot.slane %v72, 3
    %v2584 = vsel %vm2527, %v2581, %v2583
    %v2585 = vsel %vm209, %v2530, 0
    %v2587 = vsel %vm209, %v2532, 0
    %v2589 = vsel %vm209, %v2534, 0
    %v2591 = vsel %vm209, %v2536, 0
    %v2593 = vsel %vm209, %v2538, 0
    %v2595 = vsel %vm209, %v2540, 0
    %v2597 = vsel %vm209, %v2542, 0
    %v2599 = vsel %vm209, %v2544, 0
    %v2601 = vsel %vm209, %v2546, 0
    %v2603 = vsel %vm209, %v2548, 0
    %v2605 = vsel %vm209, %v2550, 0
    %v2607 = vsel %vm209, %v2552, 0
    %v2609 = vsel %vm209, %v2554, 0
    %v2611 = vsel %vm209, %v2556, 0
    %v2613 = vsel %vm209, %v2558, 0
    %v2615 = vsel %vm209, %v2560, 0
    %v2617 = vsel %vm209, %v2562, 0
    %v2619 = vsel %vm209, %v2564, 0
    %v2621 = vsel %vm209, %v2566, 0
    %v2623 = vsel %vm209, %v2568, 0
    %v2625 = vsel %vm209, %v2570, 0
    %v2627 = vsel %vm209, %v2572, 0
    %v2629 = vsel %vm209, %v2574, 0
    %v2631 = vsel %vm209, %v2576, 0
    %v2633 = vsel %vm209, %v2578, 0
    %v2635 = vsel %vm209, %v2580, 0
    %v2637 = vsel %vm209, %v2582, 0
    %v2639 = vsel %vm209, %v2584, 0
    %v2642 = vsel %vm266, %v2521, 0
    %v2645 = vsel %vm266, %v2522, 0
    %v2648 = vsel %vm266, %v2523, 0
    %v2651 = vsel %vm266, %v2524, 0
    %v2654 = vsel %vm266, %v2525, 0
    %v2657 = vsel %vm266, %v2526, 0
    %2659 = vmatpush.msra.mxu0 0.0
    %2660 = vmatpush.msra.mxu0 0.0
    %2661 = vmatpush.msra.mxu0 0.0
    %2662 = vmatpush.msra.mxu0 0.0
    %2663 = vmatpush.msra.mxu0 0.0
    %2664 = vmatpush.msra.mxu0 0.0
    %2665 = vmatpush.msra.mxu0 0.0
    %2666 = vmatpush.msra.mxu0 0.0
    %2667 = vmatpush.msra.mxu0 0.0
    %2668 = vmatpush.msra.mxu0 0.0
    %2669 = vmatpush.msra.mxu0 0.0
    %2670 = vmatpush.msra.mxu0 0.0
    %2671 = vmatpush.msra.mxu0 %v2642
    %2672 = vmatpush.msra.mxu0 %v2515
    %2673 = vmatpush.msra.mxu0 %v2509
    %2674 = vmatpush.msra.mxu0 %v2503
    %2675 = vmatmul.f32.gmra.mxu0 %v2585
    %v2676 = vpop.f32.mrf.mxu0
    %v2677 = vadd.f32 0.0, %v2676
    %2678 = vmatmul.f32.gmra.mxu0 %v2587
    %v2679 = vpop.f32.mrf.mxu0
    %v2680 = vadd.f32 0.0, %v2679
    %2681 = vmatmul.f32.gmra.mxu0 %v2589
    %v2682 = vpop.f32.mrf.mxu0
    %v2683 = vadd.f32 0.0, %v2682
    %2684 = vmatmul.f32.gmra.mxu0 %v2591
    %v2685 = vpop.f32.mrf.mxu0
    %v2686 = vadd.f32 0.0, %v2685
    %2687 = vmatmul.f32.gmra.mxu0 %v2593
    %v2688 = vpop.f32.mrf.mxu0
    %v2689 = vadd.f32 0.0, %v2688
    %2690 = vmatmul.f32.gmra.mxu0 %v2595
    %v2691 = vpop.f32.mrf.mxu0
    %v2692 = vadd.f32 0.0, %v2691
    %2693 = vmatmul.f32.gmra.mxu0 %v2597
    %v2694 = vpop.f32.mrf.mxu0
    %v2695 = vadd.f32 0.0, %v2694
    %2696 = vmatmul.f32.gmra.mxu0 %v2599
    %v2697 = vpop.f32.mrf.mxu0
    %v2698 = vadd.f32 0.0, %v2697
    %2699 = vmatmul.f32.gmra.mxu0 %v2601
    %v2700 = vpop.f32.mrf.mxu0
    %v2701 = vadd.f32 0.0, %v2700
    %2702 = vmatmul.f32.gmra.mxu0 %v2603
    %v2703 = vpop.f32.mrf.mxu0
    %v2704 = vadd.f32 0.0, %v2703
    %2705 = vmatmul.f32.gmra.mxu0 %v2605
    %v2706 = vpop.f32.mrf.mxu0
    %v2707 = vadd.f32 0.0, %v2706
    %2708 = vmatmul.f32.gmra.mxu0 %v2607
    %v2709 = vpop.f32.mrf.mxu0
    %v2710 = vadd.f32 0.0, %v2709
    %2711 = vmatmul.f32.gmra.mxu0 %v2609
    %v2712 = vpop.f32.mrf.mxu0
    %v2713 = vadd.f32 0.0, %v2712
    %2714 = vmatmul.f32.gmra.mxu0 %v2611
    %v2715 = vpop.f32.mrf.mxu0
    %v2716 = vadd.f32 0.0, %v2715
    %2717 = vmatmul.f32.gmra.mxu0 %v2613
    %v2718 = vpop.f32.mrf.mxu0
    %v2719 = vadd.f32 0.0, %v2718
    %2720 = vmatmul.f32.gmra.mxu0 %v2615
    %v2721 = vpop.f32.mrf.mxu0
    %v2722 = vadd.f32 0.0, %v2721
    %2723 = vmatmul.f32.gmra.mxu0 %v2617
    %v2724 = vpop.f32.mrf.mxu0
    %v2725 = vadd.f32 0.0, %v2724
    %2726 = vmatmul.f32.gmra.mxu0 %v2619
    %v2727 = vpop.f32.mrf.mxu0
    %v2728 = vadd.f32 0.0, %v2727
    %2729 = vmatmul.f32.gmra.mxu0 %v2621
    %v2730 = vpop.f32.mrf.mxu0
    %v2731 = vadd.f32 0.0, %v2730
    %2732 = vmatmul.f32.gmra.mxu0 %v2623
    %v2733 = vpop.f32.mrf.mxu0
    %v2734 = vadd.f32 0.0, %v2733
    %2735 = vmatmul.f32.gmra.mxu0 %v2625
    %v2736 = vpop.f32.mrf.mxu0
    %v2737 = vadd.f32 0.0, %v2736
    %2738 = vmatmul.f32.gmra.mxu0 %v2627
    %v2739 = vpop.f32.mrf.mxu0
    %v2740 = vadd.f32 0.0, %v2739
    %2741 = vmatmul.f32.gmra.mxu0 %v2629
    %v2742 = vpop.f32.mrf.mxu0
    %v2743 = vadd.f32 0.0, %v2742
    %2744 = vmatmul.f32.gmra.mxu0 %v2631
    %v2745 = vpop.f32.mrf.mxu0
    %v2746 = vadd.f32 0.0, %v2745
    %2747 = vmatmul.f32.gmra.mxu0 %v2633
    %v2748 = vpop.f32.mrf.mxu0
    %v2749 = vadd.f32 0.0, %v2748
    %2750 = vmatmul.f32.gmra.mxu0 %v2635
    %v2751 = vpop.f32.mrf.mxu0
    %v2752 = vadd.f32 0.0, %v2751
    %2753 = vmatmul.f32.gmra.mxu0 %v2637
    %v2754 = vpop.f32.mrf.mxu0
    %v2755 = vadd.f32 0.0, %v2754
    %2756 = vmatmul.f32.gmra.mxu0 %v2639
    %v2757 = vpop.f32.mrf.mxu0
    %v2758 = vadd.f32 0.0, %v2757
    %2759 = vdwg.mxu0
    %2760 = vmatpush.msra.mxu0 0.0
    %2761 = vmatpush.msra.mxu0 0.0
    %2762 = vmatpush.msra.mxu0 0.0
    %2763 = vmatpush.msra.mxu0 0.0
    %2764 = vmatpush.msra.mxu0 0.0
    %2765 = vmatpush.msra.mxu0 0.0
    %2766 = vmatpush.msra.mxu0 0.0
    %2767 = vmatpush.msra.mxu0 0.0
    %2768 = vmatpush.msra.mxu0 0.0
    %2769 = vmatpush.msra.mxu0 0.0
    %2770 = vmatpush.msra.mxu0 0.0
    %2771 = vmatpush.msra.mxu0 0.0
    %2772 = vmatpush.msra.mxu0 %v2645
    %2773 = vmatpush.msra.mxu0 %v2516
    %2774 = vmatpush.msra.mxu0 %v2510
    %2775 = vmatpush.msra.mxu0 %v2504
    %2776 = vmatmul.f32.gmra.mxu0 %v2585
    %v2777 = vpop.f32.mrf.mxu0
    %v2778 = vadd.f32 0.0, %v2777
    %2779 = vmatmul.f32.gmra.mxu0 %v2587
    %v2780 = vpop.f32.mrf.mxu0
    %v2781 = vadd.f32 0.0, %v2780
    %2782 = vmatmul.f32.gmra.mxu0 %v2589
    %v2783 = vpop.f32.mrf.mxu0
    %v2784 = vadd.f32 0.0, %v2783
    %2785 = vmatmul.f32.gmra.mxu0 %v2591
    %v2786 = vpop.f32.mrf.mxu0
    %v2787 = vadd.f32 0.0, %v2786
    %2788 = vmatmul.f32.gmra.mxu0 %v2593
    %v2789 = vpop.f32.mrf.mxu0
    %v2790 = vadd.f32 0.0, %v2789
    %2791 = vmatmul.f32.gmra.mxu0 %v2595
    %v2792 = vpop.f32.mrf.mxu0
    %v2793 = vadd.f32 0.0, %v2792
    %2794 = vmatmul.f32.gmra.mxu0 %v2597
    %v2795 = vpop.f32.mrf.mxu0
    %v2796 = vadd.f32 0.0, %v2795
    %2797 = vmatmul.f32.gmra.mxu0 %v2599
    %v2798 = vpop.f32.mrf.mxu0
    %v2799 = vadd.f32 0.0, %v2798
    %2800 = vmatmul.f32.gmra.mxu0 %v2601
    %v2801 = vpop.f32.mrf.mxu0
    %v2802 = vadd.f32 0.0, %v2801
    %2803 = vmatmul.f32.gmra.mxu0 %v2603
    %v2804 = vpop.f32.mrf.mxu0
    %v2805 = vadd.f32 0.0, %v2804
    %2806 = vmatmul.f32.gmra.mxu0 %v2605
    %v2807 = vpop.f32.mrf.mxu0
    %v2808 = vadd.f32 0.0, %v2807
    %2809 = vmatmul.f32.gmra.mxu0 %v2607
    %v2810 = vpop.f32.mrf.mxu0
    %v2811 = vadd.f32 0.0, %v2810
    %2812 = vmatmul.f32.gmra.mxu0 %v2609
    %v2813 = vpop.f32.mrf.mxu0
    %v2814 = vadd.f32 0.0, %v2813
    %2815 = vmatmul.f32.gmra.mxu0 %v2611
    %v2816 = vpop.f32.mrf.mxu0
    %v2817 = vadd.f32 0.0, %v2816
    %2818 = vmatmul.f32.gmra.mxu0 %v2613
    %v2819 = vpop.f32.mrf.mxu0
    %v2820 = vadd.f32 0.0, %v2819
    %2821 = vmatmul.f32.gmra.mxu0 %v2615
    %v2822 = vpop.f32.mrf.mxu0
    %v2823 = vadd.f32 0.0, %v2822
    %2824 = vmatmul.f32.gmra.mxu0 %v2617
    %v2825 = vpop.f32.mrf.mxu0
    %v2826 = vadd.f32 0.0, %v2825
    %2827 = vmatmul.f32.gmra.mxu0 %v2619
    %v2828 = vpop.f32.mrf.mxu0
    %v2829 = vadd.f32 0.0, %v2828
    %2830 = vmatmul.f32.gmra.mxu0 %v2621
    %v2831 = vpop.f32.mrf.mxu0
    %v2832 = vadd.f32 0.0, %v2831
    %2833 = vmatmul.f32.gmra.mxu0 %v2623
    %v2834 = vpop.f32.mrf.mxu0
    %v2835 = vadd.f32 0.0, %v2834
    %2836 = vmatmul.f32.gmra.mxu0 %v2625
    %v2837 = vpop.f32.mrf.mxu0
    %v2838 = vadd.f32 0.0, %v2837
    %2839 = vmatmul.f32.gmra.mxu0 %v2627
    %v2840 = vpop.f32.mrf.mxu0
    %v2841 = vadd.f32 0.0, %v2840
    %2842 = vmatmul.f32.gmra.mxu0 %v2629
    %v2843 = vpop.f32.mrf.mxu0
    %v2844 = vadd.f32 0.0, %v2843
    %2845 = vmatmul.f32.gmra.mxu0 %v2631
    %v2846 = vpop.f32.mrf.mxu0
    %v2847 = vadd.f32 0.0, %v2846
    %2848 = vmatmul.f32.gmra.mxu0 %v2633
    %v2849 = vpop.f32.mrf.mxu0
    %v2850 = vadd.f32 0.0, %v2849
    %2851 = vmatmul.f32.gmra.mxu0 %v2635
    %v2852 = vpop.f32.mrf.mxu0
    %v2853 = vadd.f32 0.0, %v2852
    %2854 = vmatmul.f32.gmra.mxu0 %v2637
    %v2855 = vpop.f32.mrf.mxu0
    %v2856 = vadd.f32 0.0, %v2855
    %2857 = vmatmul.f32.gmra.mxu0 %v2639
    %v2858 = vpop.f32.mrf.mxu0
    %v2859 = vadd.f32 0.0, %v2858
    %2860 = vdwg.mxu0
    %2861 = vmatpush.msra.mxu0 0.0
    %2862 = vmatpush.msra.mxu0 0.0
    %2863 = vmatpush.msra.mxu0 0.0
    %2864 = vmatpush.msra.mxu0 0.0
    %2865 = vmatpush.msra.mxu0 0.0
    %2866 = vmatpush.msra.mxu0 0.0
    %2867 = vmatpush.msra.mxu0 0.0
    %2868 = vmatpush.msra.mxu0 0.0
    %2869 = vmatpush.msra.mxu0 0.0
    %2870 = vmatpush.msra.mxu0 0.0
    %2871 = vmatpush.msra.mxu0 0.0
    %2872 = vmatpush.msra.mxu0 0.0
    %2873 = vmatpush.msra.mxu0 %v2648
    %2874 = vmatpush.msra.mxu0 %v2517
    %2875 = vmatpush.msra.mxu0 %v2511
    %2876 = vmatpush.msra.mxu0 %v2505
    %2877 = vmatmul.f32.gmra.mxu0 %v2585
    %v2878 = vpop.f32.mrf.mxu0
    %v2879 = vadd.f32 0.0, %v2878
    %2880 = vmatmul.f32.gmra.mxu0 %v2587
    %v2881 = vpop.f32.mrf.mxu0
    %v2882 = vadd.f32 0.0, %v2881
    %2883 = vmatmul.f32.gmra.mxu0 %v2589
    %v2884 = vpop.f32.mrf.mxu0
    %v2885 = vadd.f32 0.0, %v2884
    %2886 = vmatmul.f32.gmra.mxu0 %v2591
    %v2887 = vpop.f32.mrf.mxu0
    %v2888 = vadd.f32 0.0, %v2887
    %2889 = vmatmul.f32.gmra.mxu0 %v2593
    %v2890 = vpop.f32.mrf.mxu0
    %v2891 = vadd.f32 0.0, %v2890
    %2892 = vmatmul.f32.gmra.mxu0 %v2595
    %v2893 = vpop.f32.mrf.mxu0
    %v2894 = vadd.f32 0.0, %v2893
    %2895 = vmatmul.f32.gmra.mxu0 %v2597
    %v2896 = vpop.f32.mrf.mxu0
    %v2897 = vadd.f32 0.0, %v2896
    %2898 = vmatmul.f32.gmra.mxu0 %v2599
    %v2899 = vpop.f32.mrf.mxu0
    %v2900 = vadd.f32 0.0, %v2899
    %2901 = vmatmul.f32.gmra.mxu0 %v2601
    %v2902 = vpop.f32.mrf.mxu0
    %v2903 = vadd.f32 0.0, %v2902
    %2904 = vmatmul.f32.gmra.mxu0 %v2603
    %v2905 = vpop.f32.mrf.mxu0
    %v2906 = vadd.f32 0.0, %v2905
    %2907 = vmatmul.f32.gmra.mxu0 %v2605
    %v2908 = vpop.f32.mrf.mxu0
    %v2909 = vadd.f32 0.0, %v2908
    %2910 = vmatmul.f32.gmra.mxu0 %v2607
    %v2911 = vpop.f32.mrf.mxu0
    %v2912 = vadd.f32 0.0, %v2911
    %2913 = vmatmul.f32.gmra.mxu0 %v2609
    %v2914 = vpop.f32.mrf.mxu0
    %v2915 = vadd.f32 0.0, %v2914
    %2916 = vmatmul.f32.gmra.mxu0 %v2611
    %v2917 = vpop.f32.mrf.mxu0
    %v2918 = vadd.f32 0.0, %v2917
    %2919 = vmatmul.f32.gmra.mxu0 %v2613
    %v2920 = vpop.f32.mrf.mxu0
    %v2921 = vadd.f32 0.0, %v2920
    %2922 = vmatmul.f32.gmra.mxu0 %v2615
    %v2923 = vpop.f32.mrf.mxu0
    %v2924 = vadd.f32 0.0, %v2923
    %2925 = vmatmul.f32.gmra.mxu0 %v2617
    %v2926 = vpop.f32.mrf.mxu0
    %v2927 = vadd.f32 0.0, %v2926
    %2928 = vmatmul.f32.gmra.mxu0 %v2619
    %v2929 = vpop.f32.mrf.mxu0
    %v2930 = vadd.f32 0.0, %v2929
    %2931 = vmatmul.f32.gmra.mxu0 %v2621
    %v2932 = vpop.f32.mrf.mxu0
    %v2933 = vadd.f32 0.0, %v2932
    %2934 = vmatmul.f32.gmra.mxu0 %v2623
    %v2935 = vpop.f32.mrf.mxu0
    %v2936 = vadd.f32 0.0, %v2935
    %2937 = vmatmul.f32.gmra.mxu0 %v2625
    %v2938 = vpop.f32.mrf.mxu0
    %v2939 = vadd.f32 0.0, %v2938
    %2940 = vmatmul.f32.gmra.mxu0 %v2627
    %v2941 = vpop.f32.mrf.mxu0
    %v2942 = vadd.f32 0.0, %v2941
    %2943 = vmatmul.f32.gmra.mxu0 %v2629
    %v2944 = vpop.f32.mrf.mxu0
    %v2945 = vadd.f32 0.0, %v2944
    %2946 = vmatmul.f32.gmra.mxu0 %v2631
    %v2947 = vpop.f32.mrf.mxu0
    %v2948 = vadd.f32 0.0, %v2947
    %2949 = vmatmul.f32.gmra.mxu0 %v2633
    %v2950 = vpop.f32.mrf.mxu0
    %v2951 = vadd.f32 0.0, %v2950
    %2952 = vmatmul.f32.gmra.mxu0 %v2635
    %v2953 = vpop.f32.mrf.mxu0
    %v2954 = vadd.f32 0.0, %v2953
    %2955 = vmatmul.f32.gmra.mxu0 %v2637
    %v2956 = vpop.f32.mrf.mxu0
    %v2957 = vadd.f32 0.0, %v2956
    %2958 = vmatmul.f32.gmra.mxu0 %v2639
    %v2959 = vpop.f32.mrf.mxu0
    %v2960 = vadd.f32 0.0, %v2959
    %2961 = vdwg.mxu0
    %2962 = vmatpush.msra.mxu0 0.0
    %2963 = vmatpush.msra.mxu0 0.0
    %2964 = vmatpush.msra.mxu0 0.0
    %2965 = vmatpush.msra.mxu0 0.0
    %2966 = vmatpush.msra.mxu0 0.0
    %2967 = vmatpush.msra.mxu0 0.0
    %2968 = vmatpush.msra.mxu0 0.0
    %2969 = vmatpush.msra.mxu0 0.0
    %2970 = vmatpush.msra.mxu0 0.0
    %2971 = vmatpush.msra.mxu0 0.0
    %2972 = vmatpush.msra.mxu0 0.0
    %2973 = vmatpush.msra.mxu0 0.0
    %2974 = vmatpush.msra.mxu0 %v2651
    %2975 = vmatpush.msra.mxu0 %v2518
    %2976 = vmatpush.msra.mxu0 %v2512
    %2977 = vmatpush.msra.mxu0 %v2506
    %2978 = vmatmul.f32.gmra.mxu0 %v2585
    %v2979 = vpop.f32.mrf.mxu0
    %v2980 = vadd.f32 0.0, %v2979
    %2981 = vmatmul.f32.gmra.mxu0 %v2587
    %v2982 = vpop.f32.mrf.mxu0
    %v2983 = vadd.f32 0.0, %v2982
    %2984 = vmatmul.f32.gmra.mxu0 %v2589
    %v2985 = vpop.f32.mrf.mxu0
    %v2986 = vadd.f32 0.0, %v2985
    %2987 = vmatmul.f32.gmra.mxu0 %v2591
    %v2988 = vpop.f32.mrf.mxu0
    %v2989 = vadd.f32 0.0, %v2988
    %2990 = vmatmul.f32.gmra.mxu0 %v2593
    %v2991 = vpop.f32.mrf.mxu0
    %v2992 = vadd.f32 0.0, %v2991
    %2993 = vmatmul.f32.gmra.mxu0 %v2595
    %v2994 = vpop.f32.mrf.mxu0
    %v2995 = vadd.f32 0.0, %v2994
    %2996 = vmatmul.f32.gmra.mxu0 %v2597
    %v2997 = vpop.f32.mrf.mxu0
    %v2998 = vadd.f32 0.0, %v2997
    %2999 = vmatmul.f32.gmra.mxu0 %v2599
    %v3000 = vpop.f32.mrf.mxu0
    %v3001 = vadd.f32 0.0, %v3000
    %3002 = vmatmul.f32.gmra.mxu0 %v2601
    %v3003 = vpop.f32.mrf.mxu0
    %v3004 = vadd.f32 0.0, %v3003
    %3005 = vmatmul.f32.gmra.mxu0 %v2603
    %v3006 = vpop.f32.mrf.mxu0
    %v3007 = vadd.f32 0.0, %v3006
    %3008 = vmatmul.f32.gmra.mxu0 %v2605
    %v3009 = vpop.f32.mrf.mxu0
    %v3010 = vadd.f32 0.0, %v3009
    %3011 = vmatmul.f32.gmra.mxu0 %v2607
    %v3012 = vpop.f32.mrf.mxu0
    %v3013 = vadd.f32 0.0, %v3012
    %3014 = vmatmul.f32.gmra.mxu0 %v2609
    %v3015 = vpop.f32.mrf.mxu0
    %v3016 = vadd.f32 0.0, %v3015
    %3017 = vmatmul.f32.gmra.mxu0 %v2611
    %v3018 = vpop.f32.mrf.mxu0
    %v3019 = vadd.f32 0.0, %v3018
    %3020 = vmatmul.f32.gmra.mxu0 %v2613
    %v3021 = vpop.f32.mrf.mxu0
    %v3022 = vadd.f32 0.0, %v3021
    %3023 = vmatmul.f32.gmra.mxu0 %v2615
    %v3024 = vpop.f32.mrf.mxu0
    %v3025 = vadd.f32 0.0, %v3024
    %3026 = vmatmul.f32.gmra.mxu0 %v2617
    %v3027 = vpop.f32.mrf.mxu0
    %v3028 = vadd.f32 0.0, %v3027
    %3029 = vmatmul.f32.gmra.mxu0 %v2619
    %v3030 = vpop.f32.mrf.mxu0
    %v3031 = vadd.f32 0.0, %v3030
    %3032 = vmatmul.f32.gmra.mxu0 %v2621
    %v3033 = vpop.f32.mrf.mxu0
    %v3034 = vadd.f32 0.0, %v3033
    %3035 = vmatmul.f32.gmra.mxu0 %v2623
    %v3036 = vpop.f32.mrf.mxu0
    %v3037 = vadd.f32 0.0, %v3036
    %3038 = vmatmul.f32.gmra.mxu0 %v2625
    %v3039 = vpop.f32.mrf.mxu0
    %v3040 = vadd.f32 0.0, %v3039
    %3041 = vmatmul.f32.gmra.mxu0 %v2627
    %v3042 = vpop.f32.mrf.mxu0
    %v3043 = vadd.f32 0.0, %v3042
    %3044 = vmatmul.f32.gmra.mxu0 %v2629
    %v3045 = vpop.f32.mrf.mxu0
    %v3046 = vadd.f32 0.0, %v3045
    %3047 = vmatmul.f32.gmra.mxu0 %v2631
    %v3048 = vpop.f32.mrf.mxu0
    %v3049 = vadd.f32 0.0, %v3048
    %3050 = vmatmul.f32.gmra.mxu0 %v2633
    %v3051 = vpop.f32.mrf.mxu0
    %v3052 = vadd.f32 0.0, %v3051
    %3053 = vmatmul.f32.gmra.mxu0 %v2635
    %v3054 = vpop.f32.mrf.mxu0
    %v3055 = vadd.f32 0.0, %v3054
    %3056 = vmatmul.f32.gmra.mxu0 %v2637
    %v3057 = vpop.f32.mrf.mxu0
    %v3058 = vadd.f32 0.0, %v3057
    %3059 = vmatmul.f32.gmra.mxu0 %v2639
    %v3060 = vpop.f32.mrf.mxu0
    %v3061 = vadd.f32 0.0, %v3060
    %3062 = vdwg.mxu0
    %3063 = vmatpush.msra.mxu0 0.0
    %3064 = vmatpush.msra.mxu0 0.0
    %3065 = vmatpush.msra.mxu0 0.0
    %3066 = vmatpush.msra.mxu0 0.0
    %3067 = vmatpush.msra.mxu0 0.0
    %3068 = vmatpush.msra.mxu0 0.0
    %3069 = vmatpush.msra.mxu0 0.0
    %3070 = vmatpush.msra.mxu0 0.0
    %3071 = vmatpush.msra.mxu0 0.0
    %3072 = vmatpush.msra.mxu0 0.0
    %3073 = vmatpush.msra.mxu0 0.0
    %3074 = vmatpush.msra.mxu0 0.0
    %3075 = vmatpush.msra.mxu0 %v2654
    %3076 = vmatpush.msra.mxu0 %v2519
    %3077 = vmatpush.msra.mxu0 %v2513
    %3078 = vmatpush.msra.mxu0 %v2507
    %3079 = vmatmul.f32.gmra.mxu0 %v2585
    %v3080 = vpop.f32.mrf.mxu0
    %v3081 = vadd.f32 0.0, %v3080
    %3082 = vmatmul.f32.gmra.mxu0 %v2587
    %v3083 = vpop.f32.mrf.mxu0
    %v3084 = vadd.f32 0.0, %v3083
    %3085 = vmatmul.f32.gmra.mxu0 %v2589
    %v3086 = vpop.f32.mrf.mxu0
    %v3087 = vadd.f32 0.0, %v3086
    %3088 = vmatmul.f32.gmra.mxu0 %v2591
    %v3089 = vpop.f32.mrf.mxu0
    %v3090 = vadd.f32 0.0, %v3089
    %3091 = vmatmul.f32.gmra.mxu0 %v2593
    %v3092 = vpop.f32.mrf.mxu0
    %v3093 = vadd.f32 0.0, %v3092
    %3094 = vmatmul.f32.gmra.mxu0 %v2595
    %v3095 = vpop.f32.mrf.mxu0
    %v3096 = vadd.f32 0.0, %v3095
    %3097 = vmatmul.f32.gmra.mxu0 %v2597
    %v3098 = vpop.f32.mrf.mxu0
    %v3099 = vadd.f32 0.0, %v3098
    %3100 = vmatmul.f32.gmra.mxu0 %v2599
    %v3101 = vpop.f32.mrf.mxu0
    %v3102 = vadd.f32 0.0, %v3101
    %3103 = vmatmul.f32.gmra.mxu0 %v2601
    %v3104 = vpop.f32.mrf.mxu0
    %v3105 = vadd.f32 0.0, %v3104
    %3106 = vmatmul.f32.gmra.mxu0 %v2603
    %v3107 = vpop.f32.mrf.mxu0
    %v3108 = vadd.f32 0.0, %v3107
    %3109 = vmatmul.f32.gmra.mxu0 %v2605
    %v3110 = vpop.f32.mrf.mxu0
    %v3111 = vadd.f32 0.0, %v3110
    %3112 = vmatmul.f32.gmra.mxu0 %v2607
    %v3113 = vpop.f32.mrf.mxu0
    %v3114 = vadd.f32 0.0, %v3113
    %3115 = vmatmul.f32.gmra.mxu0 %v2609
    %v3116 = vpop.f32.mrf.mxu0
    %v3117 = vadd.f32 0.0, %v3116
    %3118 = vmatmul.f32.gmra.mxu0 %v2611
    %v3119 = vpop.f32.mrf.mxu0
    %v3120 = vadd.f32 0.0, %v3119
    %3121 = vmatmul.f32.gmra.mxu0 %v2613
    %v3122 = vpop.f32.mrf.mxu0
    %v3123 = vadd.f32 0.0, %v3122
    %3124 = vmatmul.f32.gmra.mxu0 %v2615
    %v3125 = vpop.f32.mrf.mxu0
    %v3126 = vadd.f32 0.0, %v3125
    %3127 = vmatmul.f32.gmra.mxu0 %v2617
    %v3128 = vpop.f32.mrf.mxu0
    %v3129 = vadd.f32 0.0, %v3128
    %3130 = vmatmul.f32.gmra.mxu0 %v2619
    %v3131 = vpop.f32.mrf.mxu0
    %v3132 = vadd.f32 0.0, %v3131
    %3133 = vmatmul.f32.gmra.mxu0 %v2621
    %v3134 = vpop.f32.mrf.mxu0
    %v3135 = vadd.f32 0.0, %v3134
    %3136 = vmatmul.f32.gmra.mxu0 %v2623
    %v3137 = vpop.f32.mrf.mxu0
    %v3138 = vadd.f32 0.0, %v3137
    %3139 = vmatmul.f32.gmra.mxu0 %v2625
    %v3140 = vpop.f32.mrf.mxu0
    %v3141 = vadd.f32 0.0, %v3140
    %3142 = vmatmul.f32.gmra.mxu0 %v2627
    %v3143 = vpop.f32.mrf.mxu0
    %v3144 = vadd.f32 0.0, %v3143
    %3145 = vmatmul.f32.gmra.mxu0 %v2629
    %v3146 = vpop.f32.mrf.mxu0
    %v3147 = vadd.f32 0.0, %v3146
    %3148 = vmatmul.f32.gmra.mxu0 %v2631
    %v3149 = vpop.f32.mrf.mxu0
    %v3150 = vadd.f32 0.0, %v3149
    %3151 = vmatmul.f32.gmra.mxu0 %v2633
    %v3152 = vpop.f32.mrf.mxu0
    %v3153 = vadd.f32 0.0, %v3152
    %3154 = vmatmul.f32.gmra.mxu0 %v2635
    %v3155 = vpop.f32.mrf.mxu0
    %v3156 = vadd.f32 0.0, %v3155
    %3157 = vmatmul.f32.gmra.mxu0 %v2637
    %v3158 = vpop.f32.mrf.mxu0
    %v3159 = vadd.f32 0.0, %v3158
    %3160 = vmatmul.f32.gmra.mxu0 %v2639
    %v3161 = vpop.f32.mrf.mxu0
    %v3162 = vadd.f32 0.0, %v3161
    %3163 = vdwg.mxu0
    %3164 = vmatpush.msra.mxu0 0.0
    %3165 = vmatpush.msra.mxu0 0.0
    %3166 = vmatpush.msra.mxu0 0.0
    %3167 = vmatpush.msra.mxu0 0.0
    %3168 = vmatpush.msra.mxu0 0.0
    %3169 = vmatpush.msra.mxu0 0.0
    %3170 = vmatpush.msra.mxu0 0.0
    %3171 = vmatpush.msra.mxu0 0.0
    %3172 = vmatpush.msra.mxu0 0.0
    %3173 = vmatpush.msra.mxu0 0.0
    %3174 = vmatpush.msra.mxu0 0.0
    %3175 = vmatpush.msra.mxu0 0.0
    %3176 = vmatpush.msra.mxu0 %v2657
    %3177 = vmatpush.msra.mxu0 %v2520
    %3178 = vmatpush.msra.mxu0 %v2514
    %3179 = vmatpush.msra.mxu0 %v2508
    %3180 = vmatmul.f32.gmra.mxu0 %v2585
    %v3181 = vpop.f32.mrf.mxu0
    %v3182 = vadd.f32 0.0, %v3181
    %3183 = vmatmul.f32.gmra.mxu0 %v2587
    %v3184 = vpop.f32.mrf.mxu0
    %v3185 = vadd.f32 0.0, %v3184
    %3186 = vmatmul.f32.gmra.mxu0 %v2589
    %v3187 = vpop.f32.mrf.mxu0
    %v3188 = vadd.f32 0.0, %v3187
    %3189 = vmatmul.f32.gmra.mxu0 %v2591
    %v3190 = vpop.f32.mrf.mxu0
    %v3191 = vadd.f32 0.0, %v3190
    %3192 = vmatmul.f32.gmra.mxu0 %v2593
    %v3193 = vpop.f32.mrf.mxu0
    %v3194 = vadd.f32 0.0, %v3193
    %3195 = vmatmul.f32.gmra.mxu0 %v2595
    %v3196 = vpop.f32.mrf.mxu0
    %v3197 = vadd.f32 0.0, %v3196
    %3198 = vmatmul.f32.gmra.mxu0 %v2597
    %v3199 = vpop.f32.mrf.mxu0
    %v3200 = vadd.f32 0.0, %v3199
    %3201 = vmatmul.f32.gmra.mxu0 %v2599
    %v3202 = vpop.f32.mrf.mxu0
    %v3203 = vadd.f32 0.0, %v3202
    %3204 = vmatmul.f32.gmra.mxu0 %v2601
    %v3205 = vpop.f32.mrf.mxu0
    %v3206 = vadd.f32 0.0, %v3205
    %3207 = vmatmul.f32.gmra.mxu0 %v2603
    %v3208 = vpop.f32.mrf.mxu0
    %v3209 = vadd.f32 0.0, %v3208
    %3210 = vmatmul.f32.gmra.mxu0 %v2605
    %v3211 = vpop.f32.mrf.mxu0
    %v3212 = vadd.f32 0.0, %v3211
    %3213 = vmatmul.f32.gmra.mxu0 %v2607
    %v3214 = vpop.f32.mrf.mxu0
    %v3215 = vadd.f32 0.0, %v3214
    %3216 = vmatmul.f32.gmra.mxu0 %v2609
    %v3217 = vpop.f32.mrf.mxu0
    %v3218 = vadd.f32 0.0, %v3217
    %3219 = vmatmul.f32.gmra.mxu0 %v2611
    %v3220 = vpop.f32.mrf.mxu0
    %v3221 = vadd.f32 0.0, %v3220
    %3222 = vmatmul.f32.gmra.mxu0 %v2613
    %v3223 = vpop.f32.mrf.mxu0
    %v3224 = vadd.f32 0.0, %v3223
    %3225 = vmatmul.f32.gmra.mxu0 %v2615
    %v3226 = vpop.f32.mrf.mxu0
    %v3227 = vadd.f32 0.0, %v3226
    %3228 = vmatmul.f32.gmra.mxu0 %v2617
    %v3229 = vpop.f32.mrf.mxu0
    %v3230 = vadd.f32 0.0, %v3229
    %3231 = vmatmul.f32.gmra.mxu0 %v2619
    %v3232 = vpop.f32.mrf.mxu0
    %v3233 = vadd.f32 0.0, %v3232
    %3234 = vmatmul.f32.gmra.mxu0 %v2621
    %v3235 = vpop.f32.mrf.mxu0
    %v3236 = vadd.f32 0.0, %v3235
    %3237 = vmatmul.f32.gmra.mxu0 %v2623
    %v3238 = vpop.f32.mrf.mxu0
    %v3239 = vadd.f32 0.0, %v3238
    %3240 = vmatmul.f32.gmra.mxu0 %v2625
    %v3241 = vpop.f32.mrf.mxu0
    %v3242 = vadd.f32 0.0, %v3241
    %3243 = vmatmul.f32.gmra.mxu0 %v2627
    %v3244 = vpop.f32.mrf.mxu0
    %v3245 = vadd.f32 0.0, %v3244
    %3246 = vmatmul.f32.gmra.mxu0 %v2629
    %v3247 = vpop.f32.mrf.mxu0
    %v3248 = vadd.f32 0.0, %v3247
    %3249 = vmatmul.f32.gmra.mxu0 %v2631
    %v3250 = vpop.f32.mrf.mxu0
    %v3251 = vadd.f32 0.0, %v3250
    %3252 = vmatmul.f32.gmra.mxu0 %v2633
    %v3253 = vpop.f32.mrf.mxu0
    %v3254 = vadd.f32 0.0, %v3253
    %3255 = vmatmul.f32.gmra.mxu0 %v2635
    %v3256 = vpop.f32.mrf.mxu0
    %v3257 = vadd.f32 0.0, %v3256
    %3258 = vmatmul.f32.gmra.mxu0 %v2637
    %v3259 = vpop.f32.mrf.mxu0
    %v3260 = vadd.f32 0.0, %v3259
    %3261 = vmatmul.f32.gmra.mxu0 %v2639
    %v3262 = vpop.f32.mrf.mxu0
    %v3263 = vadd.f32 0.0, %v3262
    %3264 = vdwg.mxu0
    %v3265 = vadd.f32 %v2334, %v2677
    %v3266 = vadd.f32 %v2335, %v2778
    %v3267 = vadd.f32 %v2336, %v2879
    %v3268 = vadd.f32 %v2337, %v2980
    %v3269 = vadd.f32 %v2338, %v3081
    %v3270 = vadd.f32 %v2339, %v3182
    %v3271 = vadd.f32 %v2340, %v2680
    %v3272 = vadd.f32 %v2341, %v2781
    %v3273 = vadd.f32 %v2342, %v2882
    %v3274 = vadd.f32 %v2343, %v2983
    %v3275 = vadd.f32 %v2344, %v3084
    %v3276 = vadd.f32 %v2345, %v3185
    %v3277 = vadd.f32 %v2346, %v2683
    %v3278 = vadd.f32 %v2347, %v2784
    %v3279 = vadd.f32 %v2348, %v2885
    %v3280 = vadd.f32 %v2349, %v2986
    %v3281 = vadd.f32 %v2350, %v3087
    %v3282 = vadd.f32 %v2351, %v3188
    %v3283 = vadd.f32 %v2352, %v2686
    %v3284 = vadd.f32 %v2353, %v2787
    %v3285 = vadd.f32 %v2354, %v2888
    %v3286 = vadd.f32 %v2355, %v2989
    %v3287 = vadd.f32 %v2356, %v3090
    %v3288 = vadd.f32 %v2357, %v3191
    %v3289 = vadd.f32 %v2358, %v2689
    %v3290 = vadd.f32 %v2359, %v2790
    %v3291 = vadd.f32 %v2360, %v2891
    %v3292 = vadd.f32 %v2361, %v2992
    %v3293 = vadd.f32 %v2362, %v3093
    %v3294 = vadd.f32 %v2363, %v3194
    %v3295 = vadd.f32 %v2364, %v2692
    %v3296 = vadd.f32 %v2365, %v2793
    %v3297 = vadd.f32 %v2366, %v2894
    %v3298 = vadd.f32 %v2367, %v2995
    %v3299 = vadd.f32 %v2368, %v3096
    %v3300 = vadd.f32 %v2369, %v3197
    %v3301 = vadd.f32 %v2370, %v2695
    %v3302 = vadd.f32 %v2371, %v2796
    %v3303 = vadd.f32 %v2372, %v2897
    %v3304 = vadd.f32 %v2373, %v2998
    %v3305 = vadd.f32 %v2374, %v3099
    %v3306 = vadd.f32 %v2375, %v3200
    %v3307 = vadd.f32 %v2376, %v2698
    %v3308 = vadd.f32 %v2377, %v2799
    %v3309 = vadd.f32 %v2378, %v2900
    %v3310 = vadd.f32 %v2379, %v3001
    %v3311 = vadd.f32 %v2380, %v3102
    %v3312 = vadd.f32 %v2381, %v3203
    %v3313 = vadd.f32 %v2382, %v2701
    %v3314 = vadd.f32 %v2383, %v2802
    %v3315 = vadd.f32 %v2384, %v2903
    %v3316 = vadd.f32 %v2385, %v3004
    %v3317 = vadd.f32 %v2386, %v3105
    %v3318 = vadd.f32 %v2387, %v3206
    %v3319 = vadd.f32 %v2388, %v2704
    %v3320 = vadd.f32 %v2389, %v2805
    %v3321 = vadd.f32 %v2390, %v2906
    %v3322 = vadd.f32 %v2391, %v3007
    %v3323 = vadd.f32 %v2392, %v3108
    %v3324 = vadd.f32 %v2393, %v3209
    %v3325 = vadd.f32 %v2394, %v2707
    %v3326 = vadd.f32 %v2395, %v2808
    %v3327 = vadd.f32 %v2396, %v2909
    %v3328 = vadd.f32 %v2397, %v3010
    %v3329 = vadd.f32 %v2398, %v3111
    %v3330 = vadd.f32 %v2399, %v3212
    %v3331 = vadd.f32 %v2400, %v2710
    %v3332 = vadd.f32 %v2401, %v2811
    %v3333 = vadd.f32 %v2402, %v2912
    %v3334 = vadd.f32 %v2403, %v3013
    %v3335 = vadd.f32 %v2404, %v3114
    %v3336 = vadd.f32 %v2405, %v3215
    %v3337 = vadd.f32 %v2406, %v2713
    %v3338 = vadd.f32 %v2407, %v2814
    %v3339 = vadd.f32 %v2408, %v2915
    %v3340 = vadd.f32 %v2409, %v3016
    %v3341 = vadd.f32 %v2410, %v3117
    %v3342 = vadd.f32 %v2411, %v3218
    %v3343 = vadd.f32 %v2412, %v2716
    %v3344 = vadd.f32 %v2413, %v2817
    %v3345 = vadd.f32 %v2414, %v2918
    %v3346 = vadd.f32 %v2415, %v3019
    %v3347 = vadd.f32 %v2416, %v3120
    %v3348 = vadd.f32 %v2417, %v3221
    %v3349 = vadd.f32 %v2418, %v2719
    %v3350 = vadd.f32 %v2419, %v2820
    %v3351 = vadd.f32 %v2420, %v2921
    %v3352 = vadd.f32 %v2421, %v3022
    %v3353 = vadd.f32 %v2422, %v3123
    %v3354 = vadd.f32 %v2423, %v3224
    %v3355 = vadd.f32 %v2424, %v2722
    %v3356 = vadd.f32 %v2425, %v2823
    %v3357 = vadd.f32 %v2426, %v2924
    %v3358 = vadd.f32 %v2427, %v3025
    %v3359 = vadd.f32 %v2428, %v3126
    %v3360 = vadd.f32 %v2429, %v3227
    %v3361 = vadd.f32 %v2430, %v2725
    %v3362 = vadd.f32 %v2431, %v2826
    %v3363 = vadd.f32 %v2432, %v2927
    %v3364 = vadd.f32 %v2433, %v3028
    %v3365 = vadd.f32 %v2434, %v3129
    %v3366 = vadd.f32 %v2435, %v3230
    %v3367 = vadd.f32 %v2436, %v2728
    %v3368 = vadd.f32 %v2437, %v2829
    %v3369 = vadd.f32 %v2438, %v2930
    %v3370 = vadd.f32 %v2439, %v3031
    %v3371 = vadd.f32 %v2440, %v3132
    %v3372 = vadd.f32 %v2441, %v3233
    %v3373 = vadd.f32 %v2442, %v2731
    %v3374 = vadd.f32 %v2443, %v2832
    %v3375 = vadd.f32 %v2444, %v2933
    %v3376 = vadd.f32 %v2445, %v3034
    %v3377 = vadd.f32 %v2446, %v3135
    %v3378 = vadd.f32 %v2447, %v3236
    %v3379 = vadd.f32 %v2448, %v2734
    %v3380 = vadd.f32 %v2449, %v2835
    %v3381 = vadd.f32 %v2450, %v2936
    %v3382 = vadd.f32 %v2451, %v3037
    %v3383 = vadd.f32 %v2452, %v3138
    %v3384 = vadd.f32 %v2453, %v3239
    %v3385 = vadd.f32 %v2454, %v2737
    %v3386 = vadd.f32 %v2455, %v2838
    %v3387 = vadd.f32 %v2456, %v2939
    %v3388 = vadd.f32 %v2457, %v3040
    %v3389 = vadd.f32 %v2458, %v3141
    %v3390 = vadd.f32 %v2459, %v3242
    %v3391 = vadd.f32 %v2460, %v2740
    %v3392 = vadd.f32 %v2461, %v2841
    %v3393 = vadd.f32 %v2462, %v2942
    %v3394 = vadd.f32 %v2463, %v3043
    %v3395 = vadd.f32 %v2464, %v3144
    %v3396 = vadd.f32 %v2465, %v3245
    %v3397 = vadd.f32 %v2466, %v2743
    %v3398 = vadd.f32 %v2467, %v2844
    %v3399 = vadd.f32 %v2468, %v2945
    %v3400 = vadd.f32 %v2469, %v3046
    %v3401 = vadd.f32 %v2470, %v3147
    %v3402 = vadd.f32 %v2471, %v3248
    %v3403 = vadd.f32 %v2472, %v2746
    %v3404 = vadd.f32 %v2473, %v2847
    %v3405 = vadd.f32 %v2474, %v2948
    %v3406 = vadd.f32 %v2475, %v3049
    %v3407 = vadd.f32 %v2476, %v3150
    %v3408 = vadd.f32 %v2477, %v3251
    %v3409 = vadd.f32 %v2478, %v2749
    %v3410 = vadd.f32 %v2479, %v2850
    %v3411 = vadd.f32 %v2480, %v2951
    %v3412 = vadd.f32 %v2481, %v3052
    %v3413 = vadd.f32 %v2482, %v3153
    %v3414 = vadd.f32 %v2483, %v3254
    %v3415 = vadd.f32 %v2484, %v2752
    %v3416 = vadd.f32 %v2485, %v2853
    %v3417 = vadd.f32 %v2486, %v2954
    %v3418 = vadd.f32 %v2487, %v3055
    %v3419 = vadd.f32 %v2488, %v3156
    %v3420 = vadd.f32 %v2489, %v3257
    %v3421 = vadd.f32 %v2490, %v2755
    %v3422 = vadd.f32 %v2491, %v2856
    %v3423 = vadd.f32 %v2492, %v2957
    %v3424 = vadd.f32 %v2493, %v3058
    %v3425 = vadd.f32 %v2494, %v3159
    %v3426 = vadd.f32 %v2495, %v3260
    %v3427 = vadd.f32 %v2496, %v2758
    %v3428 = vadd.f32 %v2497, %v2859
    %v3429 = vadd.f32 %v2498, %v2960
    %v3430 = vadd.f32 %v2499, %v3061
    %v3431 = vadd.f32 %v2500, %v3162
    %v3432 = vadd.f32 %v2501, %v3263
    %s3433 = scalar_lea.vmem [#allocation2], 768
    %v3434 = vld [vmem:[%s3433] sm:$0xff]
    %v3435 = vld [vmem:[%s3433 + $0x8] sm:$0xff]
    %v3436 = vld [vmem:[%s3433 + $0x10] sm:$0xff]
    %v3437 = vld [vmem:[%s3433 + $0x18] sm:$0xff]
    %v3438 = vld [vmem:[%s3433 + $0x20] sm:$0xff]
    %v3439 = vld [vmem:[%s3433 + $0x28] sm:$0xff]
    %v3440 = vld [vmem:[%s3433 + $0x30] sm:$0xff]
    %v3441 = vld [vmem:[%s3433 + $0x38] sm:$0xff]
    %v3442 = vld [vmem:[%s3433 + $0x40] sm:$0xff]
    %v3443 = vld [vmem:[%s3433 + $0x48] sm:$0xff]
    %v3444 = vld [vmem:[%s3433 + $0x50] sm:$0xff]
    %v3445 = vld [vmem:[%s3433 + $0x58] sm:$0xff]
    %v3446 = vld [vmem:[%s3433 + $0x60] sm:$0xff]
    %v3447 = vld [vmem:[%s3433 + $0x68] sm:$0xff]
    %v3448 = vld [vmem:[%s3433 + $0x70] sm:$0xff]
    %v3449 = vld [vmem:[%s3433 + $0x78] sm:$0xff]
    %v3450 = vld [vmem:[%s3433 + $0x80] sm:$0xff]
    %v3451 = vld [vmem:[%s3433 + $0x88] sm:$0xff]
    %v3452 = vld [vmem:[%s3433 + $0x90] sm:$0xf]
    %v3453 = vld [vmem:[%s3433 + $0x98] sm:$0xf]
    %v3454 = vld [vmem:[%s3433 + $0xa0] sm:$0xf]
    %v3455 = vld [vmem:[%s3433 + $0xa8] sm:$0xf]
    %v3456 = vld [vmem:[%s3433 + $0xb0] sm:$0xf]
    %v3457 = vld [vmem:[%s3433 + $0xb8] sm:$0xf]
    %v3458 = vrot.slane %v44, 4
    %v3459 = vrot.slane %v45, 4
    %v3460 = vsel %vm266, %v3458, %v3459
    %v3461 = vrot.slane %v46, 4
    %v3462 = vsel %vm266, %v3459, %v3461
    %v3463 = vrot.slane %v47, 4
    %v3464 = vsel %vm266, %v3461, %v3463
    %v3465 = vrot.slane %v48, 4
    %v3466 = vsel %vm266, %v3463, %v3465
    %v3467 = vrot.slane %v49, 4
    %v3468 = vsel %vm266, %v3465, %v3467
    %v3469 = vrot.slane %v50, 4
    %v3470 = vsel %vm266, %v3467, %v3469
    %v3471 = vrot.slane %v51, 4
    %v3472 = vsel %vm266, %v3469, %v3471
    %v3473 = vrot.slane %v52, 4
    %v3474 = vsel %vm266, %v3471, %v3473
    %v3475 = vrot.slane %v53, 4
    %v3476 = vsel %vm266, %v3473, %v3475
    %v3477 = vrot.slane %v54, 4
    %v3478 = vsel %vm266, %v3475, %v3477
    %v3479 = vrot.slane %v55, 4
    %v3480 = vsel %vm266, %v3477, %v3479
    %v3481 = vrot.slane %v56, 4
    %v3482 = vsel %vm266, %v3479, %v3481
    %v3483 = vrot.slane %v57, 4
    %v3484 = vsel %vm266, %v3481, %v3483
    %v3485 = vrot.slane %v58, 4
    %v3486 = vsel %vm266, %v3483, %v3485
    %v3487 = vrot.slane %v59, 4
    %v3488 = vsel %vm266, %v3485, %v3487
    %v3489 = vrot.slane %v60, 4
    %v3490 = vsel %vm266, %v3487, %v3489
    %v3491 = vrot.slane %v61, 4
    %v3492 = vsel %vm266, %v3489, %v3491
    %v3493 = vrot.slane %v62, 4
    %v3494 = vsel %vm266, %v3491, %v3493
    %v3495 = vrot.slane %v63, 4
    %v3496 = vsel %vm266, %v3493, %v3495
    %v3497 = vrot.slane %v64, 4
    %v3498 = vsel %vm266, %v3495, %v3497
    %v3499 = vrot.slane %v65, 4
    %v3500 = vsel %vm266, %v3497, %v3499
    %v3501 = vrot.slane %v66, 4
    %v3502 = vsel %vm266, %v3499, %v3501
    %v3503 = vrot.slane %v67, 4
    %v3504 = vsel %vm266, %v3501, %v3503
    %v3505 = vrot.slane %v68, 4
    %v3506 = vsel %vm266, %v3503, %v3505
    %v3507 = vrot.slane %v69, 4
    %v3508 = vsel %vm266, %v3505, %v3507
    %v3509 = vrot.slane %v70, 4
    %v3510 = vsel %vm266, %v3507, %v3509
    %v3511 = vrot.slane %v71, 4
    %v3512 = vsel %vm266, %v3509, %v3511
    %v3513 = vrot.slane %v72, 4
    %v3514 = vsel %vm266, %v3511, %v3513
    %v3515 = vsel %vm209, %v3460, 0
    %v3517 = vsel %vm209, %v3462, 0
    %v3519 = vsel %vm209, %v3464, 0
    %v3521 = vsel %vm209, %v3466, 0
    %v3523 = vsel %vm209, %v3468, 0
    %v3525 = vsel %vm209, %v3470, 0
    %v3527 = vsel %vm209, %v3472, 0
    %v3529 = vsel %vm209, %v3474, 0
    %v3531 = vsel %vm209, %v3476, 0
    %v3533 = vsel %vm209, %v3478, 0
    %v3535 = vsel %vm209, %v3480, 0
    %v3537 = vsel %vm209, %v3482, 0
    %v3539 = vsel %vm209, %v3484, 0
    %v3541 = vsel %vm209, %v3486, 0
    %v3543 = vsel %vm209, %v3488, 0
    %v3545 = vsel %vm209, %v3490, 0
    %v3547 = vsel %vm209, %v3492, 0
    %v3549 = vsel %vm209, %v3494, 0
    %v3551 = vsel %vm209, %v3496, 0
    %v3553 = vsel %vm209, %v3498, 0
    %v3555 = vsel %vm209, %v3500, 0
    %v3557 = vsel %vm209, %v3502, 0
    %v3559 = vsel %vm209, %v3504, 0
    %v3561 = vsel %vm209, %v3506, 0
    %v3563 = vsel %vm209, %v3508, 0
    %v3565 = vsel %vm209, %v3510, 0
    %v3567 = vsel %vm209, %v3512, 0
    %v3569 = vsel %vm209, %v3514, 0
    %v3572 = vsel %vm266, %v3452, 0
    %v3575 = vsel %vm266, %v3453, 0
    %v3578 = vsel %vm266, %v3454, 0
    %v3581 = vsel %vm266, %v3455, 0
    %v3584 = vsel %vm266, %v3456, 0
    %v3587 = vsel %vm266, %v3457, 0
    %3589 = vmatpush.msra.mxu0 0.0
    %3590 = vmatpush.msra.mxu0 0.0
    %3591 = vmatpush.msra.mxu0 0.0
    %3592 = vmatpush.msra.mxu0 0.0
    %3593 = vmatpush.msra.mxu0 0.0
    %3594 = vmatpush.msra.mxu0 0.0
    %3595 = vmatpush.msra.mxu0 0.0
    %3596 = vmatpush.msra.mxu0 0.0
    %3597 = vmatpush.msra.mxu0 0.0
    %3598 = vmatpush.msra.mxu0 0.0
    %3599 = vmatpush.msra.mxu0 0.0
    %3600 = vmatpush.msra.mxu0 0.0
    %3601 = vmatpush.msra.mxu0 %v3572
    %3602 = vmatpush.msra.mxu0 %v3446
    %3603 = vmatpush.msra.mxu0 %v3440
    %3604 = vmatpush.msra.mxu0 %v3434
    %3605 = vmatmul.f32.gmra.mxu0 %v3515
    %v3606 = vpop.f32.mrf.mxu0
    %v3607 = vadd.f32 0.0, %v3606
    %3608 = vmatmul.f32.gmra.mxu0 %v3517
    %v3609 = vpop.f32.mrf.mxu0
    %v3610 = vadd.f32 0.0, %v3609
    %3611 = vmatmul.f32.gmra.mxu0 %v3519
    %v3612 = vpop.f32.mrf.mxu0
    %v3613 = vadd.f32 0.0, %v3612
    %3614 = vmatmul.f32.gmra.mxu0 %v3521
    %v3615 = vpop.f32.mrf.mxu0
    %v3616 = vadd.f32 0.0, %v3615
    %3617 = vmatmul.f32.gmra.mxu0 %v3523
    %v3618 = vpop.f32.mrf.mxu0
    %v3619 = vadd.f32 0.0, %v3618
    %3620 = vmatmul.f32.gmra.mxu0 %v3525
    %v3621 = vpop.f32.mrf.mxu0
    %v3622 = vadd.f32 0.0, %v3621
    %3623 = vmatmul.f32.gmra.mxu0 %v3527
    %v3624 = vpop.f32.mrf.mxu0
    %v3625 = vadd.f32 0.0, %v3624
    %3626 = vmatmul.f32.gmra.mxu0 %v3529
    %v3627 = vpop.f32.mrf.mxu0
    %v3628 = vadd.f32 0.0, %v3627
    %3629 = vmatmul.f32.gmra.mxu0 %v3531
    %v3630 = vpop.f32.mrf.mxu0
    %v3631 = vadd.f32 0.0, %v3630
    %3632 = vmatmul.f32.gmra.mxu0 %v3533
    %v3633 = vpop.f32.mrf.mxu0
    %v3634 = vadd.f32 0.0, %v3633
    %3635 = vmatmul.f32.gmra.mxu0 %v3535
    %v3636 = vpop.f32.mrf.mxu0
    %v3637 = vadd.f32 0.0, %v3636
    %3638 = vmatmul.f32.gmra.mxu0 %v3537
    %v3639 = vpop.f32.mrf.mxu0
    %v3640 = vadd.f32 0.0, %v3639
    %3641 = vmatmul.f32.gmra.mxu0 %v3539
    %v3642 = vpop.f32.mrf.mxu0
    %v3643 = vadd.f32 0.0, %v3642
    %3644 = vmatmul.f32.gmra.mxu0 %v3541
    %v3645 = vpop.f32.mrf.mxu0
    %v3646 = vadd.f32 0.0, %v3645
    %3647 = vmatmul.f32.gmra.mxu0 %v3543
    %v3648 = vpop.f32.mrf.mxu0
    %v3649 = vadd.f32 0.0, %v3648
    %3650 = vmatmul.f32.gmra.mxu0 %v3545
    %v3651 = vpop.f32.mrf.mxu0
    %v3652 = vadd.f32 0.0, %v3651
    %3653 = vmatmul.f32.gmra.mxu0 %v3547
    %v3654 = vpop.f32.mrf.mxu0
    %v3655 = vadd.f32 0.0, %v3654
    %3656 = vmatmul.f32.gmra.mxu0 %v3549
    %v3657 = vpop.f32.mrf.mxu0
    %v3658 = vadd.f32 0.0, %v3657
    %3659 = vmatmul.f32.gmra.mxu0 %v3551
    %v3660 = vpop.f32.mrf.mxu0
    %v3661 = vadd.f32 0.0, %v3660
    %3662 = vmatmul.f32.gmra.mxu0 %v3553
    %v3663 = vpop.f32.mrf.mxu0
    %v3664 = vadd.f32 0.0, %v3663
    %3665 = vmatmul.f32.gmra.mxu0 %v3555
    %v3666 = vpop.f32.mrf.mxu0
    %v3667 = vadd.f32 0.0, %v3666
    %3668 = vmatmul.f32.gmra.mxu0 %v3557
    %v3669 = vpop.f32.mrf.mxu0
    %v3670 = vadd.f32 0.0, %v3669
    %3671 = vmatmul.f32.gmra.mxu0 %v3559
    %v3672 = vpop.f32.mrf.mxu0
    %v3673 = vadd.f32 0.0, %v3672
    %3674 = vmatmul.f32.gmra.mxu0 %v3561
    %v3675 = vpop.f32.mrf.mxu0
    %v3676 = vadd.f32 0.0, %v3675
    %3677 = vmatmul.f32.gmra.mxu0 %v3563
    %v3678 = vpop.f32.mrf.mxu0
    %v3679 = vadd.f32 0.0, %v3678
    %3680 = vmatmul.f32.gmra.mxu0 %v3565
    %v3681 = vpop.f32.mrf.mxu0
    %v3682 = vadd.f32 0.0, %v3681
    %3683 = vmatmul.f32.gmra.mxu0 %v3567
    %v3684 = vpop.f32.mrf.mxu0
    %v3685 = vadd.f32 0.0, %v3684
    %3686 = vmatmul.f32.gmra.mxu0 %v3569
    %v3687 = vpop.f32.mrf.mxu0
    %v3688 = vadd.f32 0.0, %v3687
    %3689 = vdwg.mxu0
    %3690 = vmatpush.msra.mxu0 0.0
    %3691 = vmatpush.msra.mxu0 0.0
    %3692 = vmatpush.msra.mxu0 0.0
    %3693 = vmatpush.msra.mxu0 0.0
    %3694 = vmatpush.msra.mxu0 0.0
    %3695 = vmatpush.msra.mxu0 0.0
    %3696 = vmatpush.msra.mxu0 0.0
    %3697 = vmatpush.msra.mxu0 0.0
    %3698 = vmatpush.msra.mxu0 0.0
    %3699 = vmatpush.msra.mxu0 0.0
    %3700 = vmatpush.msra.mxu0 0.0
    %3701 = vmatpush.msra.mxu0 0.0
    %3702 = vmatpush.msra.mxu0 %v3575
    %3703 = vmatpush.msra.mxu0 %v3447
    %3704 = vmatpush.msra.mxu0 %v3441
    %3705 = vmatpush.msra.mxu0 %v3435
    %3706 = vmatmul.f32.gmra.mxu0 %v3515
    %v3707 = vpop.f32.mrf.mxu0
    %v3708 = vadd.f32 0.0, %v3707
    %3709 = vmatmul.f32.gmra.mxu0 %v3517
    %v3710 = vpop.f32.mrf.mxu0
    %v3711 = vadd.f32 0.0, %v3710
    %3712 = vmatmul.f32.gmra.mxu0 %v3519
    %v3713 = vpop.f32.mrf.mxu0
    %v3714 = vadd.f32 0.0, %v3713
    %3715 = vmatmul.f32.gmra.mxu0 %v3521
    %v3716 = vpop.f32.mrf.mxu0
    %v3717 = vadd.f32 0.0, %v3716
    %3718 = vmatmul.f32.gmra.mxu0 %v3523
    %v3719 = vpop.f32.mrf.mxu0
    %v3720 = vadd.f32 0.0, %v3719
    %3721 = vmatmul.f32.gmra.mxu0 %v3525
    %v3722 = vpop.f32.mrf.mxu0
    %v3723 = vadd.f32 0.0, %v3722
    %3724 = vmatmul.f32.gmra.mxu0 %v3527
    %v3725 = vpop.f32.mrf.mxu0
    %v3726 = vadd.f32 0.0, %v3725
    %3727 = vmatmul.f32.gmra.mxu0 %v3529
    %v3728 = vpop.f32.mrf.mxu0
    %v3729 = vadd.f32 0.0, %v3728
    %3730 = vmatmul.f32.gmra.mxu0 %v3531
    %v3731 = vpop.f32.mrf.mxu0
    %v3732 = vadd.f32 0.0, %v3731
    %3733 = vmatmul.f32.gmra.mxu0 %v3533
    %v3734 = vpop.f32.mrf.mxu0
    %v3735 = vadd.f32 0.0, %v3734
    %3736 = vmatmul.f32.gmra.mxu0 %v3535
    %v3737 = vpop.f32.mrf.mxu0
    %v3738 = vadd.f32 0.0, %v3737
    %3739 = vmatmul.f32.gmra.mxu0 %v3537
    %v3740 = vpop.f32.mrf.mxu0
    %v3741 = vadd.f32 0.0, %v3740
    %3742 = vmatmul.f32.gmra.mxu0 %v3539
    %v3743 = vpop.f32.mrf.mxu0
    %v3744 = vadd.f32 0.0, %v3743
    %3745 = vmatmul.f32.gmra.mxu0 %v3541
    %v3746 = vpop.f32.mrf.mxu0
    %v3747 = vadd.f32 0.0, %v3746
    %3748 = vmatmul.f32.gmra.mxu0 %v3543
    %v3749 = vpop.f32.mrf.mxu0
    %v3750 = vadd.f32 0.0, %v3749
    %3751 = vmatmul.f32.gmra.mxu0 %v3545
    %v3752 = vpop.f32.mrf.mxu0
    %v3753 = vadd.f32 0.0, %v3752
    %3754 = vmatmul.f32.gmra.mxu0 %v3547
    %v3755 = vpop.f32.mrf.mxu0
    %v3756 = vadd.f32 0.0, %v3755
    %3757 = vmatmul.f32.gmra.mxu0 %v3549
    %v3758 = vpop.f32.mrf.mxu0
    %v3759 = vadd.f32 0.0, %v3758
    %3760 = vmatmul.f32.gmra.mxu0 %v3551
    %v3761 = vpop.f32.mrf.mxu0
    %v3762 = vadd.f32 0.0, %v3761
    %3763 = vmatmul.f32.gmra.mxu0 %v3553
    %v3764 = vpop.f32.mrf.mxu0
    %v3765 = vadd.f32 0.0, %v3764
    %3766 = vmatmul.f32.gmra.mxu0 %v3555
    %v3767 = vpop.f32.mrf.mxu0
    %v3768 = vadd.f32 0.0, %v3767
    %3769 = vmatmul.f32.gmra.mxu0 %v3557
    %v3770 = vpop.f32.mrf.mxu0
    %v3771 = vadd.f32 0.0, %v3770
    %3772 = vmatmul.f32.gmra.mxu0 %v3559
    %v3773 = vpop.f32.mrf.mxu0
    %v3774 = vadd.f32 0.0, %v3773
    %3775 = vmatmul.f32.gmra.mxu0 %v3561
    %v3776 = vpop.f32.mrf.mxu0
    %v3777 = vadd.f32 0.0, %v3776
    %3778 = vmatmul.f32.gmra.mxu0 %v3563
    %v3779 = vpop.f32.mrf.mxu0
    %v3780 = vadd.f32 0.0, %v3779
    %3781 = vmatmul.f32.gmra.mxu0 %v3565
    %v3782 = vpop.f32.mrf.mxu0
    %v3783 = vadd.f32 0.0, %v3782
    %3784 = vmatmul.f32.gmra.mxu0 %v3567
    %v3785 = vpop.f32.mrf.mxu0
    %v3786 = vadd.f32 0.0, %v3785
    %3787 = vmatmul.f32.gmra.mxu0 %v3569
    %v3788 = vpop.f32.mrf.mxu0
    %v3789 = vadd.f32 0.0, %v3788
    %3790 = vdwg.mxu0
    %3791 = vmatpush.msra.mxu0 0.0
    %3792 = vmatpush.msra.mxu0 0.0
    %3793 = vmatpush.msra.mxu0 0.0
    %3794 = vmatpush.msra.mxu0 0.0
    %3795 = vmatpush.msra.mxu0 0.0
    %3796 = vmatpush.msra.mxu0 0.0
    %3797 = vmatpush.msra.mxu0 0.0
    %3798 = vmatpush.msra.mxu0 0.0
    %3799 = vmatpush.msra.mxu0 0.0
    %3800 = vmatpush.msra.mxu0 0.0
    %3801 = vmatpush.msra.mxu0 0.0
    %3802 = vmatpush.msra.mxu0 0.0
    %3803 = vmatpush.msra.mxu0 %v3578
    %3804 = vmatpush.msra.mxu0 %v3448
    %3805 = vmatpush.msra.mxu0 %v3442
    %3806 = vmatpush.msra.mxu0 %v3436
    %3807 = vmatmul.f32.gmra.mxu0 %v3515
    %v3808 = vpop.f32.mrf.mxu0
    %v3809 = vadd.f32 0.0, %v3808
    %3810 = vmatmul.f32.gmra.mxu0 %v3517
    %v3811 = vpop.f32.mrf.mxu0
    %v3812 = vadd.f32 0.0, %v3811
    %3813 = vmatmul.f32.gmra.mxu0 %v3519
    %v3814 = vpop.f32.mrf.mxu0
    %v3815 = vadd.f32 0.0, %v3814
    %3816 = vmatmul.f32.gmra.mxu0 %v3521
    %v3817 = vpop.f32.mrf.mxu0
    %v3818 = vadd.f32 0.0, %v3817
    %3819 = vmatmul.f32.gmra.mxu0 %v3523
    %v3820 = vpop.f32.mrf.mxu0
    %v3821 = vadd.f32 0.0, %v3820
    %3822 = vmatmul.f32.gmra.mxu0 %v3525
    %v3823 = vpop.f32.mrf.mxu0
    %v3824 = vadd.f32 0.0, %v3823
    %3825 = vmatmul.f32.gmra.mxu0 %v3527
    %v3826 = vpop.f32.mrf.mxu0
    %v3827 = vadd.f32 0.0, %v3826
    %3828 = vmatmul.f32.gmra.mxu0 %v3529
    %v3829 = vpop.f32.mrf.mxu0
    %v3830 = vadd.f32 0.0, %v3829
    %3831 = vmatmul.f32.gmra.mxu0 %v3531
    %v3832 = vpop.f32.mrf.mxu0
    %v3833 = vadd.f32 0.0, %v3832
    %3834 = vmatmul.f32.gmra.mxu0 %v3533
    %v3835 = vpop.f32.mrf.mxu0
    %v3836 = vadd.f32 0.0, %v3835
    %3837 = vmatmul.f32.gmra.mxu0 %v3535
    %v3838 = vpop.f32.mrf.mxu0
    %v3839 = vadd.f32 0.0, %v3838
    %3840 = vmatmul.f32.gmra.mxu0 %v3537
    %v3841 = vpop.f32.mrf.mxu0
    %v3842 = vadd.f32 0.0, %v3841
    %3843 = vmatmul.f32.gmra.mxu0 %v3539
    %v3844 = vpop.f32.mrf.mxu0
    %v3845 = vadd.f32 0.0, %v3844
    %3846 = vmatmul.f32.gmra.mxu0 %v3541
    %v3847 = vpop.f32.mrf.mxu0
    %v3848 = vadd.f32 0.0, %v3847
    %3849 = vmatmul.f32.gmra.mxu0 %v3543
    %v3850 = vpop.f32.mrf.mxu0
    %v3851 = vadd.f32 0.0, %v3850
    %3852 = vmatmul.f32.gmra.mxu0 %v3545
    %v3853 = vpop.f32.mrf.mxu0
    %v3854 = vadd.f32 0.0, %v3853
    %3855 = vmatmul.f32.gmra.mxu0 %v3547
    %v3856 = vpop.f32.mrf.mxu0
    %v3857 = vadd.f32 0.0, %v3856
    %3858 = vmatmul.f32.gmra.mxu0 %v3549
    %v3859 = vpop.f32.mrf.mxu0
    %v3860 = vadd.f32 0.0, %v3859
    %3861 = vmatmul.f32.gmra.mxu0 %v3551
    %v3862 = vpop.f32.mrf.mxu0
    %v3863 = vadd.f32 0.0, %v3862
    %3864 = vmatmul.f32.gmra.mxu0 %v3553
    %v3865 = vpop.f32.mrf.mxu0
    %v3866 = vadd.f32 0.0, %v3865
    %3867 = vmatmul.f32.gmra.mxu0 %v3555
    %v3868 = vpop.f32.mrf.mxu0
    %v3869 = vadd.f32 0.0, %v3868
    %3870 = vmatmul.f32.gmra.mxu0 %v3557
    %v3871 = vpop.f32.mrf.mxu0
    %v3872 = vadd.f32 0.0, %v3871
    %3873 = vmatmul.f32.gmra.mxu0 %v3559
    %v3874 = vpop.f32.mrf.mxu0
    %v3875 = vadd.f32 0.0, %v3874
    %3876 = vmatmul.f32.gmra.mxu0 %v3561
    %v3877 = vpop.f32.mrf.mxu0
    %v3878 = vadd.f32 0.0, %v3877
    %3879 = vmatmul.f32.gmra.mxu0 %v3563
    %v3880 = vpop.f32.mrf.mxu0
    %v3881 = vadd.f32 0.0, %v3880
    %3882 = vmatmul.f32.gmra.mxu0 %v3565
    %v3883 = vpop.f32.mrf.mxu0
    %v3884 = vadd.f32 0.0, %v3883
    %3885 = vmatmul.f32.gmra.mxu0 %v3567
    %v3886 = vpop.f32.mrf.mxu0
    %v3887 = vadd.f32 0.0, %v3886
    %3888 = vmatmul.f32.gmra.mxu0 %v3569
    %v3889 = vpop.f32.mrf.mxu0
    %v3890 = vadd.f32 0.0, %v3889
    %3891 = vdwg.mxu0
    %3892 = vmatpush.msra.mxu0 0.0
    %3893 = vmatpush.msra.mxu0 0.0
    %3894 = vmatpush.msra.mxu0 0.0
    %3895 = vmatpush.msra.mxu0 0.0
    %3896 = vmatpush.msra.mxu0 0.0
    %3897 = vmatpush.msra.mxu0 0.0
    %3898 = vmatpush.msra.mxu0 0.0
    %3899 = vmatpush.msra.mxu0 0.0
    %3900 = vmatpush.msra.mxu0 0.0
    %3901 = vmatpush.msra.mxu0 0.0
    %3902 = vmatpush.msra.mxu0 0.0
    %3903 = vmatpush.msra.mxu0 0.0
    %3904 = vmatpush.msra.mxu0 %v3581
    %3905 = vmatpush.msra.mxu0 %v3449
    %3906 = vmatpush.msra.mxu0 %v3443
    %3907 = vmatpush.msra.mxu0 %v3437
    %3908 = vmatmul.f32.gmra.mxu0 %v3515
    %v3909 = vpop.f32.mrf.mxu0
    %v3910 = vadd.f32 0.0, %v3909
    %3911 = vmatmul.f32.gmra.mxu0 %v3517
    %v3912 = vpop.f32.mrf.mxu0
    %v3913 = vadd.f32 0.0, %v3912
    %3914 = vmatmul.f32.gmra.mxu0 %v3519
    %v3915 = vpop.f32.mrf.mxu0
    %v3916 = vadd.f32 0.0, %v3915
    %3917 = vmatmul.f32.gmra.mxu0 %v3521
    %v3918 = vpop.f32.mrf.mxu0
    %v3919 = vadd.f32 0.0, %v3918
    %3920 = vmatmul.f32.gmra.mxu0 %v3523
    %v3921 = vpop.f32.mrf.mxu0
    %v3922 = vadd.f32 0.0, %v3921
    %3923 = vmatmul.f32.gmra.mxu0 %v3525
    %v3924 = vpop.f32.mrf.mxu0
    %v3925 = vadd.f32 0.0, %v3924
    %3926 = vmatmul.f32.gmra.mxu0 %v3527
    %v3927 = vpop.f32.mrf.mxu0
    %v3928 = vadd.f32 0.0, %v3927
    %3929 = vmatmul.f32.gmra.mxu0 %v3529
    %v3930 = vpop.f32.mrf.mxu0
    %v3931 = vadd.f32 0.0, %v3930
    %3932 = vmatmul.f32.gmra.mxu0 %v3531
    %v3933 = vpop.f32.mrf.mxu0
    %v3934 = vadd.f32 0.0, %v3933
    %3935 = vmatmul.f32.gmra.mxu0 %v3533
    %v3936 = vpop.f32.mrf.mxu0
    %v3937 = vadd.f32 0.0, %v3936
    %3938 = vmatmul.f32.gmra.mxu0 %v3535
    %v3939 = vpop.f32.mrf.mxu0
    %v3940 = vadd.f32 0.0, %v3939
    %3941 = vmatmul.f32.gmra.mxu0 %v3537
    %v3942 = vpop.f32.mrf.mxu0
    %v3943 = vadd.f32 0.0, %v3942
    %3944 = vmatmul.f32.gmra.mxu0 %v3539
    %v3945 = vpop.f32.mrf.mxu0
    %v3946 = vadd.f32 0.0, %v3945
    %3947 = vmatmul.f32.gmra.mxu0 %v3541
    %v3948 = vpop.f32.mrf.mxu0
    %v3949 = vadd.f32 0.0, %v3948
    %3950 = vmatmul.f32.gmra.mxu0 %v3543
    %v3951 = vpop.f32.mrf.mxu0
    %v3952 = vadd.f32 0.0, %v3951
    %3953 = vmatmul.f32.gmra.mxu0 %v3545
    %v3954 = vpop.f32.mrf.mxu0
    %v3955 = vadd.f32 0.0, %v3954
    %3956 = vmatmul.f32.gmra.mxu0 %v3547
    %v3957 = vpop.f32.mrf.mxu0
    %v3958 = vadd.f32 0.0, %v3957
    %3959 = vmatmul.f32.gmra.mxu0 %v3549
    %v3960 = vpop.f32.mrf.mxu0
    %v3961 = vadd.f32 0.0, %v3960
    %3962 = vmatmul.f32.gmra.mxu0 %v3551
    %v3963 = vpop.f32.mrf.mxu0
    %v3964 = vadd.f32 0.0, %v3963
    %3965 = vmatmul.f32.gmra.mxu0 %v3553
    %v3966 = vpop.f32.mrf.mxu0
    %v3967 = vadd.f32 0.0, %v3966
    %3968 = vmatmul.f32.gmra.mxu0 %v3555
    %v3969 = vpop.f32.mrf.mxu0
    %v3970 = vadd.f32 0.0, %v3969
    %3971 = vmatmul.f32.gmra.mxu0 %v3557
    %v3972 = vpop.f32.mrf.mxu0
    %v3973 = vadd.f32 0.0, %v3972
    %3974 = vmatmul.f32.gmra.mxu0 %v3559
    %v3975 = vpop.f32.mrf.mxu0
    %v3976 = vadd.f32 0.0, %v3975
    %3977 = vmatmul.f32.gmra.mxu0 %v3561
    %v3978 = vpop.f32.mrf.mxu0
    %v3979 = vadd.f32 0.0, %v3978
    %3980 = vmatmul.f32.gmra.mxu0 %v3563
    %v3981 = vpop.f32.mrf.mxu0
    %v3982 = vadd.f32 0.0, %v3981
    %3983 = vmatmul.f32.gmra.mxu0 %v3565
    %v3984 = vpop.f32.mrf.mxu0
    %v3985 = vadd.f32 0.0, %v3984
    %3986 = vmatmul.f32.gmra.mxu0 %v3567
    %v3987 = vpop.f32.mrf.mxu0
    %v3988 = vadd.f32 0.0, %v3987
    %3989 = vmatmul.f32.gmra.mxu0 %v3569
    %v3990 = vpop.f32.mrf.mxu0
    %v3991 = vadd.f32 0.0, %v3990
    %3992 = vdwg.mxu0
    %3993 = vmatpush.msra.mxu0 0.0
    %3994 = vmatpush.msra.mxu0 0.0
    %3995 = vmatpush.msra.mxu0 0.0
    %3996 = vmatpush.msra.mxu0 0.0
    %3997 = vmatpush.msra.mxu0 0.0
    %3998 = vmatpush.msra.mxu0 0.0
    %3999 = vmatpush.msra.mxu0 0.0
    %4000 = vmatpush.msra.mxu0 0.0
    %4001 = vmatpush.msra.mxu0 0.0
    %4002 = vmatpush.msra.mxu0 0.0
    %4003 = vmatpush.msra.mxu0 0.0
    %4004 = vmatpush.msra.mxu0 0.0
    %4005 = vmatpush.msra.mxu0 %v3584
    %4006 = vmatpush.msra.mxu0 %v3450
    %4007 = vmatpush.msra.mxu0 %v3444
    %4008 = vmatpush.msra.mxu0 %v3438
    %4009 = vmatmul.f32.gmra.mxu0 %v3515
    %v4010 = vpop.f32.mrf.mxu0
    %v4011 = vadd.f32 0.0, %v4010
    %4012 = vmatmul.f32.gmra.mxu0 %v3517
    %v4013 = vpop.f32.mrf.mxu0
    %v4014 = vadd.f32 0.0, %v4013
    %4015 = vmatmul.f32.gmra.mxu0 %v3519
    %v4016 = vpop.f32.mrf.mxu0
    %v4017 = vadd.f32 0.0, %v4016
    %4018 = vmatmul.f32.gmra.mxu0 %v3521
    %v4019 = vpop.f32.mrf.mxu0
    %v4020 = vadd.f32 0.0, %v4019
    %4021 = vmatmul.f32.gmra.mxu0 %v3523
    %v4022 = vpop.f32.mrf.mxu0
    %v4023 = vadd.f32 0.0, %v4022
    %4024 = vmatmul.f32.gmra.mxu0 %v3525
    %v4025 = vpop.f32.mrf.mxu0
    %v4026 = vadd.f32 0.0, %v4025
    %4027 = vmatmul.f32.gmra.mxu0 %v3527
    %v4028 = vpop.f32.mrf.mxu0
    %v4029 = vadd.f32 0.0, %v4028
    %4030 = vmatmul.f32.gmra.mxu0 %v3529
    %v4031 = vpop.f32.mrf.mxu0
    %v4032 = vadd.f32 0.0, %v4031
    %4033 = vmatmul.f32.gmra.mxu0 %v3531
    %v4034 = vpop.f32.mrf.mxu0
    %v4035 = vadd.f32 0.0, %v4034
    %4036 = vmatmul.f32.gmra.mxu0 %v3533
    %v4037 = vpop.f32.mrf.mxu0
    %v4038 = vadd.f32 0.0, %v4037
    %4039 = vmatmul.f32.gmra.mxu0 %v3535
    %v4040 = vpop.f32.mrf.mxu0
    %v4041 = vadd.f32 0.0, %v4040
    %4042 = vmatmul.f32.gmra.mxu0 %v3537
    %v4043 = vpop.f32.mrf.mxu0
    %v4044 = vadd.f32 0.0, %v4043
    %4045 = vmatmul.f32.gmra.mxu0 %v3539
    %v4046 = vpop.f32.mrf.mxu0
    %v4047 = vadd.f32 0.0, %v4046
    %4048 = vmatmul.f32.gmra.mxu0 %v3541
    %v4049 = vpop.f32.mrf.mxu0
    %v4050 = vadd.f32 0.0, %v4049
    %4051 = vmatmul.f32.gmra.mxu0 %v3543
    %v4052 = vpop.f32.mrf.mxu0
    %v4053 = vadd.f32 0.0, %v4052
    %4054 = vmatmul.f32.gmra.mxu0 %v3545
    %v4055 = vpop.f32.mrf.mxu0
    %v4056 = vadd.f32 0.0, %v4055
    %4057 = vmatmul.f32.gmra.mxu0 %v3547
    %v4058 = vpop.f32.mrf.mxu0
    %v4059 = vadd.f32 0.0, %v4058
    %4060 = vmatmul.f32.gmra.mxu0 %v3549
    %v4061 = vpop.f32.mrf.mxu0
    %v4062 = vadd.f32 0.0, %v4061
    %4063 = vmatmul.f32.gmra.mxu0 %v3551
    %v4064 = vpop.f32.mrf.mxu0
    %v4065 = vadd.f32 0.0, %v4064
    %4066 = vmatmul.f32.gmra.mxu0 %v3553
    %v4067 = vpop.f32.mrf.mxu0
    %v4068 = vadd.f32 0.0, %v4067
    %4069 = vmatmul.f32.gmra.mxu0 %v3555
    %v4070 = vpop.f32.mrf.mxu0
    %v4071 = vadd.f32 0.0, %v4070
    %4072 = vmatmul.f32.gmra.mxu0 %v3557
    %v4073 = vpop.f32.mrf.mxu0
    %v4074 = vadd.f32 0.0, %v4073
    %4075 = vmatmul.f32.gmra.mxu0 %v3559
    %v4076 = vpop.f32.mrf.mxu0
    %v4077 = vadd.f32 0.0, %v4076
    %4078 = vmatmul.f32.gmra.mxu0 %v3561
    %v4079 = vpop.f32.mrf.mxu0
    %v4080 = vadd.f32 0.0, %v4079
    %4081 = vmatmul.f32.gmra.mxu0 %v3563
    %v4082 = vpop.f32.mrf.mxu0
    %v4083 = vadd.f32 0.0, %v4082
    %4084 = vmatmul.f32.gmra.mxu0 %v3565
    %v4085 = vpop.f32.mrf.mxu0
    %v4086 = vadd.f32 0.0, %v4085
    %4087 = vmatmul.f32.gmra.mxu0 %v3567
    %v4088 = vpop.f32.mrf.mxu0
    %v4089 = vadd.f32 0.0, %v4088
    %4090 = vmatmul.f32.gmra.mxu0 %v3569
    %v4091 = vpop.f32.mrf.mxu0
    %v4092 = vadd.f32 0.0, %v4091
    %4093 = vdwg.mxu0
    %4094 = vmatpush.msra.mxu0 0.0
    %4095 = vmatpush.msra.mxu0 0.0
    %4096 = vmatpush.msra.mxu0 0.0
    %4097 = vmatpush.msra.mxu0 0.0
    %4098 = vmatpush.msra.mxu0 0.0
    %4099 = vmatpush.msra.mxu0 0.0
    %4100 = vmatpush.msra.mxu0 0.0
    %4101 = vmatpush.msra.mxu0 0.0
    %4102 = vmatpush.msra.mxu0 0.0
    %4103 = vmatpush.msra.mxu0 0.0
    %4104 = vmatpush.msra.mxu0 0.0
    %4105 = vmatpush.msra.mxu0 0.0
    %4106 = vmatpush.msra.mxu0 %v3587
    %4107 = vmatpush.msra.mxu0 %v3451
    %4108 = vmatpush.msra.mxu0 %v3445
    %4109 = vmatpush.msra.mxu0 %v3439
    %4110 = vmatmul.f32.gmra.mxu0 %v3515
    %v4111 = vpop.f32.mrf.mxu0
    %v4112 = vadd.f32 0.0, %v4111
    %4113 = vmatmul.f32.gmra.mxu0 %v3517
    %v4114 = vpop.f32.mrf.mxu0
    %v4115 = vadd.f32 0.0, %v4114
    %4116 = vmatmul.f32.gmra.mxu0 %v3519
    %v4117 = vpop.f32.mrf.mxu0
    %v4118 = vadd.f32 0.0, %v4117
    %4119 = vmatmul.f32.gmra.mxu0 %v3521
    %v4120 = vpop.f32.mrf.mxu0
    %v4121 = vadd.f32 0.0, %v4120
    %4122 = vmatmul.f32.gmra.mxu0 %v3523
    %v4123 = vpop.f32.mrf.mxu0
    %v4124 = vadd.f32 0.0, %v4123
    %4125 = vmatmul.f32.gmra.mxu0 %v3525
    %v4126 = vpop.f32.mrf.mxu0
    %v4127 = vadd.f32 0.0, %v4126
    %4128 = vmatmul.f32.gmra.mxu0 %v3527
    %v4129 = vpop.f32.mrf.mxu0
    %v4130 = vadd.f32 0.0, %v4129
    %4131 = vmatmul.f32.gmra.mxu0 %v3529
    %v4132 = vpop.f32.mrf.mxu0
    %v4133 = vadd.f32 0.0, %v4132
    %4134 = vmatmul.f32.gmra.mxu0 %v3531
    %v4135 = vpop.f32.mrf.mxu0
    %v4136 = vadd.f32 0.0, %v4135
    %4137 = vmatmul.f32.gmra.mxu0 %v3533
    %v4138 = vpop.f32.mrf.mxu0
    %v4139 = vadd.f32 0.0, %v4138
    %4140 = vmatmul.f32.gmra.mxu0 %v3535
    %v4141 = vpop.f32.mrf.mxu0
    %v4142 = vadd.f32 0.0, %v4141
    %4143 = vmatmul.f32.gmra.mxu0 %v3537
    %v4144 = vpop.f32.mrf.mxu0
    %v4145 = vadd.f32 0.0, %v4144
    %4146 = vmatmul.f32.gmra.mxu0 %v3539
    %v4147 = vpop.f32.mrf.mxu0
    %v4148 = vadd.f32 0.0, %v4147
    %4149 = vmatmul.f32.gmra.mxu0 %v3541
    %v4150 = vpop.f32.mrf.mxu0
    %v4151 = vadd.f32 0.0, %v4150
    %4152 = vmatmul.f32.gmra.mxu0 %v3543
    %v4153 = vpop.f32.mrf.mxu0
    %v4154 = vadd.f32 0.0, %v4153
    %4155 = vmatmul.f32.gmra.mxu0 %v3545
    %v4156 = vpop.f32.mrf.mxu0
    %v4157 = vadd.f32 0.0, %v4156
    %4158 = vmatmul.f32.gmra.mxu0 %v3547
    %v4159 = vpop.f32.mrf.mxu0
    %v4160 = vadd.f32 0.0, %v4159
    %4161 = vmatmul.f32.gmra.mxu0 %v3549
    %v4162 = vpop.f32.mrf.mxu0
    %v4163 = vadd.f32 0.0, %v4162
    %4164 = vmatmul.f32.gmra.mxu0 %v3551
    %v4165 = vpop.f32.mrf.mxu0
    %v4166 = vadd.f32 0.0, %v4165
    %4167 = vmatmul.f32.gmra.mxu0 %v3553
    %v4168 = vpop.f32.mrf.mxu0
    %v4169 = vadd.f32 0.0, %v4168
    %4170 = vmatmul.f32.gmra.mxu0 %v3555
    %v4171 = vpop.f32.mrf.mxu0
    %v4172 = vadd.f32 0.0, %v4171
    %4173 = vmatmul.f32.gmra.mxu0 %v3557
    %v4174 = vpop.f32.mrf.mxu0
    %v4175 = vadd.f32 0.0, %v4174
    %4176 = vmatmul.f32.gmra.mxu0 %v3559
    %v4177 = vpop.f32.mrf.mxu0
    %v4178 = vadd.f32 0.0, %v4177
    %4179 = vmatmul.f32.gmra.mxu0 %v3561
    %v4180 = vpop.f32.mrf.mxu0
    %v4181 = vadd.f32 0.0, %v4180
    %4182 = vmatmul.f32.gmra.mxu0 %v3563
    %v4183 = vpop.f32.mrf.mxu0
    %v4184 = vadd.f32 0.0, %v4183
    %4185 = vmatmul.f32.gmra.mxu0 %v3565
    %v4186 = vpop.f32.mrf.mxu0
    %v4187 = vadd.f32 0.0, %v4186
    %4188 = vmatmul.f32.gmra.mxu0 %v3567
    %v4189 = vpop.f32.mrf.mxu0
    %v4190 = vadd.f32 0.0, %v4189
    %4191 = vmatmul.f32.gmra.mxu0 %v3569
    %v4192 = vpop.f32.mrf.mxu0
    %v4193 = vadd.f32 0.0, %v4192
    %4194 = vdwg.mxu0
    %v4195 = vadd.f32 %v3265, %v3607
    %v4196 = vadd.f32 %v3266, %v3708
    %v4197 = vadd.f32 %v3267, %v3809
    %v4198 = vadd.f32 %v3268, %v3910
    %v4199 = vadd.f32 %v3269, %v4011
    %v4200 = vadd.f32 %v3270, %v4112
    %v4201 = vadd.f32 %v3271, %v3610
    %v4202 = vadd.f32 %v3272, %v3711
    %v4203 = vadd.f32 %v3273, %v3812
    %v4204 = vadd.f32 %v3274, %v3913
    %v4205 = vadd.f32 %v3275, %v4014
    %v4206 = vadd.f32 %v3276, %v4115
    %v4207 = vadd.f32 %v3277, %v3613
    %v4208 = vadd.f32 %v3278, %v3714
    %v4209 = vadd.f32 %v3279, %v3815
    %v4210 = vadd.f32 %v3280, %v3916
    %v4211 = vadd.f32 %v3281, %v4017
    %v4212 = vadd.f32 %v3282, %v4118
    %v4213 = vadd.f32 %v3283, %v3616
    %v4214 = vadd.f32 %v3284, %v3717
    %v4215 = vadd.f32 %v3285, %v3818
    %v4216 = vadd.f32 %v3286, %v3919
    %v4217 = vadd.f32 %v3287, %v4020
    %v4218 = vadd.f32 %v3288, %v4121
    %v4219 = vadd.f32 %v3289, %v3619
    %v4220 = vadd.f32 %v3290, %v3720
    %v4221 = vadd.f32 %v3291, %v3821
    %v4222 = vadd.f32 %v3292, %v3922
    %v4223 = vadd.f32 %v3293, %v4023
    %v4224 = vadd.f32 %v3294, %v4124
    %v4225 = vadd.f32 %v3295, %v3622
    %v4226 = vadd.f32 %v3296, %v3723
    %v4227 = vadd.f32 %v3297, %v3824
    %v4228 = vadd.f32 %v3298, %v3925
    %v4229 = vadd.f32 %v3299, %v4026
    %v4230 = vadd.f32 %v3300, %v4127
    %v4231 = vadd.f32 %v3301, %v3625
    %v4232 = vadd.f32 %v3302, %v3726
    %v4233 = vadd.f32 %v3303, %v3827
    %v4234 = vadd.f32 %v3304, %v3928
    %v4235 = vadd.f32 %v3305, %v4029
    %v4236 = vadd.f32 %v3306, %v4130
    %v4237 = vadd.f32 %v3307, %v3628
    %v4238 = vadd.f32 %v3308, %v3729
    %v4239 = vadd.f32 %v3309, %v3830
    %v4240 = vadd.f32 %v3310, %v3931
    %v4241 = vadd.f32 %v3311, %v4032
    %v4242 = vadd.f32 %v3312, %v4133
    %v4243 = vadd.f32 %v3313, %v3631
    %v4244 = vadd.f32 %v3314, %v3732
    %v4245 = vadd.f32 %v3315, %v3833
    %v4246 = vadd.f32 %v3316, %v3934
    %v4247 = vadd.f32 %v3317, %v4035
    %v4248 = vadd.f32 %v3318, %v4136
    %v4249 = vadd.f32 %v3319, %v3634
    %v4250 = vadd.f32 %v3320, %v3735
    %v4251 = vadd.f32 %v3321, %v3836
    %v4252 = vadd.f32 %v3322, %v3937
    %v4253 = vadd.f32 %v3323, %v4038
    %v4254 = vadd.f32 %v3324, %v4139
    %v4255 = vadd.f32 %v3325, %v3637
    %v4256 = vadd.f32 %v3326, %v3738
    %v4257 = vadd.f32 %v3327, %v3839
    %v4258 = vadd.f32 %v3328, %v3940
    %v4259 = vadd.f32 %v3329, %v4041
    %v4260 = vadd.f32 %v3330, %v4142
    %v4261 = vadd.f32 %v3331, %v3640
    %v4262 = vadd.f32 %v3332, %v3741
    %v4263 = vadd.f32 %v3333, %v3842
    %v4264 = vadd.f32 %v3334, %v3943
    %v4265 = vadd.f32 %v3335, %v4044
    %v4266 = vadd.f32 %v3336, %v4145
    %v4267 = vadd.f32 %v3337, %v3643
    %v4268 = vadd.f32 %v3338, %v3744
    %v4269 = vadd.f32 %v3339, %v3845
    %v4270 = vadd.f32 %v3340, %v3946
    %v4271 = vadd.f32 %v3341, %v4047
    %v4272 = vadd.f32 %v3342, %v4148
    %v4273 = vadd.f32 %v3343, %v3646
    %v4274 = vadd.f32 %v3344, %v3747
    %v4275 = vadd.f32 %v3345, %v3848
    %v4276 = vadd.f32 %v3346, %v3949
    %v4277 = vadd.f32 %v3347, %v4050
    %v4278 = vadd.f32 %v3348, %v4151
    %v4279 = vadd.f32 %v3349, %v3649
    %v4280 = vadd.f32 %v3350, %v3750
    %v4281 = vadd.f32 %v3351, %v3851
    %v4282 = vadd.f32 %v3352, %v3952
    %v4283 = vadd.f32 %v3353, %v4053
    %v4284 = vadd.f32 %v3354, %v4154
    %v4285 = vadd.f32 %v3355, %v3652
    %v4286 = vadd.f32 %v3356, %v3753
    %v4287 = vadd.f32 %v3357, %v3854
    %v4288 = vadd.f32 %v3358, %v3955
    %v4289 = vadd.f32 %v3359, %v4056
    %v4290 = vadd.f32 %v3360, %v4157
    %v4291 = vadd.f32 %v3361, %v3655
    %v4292 = vadd.f32 %v3362, %v3756
    %v4293 = vadd.f32 %v3363, %v3857
    %v4294 = vadd.f32 %v3364, %v3958
    %v4295 = vadd.f32 %v3365, %v4059
    %v4296 = vadd.f32 %v3366, %v4160
    %v4297 = vadd.f32 %v3367, %v3658
    %v4298 = vadd.f32 %v3368, %v3759
    %v4299 = vadd.f32 %v3369, %v3860
    %v4300 = vadd.f32 %v3370, %v3961
    %v4301 = vadd.f32 %v3371, %v4062
    %v4302 = vadd.f32 %v3372, %v4163
    %v4303 = vadd.f32 %v3373, %v3661
    %v4304 = vadd.f32 %v3374, %v3762
    %v4305 = vadd.f32 %v3375, %v3863
    %v4306 = vadd.f32 %v3376, %v3964
    %v4307 = vadd.f32 %v3377, %v4065
    %v4308 = vadd.f32 %v3378, %v4166
    %v4309 = vadd.f32 %v3379, %v3664
    %v4310 = vadd.f32 %v3380, %v3765
    %v4311 = vadd.f32 %v3381, %v3866
    %v4312 = vadd.f32 %v3382, %v3967
    %v4313 = vadd.f32 %v3383, %v4068
    %v4314 = vadd.f32 %v3384, %v4169
    %v4315 = vadd.f32 %v3385, %v3667
    %v4316 = vadd.f32 %v3386, %v3768
    %v4317 = vadd.f32 %v3387, %v3869
    %v4318 = vadd.f32 %v3388, %v3970
    %v4319 = vadd.f32 %v3389, %v4071
    %v4320 = vadd.f32 %v3390, %v4172
    %v4321 = vadd.f32 %v3391, %v3670
    %v4322 = vadd.f32 %v3392, %v3771
    %v4323 = vadd.f32 %v3393, %v3872
    %v4324 = vadd.f32 %v3394, %v3973
    %v4325 = vadd.f32 %v3395, %v4074
    %v4326 = vadd.f32 %v3396, %v4175
    %v4327 = vadd.f32 %v3397, %v3673
    %v4328 = vadd.f32 %v3398, %v3774
    %v4329 = vadd.f32 %v3399, %v3875
    %v4330 = vadd.f32 %v3400, %v3976
    %v4331 = vadd.f32 %v3401, %v4077
    %v4332 = vadd.f32 %v3402, %v4178
    %v4333 = vadd.f32 %v3403, %v3676
    %v4334 = vadd.f32 %v3404, %v3777
    %v4335 = vadd.f32 %v3405, %v3878
    %v4336 = vadd.f32 %v3406, %v3979
    %v4337 = vadd.f32 %v3407, %v4080
    %v4338 = vadd.f32 %v3408, %v4181
    %v4339 = vadd.f32 %v3409, %v3679
    %v4340 = vadd.f32 %v3410, %v3780
    %v4341 = vadd.f32 %v3411, %v3881
    %v4342 = vadd.f32 %v3412, %v3982
    %v4343 = vadd.f32 %v3413, %v4083
    %v4344 = vadd.f32 %v3414, %v4184
    %v4345 = vadd.f32 %v3415, %v3682
    %v4346 = vadd.f32 %v3416, %v3783
    %v4347 = vadd.f32 %v3417, %v3884
    %v4348 = vadd.f32 %v3418, %v3985
    %v4349 = vadd.f32 %v3419, %v4086
    %v4350 = vadd.f32 %v3420, %v4187
    %v4351 = vadd.f32 %v3421, %v3685
    %v4352 = vadd.f32 %v3422, %v3786
    %v4353 = vadd.f32 %v3423, %v3887
    %v4354 = vadd.f32 %v3424, %v3988
    %v4355 = vadd.f32 %v3425, %v4089
    %v4356 = vadd.f32 %v3426, %v4190
    %v4357 = vadd.f32 %v3427, %v3688
    %v4358 = vadd.f32 %v3428, %v3789
    %v4359 = vadd.f32 %v3429, %v3890
    %v4360 = vadd.f32 %v3430, %v3991
    %v4361 = vadd.f32 %v3431, %v4092
    %v4362 = vadd.f32 %v3432, %v4193
    %v4363 = vld [vmem:[#allocation4] sm:$0x3f]
    %v4365 = vperm.slane %v4363, 0
    %v4366 = vperm.slane %v4363, 1
    %v4367 = vperm.slane %v4363, 2
    %v4368 = vperm.slane %v4363, 3
    %v4369 = vperm.slane %v4363, 4
    %v4370 = vperm.slane %v4363, 5
    %v4377 = vadd.f32 %v4195, %v4365
    %v4378 = vadd.f32 %v4196, %v4366
    %v4379 = vadd.f32 %v4197, %v4367
    %v4380 = vadd.f32 %v4198, %v4368
    %v4381 = vadd.f32 %v4199, %v4369
    %v4382 = vadd.f32 %v4200, %v4370
    %v4383 = vadd.f32 %v4201, %v4365
    %v4384 = vadd.f32 %v4202, %v4366
    %v4385 = vadd.f32 %v4203, %v4367
    %v4386 = vadd.f32 %v4204, %v4368
    %v4387 = vadd.f32 %v4205, %v4369
    %v4388 = vadd.f32 %v4206, %v4370
    %v4389 = vadd.f32 %v4207, %v4365
    %v4390 = vadd.f32 %v4208, %v4366
    %v4391 = vadd.f32 %v4209, %v4367
    %v4392 = vadd.f32 %v4210, %v4368
    %v4393 = vadd.f32 %v4211, %v4369
    %v4394 = vadd.f32 %v4212, %v4370
    %v4395 = vadd.f32 %v4213, %v4365
    %v4396 = vadd.f32 %v4214, %v4366
    %v4397 = vadd.f32 %v4215, %v4367
    %v4398 = vadd.f32 %v4216, %v4368
    %v4399 = vadd.f32 %v4217, %v4369
    %v4400 = vadd.f32 %v4218, %v4370
    %v4401 = vadd.f32 %v4219, %v4365
    %v4402 = vadd.f32 %v4220, %v4366
    %v4403 = vadd.f32 %v4221, %v4367
    %v4404 = vadd.f32 %v4222, %v4368
    %v4405 = vadd.f32 %v4223, %v4369
    %v4406 = vadd.f32 %v4224, %v4370
    %v4407 = vadd.f32 %v4225, %v4365
    %v4408 = vadd.f32 %v4226, %v4366
    %v4409 = vadd.f32 %v4227, %v4367
    %v4410 = vadd.f32 %v4228, %v4368
    %v4411 = vadd.f32 %v4229, %v4369
    %v4412 = vadd.f32 %v4230, %v4370
    %v4413 = vadd.f32 %v4231, %v4365
    %v4414 = vadd.f32 %v4232, %v4366
    %v4415 = vadd.f32 %v4233, %v4367
    %v4416 = vadd.f32 %v4234, %v4368
    %v4417 = vadd.f32 %v4235, %v4369
    %v4418 = vadd.f32 %v4236, %v4370
    %v4419 = vadd.f32 %v4237, %v4365
    %v4420 = vadd.f32 %v4238, %v4366
    %v4421 = vadd.f32 %v4239, %v4367
    %v4422 = vadd.f32 %v4240, %v4368
    %v4423 = vadd.f32 %v4241, %v4369
    %v4424 = vadd.f32 %v4242, %v4370
    %v4425 = vadd.f32 %v4243, %v4365
    %v4426 = vadd.f32 %v4244, %v4366
    %v4427 = vadd.f32 %v4245, %v4367
    %v4428 = vadd.f32 %v4246, %v4368
    %v4429 = vadd.f32 %v4247, %v4369
    %v4430 = vadd.f32 %v4248, %v4370
    %v4431 = vadd.f32 %v4249, %v4365
    %v4432 = vadd.f32 %v4250, %v4366
    %v4433 = vadd.f32 %v4251, %v4367
    %v4434 = vadd.f32 %v4252, %v4368
    %v4435 = vadd.f32 %v4253, %v4369
    %v4436 = vadd.f32 %v4254, %v4370
    %v4437 = vadd.f32 %v4255, %v4365
    %v4438 = vadd.f32 %v4256, %v4366
    %v4439 = vadd.f32 %v4257, %v4367
    %v4440 = vadd.f32 %v4258, %v4368
    %v4441 = vadd.f32 %v4259, %v4369
    %v4442 = vadd.f32 %v4260, %v4370
    %v4443 = vadd.f32 %v4261, %v4365
    %v4444 = vadd.f32 %v4262, %v4366
    %v4445 = vadd.f32 %v4263, %v4367
    %v4446 = vadd.f32 %v4264, %v4368
    %v4447 = vadd.f32 %v4265, %v4369
    %v4448 = vadd.f32 %v4266, %v4370
    %v4449 = vadd.f32 %v4267, %v4365
    %v4450 = vadd.f32 %v4268, %v4366
    %v4451 = vadd.f32 %v4269, %v4367
    %v4452 = vadd.f32 %v4270, %v4368
    %v4453 = vadd.f32 %v4271, %v4369
    %v4454 = vadd.f32 %v4272, %v4370
    %v4455 = vadd.f32 %v4273, %v4365
    %v4456 = vadd.f32 %v4274, %v4366
    %v4457 = vadd.f32 %v4275, %v4367
    %v4458 = vadd.f32 %v4276, %v4368
    %v4459 = vadd.f32 %v4277, %v4369
    %v4460 = vadd.f32 %v4278, %v4370
    %v4461 = vadd.f32 %v4279, %v4365
    %v4462 = vadd.f32 %v4280, %v4366
    %v4463 = vadd.f32 %v4281, %v4367
    %v4464 = vadd.f32 %v4282, %v4368
    %v4465 = vadd.f32 %v4283, %v4369
    %v4466 = vadd.f32 %v4284, %v4370
    %v4467 = vadd.f32 %v4285, %v4365
    %v4468 = vadd.f32 %v4286, %v4366
    %v4469 = vadd.f32 %v4287, %v4367
    %v4470 = vadd.f32 %v4288, %v4368
    %v4471 = vadd.f32 %v4289, %v4369
    %v4472 = vadd.f32 %v4290, %v4370
    %v4473 = vadd.f32 %v4291, %v4365
    %v4474 = vadd.f32 %v4292, %v4366
    %v4475 = vadd.f32 %v4293, %v4367
    %v4476 = vadd.f32 %v4294, %v4368
    %v4477 = vadd.f32 %v4295, %v4369
    %v4478 = vadd.f32 %v4296, %v4370
    %v4479 = vadd.f32 %v4297, %v4365
    %v4480 = vadd.f32 %v4298, %v4366
    %v4481 = vadd.f32 %v4299, %v4367
    %v4482 = vadd.f32 %v4300, %v4368
    %v4483 = vadd.f32 %v4301, %v4369
    %v4484 = vadd.f32 %v4302, %v4370
    %v4485 = vadd.f32 %v4303, %v4365
    %v4486 = vadd.f32 %v4304, %v4366
    %v4487 = vadd.f32 %v4305, %v4367
    %v4488 = vadd.f32 %v4306, %v4368
    %v4489 = vadd.f32 %v4307, %v4369
    %v4490 = vadd.f32 %v4308, %v4370
    %v4491 = vadd.f32 %v4309, %v4365
    %v4492 = vadd.f32 %v4310, %v4366
    %v4493 = vadd.f32 %v4311, %v4367
    %v4494 = vadd.f32 %v4312, %v4368
    %v4495 = vadd.f32 %v4313, %v4369
    %v4496 = vadd.f32 %v4314, %v4370
    %v4497 = vadd.f32 %v4315, %v4365
    %v4498 = vadd.f32 %v4316, %v4366
    %v4499 = vadd.f32 %v4317, %v4367
    %v4500 = vadd.f32 %v4318, %v4368
    %v4501 = vadd.f32 %v4319, %v4369
    %v4502 = vadd.f32 %v4320, %v4370
    %v4503 = vadd.f32 %v4321, %v4365
    %v4504 = vadd.f32 %v4322, %v4366
    %v4505 = vadd.f32 %v4323, %v4367
    %v4506 = vadd.f32 %v4324, %v4368
    %v4507 = vadd.f32 %v4325, %v4369
    %v4508 = vadd.f32 %v4326, %v4370
    %v4509 = vadd.f32 %v4327, %v4365
    %v4510 = vadd.f32 %v4328, %v4366
    %v4511 = vadd.f32 %v4329, %v4367
    %v4512 = vadd.f32 %v4330, %v4368
    %v4513 = vadd.f32 %v4331, %v4369
    %v4514 = vadd.f32 %v4332, %v4370
    %v4515 = vadd.f32 %v4333, %v4365
    %v4516 = vadd.f32 %v4334, %v4366
    %v4517 = vadd.f32 %v4335, %v4367
    %v4518 = vadd.f32 %v4336, %v4368
    %v4519 = vadd.f32 %v4337, %v4369
    %v4520 = vadd.f32 %v4338, %v4370
    %v4521 = vadd.f32 %v4339, %v4365
    %v4522 = vadd.f32 %v4340, %v4366
    %v4523 = vadd.f32 %v4341, %v4367
    %v4524 = vadd.f32 %v4342, %v4368
    %v4525 = vadd.f32 %v4343, %v4369
    %v4526 = vadd.f32 %v4344, %v4370
    %v4527 = vadd.f32 %v4345, %v4365
    %v4528 = vadd.f32 %v4346, %v4366
    %v4529 = vadd.f32 %v4347, %v4367
    %v4530 = vadd.f32 %v4348, %v4368
    %v4531 = vadd.f32 %v4349, %v4369
    %v4532 = vadd.f32 %v4350, %v4370
    %v4533 = vadd.f32 %v4351, %v4365
    %v4534 = vadd.f32 %v4352, %v4366
    %v4535 = vadd.f32 %v4353, %v4367
    %v4536 = vadd.f32 %v4354, %v4368
    %v4537 = vadd.f32 %v4355, %v4369
    %v4538 = vadd.f32 %v4356, %v4370
    %v4539 = vadd.f32 %v4357, %v4365
    %v4540 = vadd.f32 %v4358, %v4366
    %v4541 = vadd.f32 %v4359, %v4367
    %v4542 = vadd.f32 %v4360, %v4368
    %v4543 = vadd.f32 %v4361, %v4369
    %v4544 = vadd.f32 %v4362, %v4370
    %v4545 = vmax.f32 %v4377, 0.0
    %v4546 = vmax.f32 %v4378, 0.0
    %v4547 = vmax.f32 %v4379, 0.0
    %v4548 = vmax.f32 %v4380, 0.0
    %v4549 = vmax.f32 %v4381, 0.0
    %v4550 = vmax.f32 %v4382, 0.0
    %v4551 = vmax.f32 %v4383, 0.0
    %v4552 = vmax.f32 %v4384, 0.0
    %v4553 = vmax.f32 %v4385, 0.0
    %v4554 = vmax.f32 %v4386, 0.0
    %v4555 = vmax.f32 %v4387, 0.0
    %v4556 = vmax.f32 %v4388, 0.0
    %v4557 = vmax.f32 %v4389, 0.0
    %v4558 = vmax.f32 %v4390, 0.0
    %v4559 = vmax.f32 %v4391, 0.0
    %v4560 = vmax.f32 %v4392, 0.0
    %v4561 = vmax.f32 %v4393, 0.0
    %v4562 = vmax.f32 %v4394, 0.0
    %v4563 = vmax.f32 %v4395, 0.0
    %v4564 = vmax.f32 %v4396, 0.0
    %v4565 = vmax.f32 %v4397, 0.0
    %v4566 = vmax.f32 %v4398, 0.0
    %v4567 = vmax.f32 %v4399, 0.0
    %v4568 = vmax.f32 %v4400, 0.0
    %v4569 = vmax.f32 %v4401, 0.0
    %v4570 = vmax.f32 %v4402, 0.0
    %v4571 = vmax.f32 %v4403, 0.0
    %v4572 = vmax.f32 %v4404, 0.0
    %v4573 = vmax.f32 %v4405, 0.0
    %v4574 = vmax.f32 %v4406, 0.0
    %v4575 = vmax.f32 %v4407, 0.0
    %v4576 = vmax.f32 %v4408, 0.0
    %v4577 = vmax.f32 %v4409, 0.0
    %v4578 = vmax.f32 %v4410, 0.0
    %v4579 = vmax.f32 %v4411, 0.0
    %v4580 = vmax.f32 %v4412, 0.0
    %v4581 = vmax.f32 %v4413, 0.0
    %v4582 = vmax.f32 %v4414, 0.0
    %v4583 = vmax.f32 %v4415, 0.0
    %v4584 = vmax.f32 %v4416, 0.0
    %v4585 = vmax.f32 %v4417, 0.0
    %v4586 = vmax.f32 %v4418, 0.0
    %v4587 = vmax.f32 %v4419, 0.0
    %v4588 = vmax.f32 %v4420, 0.0
    %v4589 = vmax.f32 %v4421, 0.0
    %v4590 = vmax.f32 %v4422, 0.0
    %v4591 = vmax.f32 %v4423, 0.0
    %v4592 = vmax.f32 %v4424, 0.0
    %v4593 = vmax.f32 %v4425, 0.0
    %v4594 = vmax.f32 %v4426, 0.0
    %v4595 = vmax.f32 %v4427, 0.0
    %v4596 = vmax.f32 %v4428, 0.0
    %v4597 = vmax.f32 %v4429, 0.0
    %v4598 = vmax.f32 %v4430, 0.0
    %v4599 = vmax.f32 %v4431, 0.0
    %v4600 = vmax.f32 %v4432, 0.0
    %v4601 = vmax.f32 %v4433, 0.0
    %v4602 = vmax.f32 %v4434, 0.0
    %v4603 = vmax.f32 %v4435, 0.0
    %v4604 = vmax.f32 %v4436, 0.0
    %v4605 = vmax.f32 %v4437, 0.0
    %v4606 = vmax.f32 %v4438, 0.0
    %v4607 = vmax.f32 %v4439, 0.0
    %v4608 = vmax.f32 %v4440, 0.0
    %v4609 = vmax.f32 %v4441, 0.0
    %v4610 = vmax.f32 %v4442, 0.0
    %v4611 = vmax.f32 %v4443, 0.0
    %v4612 = vmax.f32 %v4444, 0.0
    %v4613 = vmax.f32 %v4445, 0.0
    %v4614 = vmax.f32 %v4446, 0.0
    %v4615 = vmax.f32 %v4447, 0.0
    %v4616 = vmax.f32 %v4448, 0.0
    %v4617 = vmax.f32 %v4449, 0.0
    %v4618 = vmax.f32 %v4450, 0.0
    %v4619 = vmax.f32 %v4451, 0.0
    %v4620 = vmax.f32 %v4452, 0.0
    %v4621 = vmax.f32 %v4453, 0.0
    %v4622 = vmax.f32 %v4454, 0.0
    %v4623 = vmax.f32 %v4455, 0.0
    %v4624 = vmax.f32 %v4456, 0.0
    %v4625 = vmax.f32 %v4457, 0.0
    %v4626 = vmax.f32 %v4458, 0.0
    %v4627 = vmax.f32 %v4459, 0.0
    %v4628 = vmax.f32 %v4460, 0.0
    %v4629 = vmax.f32 %v4461, 0.0
    %v4630 = vmax.f32 %v4462, 0.0
    %v4631 = vmax.f32 %v4463, 0.0
    %v4632 = vmax.f32 %v4464, 0.0
    %v4633 = vmax.f32 %v4465, 0.0
    %v4634 = vmax.f32 %v4466, 0.0
    %v4635 = vmax.f32 %v4467, 0.0
    %v4636 = vmax.f32 %v4468, 0.0
    %v4637 = vmax.f32 %v4469, 0.0
    %v4638 = vmax.f32 %v4470, 0.0
    %v4639 = vmax.f32 %v4471, 0.0
    %v4640 = vmax.f32 %v4472, 0.0
    %v4641 = vmax.f32 %v4473, 0.0
    %v4642 = vmax.f32 %v4474, 0.0
    %v4643 = vmax.f32 %v4475, 0.0
    %v4644 = vmax.f32 %v4476, 0.0
    %v4645 = vmax.f32 %v4477, 0.0
    %v4646 = vmax.f32 %v4478, 0.0
    %v4647 = vmax.f32 %v4479, 0.0
    %v4648 = vmax.f32 %v4480, 0.0
    %v4649 = vmax.f32 %v4481, 0.0
    %v4650 = vmax.f32 %v4482, 0.0
    %v4651 = vmax.f32 %v4483, 0.0
    %v4652 = vmax.f32 %v4484, 0.0
    %v4653 = vmax.f32 %v4485, 0.0
    %v4654 = vmax.f32 %v4486, 0.0
    %v4655 = vmax.f32 %v4487, 0.0
    %v4656 = vmax.f32 %v4488, 0.0
    %v4657 = vmax.f32 %v4489, 0.0
    %v4658 = vmax.f32 %v4490, 0.0
    %v4659 = vmax.f32 %v4491, 0.0
    %v4660 = vmax.f32 %v4492, 0.0
    %v4661 = vmax.f32 %v4493, 0.0
    %v4662 = vmax.f32 %v4494, 0.0
    %v4663 = vmax.f32 %v4495, 0.0
    %v4664 = vmax.f32 %v4496, 0.0
    %v4665 = vmax.f32 %v4497, 0.0
    %v4666 = vmax.f32 %v4498, 0.0
    %v4667 = vmax.f32 %v4499, 0.0
    %v4668 = vmax.f32 %v4500, 0.0
    %v4669 = vmax.f32 %v4501, 0.0
    %v4670 = vmax.f32 %v4502, 0.0
    %v4671 = vmax.f32 %v4503, 0.0
    %v4672 = vmax.f32 %v4504, 0.0
    %v4673 = vmax.f32 %v4505, 0.0
    %v4674 = vmax.f32 %v4506, 0.0
    %v4675 = vmax.f32 %v4507, 0.0
    %v4676 = vmax.f32 %v4508, 0.0
    %v4677 = vmax.f32 %v4509, 0.0
    %v4678 = vmax.f32 %v4510, 0.0
    %v4679 = vmax.f32 %v4511, 0.0
    %v4680 = vmax.f32 %v4512, 0.0
    %v4681 = vmax.f32 %v4513, 0.0
    %v4682 = vmax.f32 %v4514, 0.0
    %v4683 = vmax.f32 %v4515, 0.0
    %v4684 = vmax.f32 %v4516, 0.0
    %v4685 = vmax.f32 %v4517, 0.0
    %v4686 = vmax.f32 %v4518, 0.0
    %v4687 = vmax.f32 %v4519, 0.0
    %v4688 = vmax.f32 %v4520, 0.0
    %v4689 = vmax.f32 %v4521, 0.0
    %v4690 = vmax.f32 %v4522, 0.0
    %v4691 = vmax.f32 %v4523, 0.0
    %v4692 = vmax.f32 %v4524, 0.0
    %v4693 = vmax.f32 %v4525, 0.0
    %v4694 = vmax.f32 %v4526, 0.0
    %v4695 = vmax.f32 %v4527, 0.0
    %v4696 = vmax.f32 %v4528, 0.0
    %v4697 = vmax.f32 %v4529, 0.0
    %v4698 = vmax.f32 %v4530, 0.0
    %v4699 = vmax.f32 %v4531, 0.0
    %v4700 = vmax.f32 %v4532, 0.0
    %v4701 = vmax.f32 %v4533, 0.0
    %v4702 = vmax.f32 %v4534, 0.0
    %v4703 = vmax.f32 %v4535, 0.0
    %v4704 = vmax.f32 %v4536, 0.0
    %v4705 = vmax.f32 %v4537, 0.0
    %v4706 = vmax.f32 %v4538, 0.0
    %v4707 = vmax.f32 %v4539, 0.0
    %v4708 = vmax.f32 %v4540, 0.0
    %v4709 = vmax.f32 %v4541, 0.0
    %v4710 = vmax.f32 %v4542, 0.0
    %v4711 = vmax.f32 %v4543, 0.0
    %v4712 = vmax.f32 %v4544, 0.0
    %4713 = vst [vmem:[%s3] sm:$0xff] %v4545
    %4714 = vst [vmem:[%s3 + $0x8] sm:$0xff] %v4546
    %4715 = vst [vmem:[%s3 + $0x10] sm:$0xff] %v4547
    %4716 = vst [vmem:[%s3 + $0x18] sm:$0xff] %v4548
    %4717 = vst [vmem:[%s3 + $0x20] sm:$0xff] %v4549
    %4718 = vst [vmem:[%s3 + $0x28] sm:$0xff] %v4550
    %4719 = vst [vmem:[%s3 + $0x30] sm:$0xff] %v4551
    %4720 = vst [vmem:[%s3 + $0x38] sm:$0xff] %v4552
    %4721 = vst [vmem:[%s3 + $0x40] sm:$0xff] %v4553
    %4722 = vst [vmem:[%s3 + $0x48] sm:$0xff] %v4554
    %4723 = vst [vmem:[%s3 + $0x50] sm:$0xff] %v4555
    %4724 = vst [vmem:[%s3 + $0x58] sm:$0xff] %v4556
    %4725 = vst [vmem:[%s3 + $0x60] sm:$0xff] %v4557
    %4726 = vst [vmem:[%s3 + $0x68] sm:$0xff] %v4558
    %4727 = vst [vmem:[%s3 + $0x70] sm:$0xff] %v4559
    %4728 = vst [vmem:[%s3 + $0x78] sm:$0xff] %v4560
    %4729 = vst [vmem:[%s3 + $0x80] sm:$0xff] %v4561
    %4730 = vst [vmem:[%s3 + $0x88] sm:$0xff] %v4562
    %4731 = vst [vmem:[%s3 + $0x90] sm:$0xff] %v4563
    %4732 = vst [vmem:[%s3 + $0x98] sm:$0xff] %v4564
    %4733 = vst [vmem:[%s3 + $0xa0] sm:$0xff] %v4565
    %4734 = vst [vmem:[%s3 + $0xa8] sm:$0xff] %v4566
    %4735 = vst [vmem:[%s3 + $0xb0] sm:$0xff] %v4567
    %4736 = vst [vmem:[%s3 + $0xb8] sm:$0xff] %v4568
    %4737 = vst [vmem:[%s3 + $0xc0] sm:$0xff] %v4569
    %4738 = vst [vmem:[%s3 + $0xc8] sm:$0xff] %v4570
    %4739 = vst [vmem:[%s3 + $0xd0] sm:$0xff] %v4571
    %4740 = vst [vmem:[%s3 + $0xd8] sm:$0xff] %v4572
    %4741 = vst [vmem:[%s3 + $0xe0] sm:$0xff] %v4573
    %4742 = vst [vmem:[%s3 + $0xe8] sm:$0xff] %v4574
    %4743 = vst [vmem:[%s3 + $0xf0] sm:$0xff] %v4575
    %4744 = vst [vmem:[%s3 + $0xf8] sm:$0xff] %v4576
    %4745 = vst [vmem:[%s3 + $0x100] sm:$0xff] %v4577
    %4746 = vst [vmem:[%s3 + $0x108] sm:$0xff] %v4578
    %4747 = vst [vmem:[%s3 + $0x110] sm:$0xff] %v4579
    %4748 = vst [vmem:[%s3 + $0x118] sm:$0xff] %v4580
    %4749 = vst [vmem:[%s3 + $0x120] sm:$0xff] %v4581
    %4750 = vst [vmem:[%s3 + $0x128] sm:$0xff] %v4582
    %4751 = vst [vmem:[%s3 + $0x130] sm:$0xff] %v4583
    %4752 = vst [vmem:[%s3 + $0x138] sm:$0xff] %v4584
    %4753 = vst [vmem:[%s3 + $0x140] sm:$0xff] %v4585
    %4754 = vst [vmem:[%s3 + $0x148] sm:$0xff] %v4586
    %4755 = vst [vmem:[%s3 + $0x150] sm:$0xff] %v4587
    %4756 = vst [vmem:[%s3 + $0x158] sm:$0xff] %v4588
    %4757 = vst [vmem:[%s3 + $0x160] sm:$0xff] %v4589
    %4758 = vst [vmem:[%s3 + $0x168] sm:$0xff] %v4590
    %4759 = vst [vmem:[%s3 + $0x170] sm:$0xff] %v4591
    %4760 = vst [vmem:[%s3 + $0x178] sm:$0xff] %v4592
    %4761 = vst [vmem:[%s3 + $0x180] sm:$0xff] %v4593
    %4762 = vst [vmem:[%s3 + $0x188] sm:$0xff] %v4594
    %4763 = vst [vmem:[%s3 + $0x190] sm:$0xff] %v4595
    %4764 = vst [vmem:[%s3 + $0x198] sm:$0xff] %v4596
    %4765 = vst [vmem:[%s3 + $0x1a0] sm:$0xff] %v4597
    %4766 = vst [vmem:[%s3 + $0x1a8] sm:$0xff] %v4598
    %4767 = vst [vmem:[%s3 + $0x1b0] sm:$0xff] %v4599
    %4768 = vst [vmem:[%s3 + $0x1b8] sm:$0xff] %v4600
    %4769 = vst [vmem:[%s3 + $0x1c0] sm:$0xff] %v4601
    %4770 = vst [vmem:[%s3 + $0x1c8] sm:$0xff] %v4602
    %4771 = vst [vmem:[%s3 + $0x1d0] sm:$0xff] %v4603
    %4772 = vst [vmem:[%s3 + $0x1d8] sm:$0xff] %v4604
    %4773 = vst [vmem:[%s3 + $0x1e0] sm:$0xff] %v4605
    %4774 = vst [vmem:[%s3 + $0x1e8] sm:$0xff] %v4606
    %4775 = vst [vmem:[%s3 + $0x1f0] sm:$0xff] %v4607
    %4776 = vst [vmem:[%s3 + $0x1f8] sm:$0xff] %v4608
    %4777 = vst [vmem:[%s3 + $0x200] sm:$0xff] %v4609
    %4778 = vst [vmem:[%s3 + $0x208] sm:$0xff] %v4610
    %4779 = vst [vmem:[%s3 + $0x210] sm:$0xff] %v4611
    %4780 = vst [vmem:[%s3 + $0x218] sm:$0xff] %v4612
    %4781 = vst [vmem:[%s3 + $0x220] sm:$0xff] %v4613
    %4782 = vst [vmem:[%s3 + $0x228] sm:$0xff] %v4614
    %4783 = vst [vmem:[%s3 + $0x230] sm:$0xff] %v4615
    %4784 = vst [vmem:[%s3 + $0x238] sm:$0xff] %v4616
    %4785 = vst [vmem:[%s3 + $0x240] sm:$0xff] %v4617
    %4786 = vst [vmem:[%s3 + $0x248] sm:$0xff] %v4618
    %4787 = vst [vmem:[%s3 + $0x250] sm:$0xff] %v4619
    %4788 = vst [vmem:[%s3 + $0x258] sm:$0xff] %v4620
    %4789 = vst [vmem:[%s3 + $0x260] sm:$0xff] %v4621
    %4790 = vst [vmem:[%s3 + $0x268] sm:$0xff] %v4622
    %4791 = vst [vmem:[%s3 + $0x270] sm:$0xff] %v4623
    %4792 = vst [vmem:[%s3 + $0x278] sm:$0xff] %v4624
    %4793 = vst [vmem:[%s3 + $0x280] sm:$0xff] %v4625
    %4794 = vst [vmem:[%s3 + $0x288] sm:$0xff] %v4626
    %4795 = vst [vmem:[%s3 + $0x290] sm:$0xff] %v4627
    %4796 = vst [vmem:[%s3 + $0x298] sm:$0xff] %v4628
    %4797 = vst [vmem:[%s3 + $0x2a0] sm:$0xff] %v4629
    %4798 = vst [vmem:[%s3 + $0x2a8] sm:$0xff] %v4630
    %4799 = vst [vmem:[%s3 + $0x2b0] sm:$0xff] %v4631
    %4800 = vst [vmem:[%s3 + $0x2b8] sm:$0xff] %v4632
    %4801 = vst [vmem:[%s3 + $0x2c0] sm:$0xff] %v4633
    %4802 = vst [vmem:[%s3 + $0x2c8] sm:$0xff] %v4634
    %4803 = vst [vmem:[%s3 + $0x2d0] sm:$0xff] %v4635
    %4804 = vst [vmem:[%s3 + $0x2d8] sm:$0xff] %v4636
    %4805 = vst [vmem:[%s3 + $0x2e0] sm:$0xff] %v4637
    %4806 = vst [vmem:[%s3 + $0x2e8] sm:$0xff] %v4638
    %4807 = vst [vmem:[%s3 + $0x2f0] sm:$0xff] %v4639
    %4808 = vst [vmem:[%s3 + $0x2f8] sm:$0xff] %v4640
    %4809 = vst [vmem:[%s3 + $0x300] sm:$0xff] %v4641
    %4810 = vst [vmem:[%s3 + $0x308] sm:$0xff] %v4642
    %4811 = vst [vmem:[%s3 + $0x310] sm:$0xff] %v4643
    %4812 = vst [vmem:[%s3 + $0x318] sm:$0xff] %v4644
    %4813 = vst [vmem:[%s3 + $0x320] sm:$0xff] %v4645
    %4814 = vst [vmem:[%s3 + $0x328] sm:$0xff] %v4646
    %4815 = vst [vmem:[%s3 + $0x330] sm:$0xff] %v4647
    %4816 = vst [vmem:[%s3 + $0x338] sm:$0xff] %v4648
    %4817 = vst [vmem:[%s3 + $0x340] sm:$0xff] %v4649
    %4818 = vst [vmem:[%s3 + $0x348] sm:$0xff] %v4650
    %4819 = vst [vmem:[%s3 + $0x350] sm:$0xff] %v4651
    %4820 = vst [vmem:[%s3 + $0x358] sm:$0xff] %v4652
    %4821 = vst [vmem:[%s3 + $0x360] sm:$0xff] %v4653
    %4822 = vst [vmem:[%s3 + $0x368] sm:$0xff] %v4654
    %4823 = vst [vmem:[%s3 + $0x370] sm:$0xff] %v4655
    %4824 = vst [vmem:[%s3 + $0x378] sm:$0xff] %v4656
    %4825 = vst [vmem:[%s3 + $0x380] sm:$0xff] %v4657
    %4826 = vst [vmem:[%s3 + $0x388] sm:$0xff] %v4658
    %4827 = vst [vmem:[%s3 + $0x390] sm:$0xff] %v4659
    %4828 = vst [vmem:[%s3 + $0x398] sm:$0xff] %v4660
    %4829 = vst [vmem:[%s3 + $0x3a0] sm:$0xff] %v4661
    %4830 = vst [vmem:[%s3 + $0x3a8] sm:$0xff] %v4662
    %4831 = vst [vmem:[%s3 + $0x3b0] sm:$0xff] %v4663
    %4832 = vst [vmem:[%s3 + $0x3b8] sm:$0xff] %v4664
    %4833 = vst [vmem:[%s3 + $0x3c0] sm:$0xff] %v4665
    %4834 = vst [vmem:[%s3 + $0x3c8] sm:$0xff] %v4666
    %4835 = vst [vmem:[%s3 + $0x3d0] sm:$0xff] %v4667
    %4836 = vst [vmem:[%s3 + $0x3d8] sm:$0xff] %v4668
    %4837 = vst [vmem:[%s3 + $0x3e0] sm:$0xff] %v4669
    %4838 = vst [vmem:[%s3 + $0x3e8] sm:$0xff] %v4670
    %4839 = vst [vmem:[%s3 + $0x3f0] sm:$0xff] %v4671
    %4840 = vst [vmem:[%s3 + $0x3f8] sm:$0xff] %v4672
    %4841 = vst [vmem:[%s3 + $0x400] sm:$0xff] %v4673
    %4842 = vst [vmem:[%s3 + $0x408] sm:$0xff] %v4674
    %4843 = vst [vmem:[%s3 + $0x410] sm:$0xff] %v4675
    %4844 = vst [vmem:[%s3 + $0x418] sm:$0xff] %v4676
    %4845 = vst [vmem:[%s3 + $0x420] sm:$0xff] %v4677
    %4846 = vst [vmem:[%s3 + $0x428] sm:$0xff] %v4678
    %4847 = vst [vmem:[%s3 + $0x430] sm:$0xff] %v4679
    %4848 = vst [vmem:[%s3 + $0x438] sm:$0xff] %v4680
    %4849 = vst [vmem:[%s3 + $0x440] sm:$0xff] %v4681
    %4850 = vst [vmem:[%s3 + $0x448] sm:$0xff] %v4682
    %4851 = vst [vmem:[%s3 + $0x450] sm:$0xff] %v4683
    %4852 = vst [vmem:[%s3 + $0x458] sm:$0xff] %v4684
    %4853 = vst [vmem:[%s3 + $0x460] sm:$0xff] %v4685
    %4854 = vst [vmem:[%s3 + $0x468] sm:$0xff] %v4686
    %4855 = vst [vmem:[%s3 + $0x470] sm:$0xff] %v4687
    %4856 = vst [vmem:[%s3 + $0x478] sm:$0xff] %v4688
    %4857 = vst [vmem:[%s3 + $0x480] sm:$0xff] %v4689
    %4858 = vst [vmem:[%s3 + $0x488] sm:$0xff] %v4690
    %4859 = vst [vmem:[%s3 + $0x490] sm:$0xff] %v4691
    %4860 = vst [vmem:[%s3 + $0x498] sm:$0xff] %v4692
    %4861 = vst [vmem:[%s3 + $0x4a0] sm:$0xff] %v4693
    %4862 = vst [vmem:[%s3 + $0x4a8] sm:$0xff] %v4694
    %4863 = vst [vmem:[%s3 + $0x4b0] sm:$0xff] %v4695
    %4864 = vst [vmem:[%s3 + $0x4b8] sm:$0xff] %v4696
    %4865 = vst [vmem:[%s3 + $0x4c0] sm:$0xff] %v4697
    %4866 = vst [vmem:[%s3 + $0x4c8] sm:$0xff] %v4698
    %4867 = vst [vmem:[%s3 + $0x4d0] sm:$0xff] %v4699
    %4868 = vst [vmem:[%s3 + $0x4d8] sm:$0xff] %v4700
    %4869 = vst [vmem:[%s3 + $0x4e0] sm:$0xff] %v4701
    %4870 = vst [vmem:[%s3 + $0x4e8] sm:$0xff] %v4702
    %4871 = vst [vmem:[%s3 + $0x4f0] sm:$0xff] %v4703
    %4872 = vst [vmem:[%s3 + $0x4f8] sm:$0xff] %v4704
    %4873 = vst [vmem:[%s3 + $0x500] sm:$0xff] %v4705
    %4874 = vst [vmem:[%s3 + $0x508] sm:$0xff] %v4706
    %4875 = vst [vmem:[%s3 + $0x510] sm:$0xff] %v4707
    %4876 = vst [vmem:[%s3 + $0x518] sm:$0xff] %v4708
    %4877 = vst [vmem:[%s3 + $0x520] sm:$0xff] %v4709
    %4878 = vst [vmem:[%s3 + $0x528] sm:$0xff] %v4710
    %4879 = vst [vmem:[%s3 + $0x530] sm:$0xff] %v4711
    %4880 = vst [vmem:[%s3 + $0x538] sm:$0xff] %v4712
    // Predicated region
    $region22: #{net_forward.5} parent=1 // pred_check
      _
    $region23: #{net_forward.5} parent=1 // pred_check_branch
      %4882 = sbr.rel (0) target = $region25
    $region24: #{net_forward.5} parent=1 // pred_region
      _
    $region25: #{net_forward.5} parent=1 // pred_fallthru
      _
    // Predicated region
    $region26: #{net_forward.5} parent=1 // pred_check
      _
    $region27: #{net_forward.5} parent=1 // pred_check_branch
      %4884 = sbr.rel (0) target = $region29
    $region28: #{net_forward.5} parent=1 // pred_region
      _
    $region29: #{net_forward.5} parent=1 // pred_fallthru
      _
    %4885 = vsyncpa [#allocation3], 1
    %4886 = vsyncpa [#allocation5], 1

// kernel: net_forward.8
$region0: #{net_forward.8}
  #allocation0 [shape = 'u32[]', space=smem, size = 0x4, offset = 0x4, fixed_abs, tag = 'smem constant byte address 0x4 - core index']
  #allocation1 [shape = 'u32[72,128]{1,0:T(1,128)}', space=vmem, size = 0x9000, scoped, tag = 'internal scratch']
  %s0 = inlined_call_operand.vmem [shape: f32[16,512], index: 0, kind: input, shape index: {}]
  %s1 = inlined_call_operand.vmem [shape: f32[16,512], index: 1, kind: input, shape index: {}]
  %s2 = inlined_call_operand.vmem [shape: f32[16,512], index: 2, kind: input, shape index: {}]
  %s3 = inlined_call_operand.vmem [shape: f32[16,512], index: 3, kind: input, shape index: {}]
  %s4 = inlined_call_operand.vmem [shape: f32[16,512], index: 4, kind: output, shape index: {}]
  %s5 = sld [smem:[#allocation0]]
  $region26: #{net_forward.8} parent=0
    _
  %s7 = ssub.s32 1, %s5
  %s8 = scalar_select 0, %s7, %s5
  // Predicated region
  $region2: #{net_forward.8} parent=0 // pred_check
    _
  $region3: #{net_forward.8} parent=0 // pred_check_branch
    %10 = sbr.rel (0) target = $region5
  $region4: #{net_forward.8} parent=0 // pred_region
    _
  $region5: #{net_forward.8} parent=0 // pred_fallthru
    _
  // Predicated region
  $region6: #{net_forward.8} parent=0 // pred_check
    _
  $region7: #{net_forward.8} parent=0 // pred_check_branch
    %12 = sbr.rel (0) target = $region9
  $region8: #{net_forward.8} parent=0 // pred_region
    _
  $region9: #{net_forward.8} parent=0 // pred_fallthru
    _
  // Predicated region
  $region10: #{net_forward.8} parent=0 // pred_check
    _
  $region11: #{net_forward.8} parent=0 // pred_check_branch
    %14 = sbr.rel (0) target = $region13
  $region12: #{net_forward.8} parent=0 // pred_region
    _
  $region13: #{net_forward.8} parent=0 // pred_fallthru
    _
  // Predicated region
  $region14: #{net_forward.8} parent=0 // pred_check
    _
  $region15: #{net_forward.8} parent=0 // pred_check_branch
    %16 = sbr.rel (0) target = $region17
  $region16: #{net_forward.8} parent=0 // pred_region
    _
  $region17: #{net_forward.8} parent=0 // pred_fallthru
    _
  %v17 = vld [vmem:[%s0] sm:$0xff]
  %v18 = vld [vmem:[%s0 + $0x8] sm:$0xff]
  %v19 = vld [vmem:[%s0 + $0x10] sm:$0xff]
  %v20 = vld [vmem:[%s0 + $0x18] sm:$0xff]
  %v21 = vld [vmem:[%s0 + $0x20] sm:$0xff]
  %v22 = vld [vmem:[%s0 + $0x28] sm:$0xff]
  %v23 = vld [vmem:[%s0 + $0x30] sm:$0xff]
  %v24 = vld [vmem:[%s0 + $0x38] sm:$0xff]
  %v25 = vld [vmem:[%s1] sm:$0xff]
  %v26 = vld [vmem:[%s1 + $0x8] sm:$0xff]
  %v27 = vld [vmem:[%s1 + $0x10] sm:$0xff]
  %v28 = vld [vmem:[%s1 + $0x18] sm:$0xff]
  %v29 = vld [vmem:[%s1 + $0x20] sm:$0xff]
  %v30 = vld [vmem:[%s1 + $0x28] sm:$0xff]
  %v31 = vld [vmem:[%s1 + $0x30] sm:$0xff]
  %v32 = vld [vmem:[%s1 + $0x38] sm:$0xff]
  %v33 = vmax.f32 %v17, %v25
  %v34 = vmax.f32 %v18, %v26
  %v35 = vmax.f32 %v19, %v27
  %v36 = vmax.f32 %v20, %v28
  %v37 = vmax.f32 %v21, %v29
  %v38 = vmax.f32 %v22, %v30
  %v39 = vmax.f32 %v23, %v31
  %v40 = vmax.f32 %v24, %v32
  %v41 = vld [vmem:[%s2] sm:$0xff]
  %v42 = vld [vmem:[%s2 + $0x8] sm:$0xff]
  %v43 = vld [vmem:[%s2 + $0x10] sm:$0xff]
  %v44 = vld [vmem:[%s2 + $0x18] sm:$0xff]
  %v45 = vld [vmem:[%s2 + $0x20] sm:$0xff]
  %v46 = vld [vmem:[%s2 + $0x28] sm:$0xff]
  %v47 = vld [vmem:[%s2 + $0x30] sm:$0xff]
  %v48 = vld [vmem:[%s2 + $0x38] sm:$0xff]
  %v49 = vld [vmem:[%s3] sm:$0xff]
  %v50 = vld [vmem:[%s3 + $0x8] sm:$0xff]
  %v51 = vld [vmem:[%s3 + $0x10] sm:$0xff]
  %v52 = vld [vmem:[%s3 + $0x18] sm:$0xff]
  %v53 = vld [vmem:[%s3 + $0x20] sm:$0xff]
  %v54 = vld [vmem:[%s3 + $0x28] sm:$0xff]
  %v55 = vld [vmem:[%s3 + $0x30] sm:$0xff]
  %v56 = vld [vmem:[%s3 + $0x38] sm:$0xff]
  %v57 = vmax.f32 %v41, %v49
  %v58 = vmax.f32 %v42, %v50
  %v59 = vmax.f32 %v43, %v51
  %v60 = vmax.f32 %v44, %v52
  %v61 = vmax.f32 %v45, %v53
  %v62 = vmax.f32 %v46, %v54
  %v63 = vmax.f32 %v47, %v55
  %v64 = vmax.f32 %v48, %v56
  %v65 = vmax.f32 %v33, %v57
  %v66 = vmax.f32 %v34, %v58
  %v67 = vmax.f32 %v35, %v59
  %v68 = vmax.f32 %v36, %v60
  %v69 = vmax.f32 %v37, %v61
  %v70 = vmax.f32 %v38, %v62
  %v71 = vmax.f32 %v39, %v63
  %v72 = vmax.f32 %v40, %v64
  %73 = vst [vmem:[%s4] sm:$0xff] %v65
  %74 = vst [vmem:[%s4 + $0x8] sm:$0xff] %v66
  %75 = vst [vmem:[%s4 + $0x10] sm:$0xff] %v67
  %76 = vst [vmem:[%s4 + $0x18] sm:$0xff] %v68
  %77 = vst [vmem:[%s4 + $0x20] sm:$0xff] %v69
  %78 = vst [vmem:[%s4 + $0x28] sm:$0xff] %v70
  %79 = vst [vmem:[%s4 + $0x30] sm:$0xff] %v71
  %80 = vst [vmem:[%s4 + $0x38] sm:$0xff] %v72
  // Predicated region
  $region18: #{net_forward.8} parent=0 // pred_check
    _
  $region19: #{net_forward.8} parent=0 // pred_check_branch
    %82 = sbr.rel (0) target = $region21
  $region20: #{net_forward.8} parent=0 // pred_region
    _
  $region21: #{net_forward.8} parent=0 // pred_fallthru
    _
  // Predicated region
  $region22: #{net_forward.8} parent=0 // pred_check
    _
  $region23: #{net_forward.8} parent=0 // pred_check_branch
    %84 = sbr.rel (0) target = $region25
  $region24: #{net_forward.8} parent=0 // pred_region
    _
  $region25: #{net_forward.8} parent=0 // pred_fallthru
    _

// kernel: net_forward.9
$region0: #{net_forward.9}
  #allocation0 [shape = 'u32[]', space=smem, size = 0x4, offset = 0x4, fixed_abs, tag = 'smem constant byte address 0x4 - core index']
  #allocation1 [shape = 'u32[72,128]{1,0:T(1,128)}', space=vmem, size = 0x9000, scoped, tag = 'internal scratch']
  %s0 = inlined_call_operand.vmem [shape: f32[8,1024], index: 0, kind: input, shape index: {}]
  %s1 = inlined_call_operand.vmem [shape: f32[1024,512], index: 1, kind: input, shape index: {}]
  %s2 = inlined_call_operand.vmem [shape: f32[1,512], index: 2, kind: input, shape index: {}]
  %s3 = inlined_call_operand.vmem [shape: f32[512,128], index: 3, kind: input, shape index: {}]
  %s4 = inlined_call_operand.vmem [shape: f32[1,128], index: 4, kind: input, shape index: {}]
  %s5 = inlined_call_operand.vmem [shape: f32[8,128], index: 5, kind: output, shape index: {}]
  %s6 = sld [smem:[#allocation0]]
  $region30: #{net_forward.9} parent=0
    _
  %s8 = ssub.s32 1, %s6
  %s9 = scalar_select 0, %s8, %s6
  // Predicated region
  $region2: #{net_forward.9} parent=0 // pred_check
    _
  $region3: #{net_forward.9} parent=0 // pred_check_branch
    %11 = sbr.rel (0) target = $region5
  $region4: #{net_forward.9} parent=0 // pred_region
    _
  $region5: #{net_forward.9} parent=0 // pred_fallthru
    _
  // Predicated region
  $region6: #{net_forward.9} parent=0 // pred_check
    _
  $region7: #{net_forward.9} parent=0 // pred_check_branch
    %13 = sbr.rel (0) target = $region9
  $region8: #{net_forward.9} parent=0 // pred_region
    _
  $region9: #{net_forward.9} parent=0 // pred_fallthru
    _
  // Predicated region
  $region10: #{net_forward.9} parent=0 // pred_check
    _
  $region11: #{net_forward.9} parent=0 // pred_check_branch
    %15 = sbr.rel (0) target = $region13
  $region12: #{net_forward.9} parent=0 // pred_region
    _
  $region13: #{net_forward.9} parent=0 // pred_fallthru
    _
  // Predicated region
  $region14: #{net_forward.9} parent=0 // pred_check
    _
  $region15: #{net_forward.9} parent=0 // pred_check_branch
    %17 = sbr.rel (0) target = $region17
  $region16: #{net_forward.9} parent=0 // pred_region
    _
  $region17: #{net_forward.9} parent=0 // pred_fallthru
    _
  // Predicated region
  $region18: #{net_forward.9} parent=0 // pred_check
    _
  $region19: #{net_forward.9} parent=0 // pred_check_branch
    %19 = sbr.rel (0) target = $region21
  $region20: #{net_forward.9} parent=0 // pred_region
    _
  $region21: #{net_forward.9} parent=0 // pred_fallthru
    _
  %v20 = vld [vmem:[%s0] sm:$0xff]
  %v21 = vld [vmem:[%s0 + $0x8] sm:$0xff]
  %v22 = vld [vmem:[%s0 + $0x10] sm:$0xff]
  %v23 = vld [vmem:[%s0 + $0x18] sm:$0xff]
  %v24 = vld [vmem:[%s0 + $0x20] sm:$0xff]
  %v25 = vld [vmem:[%s0 + $0x28] sm:$0xff]
  %v26 = vld [vmem:[%s0 + $0x30] sm:$0xff]
  %v27 = vld [vmem:[%s0 + $0x38] sm:$0xff]
  %v28 = vld [vmem:[%s1] sm:$0xff]
  %v29 = vld [vmem:[%s1 + $0x8] sm:$0xff]
  %v30 = vld [vmem:[%s1 + $0x10] sm:$0xff]
  %v31 = vld [vmem:[%s1 + $0x18] sm:$0xff]
  %v32 = vld [vmem:[%s1 + $0x20] sm:$0xff]
  %v33 = vld [vmem:[%s1 + $0x28] sm:$0xff]
  %v34 = vld [vmem:[%s1 + $0x30] sm:$0xff]
  %v35 = vld [vmem:[%s1 + $0x38] sm:$0xff]
  %v36 = vld [vmem:[%s1 + $0x40] sm:$0xff]
  %v37 = vld [vmem:[%s1 + $0x48] sm:$0xff]
  %v38 = vld [vmem:[%s1 + $0x50] sm:$0xff]
  %v39 = vld [vmem:[%s1 + $0x58] sm:$0xff]
  %v40 = vld [vmem:[%s1 + $0x60] sm:$0xff]
  %v41 = vld [vmem:[%s1 + $0x68] sm:$0xff]
  %v42 = vld [vmem:[%s1 + $0x70] sm:$0xff]
  %v43 = vld [vmem:[%s1 + $0x78] sm:$0xff]
  %v44 = vld [vmem:[%s1 + $0x80] sm:$0xff]
  %v45 = vld [vmem:[%s1 + $0x88] sm:$0xff]
  %v46 = vld [vmem:[%s1 + $0x90] sm:$0xff]
  %v47 = vld [vmem:[%s1 + $0x98] sm:$0xff]
  %v48 = vld [vmem:[%s1 + $0xa0] sm:$0xff]
  %v49 = vld [vmem:[%s1 + $0xa8] sm:$0xff]
  %v50 = vld [vmem:[%s1 + $0xb0] sm:$0xff]
  %v51 = vld [vmem:[%s1 + $0xb8] sm:$0xff]
  %v52 = vld [vmem:[%s1 + $0xc0] sm:$0xff]
  %v53 = vld [vmem:[%s1 + $0xc8] sm:$0xff]
  %v54 = vld [vmem:[%s1 + $0xd0] sm:$0xff]
  %v55 = vld [vmem:[%s1 + $0xd8] sm:$0xff]
  %v56 = vld [vmem:[%s1 + $0xe0] sm:$0xff]
  %v57 = vld [vmem:[%s1 + $0xe8] sm:$0xff]
  %v58 = vld [vmem:[%s1 + $0xf0] sm:$0xff]
  %v59 = vld [vmem:[%s1 + $0xf8] sm:$0xff]
  %v60 = vld [vmem:[%s1 + $0x100] sm:$0xff]
  %v61 = vld [vmem:[%s1 + $0x108] sm:$0xff]
  %v62 = vld [vmem:[%s1 + $0x110] sm:$0xff]
  %v63 = vld [vmem:[%s1 + $0x118] sm:$0xff]
  %v64 = vld [vmem:[%s1 + $0x120] sm:$0xff]
  %v65 = vld [vmem:[%s1 + $0x128] sm:$0xff]
  %v66 = vld [vmem:[%s1 + $0x130] sm:$0xff]
  %v67 = vld [vmem:[%s1 + $0x138] sm:$0xff]
  %v68 = vld [vmem:[%s1 + $0x140] sm:$0xff]
  %v69 = vld [vmem:[%s1 + $0x148] sm:$0xff]
  %v70 = vld [vmem:[%s1 + $0x150] sm:$0xff]
  %v71 = vld [vmem:[%s1 + $0x158] sm:$0xff]
  %v72 = vld [vmem:[%s1 + $0x160] sm:$0xff]
  %v73 = vld [vmem:[%s1 + $0x168] sm:$0xff]
  %v74 = vld [vmem:[%s1 + $0x170] sm:$0xff]
  %v75 = vld [vmem:[%s1 + $0x178] sm:$0xff]
  %v76 = vld [vmem:[%s1 + $0x180] sm:$0xff]
  %v77 = vld [vmem:[%s1 + $0x188] sm:$0xff]
  %v78 = vld [vmem:[%s1 + $0x190] sm:$0xff]
  %v79 = vld [vmem:[%s1 + $0x198] sm:$0xff]
  %v80 = vld [vmem:[%s1 + $0x1a0] sm:$0xff]
  %v81 = vld [vmem:[%s1 + $0x1a8] sm:$0xff]
  %v82 = vld [vmem:[%s1 + $0x1b0] sm:$0xff]
  %v83 = vld [vmem:[%s1 + $0x1b8] sm:$0xff]
  %v84 = vld [vmem:[%s1 + $0x1c0] sm:$0xff]
  %v85 = vld [vmem:[%s1 + $0x1c8] sm:$0xff]
  %v86 = vld [vmem:[%s1 + $0x1d0] sm:$0xff]
  %v87 = vld [vmem:[%s1 + $0x1d8] sm:$0xff]
  %v88 = vld [vmem:[%s1 + $0x1e0] sm:$0xff]
  %v89 = vld [vmem:[%s1 + $0x1e8] sm:$0xff]
  %v90 = vld [vmem:[%s1 + $0x1f0] sm:$0xff]
  %v91 = vld [vmem:[%s1 + $0x1f8] sm:$0xff]
  %v92 = vld [vmem:[%s1 + $0x200] sm:$0xff]
  %v93 = vld [vmem:[%s1 + $0x208] sm:$0xff]
  %v94 = vld [vmem:[%s1 + $0x210] sm:$0xff]
  %v95 = vld [vmem:[%s1 + $0x218] sm:$0xff]
  %v96 = vld [vmem:[%s1 + $0x220] sm:$0xff]
  %v97 = vld [vmem:[%s1 + $0x228] sm:$0xff]
  %v98 = vld [vmem:[%s1 + $0x230] sm:$0xff]
  %v99 = vld [vmem:[%s1 + $0x238] sm:$0xff]
  %v100 = vld [vmem:[%s1 + $0x240] sm:$0xff]
  %v101 = vld [vmem:[%s1 + $0x248] sm:$0xff]
  %v102 = vld [vmem:[%s1 + $0x250] sm:$0xff]
  %v103 = vld [vmem:[%s1 + $0x258] sm:$0xff]
  %v104 = vld [vmem:[%s1 + $0x260] sm:$0xff]
  %v105 = vld [vmem:[%s1 + $0x268] sm:$0xff]
  %v106 = vld [vmem:[%s1 + $0x270] sm:$0xff]
  %v107 = vld [vmem:[%s1 + $0x278] sm:$0xff]
  %v108 = vld [vmem:[%s1 + $0x280] sm:$0xff]
  %v109 = vld [vmem:[%s1 + $0x288] sm:$0xff]
  %v110 = vld [vmem:[%s1 + $0x290] sm:$0xff]
  %v111 = vld [vmem:[%s1 + $0x298] sm:$0xff]
  %v112 = vld [vmem:[%s1 + $0x2a0] sm:$0xff]
  %v113 = vld [vmem:[%s1 + $0x2a8] sm:$0xff]
  %v114 = vld [vmem:[%s1 + $0x2b0] sm:$0xff]
  %v115 = vld [vmem:[%s1 + $0x2b8] sm:$0xff]
  %v116 = vld [vmem:[%s1 + $0x2c0] sm:$0xff]
  %v117 = vld [vmem:[%s1 + $0x2c8] sm:$0xff]
  %v118 = vld [vmem:[%s1 + $0x2d0] sm:$0xff]
  %v119 = vld [vmem:[%s1 + $0x2d8] sm:$0xff]
  %v120 = vld [vmem:[%s1 + $0x2e0] sm:$0xff]
  %v121 = vld [vmem:[%s1 + $0x2e8] sm:$0xff]
  %v122 = vld [vmem:[%s1 + $0x2f0] sm:$0xff]
  %v123 = vld [vmem:[%s1 + $0x2f8] sm:$0xff]
  %v124 = vld [vmem:[%s1 + $0x300] sm:$0xff]
  %v125 = vld [vmem:[%s1 + $0x308] sm:$0xff]
  %v126 = vld [vmem:[%s1 + $0x310] sm:$0xff]
  %v127 = vld [vmem:[%s1 + $0x318] sm:$0xff]
  %v128 = vld [vmem:[%s1 + $0x320] sm:$0xff]
  %v129 = vld [vmem:[%s1 + $0x328] sm:$0xff]
  %v130 = vld [vmem:[%s1 + $0x330] sm:$0xff]
  %v131 = vld [vmem:[%s1 + $0x338] sm:$0xff]
  %v132 = vld [vmem:[%s1 + $0x340] sm:$0xff]
  %v133 = vld [vmem:[%s1 + $0x348] sm:$0xff]
  %v134 = vld [vmem:[%s1 + $0x350] sm:$0xff]
  %v135 = vld [vmem:[%s1 + $0x358] sm:$0xff]
  %v136 = vld [vmem:[%s1 + $0x360] sm:$0xff]
  %v137 = vld [vmem:[%s1 + $0x368] sm:$0xff]
  %v138 = vld [vmem:[%s1 + $0x370] sm:$0xff]
  %v139 = vld [vmem:[%s1 + $0x378] sm:$0xff]
  %v140 = vld [vmem:[%s1 + $0x380] sm:$0xff]
  %v141 = vld [vmem:[%s1 + $0x388] sm:$0xff]
  %v142 = vld [vmem:[%s1 + $0x390] sm:$0xff]
  %v143 = vld [vmem:[%s1 + $0x398] sm:$0xff]
  %v144 = vld [vmem:[%s1 + $0x3a0] sm:$0xff]
  %v145 = vld [vmem:[%s1 + $0x3a8] sm:$0xff]
  %v146 = vld [vmem:[%s1 + $0x3b0] sm:$0xff]
  %v147 = vld [vmem:[%s1 + $0x3b8] sm:$0xff]
  %v148 = vld [vmem:[%s1 + $0x3c0] sm:$0xff]
  %v149 = vld [vmem:[%s1 + $0x3c8] sm:$0xff]
  %v150 = vld [vmem:[%s1 + $0x3d0] sm:$0xff]
  %v151 = vld [vmem:[%s1 + $0x3d8] sm:$0xff]
  %v152 = vld [vmem:[%s1 + $0x3e0] sm:$0xff]
  %v153 = vld [vmem:[%s1 + $0x3e8] sm:$0xff]
  %v154 = vld [vmem:[%s1 + $0x3f0] sm:$0xff]
  %v155 = vld [vmem:[%s1 + $0x3f8] sm:$0xff]
  %v156 = vld [vmem:[%s1 + $0x400] sm:$0xff]
  %v157 = vld [vmem:[%s1 + $0x408] sm:$0xff]
  %v158 = vld [vmem:[%s1 + $0x410] sm:$0xff]
  %v159 = vld [vmem:[%s1 + $0x418] sm:$0xff]
  %v160 = vld [vmem:[%s1 + $0x420] sm:$0xff]
  %v161 = vld [vmem:[%s1 + $0x428] sm:$0xff]
  %v162 = vld [vmem:[%s1 + $0x430] sm:$0xff]
  %v163 = vld [vmem:[%s1 + $0x438] sm:$0xff]
  %v164 = vld [vmem:[%s1 + $0x440] sm:$0xff]
  %v165 = vld [vmem:[%s1 + $0x448] sm:$0xff]
  %v166 = vld [vmem:[%s1 + $0x450] sm:$0xff]
  %v167 = vld [vmem:[%s1 + $0x458] sm:$0xff]
  %v168 = vld [vmem:[%s1 + $0x460] sm:$0xff]
  %v169 = vld [vmem:[%s1 + $0x468] sm:$0xff]
  %v170 = vld [vmem:[%s1 + $0x470] sm:$0xff]
  %v171 = vld [vmem:[%s1 + $0x478] sm:$0xff]
  %v172 = vld [vmem:[%s1 + $0x480] sm:$0xff]
  %v173 = vld [vmem:[%s1 + $0x488] sm:$0xff]
  %v174 = vld [vmem:[%s1 + $0x490] sm:$0xff]
  %v175 = vld [vmem:[%s1 + $0x498] sm:$0xff]
  %v176 = vld [vmem:[%s1 + $0x4a0] sm:$0xff]
  %v177 = vld [vmem:[%s1 + $0x4a8] sm:$0xff]
  %v178 = vld [vmem:[%s1 + $0x4b0] sm:$0xff]
  %v179 = vld [vmem:[%s1 + $0x4b8] sm:$0xff]
  %v180 = vld [vmem:[%s1 + $0x4c0] sm:$0xff]
  %v181 = vld [vmem:[%s1 + $0x4c8] sm:$0xff]
  %v182 = vld [vmem:[%s1 + $0x4d0] sm:$0xff]
  %v183 = vld [vmem:[%s1 + $0x4d8] sm:$0xff]
  %v184 = vld [vmem:[%s1 + $0x4e0] sm:$0xff]
  %v185 = vld [vmem:[%s1 + $0x4e8] sm:$0xff]
  %v186 = vld [vmem:[%s1 + $0x4f0] sm:$0xff]
  %v187 = vld [vmem:[%s1 + $0x4f8] sm:$0xff]
  %v188 = vld [vmem:[%s1 + $0x500] sm:$0xff]
  %v189 = vld [vmem:[%s1 + $0x508] sm:$0xff]
  %v190 = vld [vmem:[%s1 + $0x510] sm:$0xff]
  %v191 = vld [vmem:[%s1 + $0x518] sm:$0xff]
  %v192 = vld [vmem:[%s1 + $0x520] sm:$0xff]
  %v193 = vld [vmem:[%s1 + $0x528] sm:$0xff]
  %v194 = vld [vmem:[%s1 + $0x530] sm:$0xff]
  %v195 = vld [vmem:[%s1 + $0x538] sm:$0xff]
  %v196 = vld [vmem:[%s1 + $0x540] sm:$0xff]
  %v197 = vld [vmem:[%s1 + $0x548] sm:$0xff]
  %v198 = vld [vmem:[%s1 + $0x550] sm:$0xff]
  %v199 = vld [vmem:[%s1 + $0x558] sm:$0xff]
  %v200 = vld [vmem:[%s1 + $0x560] sm:$0xff]
  %v201 = vld [vmem:[%s1 + $0x568] sm:$0xff]
  %v202 = vld [vmem:[%s1 + $0x570] sm:$0xff]
  %v203 = vld [vmem:[%s1 + $0x578] sm:$0xff]
  %v204 = vld [vmem:[%s1 + $0x580] sm:$0xff]
  %v205 = vld [vmem:[%s1 + $0x588] sm:$0xff]
  %v206 = vld [vmem:[%s1 + $0x590] sm:$0xff]
  %v207 = vld [vmem:[%s1 + $0x598] sm:$0xff]
  %v208 = vld [vmem:[%s1 + $0x5a0] sm:$0xff]
  %v209 = vld [vmem:[%s1 + $0x5a8] sm:$0xff]
  %v210 = vld [vmem:[%s1 + $0x5b0] sm:$0xff]
  %v211 = vld [vmem:[%s1 + $0x5b8] sm:$0xff]
  %v212 = vld [vmem:[%s1 + $0x5c0] sm:$0xff]
  %v213 = vld [vmem:[%s1 + $0x5c8] sm:$0xff]
  %v214 = vld [vmem:[%s1 + $0x5d0] sm:$0xff]
  %v215 = vld [vmem:[%s1 + $0x5d8] sm:$0xff]
  %v216 = vld [vmem:[%s1 + $0x5e0] sm:$0xff]
  %v217 = vld [vmem:[%s1 + $0x5e8] sm:$0xff]
  %v218 = vld [vmem:[%s1 + $0x5f0] sm:$0xff]
  %v219 = vld [vmem:[%s1 + $0x5f8] sm:$0xff]
  %v220 = vld [vmem:[%s1 + $0x600] sm:$0xff]
  %v221 = vld [vmem:[%s1 + $0x608] sm:$0xff]
  %v222 = vld [vmem:[%s1 + $0x610] sm:$0xff]
  %v223 = vld [vmem:[%s1 + $0x618] sm:$0xff]
  %v224 = vld [vmem:[%s1 + $0x620] sm:$0xff]
  %v225 = vld [vmem:[%s1 + $0x628] sm:$0xff]
  %v226 = vld [vmem:[%s1 + $0x630] sm:$0xff]
  %v227 = vld [vmem:[%s1 + $0x638] sm:$0xff]
  %v228 = vld [vmem:[%s1 + $0x640] sm:$0xff]
  %v229 = vld [vmem:[%s1 + $0x648] sm:$0xff]
  %v230 = vld [vmem:[%s1 + $0x650] sm:$0xff]
  %v231 = vld [vmem:[%s1 + $0x658] sm:$0xff]
  %v232 = vld [vmem:[%s1 + $0x660] sm:$0xff]
  %v233 = vld [vmem:[%s1 + $0x668] sm:$0xff]
  %v234 = vld [vmem:[%s1 + $0x670] sm:$0xff]
  %v235 = vld [vmem:[%s1 + $0x678] sm:$0xff]
  %v236 = vld [vmem:[%s1 + $0x680] sm:$0xff]
  %v237 = vld [vmem:[%s1 + $0x688] sm:$0xff]
  %v238 = vld [vmem:[%s1 + $0x690] sm:$0xff]
  %v239 = vld [vmem:[%s1 + $0x698] sm:$0xff]
  %v240 = vld [vmem:[%s1 + $0x6a0] sm:$0xff]
  %v241 = vld [vmem:[%s1 + $0x6a8] sm:$0xff]
  %v242 = vld [vmem:[%s1 + $0x6b0] sm:$0xff]
  %v243 = vld [vmem:[%s1 + $0x6b8] sm:$0xff]
  %v244 = vld [vmem:[%s1 + $0x6c0] sm:$0xff]
  %v245 = vld [vmem:[%s1 + $0x6c8] sm:$0xff]
  %v246 = vld [vmem:[%s1 + $0x6d0] sm:$0xff]
  %v247 = vld [vmem:[%s1 + $0x6d8] sm:$0xff]
  %v248 = vld [vmem:[%s1 + $0x6e0] sm:$0xff]
  %v249 = vld [vmem:[%s1 + $0x6e8] sm:$0xff]
  %v250 = vld [vmem:[%s1 + $0x6f0] sm:$0xff]
  %v251 = vld [vmem:[%s1 + $0x6f8] sm:$0xff]
  %v252 = vld [vmem:[%s1 + $0x700] sm:$0xff]
  %v253 = vld [vmem:[%s1 + $0x708] sm:$0xff]
  %v254 = vld [vmem:[%s1 + $0x710] sm:$0xff]
  %v255 = vld [vmem:[%s1 + $0x718] sm:$0xff]
  %v256 = vld [vmem:[%s1 + $0x720] sm:$0xff]
  %v257 = vld [vmem:[%s1 + $0x728] sm:$0xff]
  %v258 = vld [vmem:[%s1 + $0x730] sm:$0xff]
  %v259 = vld [vmem:[%s1 + $0x738] sm:$0xff]
  %v260 = vld [vmem:[%s1 + $0x740] sm:$0xff]
  %v261 = vld [vmem:[%s1 + $0x748] sm:$0xff]
  %v262 = vld [vmem:[%s1 + $0x750] sm:$0xff]
  %v263 = vld [vmem:[%s1 + $0x758] sm:$0xff]
  %v264 = vld [vmem:[%s1 + $0x760] sm:$0xff]
  %v265 = vld [vmem:[%s1 + $0x768] sm:$0xff]
  %v266 = vld [vmem:[%s1 + $0x770] sm:$0xff]
  %v267 = vld [vmem:[%s1 + $0x778] sm:$0xff]
  %v268 = vld [vmem:[%s1 + $0x780] sm:$0xff]
  %v269 = vld [vmem:[%s1 + $0x788] sm:$0xff]
  %v270 = vld [vmem:[%s1 + $0x790] sm:$0xff]
  %v271 = vld [vmem:[%s1 + $0x798] sm:$0xff]
  %v272 = vld [vmem:[%s1 + $0x7a0] sm:$0xff]
  %v273 = vld [vmem:[%s1 + $0x7a8] sm:$0xff]
  %v274 = vld [vmem:[%s1 + $0x7b0] sm:$0xff]
  %v275 = vld [vmem:[%s1 + $0x7b8] sm:$0xff]
  %v276 = vld [vmem:[%s1 + $0x7c0] sm:$0xff]
  %v277 = vld [vmem:[%s1 + $0x7c8] sm:$0xff]
  %v278 = vld [vmem:[%s1 + $0x7d0] sm:$0xff]
  %v279 = vld [vmem:[%s1 + $0x7d8] sm:$0xff]
  %v280 = vld [vmem:[%s1 + $0x7e0] sm:$0xff]
  %v281 = vld [vmem:[%s1 + $0x7e8] sm:$0xff]
  %v282 = vld [vmem:[%s1 + $0x7f0] sm:$0xff]
  %v283 = vld [vmem:[%s1 + $0x7f8] sm:$0xff]
  %v284 = vld [vmem:[%s1 + $0x800] sm:$0xff]
  %v285 = vld [vmem:[%s1 + $0x808] sm:$0xff]
  %v286 = vld [vmem:[%s1 + $0x810] sm:$0xff]
  %v287 = vld [vmem:[%s1 + $0x818] sm:$0xff]
  %v288 = vld [vmem:[%s1 + $0x820] sm:$0xff]
  %v289 = vld [vmem:[%s1 + $0x828] sm:$0xff]
  %v290 = vld [vmem:[%s1 + $0x830] sm:$0xff]
  %v291 = vld [vmem:[%s1 + $0x838] sm:$0xff]
  %v292 = vld [vmem:[%s1 + $0x840] sm:$0xff]
  %v293 = vld [vmem:[%s1 + $0x848] sm:$0xff]
  %v294 = vld [vmem:[%s1 + $0x850] sm:$0xff]
  %v295 = vld [vmem:[%s1 + $0x858] sm:$0xff]
  %v296 = vld [vmem:[%s1 + $0x860] sm:$0xff]
  %v297 = vld [vmem:[%s1 + $0x868] sm:$0xff]
  %v298 = vld [vmem:[%s1 + $0x870] sm:$0xff]
  %v299 = vld [vmem:[%s1 + $0x878] sm:$0xff]
  %v300 = vld [vmem:[%s1 + $0x880] sm:$0xff]
  %v301 = vld [vmem:[%s1 + $0x888] sm:$0xff]
  %v302 = vld [vmem:[%s1 + $0x890] sm:$0xff]
  %v303 = vld [vmem:[%s1 + $0x898] sm:$0xff]
  %v304 = vld [vmem:[%s1 + $0x8a0] sm:$0xff]
  %v305 = vld [vmem:[%s1 + $0x8a8] sm:$0xff]
  %v306 = vld [vmem:[%s1 + $0x8b0] sm:$0xff]
  %v307 = vld [vmem:[%s1 + $0x8b8] sm:$0xff]
  %v308 = vld [vmem:[%s1 + $0x8c0] sm:$0xff]
  %v309 = vld [vmem:[%s1 + $0x8c8] sm:$0xff]
  %v310 = vld [vmem:[%s1 + $0x8d0] sm:$0xff]
  %v311 = vld [vmem:[%s1 + $0x8d8] sm:$0xff]
  %v312 = vld [vmem:[%s1 + $0x8e0] sm:$0xff]
  %v313 = vld [vmem:[%s1 + $0x8e8] sm:$0xff]
  %v314 = vld [vmem:[%s1 + $0x8f0] sm:$0xff]
  %v315 = vld [vmem:[%s1 + $0x8f8] sm:$0xff]
  %v316 = vld [vmem:[%s1 + $0x900] sm:$0xff]
  %v317 = vld [vmem:[%s1 + $0x908] sm:$0xff]
  %v318 = vld [vmem:[%s1 + $0x910] sm:$0xff]
  %v319 = vld [vmem:[%s1 + $0x918] sm:$0xff]
  %v320 = vld [vmem:[%s1 + $0x920] sm:$0xff]
  %v321 = vld [vmem:[%s1 + $0x928] sm:$0xff]
  %v322 = vld [vmem:[%s1 + $0x930] sm:$0xff]
  %v323 = vld [vmem:[%s1 + $0x938] sm:$0xff]
  %v324 = vld [vmem:[%s1 + $0x940] sm:$0xff]
  %v325 = vld [vmem:[%s1 + $0x948] sm:$0xff]
  %v326 = vld [vmem:[%s1 + $0x950] sm:$0xff]
  %v327 = vld [vmem:[%s1 + $0x958] sm:$0xff]
  %v328 = vld [vmem:[%s1 + $0x960] sm:$0xff]
  %v329 = vld [vmem:[%s1 + $0x968] sm:$0xff]
  %v330 = vld [vmem:[%s1 + $0x970] sm:$0xff]
  %v331 = vld [vmem:[%s1 + $0x978] sm:$0xff]
  %v332 = vld [vmem:[%s1 + $0x980] sm:$0xff]
  %v333 = vld [vmem:[%s1 + $0x988] sm:$0xff]
  %v334 = vld [vmem:[%s1 + $0x990] sm:$0xff]
  %v335 = vld [vmem:[%s1 + $0x998] sm:$0xff]
  %v336 = vld [vmem:[%s1 + $0x9a0] sm:$0xff]
  %v337 = vld [vmem:[%s1 + $0x9a8] sm:$0xff]
  %v338 = vld [vmem:[%s1 + $0x9b0] sm:$0xff]
  %v339 = vld [vmem:[%s1 + $0x9b8] sm:$0xff]
  %v340 = vld [vmem:[%s1 + $0x9c0] sm:$0xff]
  %v341 = vld [vmem:[%s1 + $0x9c8] sm:$0xff]
  %v342 = vld [vmem:[%s1 + $0x9d0] sm:$0xff]
  %v343 = vld [vmem:[%s1 + $0x9d8] sm:$0xff]
  %v344 = vld [vmem:[%s1 + $0x9e0] sm:$0xff]
  %v345 = vld [vmem:[%s1 + $0x9e8] sm:$0xff]
  %v346 = vld [vmem:[%s1 + $0x9f0] sm:$0xff]
  %v347 = vld [vmem:[%s1 + $0x9f8] sm:$0xff]
  %v348 = vld [vmem:[%s1 + $0xa00] sm:$0xff]
  %v349 = vld [vmem:[%s1 + $0xa08] sm:$0xff]
  %v350 = vld [vmem:[%s1 + $0xa10] sm:$0xff]
  %v351 = vld [vmem:[%s1 + $0xa18] sm:$0xff]
  %v352 = vld [vmem:[%s1 + $0xa20] sm:$0xff]
  %v353 = vld [vmem:[%s1 + $0xa28] sm:$0xff]
  %v354 = vld [vmem:[%s1 + $0xa30] sm:$0xff]
  %v355 = vld [vmem:[%s1 + $0xa38] sm:$0xff]
  %v356 = vld [vmem:[%s1 + $0xa40] sm:$0xff]
  %v357 = vld [vmem:[%s1 + $0xa48] sm:$0xff]
  %v358 = vld [vmem:[%s1 + $0xa50] sm:$0xff]
  %v359 = vld [vmem:[%s1 + $0xa58] sm:$0xff]
  %v360 = vld [vmem:[%s1 + $0xa60] sm:$0xff]
  %v361 = vld [vmem:[%s1 + $0xa68] sm:$0xff]
  %v362 = vld [vmem:[%s1 + $0xa70] sm:$0xff]
  %v363 = vld [vmem:[%s1 + $0xa78] sm:$0xff]
  %v364 = vld [vmem:[%s1 + $0xa80] sm:$0xff]
  %v365 = vld [vmem:[%s1 + $0xa88] sm:$0xff]
  %v366 = vld [vmem:[%s1 + $0xa90] sm:$0xff]
  %v367 = vld [vmem:[%s1 + $0xa98] sm:$0xff]
  %v368 = vld [vmem:[%s1 + $0xaa0] sm:$0xff]
  %v369 = vld [vmem:[%s1 + $0xaa8] sm:$0xff]
  %v370 = vld [vmem:[%s1 + $0xab0] sm:$0xff]
  %v371 = vld [vmem:[%s1 + $0xab8] sm:$0xff]
  %v372 = vld [vmem:[%s1 + $0xac0] sm:$0xff]
  %v373 = vld [vmem:[%s1 + $0xac8] sm:$0xff]
  %v374 = vld [vmem:[%s1 + $0xad0] sm:$0xff]
  %v375 = vld [vmem:[%s1 + $0xad8] sm:$0xff]
  %v376 = vld [vmem:[%s1 + $0xae0] sm:$0xff]
  %v377 = vld [vmem:[%s1 + $0xae8] sm:$0xff]
  %v378 = vld [vmem:[%s1 + $0xaf0] sm:$0xff]
  %v379 = vld [vmem:[%s1 + $0xaf8] sm:$0xff]
  %v380 = vld [vmem:[%s1 + $0xb00] sm:$0xff]
  %v381 = vld [vmem:[%s1 + $0xb08] sm:$0xff]
  %v382 = vld [vmem:[%s1 + $0xb10] sm:$0xff]
  %v383 = vld [vmem:[%s1 + $0xb18] sm:$0xff]
  %v384 = vld [vmem:[%s1 + $0xb20] sm:$0xff]
  %v385 = vld [vmem:[%s1 + $0xb28] sm:$0xff]
  %v386 = vld [vmem:[%s1 + $0xb30] sm:$0xff]
  %v387 = vld [vmem:[%s1 + $0xb38] sm:$0xff]
  %v388 = vld [vmem:[%s1 + $0xb40] sm:$0xff]
  %v389 = vld [vmem:[%s1 + $0xb48] sm:$0xff]
  %v390 = vld [vmem:[%s1 + $0xb50] sm:$0xff]
  %v391 = vld [vmem:[%s1 + $0xb58] sm:$0xff]
  %v392 = vld [vmem:[%s1 + $0xb60] sm:$0xff]
  %v393 = vld [vmem:[%s1 + $0xb68] sm:$0xff]
  %v394 = vld [vmem:[%s1 + $0xb70] sm:$0xff]
  %v395 = vld [vmem:[%s1 + $0xb78] sm:$0xff]
  %v396 = vld [vmem:[%s1 + $0xb80] sm:$0xff]
  %v397 = vld [vmem:[%s1 + $0xb88] sm:$0xff]
  %v398 = vld [vmem:[%s1 + $0xb90] sm:$0xff]
  %v399 = vld [vmem:[%s1 + $0xb98] sm:$0xff]
  %v400 = vld [vmem:[%s1 + $0xba0] sm:$0xff]
  %v401 = vld [vmem:[%s1 + $0xba8] sm:$0xff]
  %v402 = vld [vmem:[%s1 + $0xbb0] sm:$0xff]
  %v403 = vld [vmem:[%s1 + $0xbb8] sm:$0xff]
  %v404 = vld [vmem:[%s1 + $0xbc0] sm:$0xff]
  %v405 = vld [vmem:[%s1 + $0xbc8] sm:$0xff]
  %v406 = vld [vmem:[%s1 + $0xbd0] sm:$0xff]
  %v407 = vld [vmem:[%s1 + $0xbd8] sm:$0xff]
  %v408 = vld [vmem:[%s1 + $0xbe0] sm:$0xff]
  %v409 = vld [vmem:[%s1 + $0xbe8] sm:$0xff]
  %v410 = vld [vmem:[%s1 + $0xbf0] sm:$0xff]
  %v411 = vld [vmem:[%s1 + $0xbf8] sm:$0xff]
  %v412 = vld [vmem:[%s1 + $0xc00] sm:$0xff]
  %v413 = vld [vmem:[%s1 + $0xc08] sm:$0xff]
  %v414 = vld [vmem:[%s1 + $0xc10] sm:$0xff]
  %v415 = vld [vmem:[%s1 + $0xc18] sm:$0xff]
  %v416 = vld [vmem:[%s1 + $0xc20] sm:$0xff]
  %v417 = vld [vmem:[%s1 + $0xc28] sm:$0xff]
  %v418 = vld [vmem:[%s1 + $0xc30] sm:$0xff]
  %v419 = vld [vmem:[%s1 + $0xc38] sm:$0xff]
  %v420 = vld [vmem:[%s1 + $0xc40] sm:$0xff]
  %v421 = vld [vmem:[%s1 + $0xc48] sm:$0xff]
  %v422 = vld [vmem:[%s1 + $0xc50] sm:$0xff]
  %v423 = vld [vmem:[%s1 + $0xc58] sm:$0xff]
  %v424 = vld [vmem:[%s1 + $0xc60] sm:$0xff]
  %v425 = vld [vmem:[%s1 + $0xc68] sm:$0xff]
  %v426 = vld [vmem:[%s1 + $0xc70] sm:$0xff]
  %v427 = vld [vmem:[%s1 + $0xc78] sm:$0xff]
  %v428 = vld [vmem:[%s1 + $0xc80] sm:$0xff]
  %v429 = vld [vmem:[%s1 + $0xc88] sm:$0xff]
  %v430 = vld [vmem:[%s1 + $0xc90] sm:$0xff]
  %v431 = vld [vmem:[%s1 + $0xc98] sm:$0xff]
  %v432 = vld [vmem:[%s1 + $0xca0] sm:$0xff]
  %v433 = vld [vmem:[%s1 + $0xca8] sm:$0xff]
  %v434 = vld [vmem:[%s1 + $0xcb0] sm:$0xff]
  %v435 = vld [vmem:[%s1 + $0xcb8] sm:$0xff]
  %v436 = vld [vmem:[%s1 + $0xcc0] sm:$0xff]
  %v437 = vld [vmem:[%s1 + $0xcc8] sm:$0xff]
  %v438 = vld [vmem:[%s1 + $0xcd0] sm:$0xff]
  %v439 = vld [vmem:[%s1 + $0xcd8] sm:$0xff]
  %v440 = vld [vmem:[%s1 + $0xce0] sm:$0xff]
  %v441 = vld [vmem:[%s1 + $0xce8] sm:$0xff]
  %v442 = vld [vmem:[%s1 + $0xcf0] sm:$0xff]
  %v443 = vld [vmem:[%s1 + $0xcf8] sm:$0xff]
  %v444 = vld [vmem:[%s1 + $0xd00] sm:$0xff]
  %v445 = vld [vmem:[%s1 + $0xd08] sm:$0xff]
  %v446 = vld [vmem:[%s1 + $0xd10] sm:$0xff]
  %v447 = vld [vmem:[%s1 + $0xd18] sm:$0xff]
  %v448 = vld [vmem:[%s1 + $0xd20] sm:$0xff]
  %v449 = vld [vmem:[%s1 + $0xd28] sm:$0xff]
  %v450 = vld [vmem:[%s1 + $0xd30] sm:$0xff]
  %v451 = vld [vmem:[%s1 + $0xd38] sm:$0xff]
  %v452 = vld [vmem:[%s1 + $0xd40] sm:$0xff]
  %v453 = vld [vmem:[%s1 + $0xd48] sm:$0xff]
  %v454 = vld [vmem:[%s1 + $0xd50] sm:$0xff]
  %v455 = vld [vmem:[%s1 + $0xd58] sm:$0xff]
  %v456 = vld [vmem:[%s1 + $0xd60] sm:$0xff]
  %v457 = vld [vmem:[%s1 + $0xd68] sm:$0xff]
  %v458 = vld [vmem:[%s1 + $0xd70] sm:$0xff]
  %v459 = vld [vmem:[%s1 + $0xd78] sm:$0xff]
  %v460 = vld [vmem:[%s1 + $0xd80] sm:$0xff]
  %v461 = vld [vmem:[%s1 + $0xd88] sm:$0xff]
  %v462 = vld [vmem:[%s1 + $0xd90] sm:$0xff]
  %v463 = vld [vmem:[%s1 + $0xd98] sm:$0xff]
  %v464 = vld [vmem:[%s1 + $0xda0] sm:$0xff]
  %v465 = vld [vmem:[%s1 + $0xda8] sm:$0xff]
  %v466 = vld [vmem:[%s1 + $0xdb0] sm:$0xff]
  %v467 = vld [vmem:[%s1 + $0xdb8] sm:$0xff]
  %v468 = vld [vmem:[%s1 + $0xdc0] sm:$0xff]
  %v469 = vld [vmem:[%s1 + $0xdc8] sm:$0xff]
  %v470 = vld [vmem:[%s1 + $0xdd0] sm:$0xff]
  %v471 = vld [vmem:[%s1 + $0xdd8] sm:$0xff]
  %v472 = vld [vmem:[%s1 + $0xde0] sm:$0xff]
  %v473 = vld [vmem:[%s1 + $0xde8] sm:$0xff]
  %v474 = vld [vmem:[%s1 + $0xdf0] sm:$0xff]
  %v475 = vld [vmem:[%s1 + $0xdf8] sm:$0xff]
  %v476 = vld [vmem:[%s1 + $0xe00] sm:$0xff]
  %v477 = vld [vmem:[%s1 + $0xe08] sm:$0xff]
  %v478 = vld [vmem:[%s1 + $0xe10] sm:$0xff]
  %v479 = vld [vmem:[%s1 + $0xe18] sm:$0xff]
  %v480 = vld [vmem:[%s1 + $0xe20] sm:$0xff]
  %v481 = vld [vmem:[%s1 + $0xe28] sm:$0xff]
  %v482 = vld [vmem:[%s1 + $0xe30] sm:$0xff]
  %v483 = vld [vmem:[%s1 + $0xe38] sm:$0xff]
  %v484 = vld [vmem:[%s1 + $0xe40] sm:$0xff]
  %v485 = vld [vmem:[%s1 + $0xe48] sm:$0xff]
  %v486 = vld [vmem:[%s1 + $0xe50] sm:$0xff]
  %v487 = vld [vmem:[%s1 + $0xe58] sm:$0xff]
  %v488 = vld [vmem:[%s1 + $0xe60] sm:$0xff]
  %v489 = vld [vmem:[%s1 + $0xe68] sm:$0xff]
  %v490 = vld [vmem:[%s1 + $0xe70] sm:$0xff]
  %v491 = vld [vmem:[%s1 + $0xe78] sm:$0xff]
  %v492 = vld [vmem:[%s1 + $0xe80] sm:$0xff]
  %v493 = vld [vmem:[%s1 + $0xe88] sm:$0xff]
  %v494 = vld [vmem:[%s1 + $0xe90] sm:$0xff]
  %v495 = vld [vmem:[%s1 + $0xe98] sm:$0xff]
  %v496 = vld [vmem:[%s1 + $0xea0] sm:$0xff]
  %v497 = vld [vmem:[%s1 + $0xea8] sm:$0xff]
  %v498 = vld [vmem:[%s1 + $0xeb0] sm:$0xff]
  %v499 = vld [vmem:[%s1 + $0xeb8] sm:$0xff]
  %v500 = vld [vmem:[%s1 + $0xec0] sm:$0xff]
  %v501 = vld [vmem:[%s1 + $0xec8] sm:$0xff]
  %v502 = vld [vmem:[%s1 + $0xed0] sm:$0xff]
  %v503 = vld [vmem:[%s1 + $0xed8] sm:$0xff]
  %v504 = vld [vmem:[%s1 + $0xee0] sm:$0xff]
  %v505 = vld [vmem:[%s1 + $0xee8] sm:$0xff]
  %v506 = vld [vmem:[%s1 + $0xef0] sm:$0xff]
  %v507 = vld [vmem:[%s1 + $0xef8] sm:$0xff]
  %v508 = vld [vmem:[%s1 + $0xf00] sm:$0xff]
  %v509 = vld [vmem:[%s1 + $0xf08] sm:$0xff]
  %v510 = vld [vmem:[%s1 + $0xf10] sm:$0xff]
  %v511 = vld [vmem:[%s1 + $0xf18] sm:$0xff]
  %v512 = vld [vmem:[%s1 + $0xf20] sm:$0xff]
  %v513 = vld [vmem:[%s1 + $0xf28] sm:$0xff]
  %v514 = vld [vmem:[%s1 + $0xf30] sm:$0xff]
  %v515 = vld [vmem:[%s1 + $0xf38] sm:$0xff]
  %v516 = vld [vmem:[%s1 + $0xf40] sm:$0xff]
  %v517 = vld [vmem:[%s1 + $0xf48] sm:$0xff]
  %v518 = vld [vmem:[%s1 + $0xf50] sm:$0xff]
  %v519 = vld [vmem:[%s1 + $0xf58] sm:$0xff]
  %v520 = vld [vmem:[%s1 + $0xf60] sm:$0xff]
  %v521 = vld [vmem:[%s1 + $0xf68] sm:$0xff]
  %v522 = vld [vmem:[%s1 + $0xf70] sm:$0xff]
  %v523 = vld [vmem:[%s1 + $0xf78] sm:$0xff]
  %v524 = vld [vmem:[%s1 + $0xf80] sm:$0xff]
  %v525 = vld [vmem:[%s1 + $0xf88] sm:$0xff]
  %v526 = vld [vmem:[%s1 + $0xf90] sm:$0xff]
  %v527 = vld [vmem:[%s1 + $0xf98] sm:$0xff]
  %v528 = vld [vmem:[%s1 + $0xfa0] sm:$0xff]
  %v529 = vld [vmem:[%s1 + $0xfa8] sm:$0xff]
  %v530 = vld [vmem:[%s1 + $0xfb0] sm:$0xff]
  %v531 = vld [vmem:[%s1 + $0xfb8] sm:$0xff]
  %v532 = vld [vmem:[%s1 + $0xfc0] sm:$0xff]
  %v533 = vld [vmem:[%s1 + $0xfc8] sm:$0xff]
  %v534 = vld [vmem:[%s1 + $0xfd0] sm:$0xff]
  %v535 = vld [vmem:[%s1 + $0xfd8] sm:$0xff]
  %v536 = vld [vmem:[%s1 + $0xfe0] sm:$0xff]
  %v537 = vld [vmem:[%s1 + $0xfe8] sm:$0xff]
  %v538 = vld [vmem:[%s1 + $0xff0] sm:$0xff]
  %v539 = vld [vmem:[%s1 + $0xff8] sm:$0xff]
  %v540 = vld [vmem:[%s2] sm:$0xf]
  %v542 = vperm.slane %v540, 0
  %v543 = vperm.slane %v540, 1
  %v544 = vperm.slane %v540, 2
  %v545 = vperm.slane %v540, 3
  %550 = vmatpush.msra.mxu0 %v88
  %551 = vmatpush.msra.mxu0 %v84
  %552 = vmatpush.msra.mxu0 %v80
  %553 = vmatpush.msra.mxu0 %v76
  %554 = vmatpush.msra.mxu0 %v72
  %555 = vmatpush.msra.mxu0 %v68
  %556 = vmatpush.msra.mxu0 %v64
  %557 = vmatpush.msra.mxu0 %v60
  %558 = vmatpush.msra.mxu0 %v56
  %559 = vmatpush.msra.mxu0 %v52
  %560 = vmatpush.msra.mxu0 %v48
  %561 = vmatpush.msra.mxu0 %v44
  %562 = vmatpush.msra.mxu0 %v40
  %563 = vmatpush.msra.mxu0 %v36
  %564 = vmatpush.msra.mxu0 %v32
  %565 = vmatpush.msra.mxu0 %v28
  %566 = vmatmul.f32.gmra.mxu0 %v20
  %v567 = vpop.f32.mrf.mxu0
  %v568 = vadd.f32 %v542, %v567
  %569 = vdwg.mxu0
  %570 = vmatpush.msra.mxu0 %v152
  %571 = vmatpush.msra.mxu0 %v148
  %572 = vmatpush.msra.mxu0 %v144
  %573 = vmatpush.msra.mxu0 %v140
  %574 = vmatpush.msra.mxu0 %v136
  %575 = vmatpush.msra.mxu0 %v132
  %576 = vmatpush.msra.mxu0 %v128
  %577 = vmatpush.msra.mxu0 %v124
  %578 = vmatpush.msra.mxu0 %v120
  %579 = vmatpush.msra.mxu0 %v116
  %580 = vmatpush.msra.mxu0 %v112
  %581 = vmatpush.msra.mxu0 %v108
  %582 = vmatpush.msra.mxu0 %v104
  %583 = vmatpush.msra.mxu0 %v100
  %584 = vmatpush.msra.mxu0 %v96
  %585 = vmatpush.msra.mxu0 %v92
  %586 = vmatmul.f32.gmra.mxu0 %v21
  %v587 = vpop.f32.mrf.mxu0
  %v588 = vadd.f32 %v568, %v587
  %589 = vdwg.mxu0
  %590 = vmatpush.msra.mxu0 %v216
  %591 = vmatpush.msra.mxu0 %v212
  %592 = vmatpush.msra.mxu0 %v208
  %593 = vmatpush.msra.mxu0 %v204
  %594 = vmatpush.msra.mxu0 %v200
  %595 = vmatpush.msra.mxu0 %v196
  %596 = vmatpush.msra.mxu0 %v192
  %597 = vmatpush.msra.mxu0 %v188
  %598 = vmatpush.msra.mxu0 %v184
  %599 = vmatpush.msra.mxu0 %v180
  %600 = vmatpush.msra.mxu0 %v176
  %601 = vmatpush.msra.mxu0 %v172
  %602 = vmatpush.msra.mxu0 %v168
  %603 = vmatpush.msra.mxu0 %v164
  %604 = vmatpush.msra.mxu0 %v160
  %605 = vmatpush.msra.mxu0 %v156
  %606 = vmatmul.f32.gmra.mxu0 %v22
  %v607 = vpop.f32.mrf.mxu0
  %v608 = vadd.f32 %v588, %v607
  %609 = vdwg.mxu0
  %610 = vmatpush.msra.mxu0 %v280
  %611 = vmatpush.msra.mxu0 %v276
  %612 = vmatpush.msra.mxu0 %v272
  %613 = vmatpush.msra.mxu0 %v268
  %614 = vmatpush.msra.mxu0 %v264
  %615 = vmatpush.msra.mxu0 %v260
  %616 = vmatpush.msra.mxu0 %v256
  %617 = vmatpush.msra.mxu0 %v252
  %618 = vmatpush.msra.mxu0 %v248
  %619 = vmatpush.msra.mxu0 %v244
  %620 = vmatpush.msra.mxu0 %v240
  %621 = vmatpush.msra.mxu0 %v236
  %622 = vmatpush.msra.mxu0 %v232
  %623 = vmatpush.msra.mxu0 %v228
  %624 = vmatpush.msra.mxu0 %v224
  %625 = vmatpush.msra.mxu0 %v220
  %626 = vmatmul.f32.gmra.mxu0 %v23
  %v627 = vpop.f32.mrf.mxu0
  %v628 = vadd.f32 %v608, %v627
  %629 = vdwg.mxu0
  %630 = vmatpush.msra.mxu0 %v344
  %631 = vmatpush.msra.mxu0 %v340
  %632 = vmatpush.msra.mxu0 %v336
  %633 = vmatpush.msra.mxu0 %v332
  %634 = vmatpush.msra.mxu0 %v328
  %635 = vmatpush.msra.mxu0 %v324
  %636 = vmatpush.msra.mxu0 %v320
  %637 = vmatpush.msra.mxu0 %v316
  %638 = vmatpush.msra.mxu0 %v312
  %639 = vmatpush.msra.mxu0 %v308
  %640 = vmatpush.msra.mxu0 %v304
  %641 = vmatpush.msra.mxu0 %v300
  %642 = vmatpush.msra.mxu0 %v296
  %643 = vmatpush.msra.mxu0 %v292
  %644 = vmatpush.msra.mxu0 %v288
  %645 = vmatpush.msra.mxu0 %v284
  %646 = vmatmul.f32.gmra.mxu0 %v24
  %v647 = vpop.f32.mrf.mxu0
  %v648 = vadd.f32 %v628, %v647
  %649 = vdwg.mxu0
  %650 = vmatpush.msra.mxu0 %v408
  %651 = vmatpush.msra.mxu0 %v404
  %652 = vmatpush.msra.mxu0 %v400
  %653 = vmatpush.msra.mxu0 %v396
  %654 = vmatpush.msra.mxu0 %v392
  %655 = vmatpush.msra.mxu0 %v388
  %656 = vmatpush.msra.mxu0 %v384
  %657 = vmatpush.msra.mxu0 %v380
  %658 = vmatpush.msra.mxu0 %v376
  %659 = vmatpush.msra.mxu0 %v372
  %660 = vmatpush.msra.mxu0 %v368
  %661 = vmatpush.msra.mxu0 %v364
  %662 = vmatpush.msra.mxu0 %v360
  %663 = vmatpush.msra.mxu0 %v356
  %664 = vmatpush.msra.mxu0 %v352
  %665 = vmatpush.msra.mxu0 %v348
  %666 = vmatmul.f32.gmra.mxu0 %v25
  %v667 = vpop.f32.mrf.mxu0
  %v668 = vadd.f32 %v648, %v667
  %669 = vdwg.mxu0
  %670 = vmatpush.msra.mxu0 %v472
  %671 = vmatpush.msra.mxu0 %v468
  %672 = vmatpush.msra.mxu0 %v464
  %673 = vmatpush.msra.mxu0 %v460
  %674 = vmatpush.msra.mxu0 %v456
  %675 = vmatpush.msra.mxu0 %v452
  %676 = vmatpush.msra.mxu0 %v448
  %677 = vmatpush.msra.mxu0 %v444
  %678 = vmatpush.msra.mxu0 %v440
  %679 = vmatpush.msra.mxu0 %v436
  %680 = vmatpush.msra.mxu0 %v432
  %681 = vmatpush.msra.mxu0 %v428
  %682 = vmatpush.msra.mxu0 %v424
  %683 = vmatpush.msra.mxu0 %v420
  %684 = vmatpush.msra.mxu0 %v416
  %685 = vmatpush.msra.mxu0 %v412
  %686 = vmatmul.f32.gmra.mxu0 %v26
  %v687 = vpop.f32.mrf.mxu0
  %v688 = vadd.f32 %v668, %v687
  %689 = vdwg.mxu0
  %690 = vmatpush.msra.mxu0 %v536
  %691 = vmatpush.msra.mxu0 %v532
  %692 = vmatpush.msra.mxu0 %v528
  %693 = vmatpush.msra.mxu0 %v524
  %694 = vmatpush.msra.mxu0 %v520
  %695 = vmatpush.msra.mxu0 %v516
  %696 = vmatpush.msra.mxu0 %v512
  %697 = vmatpush.msra.mxu0 %v508
  %698 = vmatpush.msra.mxu0 %v504
  %699 = vmatpush.msra.mxu0 %v500
  %700 = vmatpush.msra.mxu0 %v496
  %701 = vmatpush.msra.mxu0 %v492
  %702 = vmatpush.msra.mxu0 %v488
  %703 = vmatpush.msra.mxu0 %v484
  %704 = vmatpush.msra.mxu0 %v480
  %705 = vmatpush.msra.mxu0 %v476
  %706 = vmatmul.f32.gmra.mxu0 %v27
  %v707 = vpop.f32.mrf.mxu0
  %v708 = vadd.f32 %v688, %v707
  %709 = vdwg.mxu0
  %710 = vmatpush.msra.mxu0 %v89
  %711 = vmatpush.msra.mxu0 %v85
  %712 = vmatpush.msra.mxu0 %v81
  %713 = vmatpush.msra.mxu0 %v77
  %714 = vmatpush.msra.mxu0 %v73
  %715 = vmatpush.msra.mxu0 %v69
  %716 = vmatpush.msra.mxu0 %v65
  %717 = vmatpush.msra.mxu0 %v61
  %718 = vmatpush.msra.mxu0 %v57
  %719 = vmatpush.msra.mxu0 %v53
  %720 = vmatpush.msra.mxu0 %v49
  %721 = vmatpush.msra.mxu0 %v45
  %722 = vmatpush.msra.mxu0 %v41
  %723 = vmatpush.msra.mxu0 %v37
  %724 = vmatpush.msra.mxu0 %v33
  %725 = vmatpush.msra.mxu0 %v29
  %726 = vmatmul.f32.gmra.mxu0 %v20
  %v727 = vpop.f32.mrf.mxu0
  %v728 = vadd.f32 %v543, %v727
  %729 = vdwg.mxu0
  %730 = vmatpush.msra.mxu0 %v153
  %731 = vmatpush.msra.mxu0 %v149
  %732 = vmatpush.msra.mxu0 %v145
  %733 = vmatpush.msra.mxu0 %v141
  %734 = vmatpush.msra.mxu0 %v137
  %735 = vmatpush.msra.mxu0 %v133
  %736 = vmatpush.msra.mxu0 %v129
  %737 = vmatpush.msra.mxu0 %v125
  %738 = vmatpush.msra.mxu0 %v121
  %739 = vmatpush.msra.mxu0 %v117
  %740 = vmatpush.msra.mxu0 %v113
  %741 = vmatpush.msra.mxu0 %v109
  %742 = vmatpush.msra.mxu0 %v105
  %743 = vmatpush.msra.mxu0 %v101
  %744 = vmatpush.msra.mxu0 %v97
  %745 = vmatpush.msra.mxu0 %v93
  %746 = vmatmul.f32.gmra.mxu0 %v21
  %v747 = vpop.f32.mrf.mxu0
  %v748 = vadd.f32 %v728, %v747
  %749 = vdwg.mxu0
  %750 = vmatpush.msra.mxu0 %v217
  %751 = vmatpush.msra.mxu0 %v213
  %752 = vmatpush.msra.mxu0 %v209
  %753 = vmatpush.msra.mxu0 %v205
  %754 = vmatpush.msra.mxu0 %v201
  %755 = vmatpush.msra.mxu0 %v197
  %756 = vmatpush.msra.mxu0 %v193
  %757 = vmatpush.msra.mxu0 %v189
  %758 = vmatpush.msra.mxu0 %v185
  %759 = vmatpush.msra.mxu0 %v181
  %760 = vmatpush.msra.mxu0 %v177
  %761 = vmatpush.msra.mxu0 %v173
  %762 = vmatpush.msra.mxu0 %v169
  %763 = vmatpush.msra.mxu0 %v165
  %764 = vmatpush.msra.mxu0 %v161
  %765 = vmatpush.msra.mxu0 %v157
  %766 = vmatmul.f32.gmra.mxu0 %v22
  %v767 = vpop.f32.mrf.mxu0
  %v768 = vadd.f32 %v748, %v767
  %769 = vdwg.mxu0
  %770 = vmatpush.msra.mxu0 %v281
  %771 = vmatpush.msra.mxu0 %v277
  %772 = vmatpush.msra.mxu0 %v273
  %773 = vmatpush.msra.mxu0 %v269
  %774 = vmatpush.msra.mxu0 %v265
  %775 = vmatpush.msra.mxu0 %v261
  %776 = vmatpush.msra.mxu0 %v257
  %777 = vmatpush.msra.mxu0 %v253
  %778 = vmatpush.msra.mxu0 %v249
  %779 = vmatpush.msra.mxu0 %v245
  %780 = vmatpush.msra.mxu0 %v241
  %781 = vmatpush.msra.mxu0 %v237
  %782 = vmatpush.msra.mxu0 %v233
  %783 = vmatpush.msra.mxu0 %v229
  %784 = vmatpush.msra.mxu0 %v225
  %785 = vmatpush.msra.mxu0 %v221
  %786 = vmatmul.f32.gmra.mxu0 %v23
  %v787 = vpop.f32.mrf.mxu0
  %v788 = vadd.f32 %v768, %v787
  %789 = vdwg.mxu0
  %790 = vmatpush.msra.mxu0 %v345
  %791 = vmatpush.msra.mxu0 %v341
  %792 = vmatpush.msra.mxu0 %v337
  %793 = vmatpush.msra.mxu0 %v333
  %794 = vmatpush.msra.mxu0 %v329
  %795 = vmatpush.msra.mxu0 %v325
  %796 = vmatpush.msra.mxu0 %v321
  %797 = vmatpush.msra.mxu0 %v317
  %798 = vmatpush.msra.mxu0 %v313
  %799 = vmatpush.msra.mxu0 %v309
  %800 = vmatpush.msra.mxu0 %v305
  %801 = vmatpush.msra.mxu0 %v301
  %802 = vmatpush.msra.mxu0 %v297
  %803 = vmatpush.msra.mxu0 %v293
  %804 = vmatpush.msra.mxu0 %v289
  %805 = vmatpush.msra.mxu0 %v285
  %806 = vmatmul.f32.gmra.mxu0 %v24
  %v807 = vpop.f32.mrf.mxu0
  %v808 = vadd.f32 %v788, %v807
  %809 = vdwg.mxu0
  %810 = vmatpush.msra.mxu0 %v409
  %811 = vmatpush.msra.mxu0 %v405
  %812 = vmatpush.msra.mxu0 %v401
  %813 = vmatpush.msra.mxu0 %v397
  %814 = vmatpush.msra.mxu0 %v393
  %815 = vmatpush.msra.mxu0 %v389
  %816 = vmatpush.msra.mxu0 %v385
  %817 = vmatpush.msra.mxu0 %v381
  %818 = vmatpush.msra.mxu0 %v377
  %819 = vmatpush.msra.mxu0 %v373
  %820 = vmatpush.msra.mxu0 %v369
  %821 = vmatpush.msra.mxu0 %v365
  %822 = vmatpush.msra.mxu0 %v361
  %823 = vmatpush.msra.mxu0 %v357
  %824 = vmatpush.msra.mxu0 %v353
  %825 = vmatpush.msra.mxu0 %v349
  %826 = vmatmul.f32.gmra.mxu0 %v25
  %v827 = vpop.f32.mrf.mxu0
  %v828 = vadd.f32 %v808, %v827
  %829 = vdwg.mxu0
  %830 = vmatpush.msra.mxu0 %v473
  %831 = vmatpush.msra.mxu0 %v469
  %832 = vmatpush.msra.mxu0 %v465
  %833 = vmatpush.msra.mxu0 %v461
  %834 = vmatpush.msra.mxu0 %v457
  %835 = vmatpush.msra.mxu0 %v453
  %836 = vmatpush.msra.mxu0 %v449
  %837 = vmatpush.msra.mxu0 %v445
  %838 = vmatpush.msra.mxu0 %v441
  %839 = vmatpush.msra.mxu0 %v437
  %840 = vmatpush.msra.mxu0 %v433
  %841 = vmatpush.msra.mxu0 %v429
  %842 = vmatpush.msra.mxu0 %v425
  %843 = vmatpush.msra.mxu0 %v421
  %844 = vmatpush.msra.mxu0 %v417
  %845 = vmatpush.msra.mxu0 %v413
  %846 = vmatmul.f32.gmra.mxu0 %v26
  %v847 = vpop.f32.mrf.mxu0
  %v848 = vadd.f32 %v828, %v847
  %849 = vdwg.mxu0
  %850 = vmatpush.msra.mxu0 %v537
  %851 = vmatpush.msra.mxu0 %v533
  %852 = vmatpush.msra.mxu0 %v529
  %853 = vmatpush.msra.mxu0 %v525
  %854 = vmatpush.msra.mxu0 %v521
  %855 = vmatpush.msra.mxu0 %v517
  %856 = vmatpush.msra.mxu0 %v513
  %857 = vmatpush.msra.mxu0 %v509
  %858 = vmatpush.msra.mxu0 %v505
  %859 = vmatpush.msra.mxu0 %v501
  %860 = vmatpush.msra.mxu0 %v497
  %861 = vmatpush.msra.mxu0 %v493
  %862 = vmatpush.msra.mxu0 %v489
  %863 = vmatpush.msra.mxu0 %v485
  %864 = vmatpush.msra.mxu0 %v481
  %865 = vmatpush.msra.mxu0 %v477
  %866 = vmatmul.f32.gmra.mxu0 %v27
  %v867 = vpop.f32.mrf.mxu0
  %v868 = vadd.f32 %v848, %v867
  %869 = vdwg.mxu0
  %870 = vmatpush.msra.mxu0 %v90
  %871 = vmatpush.msra.mxu0 %v86
  %872 = vmatpush.msra.mxu0 %v82
  %873 = vmatpush.msra.mxu0 %v78
  %874 = vmatpush.msra.mxu0 %v74
  %875 = vmatpush.msra.mxu0 %v70
  %876 = vmatpush.msra.mxu0 %v66
  %877 = vmatpush.msra.mxu0 %v62
  %878 = vmatpush.msra.mxu0 %v58
  %879 = vmatpush.msra.mxu0 %v54
  %880 = vmatpush.msra.mxu0 %v50
  %881 = vmatpush.msra.mxu0 %v46
  %882 = vmatpush.msra.mxu0 %v42
  %883 = vmatpush.msra.mxu0 %v38
  %884 = vmatpush.msra.mxu0 %v34
  %885 = vmatpush.msra.mxu0 %v30
  %886 = vmatmul.f32.gmra.mxu0 %v20
  %v887 = vpop.f32.mrf.mxu0
  %v888 = vadd.f32 %v544, %v887
  %889 = vdwg.mxu0
  %890 = vmatpush.msra.mxu0 %v154
  %891 = vmatpush.msra.mxu0 %v150
  %892 = vmatpush.msra.mxu0 %v146
  %893 = vmatpush.msra.mxu0 %v142
  %894 = vmatpush.msra.mxu0 %v138
  %895 = vmatpush.msra.mxu0 %v134
  %896 = vmatpush.msra.mxu0 %v130
  %897 = vmatpush.msra.mxu0 %v126
  %898 = vmatpush.msra.mxu0 %v122
  %899 = vmatpush.msra.mxu0 %v118
  %900 = vmatpush.msra.mxu0 %v114
  %901 = vmatpush.msra.mxu0 %v110
  %902 = vmatpush.msra.mxu0 %v106
  %903 = vmatpush.msra.mxu0 %v102
  %904 = vmatpush.msra.mxu0 %v98
  %905 = vmatpush.msra.mxu0 %v94
  %906 = vmatmul.f32.gmra.mxu0 %v21
  %v907 = vpop.f32.mrf.mxu0
  %v908 = vadd.f32 %v888, %v907
  %909 = vdwg.mxu0
  %910 = vmatpush.msra.mxu0 %v218
  %911 = vmatpush.msra.mxu0 %v214
  %912 = vmatpush.msra.mxu0 %v210
  %913 = vmatpush.msra.mxu0 %v206
  %914 = vmatpush.msra.mxu0 %v202
  %915 = vmatpush.msra.mxu0 %v198
  %916 = vmatpush.msra.mxu0 %v194
  %917 = vmatpush.msra.mxu0 %v190
  %918 = vmatpush.msra.mxu0 %v186
  %919 = vmatpush.msra.mxu0 %v182
  %920 = vmatpush.msra.mxu0 %v178
  %921 = vmatpush.msra.mxu0 %v174
  %922 = vmatpush.msra.mxu0 %v170
  %923 = vmatpush.msra.mxu0 %v166
  %924 = vmatpush.msra.mxu0 %v162
  %925 = vmatpush.msra.mxu0 %v158
  %926 = vmatmul.f32.gmra.mxu0 %v22
  %v927 = vpop.f32.mrf.mxu0
  %v928 = vadd.f32 %v908, %v927
  %929 = vdwg.mxu0
  %930 = vmatpush.msra.mxu0 %v282
  %931 = vmatpush.msra.mxu0 %v278
  %932 = vmatpush.msra.mxu0 %v274
  %933 = vmatpush.msra.mxu0 %v270
  %934 = vmatpush.msra.mxu0 %v266
  %935 = vmatpush.msra.mxu0 %v262
  %936 = vmatpush.msra.mxu0 %v258
  %937 = vmatpush.msra.mxu0 %v254
  %938 = vmatpush.msra.mxu0 %v250
  %939 = vmatpush.msra.mxu0 %v246
  %940 = vmatpush.msra.mxu0 %v242
  %941 = vmatpush.msra.mxu0 %v238
  %942 = vmatpush.msra.mxu0 %v234
  %943 = vmatpush.msra.mxu0 %v230
  %944 = vmatpush.msra.mxu0 %v226
  %945 = vmatpush.msra.mxu0 %v222
  %946 = vmatmul.f32.gmra.mxu0 %v23
  %v947 = vpop.f32.mrf.mxu0
  %v948 = vadd.f32 %v928, %v947
  %949 = vdwg.mxu0
  %950 = vmatpush.msra.mxu0 %v346
  %951 = vmatpush.msra.mxu0 %v342
  %952 = vmatpush.msra.mxu0 %v338
  %953 = vmatpush.msra.mxu0 %v334
  %954 = vmatpush.msra.mxu0 %v330
  %955 = vmatpush.msra.mxu0 %v326
  %956 = vmatpush.msra.mxu0 %v322
  %957 = vmatpush.msra.mxu0 %v318
  %958 = vmatpush.msra.mxu0 %v314
  %959 = vmatpush.msra.mxu0 %v310
  %960 = vmatpush.msra.mxu0 %v306
  %961 = vmatpush.msra.mxu0 %v302
  %962 = vmatpush.msra.mxu0 %v298
  %963 = vmatpush.msra.mxu0 %v294
  %964 = vmatpush.msra.mxu0 %v290
  %965 = vmatpush.msra.mxu0 %v286
  %966 = vmatmul.f32.gmra.mxu0 %v24
  %v967 = vpop.f32.mrf.mxu0
  %v968 = vadd.f32 %v948, %v967
  %969 = vdwg.mxu0
  %970 = vmatpush.msra.mxu0 %v410
  %971 = vmatpush.msra.mxu0 %v406
  %972 = vmatpush.msra.mxu0 %v402
  %973 = vmatpush.msra.mxu0 %v398
  %974 = vmatpush.msra.mxu0 %v394
  %975 = vmatpush.msra.mxu0 %v390
  %976 = vmatpush.msra.mxu0 %v386
  %977 = vmatpush.msra.mxu0 %v382
  %978 = vmatpush.msra.mxu0 %v378
  %979 = vmatpush.msra.mxu0 %v374
  %980 = vmatpush.msra.mxu0 %v370
  %981 = vmatpush.msra.mxu0 %v366
  %982 = vmatpush.msra.mxu0 %v362
  %983 = vmatpush.msra.mxu0 %v358
  %984 = vmatpush.msra.mxu0 %v354
  %985 = vmatpush.msra.mxu0 %v350
  %986 = vmatmul.f32.gmra.mxu0 %v25
  %v987 = vpop.f32.mrf.mxu0
  %v988 = vadd.f32 %v968, %v987
  %989 = vdwg.mxu0
  %990 = vmatpush.msra.mxu0 %v474
  %991 = vmatpush.msra.mxu0 %v470
  %992 = vmatpush.msra.mxu0 %v466
  %993 = vmatpush.msra.mxu0 %v462
  %994 = vmatpush.msra.mxu0 %v458
  %995 = vmatpush.msra.mxu0 %v454
  %996 = vmatpush.msra.mxu0 %v450
  %997 = vmatpush.msra.mxu0 %v446
  %998 = vmatpush.msra.mxu0 %v442
  %999 = vmatpush.msra.mxu0 %v438
  %1000 = vmatpush.msra.mxu0 %v434
  %1001 = vmatpush.msra.mxu0 %v430
  %1002 = vmatpush.msra.mxu0 %v426
  %1003 = vmatpush.msra.mxu0 %v422
  %1004 = vmatpush.msra.mxu0 %v418
  %1005 = vmatpush.msra.mxu0 %v414
  %1006 = vmatmul.f32.gmra.mxu0 %v26
  %v1007 = vpop.f32.mrf.mxu0
  %v1008 = vadd.f32 %v988, %v1007
  %1009 = vdwg.mxu0
  %1010 = vmatpush.msra.mxu0 %v538
  %1011 = vmatpush.msra.mxu0 %v534
  %1012 = vmatpush.msra.mxu0 %v530
  %1013 = vmatpush.msra.mxu0 %v526
  %1014 = vmatpush.msra.mxu0 %v522
  %1015 = vmatpush.msra.mxu0 %v518
  %1016 = vmatpush.msra.mxu0 %v514
  %1017 = vmatpush.msra.mxu0 %v510
  %1018 = vmatpush.msra.mxu0 %v506
  %1019 = vmatpush.msra.mxu0 %v502
  %1020 = vmatpush.msra.mxu0 %v498
  %1021 = vmatpush.msra.mxu0 %v494
  %1022 = vmatpush.msra.mxu0 %v490
  %1023 = vmatpush.msra.mxu0 %v486
  %1024 = vmatpush.msra.mxu0 %v482
  %1025 = vmatpush.msra.mxu0 %v478
  %1026 = vmatmul.f32.gmra.mxu0 %v27
  %v1027 = vpop.f32.mrf.mxu0
  %v1028 = vadd.f32 %v1008, %v1027
  %1029 = vdwg.mxu0
  %1030 = vmatpush.msra.mxu0 %v91
  %1031 = vmatpush.msra.mxu0 %v87
  %1032 = vmatpush.msra.mxu0 %v83
  %1033 = vmatpush.msra.mxu0 %v79
  %1034 = vmatpush.msra.mxu0 %v75
  %1035 = vmatpush.msra.mxu0 %v71
  %1036 = vmatpush.msra.mxu0 %v67
  %1037 = vmatpush.msra.mxu0 %v63
  %1038 = vmatpush.msra.mxu0 %v59
  %1039 = vmatpush.msra.mxu0 %v55
  %1040 = vmatpush.msra.mxu0 %v51
  %1041 = vmatpush.msra.mxu0 %v47
  %1042 = vmatpush.msra.mxu0 %v43
  %1043 = vmatpush.msra.mxu0 %v39
  %1044 = vmatpush.msra.mxu0 %v35
  %1045 = vmatpush.msra.mxu0 %v31
  %1046 = vmatmul.f32.gmra.mxu0 %v20
  %v1047 = vpop.f32.mrf.mxu0
  %v1048 = vadd.f32 %v545, %v1047
  %1049 = vdwg.mxu0
  %1050 = vmatpush.msra.mxu0 %v155
  %1051 = vmatpush.msra.mxu0 %v151
  %1052 = vmatpush.msra.mxu0 %v147
  %1053 = vmatpush.msra.mxu0 %v143
  %1054 = vmatpush.msra.mxu0 %v139
  %1055 = vmatpush.msra.mxu0 %v135
  %1056 = vmatpush.msra.mxu0 %v131
  %1057 = vmatpush.msra.mxu0 %v127
  %1058 = vmatpush.msra.mxu0 %v123
  %1059 = vmatpush.msra.mxu0 %v119
  %1060 = vmatpush.msra.mxu0 %v115
  %1061 = vmatpush.msra.mxu0 %v111
  %1062 = vmatpush.msra.mxu0 %v107
  %1063 = vmatpush.msra.mxu0 %v103
  %1064 = vmatpush.msra.mxu0 %v99
  %1065 = vmatpush.msra.mxu0 %v95
  %1066 = vmatmul.f32.gmra.mxu0 %v21
  %v1067 = vpop.f32.mrf.mxu0
  %v1068 = vadd.f32 %v1048, %v1067
  %1069 = vdwg.mxu0
  %1070 = vmatpush.msra.mxu0 %v219
  %1071 = vmatpush.msra.mxu0 %v215
  %1072 = vmatpush.msra.mxu0 %v211
  %1073 = vmatpush.msra.mxu0 %v207
  %1074 = vmatpush.msra.mxu0 %v203
  %1075 = vmatpush.msra.mxu0 %v199
  %1076 = vmatpush.msra.mxu0 %v195
  %1077 = vmatpush.msra.mxu0 %v191
  %1078 = vmatpush.msra.mxu0 %v187
  %1079 = vmatpush.msra.mxu0 %v183
  %1080 = vmatpush.msra.mxu0 %v179
  %1081 = vmatpush.msra.mxu0 %v175
  %1082 = vmatpush.msra.mxu0 %v171
  %1083 = vmatpush.msra.mxu0 %v167
  %1084 = vmatpush.msra.mxu0 %v163
  %1085 = vmatpush.msra.mxu0 %v159
  %1086 = vmatmul.f32.gmra.mxu0 %v22
  %v1087 = vpop.f32.mrf.mxu0
  %v1088 = vadd.f32 %v1068, %v1087
  %1089 = vdwg.mxu0
  %1090 = vmatpush.msra.mxu0 %v283
  %1091 = vmatpush.msra.mxu0 %v279
  %1092 = vmatpush.msra.mxu0 %v275
  %1093 = vmatpush.msra.mxu0 %v271
  %1094 = vmatpush.msra.mxu0 %v267
  %1095 = vmatpush.msra.mxu0 %v263
  %1096 = vmatpush.msra.mxu0 %v259
  %1097 = vmatpush.msra.mxu0 %v255
  %1098 = vmatpush.msra.mxu0 %v251
  %1099 = vmatpush.msra.mxu0 %v247
  %1100 = vmatpush.msra.mxu0 %v243
  %1101 = vmatpush.msra.mxu0 %v239
  %1102 = vmatpush.msra.mxu0 %v235
  %1103 = vmatpush.msra.mxu0 %v231
  %1104 = vmatpush.msra.mxu0 %v227
  %1105 = vmatpush.msra.mxu0 %v223
  %1106 = vmatmul.f32.gmra.mxu0 %v23
  %v1107 = vpop.f32.mrf.mxu0
  %v1108 = vadd.f32 %v1088, %v1107
  %1109 = vdwg.mxu0
  %1110 = vmatpush.msra.mxu0 %v347
  %1111 = vmatpush.msra.mxu0 %v343
  %1112 = vmatpush.msra.mxu0 %v339
  %1113 = vmatpush.msra.mxu0 %v335
  %1114 = vmatpush.msra.mxu0 %v331
  %1115 = vmatpush.msra.mxu0 %v327
  %1116 = vmatpush.msra.mxu0 %v323
  %1117 = vmatpush.msra.mxu0 %v319
  %1118 = vmatpush.msra.mxu0 %v315
  %1119 = vmatpush.msra.mxu0 %v311
  %1120 = vmatpush.msra.mxu0 %v307
  %1121 = vmatpush.msra.mxu0 %v303
  %1122 = vmatpush.msra.mxu0 %v299
  %1123 = vmatpush.msra.mxu0 %v295
  %1124 = vmatpush.msra.mxu0 %v291
  %1125 = vmatpush.msra.mxu0 %v287
  %1126 = vmatmul.f32.gmra.mxu0 %v24
  %v1127 = vpop.f32.mrf.mxu0
  %v1128 = vadd.f32 %v1108, %v1127
  %1129 = vdwg.mxu0
  %1130 = vmatpush.msra.mxu0 %v411
  %1131 = vmatpush.msra.mxu0 %v407
  %1132 = vmatpush.msra.mxu0 %v403
  %1133 = vmatpush.msra.mxu0 %v399
  %1134 = vmatpush.msra.mxu0 %v395
  %1135 = vmatpush.msra.mxu0 %v391
  %1136 = vmatpush.msra.mxu0 %v387
  %1137 = vmatpush.msra.mxu0 %v383
  %1138 = vmatpush.msra.mxu0 %v379
  %1139 = vmatpush.msra.mxu0 %v375
  %1140 = vmatpush.msra.mxu0 %v371
  %1141 = vmatpush.msra.mxu0 %v367
  %1142 = vmatpush.msra.mxu0 %v363
  %1143 = vmatpush.msra.mxu0 %v359
  %1144 = vmatpush.msra.mxu0 %v355
  %1145 = vmatpush.msra.mxu0 %v351
  %1146 = vmatmul.f32.gmra.mxu0 %v25
  %v1147 = vpop.f32.mrf.mxu0
  %v1148 = vadd.f32 %v1128, %v1147
  %1149 = vdwg.mxu0
  %1150 = vmatpush.msra.mxu0 %v475
  %1151 = vmatpush.msra.mxu0 %v471
  %1152 = vmatpush.msra.mxu0 %v467
  %1153 = vmatpush.msra.mxu0 %v463
  %1154 = vmatpush.msra.mxu0 %v459
  %1155 = vmatpush.msra.mxu0 %v455
  %1156 = vmatpush.msra.mxu0 %v451
  %1157 = vmatpush.msra.mxu0 %v447
  %1158 = vmatpush.msra.mxu0 %v443
  %1159 = vmatpush.msra.mxu0 %v439
  %1160 = vmatpush.msra.mxu0 %v435
  %1161 = vmatpush.msra.mxu0 %v431
  %1162 = vmatpush.msra.mxu0 %v427
  %1163 = vmatpush.msra.mxu0 %v423
  %1164 = vmatpush.msra.mxu0 %v419
  %1165 = vmatpush.msra.mxu0 %v415
  %1166 = vmatmul.f32.gmra.mxu0 %v26
  %v1167 = vpop.f32.mrf.mxu0
  %v1168 = vadd.f32 %v1148, %v1167
  %1169 = vdwg.mxu0
  %1170 = vmatpush.msra.mxu0 %v539
  %1171 = vmatpush.msra.mxu0 %v535
  %1172 = vmatpush.msra.mxu0 %v531
  %1173 = vmatpush.msra.mxu0 %v527
  %1174 = vmatpush.msra.mxu0 %v523
  %1175 = vmatpush.msra.mxu0 %v519
  %1176 = vmatpush.msra.mxu0 %v515
  %1177 = vmatpush.msra.mxu0 %v511
  %1178 = vmatpush.msra.mxu0 %v507
  %1179 = vmatpush.msra.mxu0 %v503
  %1180 = vmatpush.msra.mxu0 %v499
  %1181 = vmatpush.msra.mxu0 %v495
  %1182 = vmatpush.msra.mxu0 %v491
  %1183 = vmatpush.msra.mxu0 %v487
  %1184 = vmatpush.msra.mxu0 %v483
  %1185 = vmatpush.msra.mxu0 %v479
  %1186 = vmatmul.f32.gmra.mxu0 %v27
  %v1187 = vpop.f32.mrf.mxu0
  %v1188 = vadd.f32 %v1168, %v1187
  %1189 = vdwg.mxu0
  %v1190 = vmax.f32 %v708, 0.0
  %v1191 = vmax.f32 %v868, 0.0
  %v1192 = vmax.f32 %v1028, 0.0
  %v1193 = vmax.f32 %v1188, 0.0
  %v1194 = vld [vmem:[%s3] sm:$0xff]
  %v1195 = vld [vmem:[%s3 + $0x8] sm:$0xff]
  %v1196 = vld [vmem:[%s3 + $0x10] sm:$0xff]
  %v1197 = vld [vmem:[%s3 + $0x18] sm:$0xff]
  %v1198 = vld [vmem:[%s3 + $0x20] sm:$0xff]
  %v1199 = vld [vmem:[%s3 + $0x28] sm:$0xff]
  %v1200 = vld [vmem:[%s3 + $0x30] sm:$0xff]
  %v1201 = vld [vmem:[%s3 + $0x38] sm:$0xff]
  %v1202 = vld [vmem:[%s3 + $0x40] sm:$0xff]
  %v1203 = vld [vmem:[%s3 + $0x48] sm:$0xff]
  %v1204 = vld [vmem:[%s3 + $0x50] sm:$0xff]
  %v1205 = vld [vmem:[%s3 + $0x58] sm:$0xff]
  %v1206 = vld [vmem:[%s3 + $0x60] sm:$0xff]
  %v1207 = vld [vmem:[%s3 + $0x68] sm:$0xff]
  %v1208 = vld [vmem:[%s3 + $0x70] sm:$0xff]
  %v1209 = vld [vmem:[%s3 + $0x78] sm:$0xff]
  %v1210 = vld [vmem:[%s3 + $0x80] sm:$0xff]
  %v1211 = vld [vmem:[%s3 + $0x88] sm:$0xff]
  %v1212 = vld [vmem:[%s3 + $0x90] sm:$0xff]
  %v1213 = vld [vmem:[%s3 + $0x98] sm:$0xff]
  %v1214 = vld [vmem:[%s3 + $0xa0] sm:$0xff]
  %v1215 = vld [vmem:[%s3 + $0xa8] sm:$0xff]
  %v1216 = vld [vmem:[%s3 + $0xb0] sm:$0xff]
  %v1217 = vld [vmem:[%s3 + $0xb8] sm:$0xff]
  %v1218 = vld [vmem:[%s3 + $0xc0] sm:$0xff]
  %v1219 = vld [vmem:[%s3 + $0xc8] sm:$0xff]
  %v1220 = vld [vmem:[%s3 + $0xd0] sm:$0xff]
  %v1221 = vld [vmem:[%s3 + $0xd8] sm:$0xff]
  %v1222 = vld [vmem:[%s3 + $0xe0] sm:$0xff]
  %v1223 = vld [vmem:[%s3 + $0xe8] sm:$0xff]
  %v1224 = vld [vmem:[%s3 + $0xf0] sm:$0xff]
  %v1225 = vld [vmem:[%s3 + $0xf8] sm:$0xff]
  %v1226 = vld [vmem:[%s3 + $0x100] sm:$0xff]
  %v1227 = vld [vmem:[%s3 + $0x108] sm:$0xff]
  %v1228 = vld [vmem:[%s3 + $0x110] sm:$0xff]
  %v1229 = vld [vmem:[%s3 + $0x118] sm:$0xff]
  %v1230 = vld [vmem:[%s3 + $0x120] sm:$0xff]
  %v1231 = vld [vmem:[%s3 + $0x128] sm:$0xff]
  %v1232 = vld [vmem:[%s3 + $0x130] sm:$0xff]
  %v1233 = vld [vmem:[%s3 + $0x138] sm:$0xff]
  %v1234 = vld [vmem:[%s3 + $0x140] sm:$0xff]
  %v1235 = vld [vmem:[%s3 + $0x148] sm:$0xff]
  %v1236 = vld [vmem:[%s3 + $0x150] sm:$0xff]
  %v1237 = vld [vmem:[%s3 + $0x158] sm:$0xff]
  %v1238 = vld [vmem:[%s3 + $0x160] sm:$0xff]
  %v1239 = vld [vmem:[%s3 + $0x168] sm:$0xff]
  %v1240 = vld [vmem:[%s3 + $0x170] sm:$0xff]
  %v1241 = vld [vmem:[%s3 + $0x178] sm:$0xff]
  %v1242 = vld [vmem:[%s3 + $0x180] sm:$0xff]
  %v1243 = vld [vmem:[%s3 + $0x188] sm:$0xff]
  %v1244 = vld [vmem:[%s3 + $0x190] sm:$0xff]
  %v1245 = vld [vmem:[%s3 + $0x198] sm:$0xff]
  %v1246 = vld [vmem:[%s3 + $0x1a0] sm:$0xff]
  %v1247 = vld [vmem:[%s3 + $0x1a8] sm:$0xff]
  %v1248 = vld [vmem:[%s3 + $0x1b0] sm:$0xff]
  %v1249 = vld [vmem:[%s3 + $0x1b8] sm:$0xff]
  %v1250 = vld [vmem:[%s3 + $0x1c0] sm:$0xff]
  %v1251 = vld [vmem:[%s3 + $0x1c8] sm:$0xff]
  %v1252 = vld [vmem:[%s3 + $0x1d0] sm:$0xff]
  %v1253 = vld [vmem:[%s3 + $0x1d8] sm:$0xff]
  %v1254 = vld [vmem:[%s3 + $0x1e0] sm:$0xff]
  %v1255 = vld [vmem:[%s3 + $0x1e8] sm:$0xff]
  %v1256 = vld [vmem:[%s3 + $0x1f0] sm:$0xff]
  %v1257 = vld [vmem:[%s3 + $0x1f8] sm:$0xff]
  %v1258 = vld [vmem:[%s4] sm:$0x1]
  %v1260 = vperm.slane %v1258, 0
  %1262 = vmatpush.msra.mxu0 %v1209
  %1263 = vmatpush.msra.mxu0 %v1208
  %1264 = vmatpush.msra.mxu0 %v1207
  %1265 = vmatpush.msra.mxu0 %v1206
  %1266 = vmatpush.msra.mxu0 %v1205
  %1267 = vmatpush.msra.mxu0 %v1204
  %1268 = vmatpush.msra.mxu0 %v1203
  %1269 = vmatpush.msra.mxu0 %v1202
  %1270 = vmatpush.msra.mxu0 %v1201
  %1271 = vmatpush.msra.mxu0 %v1200
  %1272 = vmatpush.msra.mxu0 %v1199
  %1273 = vmatpush.msra.mxu0 %v1198
  %1274 = vmatpush.msra.mxu0 %v1197
  %1275 = vmatpush.msra.mxu0 %v1196
  %1276 = vmatpush.msra.mxu0 %v1195
  %1277 = vmatpush.msra.mxu0 %v1194
  %1278 = vmatmul.f32.gmra.mxu0 %v1190
  %v1279 = vpop.f32.mrf.mxu0
  %v1280 = vadd.f32 %v1260, %v1279
  %1281 = vdwg.mxu0
  %1282 = vmatpush.msra.mxu0 %v1225
  %1283 = vmatpush.msra.mxu0 %v1224
  %1284 = vmatpush.msra.mxu0 %v1223
  %1285 = vmatpush.msra.mxu0 %v1222
  %1286 = vmatpush.msra.mxu0 %v1221
  %1287 = vmatpush.msra.mxu0 %v1220
  %1288 = vmatpush.msra.mxu0 %v1219
  %1289 = vmatpush.msra.mxu0 %v1218
  %1290 = vmatpush.msra.mxu0 %v1217
  %1291 = vmatpush.msra.mxu0 %v1216
  %1292 = vmatpush.msra.mxu0 %v1215
  %1293 = vmatpush.msra.mxu0 %v1214
  %1294 = vmatpush.msra.mxu0 %v1213
  %1295 = vmatpush.msra.mxu0 %v1212
  %1296 = vmatpush.msra.mxu0 %v1211
  %1297 = vmatpush.msra.mxu0 %v1210
  %1298 = vmatmul.f32.gmra.mxu0 %v1191
  %v1299 = vpop.f32.mrf.mxu0
  %v1300 = vadd.f32 %v1280, %v1299
  %1301 = vdwg.mxu0
  %1302 = vmatpush.msra.mxu0 %v1241
  %1303 = vmatpush.msra.mxu0 %v1240
  %1304 = vmatpush.msra.mxu0 %v1239
  %1305 = vmatpush.msra.mxu0 %v1238
  %1306 = vmatpush.msra.mxu0 %v1237
  %1307 = vmatpush.msra.mxu0 %v1236
  %1308 = vmatpush.msra.mxu0 %v1235
  %1309 = vmatpush.msra.mxu0 %v1234
  %1310 = vmatpush.msra.mxu0 %v1233
  %1311 = vmatpush.msra.mxu0 %v1232
  %1312 = vmatpush.msra.mxu0 %v1231
  %1313 = vmatpush.msra.mxu0 %v1230
  %1314 = vmatpush.msra.mxu0 %v1229
  %1315 = vmatpush.msra.mxu0 %v1228
  %1316 = vmatpush.msra.mxu0 %v1227
  %1317 = vmatpush.msra.mxu0 %v1226
  %1318 = vmatmul.f32.gmra.mxu0 %v1192
  %v1319 = vpop.f32.mrf.mxu0
  %v1320 = vadd.f32 %v1300, %v1319
  %1321 = vdwg.mxu0
  %1322 = vmatpush.msra.mxu0 %v1257
  %1323 = vmatpush.msra.mxu0 %v1256
  %1324 = vmatpush.msra.mxu0 %v1255
  %1325 = vmatpush.msra.mxu0 %v1254
  %1326 = vmatpush.msra.mxu0 %v1253
  %1327 = vmatpush.msra.mxu0 %v1252
  %1328 = vmatpush.msra.mxu0 %v1251
  %1329 = vmatpush.msra.mxu0 %v1250
  %1330 = vmatpush.msra.mxu0 %v1249
  %1331 = vmatpush.msra.mxu0 %v1248
  %1332 = vmatpush.msra.mxu0 %v1247
  %1333 = vmatpush.msra.mxu0 %v1246
  %1334 = vmatpush.msra.mxu0 %v1245
  %1335 = vmatpush.msra.mxu0 %v1244
  %1336 = vmatpush.msra.mxu0 %v1243
  %1337 = vmatpush.msra.mxu0 %v1242
  %1338 = vmatmul.f32.gmra.mxu0 %v1193
  %v1339 = vpop.f32.mrf.mxu0
  %v1340 = vadd.f32 %v1320, %v1339
  %1341 = vdwg.mxu0
  %1342 = vmax.xlane.f32.xlu0 %v1340
  %v1343 = vpop.xlane.xlu0 %1342
  %v1344 = vsub.f32 %v1340, %v1343
  %v1345 = vmul.f32 %v1344, 1.442695
  %v1346 = vpow.pop %v1345
  %1347 = vadd.xlane.f32.xlu0 %v1346
  %v1348 = vpop.xlane.xlu0 %1347
  %v1349 = vlog2.pop %v1348
  %v1350 = vmul.f32 %v1349, 0.6931472
  %v1351 = vsub.f32 %v1344, %v1350
  %1352 = vst [vmem:[%s5] sm:$0xff] %v1351
  // Predicated region
  $region22: #{net_forward.9} parent=0 // pred_check
    _
  $region23: #{net_forward.9} parent=0 // pred_check_branch
    %1354 = sbr.rel (0) target = $region25
  $region24: #{net_forward.9} parent=0 // pred_region
    _
  $region25: #{net_forward.9} parent=0 // pred_fallthru
    _
  // Predicated region
  $region26: #{net_forward.9} parent=0 // pred_check
    _
  $region27: #{net_forward.9} parent=0 // pred_check_branch
    %1356 = sbr.rel (0) target = $region29
  $region28: #{net_forward.9} parent=0 // pred_region
    _
  $region29: #{net_forward.9} parent=0 // pred_fallthru
    _

// kernel: net_forward.7
$region0: #{net_forward.7}
  #allocation0 [shape = 'u32[]', space=smem, size = 0x4, offset = 0x4, fixed_abs, tag = 'smem constant byte address 0x4 - core index']
  #allocation1 [shape = 'u32[72,128]{1,0:T(1,128)}', space=vmem, size = 0x9000, scoped, tag = 'internal scratch']
  %s0 = inlined_call_operand.vmem [shape: f32[1,100,384], index: 0, kind: input, shape index: {}]
  %s1 = inlined_call_operand.vmem [shape: f32[5,384,512], index: 1, kind: input, shape index: {}]
  %s2 = inlined_call_operand.vmem [shape: f32[1,512], index: 2, kind: input, shape index: {}]
  %s3 = inlined_call_operand.vmem [shape: f32[96,512], index: 3, kind: output, shape index: {}]
  %s4 = sld [smem:[#allocation0]]
  $region22: #{net_forward.7} parent=0
    _
  %s6 = ssub.s32 1, %s4
  %s7 = scalar_select 0, %s6, %s4
  // Predicated region
  $region2: #{net_forward.7} parent=0 // pred_check
    _
  $region3: #{net_forward.7} parent=0 // pred_check_branch
    %9 = sbr.rel (0) target = $region5
  $region4: #{net_forward.7} parent=0 // pred_region
    _
  $region5: #{net_forward.7} parent=0 // pred_fallthru
    _
  // Predicated region
  $region6: #{net_forward.7} parent=0 // pred_check
    _
  $region7: #{net_forward.7} parent=0 // pred_check_branch
    %11 = sbr.rel (0) target = $region9
  $region8: #{net_forward.7} parent=0 // pred_region
    _
  $region9: #{net_forward.7} parent=0 // pred_fallthru
    _
  // Predicated region
  $region10: #{net_forward.7} parent=0 // pred_check
    _
  $region11: #{net_forward.7} parent=0 // pred_check_branch
    %13 = sbr.rel (0) target = $region13
  $region12: #{net_forward.7} parent=0 // pred_region
    _
  $region13: #{net_forward.7} parent=0 // pred_fallthru
    _
  %v14 = vld [vmem:[%s0] sm:$0xff]
  %v15 = vld [vmem:[%s0 + $0x8] sm:$0xff]
  %v16 = vld [vmem:[%s0 + $0x10] sm:$0xff]
  %v17 = vld [vmem:[%s0 + $0x18] sm:$0xff]
  %v18 = vld [vmem:[%s0 + $0x20] sm:$0xff]
  %v19 = vld [vmem:[%s0 + $0x28] sm:$0xff]
  %v20 = vld [vmem:[%s0 + $0x30] sm:$0xff]
  %v21 = vld [vmem:[%s0 + $0x38] sm:$0xff]
  %v22 = vld [vmem:[%s0 + $0x40] sm:$0xff]
  %v23 = vld [vmem:[%s0 + $0x48] sm:$0xff]
  %v24 = vld [vmem:[%s0 + $0x50] sm:$0xff]
  %v25 = vld [vmem:[%s0 + $0x58] sm:$0xff]
  %v26 = vld [vmem:[%s0 + $0x60] sm:$0xff]
  %v27 = vld [vmem:[%s0 + $0x68] sm:$0xff]
  %v28 = vld [vmem:[%s0 + $0x70] sm:$0xff]
  %v29 = vld [vmem:[%s0 + $0x78] sm:$0xff]
  %v30 = vld [vmem:[%s0 + $0x80] sm:$0xff]
  %v31 = vld [vmem:[%s0 + $0x88] sm:$0xff]
  %v32 = vld [vmem:[%s0 + $0x90] sm:$0xff]
  %v33 = vld [vmem:[%s0 + $0x98] sm:$0xff]
  %v34 = vld [vmem:[%s0 + $0xa0] sm:$0xff]
  %v35 = vld [vmem:[%s0 + $0xa8] sm:$0xff]
  %v36 = vld [vmem:[%s0 + $0xb0] sm:$0xff]
  %v37 = vld [vmem:[%s0 + $0xb8] sm:$0xff]
  %v38 = vld [vmem:[%s0 + $0xc0] sm:$0xff]
  %v39 = vld [vmem:[%s0 + $0xc8] sm:$0xff]
  %v40 = vld [vmem:[%s0 + $0xd0] sm:$0xff]
  %v41 = vld [vmem:[%s0 + $0xd8] sm:$0xff]
  %v42 = vld [vmem:[%s0 + $0xe0] sm:$0xff]
  %v43 = vld [vmem:[%s0 + $0xe8] sm:$0xff]
  %v44 = vld [vmem:[%s0 + $0xf0] sm:$0xff]
  %v45 = vld [vmem:[%s0 + $0xf8] sm:$0xff]
  %v46 = vld [vmem:[%s0 + $0x100] sm:$0xff]
  %v47 = vld [vmem:[%s0 + $0x108] sm:$0xff]
  %v48 = vld [vmem:[%s0 + $0x110] sm:$0xff]
  %v49 = vld [vmem:[%s0 + $0x118] sm:$0xff]
  %v50 = vld [vmem:[%s0 + $0x120] sm:$0xf]
  %v51 = vld [vmem:[%s0 + $0x128] sm:$0xf]
  %v52 = vld [vmem:[%s0 + $0x130] sm:$0xf]
  %v53 = vld [vmem:[%s1] sm:$0xff]
  %v54 = vld [vmem:[%s1 + $0x8] sm:$0xff]
  %v55 = vld [vmem:[%s1 + $0x10] sm:$0xff]
  %v56 = vld [vmem:[%s1 + $0x18] sm:$0xff]
  %v57 = vld [vmem:[%s1 + $0x20] sm:$0xff]
  %v58 = vld [vmem:[%s1 + $0x28] sm:$0xff]
  %v59 = vld [vmem:[%s1 + $0x30] sm:$0xff]
  %v60 = vld [vmem:[%s1 + $0x38] sm:$0xff]
  %v61 = vld [vmem:[%s1 + $0x40] sm:$0xff]
  %v62 = vld [vmem:[%s1 + $0x48] sm:$0xff]
  %v63 = vld [vmem:[%s1 + $0x50] sm:$0xff]
  %v64 = vld [vmem:[%s1 + $0x58] sm:$0xff]
  %v65 = vld [vmem:[%s1 + $0x60] sm:$0xff]
  %v66 = vld [vmem:[%s1 + $0x68] sm:$0xff]
  %v67 = vld [vmem:[%s1 + $0x70] sm:$0xff]
  %v68 = vld [vmem:[%s1 + $0x78] sm:$0xff]
  %v69 = vld [vmem:[%s1 + $0x80] sm:$0xff]
  %v70 = vld [vmem:[%s1 + $0x88] sm:$0xff]
  %v71 = vld [vmem:[%s1 + $0x90] sm:$0xff]
  %v72 = vld [vmem:[%s1 + $0x98] sm:$0xff]
  %v73 = vld [vmem:[%s1 + $0xa0] sm:$0xff]
  %v74 = vld [vmem:[%s1 + $0xa8] sm:$0xff]
  %v75 = vld [vmem:[%s1 + $0xb0] sm:$0xff]
  %v76 = vld [vmem:[%s1 + $0xb8] sm:$0xff]
  %v77 = vld [vmem:[%s1 + $0xc0] sm:$0xff]
  %v78 = vld [vmem:[%s1 + $0xc8] sm:$0xff]
  %v79 = vld [vmem:[%s1 + $0xd0] sm:$0xff]
  %v80 = vld [vmem:[%s1 + $0xd8] sm:$0xff]
  %v81 = vld [vmem:[%s1 + $0xe0] sm:$0xff]
  %v82 = vld [vmem:[%s1 + $0xe8] sm:$0xff]
  %v83 = vld [vmem:[%s1 + $0xf0] sm:$0xff]
  %v84 = vld [vmem:[%s1 + $0xf8] sm:$0xff]
  %v85 = vld [vmem:[%s1 + $0x100] sm:$0xff]
  %v86 = vld [vmem:[%s1 + $0x108] sm:$0xff]
  %v87 = vld [vmem:[%s1 + $0x110] sm:$0xff]
  %v88 = vld [vmem:[%s1 + $0x118] sm:$0xff]
  %v89 = vld [vmem:[%s1 + $0x120] sm:$0xff]
  %v90 = vld [vmem:[%s1 + $0x128] sm:$0xff]
  %v91 = vld [vmem:[%s1 + $0x130] sm:$0xff]
  %v92 = vld [vmem:[%s1 + $0x138] sm:$0xff]
  %v93 = vld [vmem:[%s1 + $0x140] sm:$0xff]
  %v94 = vld [vmem:[%s1 + $0x148] sm:$0xff]
  %v95 = vld [vmem:[%s1 + $0x150] sm:$0xff]
  %v96 = vld [vmem:[%s1 + $0x158] sm:$0xff]
  %v97 = vld [vmem:[%s1 + $0x160] sm:$0xff]
  %v98 = vld [vmem:[%s1 + $0x168] sm:$0xff]
  %v99 = vld [vmem:[%s1 + $0x170] sm:$0xff]
  %v100 = vld [vmem:[%s1 + $0x178] sm:$0xff]
  %v101 = vld [vmem:[%s1 + $0x180] sm:$0xff]
  %v102 = vld [vmem:[%s1 + $0x188] sm:$0xff]
  %v103 = vld [vmem:[%s1 + $0x190] sm:$0xff]
  %v104 = vld [vmem:[%s1 + $0x198] sm:$0xff]
  %v105 = vld [vmem:[%s1 + $0x1a0] sm:$0xff]
  %v106 = vld [vmem:[%s1 + $0x1a8] sm:$0xff]
  %v107 = vld [vmem:[%s1 + $0x1b0] sm:$0xff]
  %v108 = vld [vmem:[%s1 + $0x1b8] sm:$0xff]
  %v109 = vld [vmem:[%s1 + $0x1c0] sm:$0xff]
  %v110 = vld [vmem:[%s1 + $0x1c8] sm:$0xff]
  %v111 = vld [vmem:[%s1 + $0x1d0] sm:$0xff]
  %v112 = vld [vmem:[%s1 + $0x1d8] sm:$0xff]
  %v113 = vld [vmem:[%s1 + $0x1e0] sm:$0xff]
  %v114 = vld [vmem:[%s1 + $0x1e8] sm:$0xff]
  %v115 = vld [vmem:[%s1 + $0x1f0] sm:$0xff]
  %v116 = vld [vmem:[%s1 + $0x1f8] sm:$0xff]
  %v117 = vld [vmem:[%s1 + $0x200] sm:$0xff]
  %v118 = vld [vmem:[%s1 + $0x208] sm:$0xff]
  %v119 = vld [vmem:[%s1 + $0x210] sm:$0xff]
  %v120 = vld [vmem:[%s1 + $0x218] sm:$0xff]
  %v121 = vld [vmem:[%s1 + $0x220] sm:$0xff]
  %v122 = vld [vmem:[%s1 + $0x228] sm:$0xff]
  %v123 = vld [vmem:[%s1 + $0x230] sm:$0xff]
  %v124 = vld [vmem:[%s1 + $0x238] sm:$0xff]
  %v125 = vld [vmem:[%s1 + $0x240] sm:$0xff]
  %v126 = vld [vmem:[%s1 + $0x248] sm:$0xff]
  %v127 = vld [vmem:[%s1 + $0x250] sm:$0xff]
  %v128 = vld [vmem:[%s1 + $0x258] sm:$0xff]
  %v129 = vld [vmem:[%s1 + $0x260] sm:$0xff]
  %v130 = vld [vmem:[%s1 + $0x268] sm:$0xff]
  %v131 = vld [vmem:[%s1 + $0x270] sm:$0xff]
  %v132 = vld [vmem:[%s1 + $0x278] sm:$0xff]
  %v133 = vld [vmem:[%s1 + $0x280] sm:$0xff]
  %v134 = vld [vmem:[%s1 + $0x288] sm:$0xff]
  %v135 = vld [vmem:[%s1 + $0x290] sm:$0xff]
  %v136 = vld [vmem:[%s1 + $0x298] sm:$0xff]
  %v137 = vld [vmem:[%s1 + $0x2a0] sm:$0xff]
  %v138 = vld [vmem:[%s1 + $0x2a8] sm:$0xff]
  %v139 = vld [vmem:[%s1 + $0x2b0] sm:$0xff]
  %v140 = vld [vmem:[%s1 + $0x2b8] sm:$0xff]
  %v141 = vld [vmem:[%s1 + $0x2c0] sm:$0xff]
  %v142 = vld [vmem:[%s1 + $0x2c8] sm:$0xff]
  %v143 = vld [vmem:[%s1 + $0x2d0] sm:$0xff]
  %v144 = vld [vmem:[%s1 + $0x2d8] sm:$0xff]
  %v145 = vld [vmem:[%s1 + $0x2e0] sm:$0xff]
  %v146 = vld [vmem:[%s1 + $0x2e8] sm:$0xff]
  %v147 = vld [vmem:[%s1 + $0x2f0] sm:$0xff]
  %v148 = vld [vmem:[%s1 + $0x2f8] sm:$0xff]
  %v149 = vld [vmem:[%s1 + $0x300] sm:$0xff]
  %v150 = vld [vmem:[%s1 + $0x308] sm:$0xff]
  %v151 = vld [vmem:[%s1 + $0x310] sm:$0xff]
  %v152 = vld [vmem:[%s1 + $0x318] sm:$0xff]
  %v153 = vld [vmem:[%s1 + $0x320] sm:$0xff]
  %v154 = vld [vmem:[%s1 + $0x328] sm:$0xff]
  %v155 = vld [vmem:[%s1 + $0x330] sm:$0xff]
  %v156 = vld [vmem:[%s1 + $0x338] sm:$0xff]
  %v157 = vld [vmem:[%s1 + $0x340] sm:$0xff]
  %v158 = vld [vmem:[%s1 + $0x348] sm:$0xff]
  %v159 = vld [vmem:[%s1 + $0x350] sm:$0xff]
  %v160 = vld [vmem:[%s1 + $0x358] sm:$0xff]
  %v161 = vld [vmem:[%s1 + $0x360] sm:$0xff]
  %v162 = vld [vmem:[%s1 + $0x368] sm:$0xff]
  %v163 = vld [vmem:[%s1 + $0x370] sm:$0xff]
  %v164 = vld [vmem:[%s1 + $0x378] sm:$0xff]
  %v165 = vld [vmem:[%s1 + $0x380] sm:$0xff]
  %v166 = vld [vmem:[%s1 + $0x388] sm:$0xff]
  %v167 = vld [vmem:[%s1 + $0x390] sm:$0xff]
  %v168 = vld [vmem:[%s1 + $0x398] sm:$0xff]
  %v169 = vld [vmem:[%s1 + $0x3a0] sm:$0xff]
  %v170 = vld [vmem:[%s1 + $0x3a8] sm:$0xff]
  %v171 = vld [vmem:[%s1 + $0x3b0] sm:$0xff]
  %v172 = vld [vmem:[%s1 + $0x3b8] sm:$0xff]
  %v173 = vld [vmem:[%s1 + $0x3c0] sm:$0xff]
  %v174 = vld [vmem:[%s1 + $0x3c8] sm:$0xff]
  %v175 = vld [vmem:[%s1 + $0x3d0] sm:$0xff]
  %v176 = vld [vmem:[%s1 + $0x3d8] sm:$0xff]
  %v177 = vld [vmem:[%s1 + $0x3e0] sm:$0xff]
  %v178 = vld [vmem:[%s1 + $0x3e8] sm:$0xff]
  %v179 = vld [vmem:[%s1 + $0x3f0] sm:$0xff]
  %v180 = vld [vmem:[%s1 + $0x3f8] sm:$0xff]
  %v181 = vld [vmem:[%s1 + $0x400] sm:$0xff]
  %v182 = vld [vmem:[%s1 + $0x408] sm:$0xff]
  %v183 = vld [vmem:[%s1 + $0x410] sm:$0xff]
  %v184 = vld [vmem:[%s1 + $0x418] sm:$0xff]
  %v185 = vld [vmem:[%s1 + $0x420] sm:$0xff]
  %v186 = vld [vmem:[%s1 + $0x428] sm:$0xff]
  %v187 = vld [vmem:[%s1 + $0x430] sm:$0xff]
  %v188 = vld [vmem:[%s1 + $0x438] sm:$0xff]
  %v189 = vld [vmem:[%s1 + $0x440] sm:$0xff]
  %v190 = vld [vmem:[%s1 + $0x448] sm:$0xff]
  %v191 = vld [vmem:[%s1 + $0x450] sm:$0xff]
  %v192 = vld [vmem:[%s1 + $0x458] sm:$0xff]
  %v193 = vld [vmem:[%s1 + $0x460] sm:$0xff]
  %v194 = vld [vmem:[%s1 + $0x468] sm:$0xff]
  %v195 = vld [vmem:[%s1 + $0x470] sm:$0xff]
  %v196 = vld [vmem:[%s1 + $0x478] sm:$0xff]
  %v197 = vld [vmem:[%s1 + $0x480] sm:$0xff]
  %v198 = vld [vmem:[%s1 + $0x488] sm:$0xff]
  %v199 = vld [vmem:[%s1 + $0x490] sm:$0xff]
  %v200 = vld [vmem:[%s1 + $0x498] sm:$0xff]
  %v201 = vld [vmem:[%s1 + $0x4a0] sm:$0xff]
  %v202 = vld [vmem:[%s1 + $0x4a8] sm:$0xff]
  %v203 = vld [vmem:[%s1 + $0x4b0] sm:$0xff]
  %v204 = vld [vmem:[%s1 + $0x4b8] sm:$0xff]
  %v205 = vld [vmem:[%s1 + $0x4c0] sm:$0xff]
  %v206 = vld [vmem:[%s1 + $0x4c8] sm:$0xff]
  %v207 = vld [vmem:[%s1 + $0x4d0] sm:$0xff]
  %v208 = vld [vmem:[%s1 + $0x4d8] sm:$0xff]
  %v209 = vld [vmem:[%s1 + $0x4e0] sm:$0xff]
  %v210 = vld [vmem:[%s1 + $0x4e8] sm:$0xff]
  %v211 = vld [vmem:[%s1 + $0x4f0] sm:$0xff]
  %v212 = vld [vmem:[%s1 + $0x4f8] sm:$0xff]
  %v213 = vld [vmem:[%s1 + $0x500] sm:$0xff]
  %v214 = vld [vmem:[%s1 + $0x508] sm:$0xff]
  %v215 = vld [vmem:[%s1 + $0x510] sm:$0xff]
  %v216 = vld [vmem:[%s1 + $0x518] sm:$0xff]
  %v217 = vld [vmem:[%s1 + $0x520] sm:$0xff]
  %v218 = vld [vmem:[%s1 + $0x528] sm:$0xff]
  %v219 = vld [vmem:[%s1 + $0x530] sm:$0xff]
  %v220 = vld [vmem:[%s1 + $0x538] sm:$0xff]
  %v221 = vld [vmem:[%s1 + $0x540] sm:$0xff]
  %v222 = vld [vmem:[%s1 + $0x548] sm:$0xff]
  %v223 = vld [vmem:[%s1 + $0x550] sm:$0xff]
  %v224 = vld [vmem:[%s1 + $0x558] sm:$0xff]
  %v225 = vld [vmem:[%s1 + $0x560] sm:$0xff]
  %v226 = vld [vmem:[%s1 + $0x568] sm:$0xff]
  %v227 = vld [vmem:[%s1 + $0x570] sm:$0xff]
  %v228 = vld [vmem:[%s1 + $0x578] sm:$0xff]
  %v229 = vld [vmem:[%s1 + $0x580] sm:$0xff]
  %v230 = vld [vmem:[%s1 + $0x588] sm:$0xff]
  %v231 = vld [vmem:[%s1 + $0x590] sm:$0xff]
  %v232 = vld [vmem:[%s1 + $0x598] sm:$0xff]
  %v233 = vld [vmem:[%s1 + $0x5a0] sm:$0xff]
  %v234 = vld [vmem:[%s1 + $0x5a8] sm:$0xff]
  %v235 = vld [vmem:[%s1 + $0x5b0] sm:$0xff]
  %v236 = vld [vmem:[%s1 + $0x5b8] sm:$0xff]
  %v237 = vld [vmem:[%s1 + $0x5c0] sm:$0xff]
  %v238 = vld [vmem:[%s1 + $0x5c8] sm:$0xff]
  %v239 = vld [vmem:[%s1 + $0x5d0] sm:$0xff]
  %v240 = vld [vmem:[%s1 + $0x5d8] sm:$0xff]
  %v241 = vld [vmem:[%s1 + $0x5e0] sm:$0xff]
  %v242 = vld [vmem:[%s1 + $0x5e8] sm:$0xff]
  %v243 = vld [vmem:[%s1 + $0x5f0] sm:$0xff]
  %v244 = vld [vmem:[%s1 + $0x5f8] sm:$0xff]
  %s245 = scalar_lea.vmem %s1, 1536
  %v246 = vld [vmem:[%s245] sm:$0xff]
  %v247 = vld [vmem:[%s245 + $0x8] sm:$0xff]
  %v248 = vld [vmem:[%s245 + $0x10] sm:$0xff]
  %v249 = vld [vmem:[%s245 + $0x18] sm:$0xff]
  %v250 = vld [vmem:[%s245 + $0x20] sm:$0xff]
  %v251 = vld [vmem:[%s245 + $0x28] sm:$0xff]
  %v252 = vld [vmem:[%s245 + $0x30] sm:$0xff]
  %v253 = vld [vmem:[%s245 + $0x38] sm:$0xff]
  %v254 = vld [vmem:[%s245 + $0x40] sm:$0xff]
  %v255 = vld [vmem:[%s245 + $0x48] sm:$0xff]
  %v256 = vld [vmem:[%s245 + $0x50] sm:$0xff]
  %v257 = vld [vmem:[%s245 + $0x58] sm:$0xff]
  %v258 = vld [vmem:[%s245 + $0x60] sm:$0xff]
  %v259 = vld [vmem:[%s245 + $0x68] sm:$0xff]
  %v260 = vld [vmem:[%s245 + $0x70] sm:$0xff]
  %v261 = vld [vmem:[%s245 + $0x78] sm:$0xff]
  %v262 = vld [vmem:[%s245 + $0x80] sm:$0xff]
  %v263 = vld [vmem:[%s245 + $0x88] sm:$0xff]
  %v264 = vld [vmem:[%s245 + $0x90] sm:$0xff]
  %v265 = vld [vmem:[%s245 + $0x98] sm:$0xff]
  %v266 = vld [vmem:[%s245 + $0xa0] sm:$0xff]
  %v267 = vld [vmem:[%s245 + $0xa8] sm:$0xff]
  %v268 = vld [vmem:[%s245 + $0xb0] sm:$0xff]
  %v269 = vld [vmem:[%s245 + $0xb8] sm:$0xff]
  %v270 = vld [vmem:[%s245 + $0xc0] sm:$0xff]
  %v271 = vld [vmem:[%s245 + $0xc8] sm:$0xff]
  %v272 = vld [vmem:[%s245 + $0xd0] sm:$0xff]
  %v273 = vld [vmem:[%s245 + $0xd8] sm:$0xff]
  %v274 = vld [vmem:[%s245 + $0xe0] sm:$0xff]
  %v275 = vld [vmem:[%s245 + $0xe8] sm:$0xff]
  %v276 = vld [vmem:[%s245 + $0xf0] sm:$0xff]
  %v277 = vld [vmem:[%s245 + $0xf8] sm:$0xff]
  %v278 = vld [vmem:[%s245 + $0x100] sm:$0xff]
  %v279 = vld [vmem:[%s245 + $0x108] sm:$0xff]
  %v280 = vld [vmem:[%s245 + $0x110] sm:$0xff]
  %v281 = vld [vmem:[%s245 + $0x118] sm:$0xff]
  %v282 = vld [vmem:[%s245 + $0x120] sm:$0xff]
  %v283 = vld [vmem:[%s245 + $0x128] sm:$0xff]
  %v284 = vld [vmem:[%s245 + $0x130] sm:$0xff]
  %v285 = vld [vmem:[%s245 + $0x138] sm:$0xff]
  %v286 = vld [vmem:[%s245 + $0x140] sm:$0xff]
  %v287 = vld [vmem:[%s245 + $0x148] sm:$0xff]
  %v288 = vld [vmem:[%s245 + $0x150] sm:$0xff]
  %v289 = vld [vmem:[%s245 + $0x158] sm:$0xff]
  %v290 = vld [vmem:[%s245 + $0x160] sm:$0xff]
  %v291 = vld [vmem:[%s245 + $0x168] sm:$0xff]
  %v292 = vld [vmem:[%s245 + $0x170] sm:$0xff]
  %v293 = vld [vmem:[%s245 + $0x178] sm:$0xff]
  %v294 = vld [vmem:[%s245 + $0x180] sm:$0xff]
  %v295 = vld [vmem:[%s245 + $0x188] sm:$0xff]
  %v296 = vld [vmem:[%s245 + $0x190] sm:$0xff]
  %v297 = vld [vmem:[%s245 + $0x198] sm:$0xff]
  %v298 = vld [vmem:[%s245 + $0x1a0] sm:$0xff]
  %v299 = vld [vmem:[%s245 + $0x1a8] sm:$0xff]
  %v300 = vld [vmem:[%s245 + $0x1b0] sm:$0xff]
  %v301 = vld [vmem:[%s245 + $0x1b8] sm:$0xff]
  %v302 = vld [vmem:[%s245 + $0x1c0] sm:$0xff]
  %v303 = vld [vmem:[%s245 + $0x1c8] sm:$0xff]
  %v304 = vld [vmem:[%s245 + $0x1d0] sm:$0xff]
  %v305 = vld [vmem:[%s245 + $0x1d8] sm:$0xff]
  %v306 = vld [vmem:[%s245 + $0x1e0] sm:$0xff]
  %v307 = vld [vmem:[%s245 + $0x1e8] sm:$0xff]
  %v308 = vld [vmem:[%s245 + $0x1f0] sm:$0xff]
  %v309 = vld [vmem:[%s245 + $0x1f8] sm:$0xff]
  %v310 = vld [vmem:[%s245 + $0x200] sm:$0xff]
  %v311 = vld [vmem:[%s245 + $0x208] sm:$0xff]
  %v312 = vld [vmem:[%s245 + $0x210] sm:$0xff]
  %v313 = vld [vmem:[%s245 + $0x218] sm:$0xff]
  %v314 = vld [vmem:[%s245 + $0x220] sm:$0xff]
  %v315 = vld [vmem:[%s245 + $0x228] sm:$0xff]
  %v316 = vld [vmem:[%s245 + $0x230] sm:$0xff]
  %v317 = vld [vmem:[%s245 + $0x238] sm:$0xff]
  %v318 = vld [vmem:[%s245 + $0x240] sm:$0xff]
  %v319 = vld [vmem:[%s245 + $0x248] sm:$0xff]
  %v320 = vld [vmem:[%s245 + $0x250] sm:$0xff]
  %v321 = vld [vmem:[%s245 + $0x258] sm:$0xff]
  %v322 = vld [vmem:[%s245 + $0x260] sm:$0xff]
  %v323 = vld [vmem:[%s245 + $0x268] sm:$0xff]
  %v324 = vld [vmem:[%s245 + $0x270] sm:$0xff]
  %v325 = vld [vmem:[%s245 + $0x278] sm:$0xff]
  %v326 = vld [vmem:[%s245 + $0x280] sm:$0xff]
  %v327 = vld [vmem:[%s245 + $0x288] sm:$0xff]
  %v328 = vld [vmem:[%s245 + $0x290] sm:$0xff]
  %v329 = vld [vmem:[%s245 + $0x298] sm:$0xff]
  %v330 = vld [vmem:[%s245 + $0x2a0] sm:$0xff]
  %v331 = vld [vmem:[%s245 + $0x2a8] sm:$0xff]
  %v332 = vld [vmem:[%s245 + $0x2b0] sm:$0xff]
  %v333 = vld [vmem:[%s245 + $0x2b8] sm:$0xff]
  %v334 = vld [vmem:[%s245 + $0x2c0] sm:$0xff]
  %v335 = vld [vmem:[%s245 + $0x2c8] sm:$0xff]
  %v336 = vld [vmem:[%s245 + $0x2d0] sm:$0xff]
  %v337 = vld [vmem:[%s245 + $0x2d8] sm:$0xff]
  %v338 = vld [vmem:[%s245 + $0x2e0] sm:$0xff]
  %v339 = vld [vmem:[%s245 + $0x2e8] sm:$0xff]
  %v340 = vld [vmem:[%s245 + $0x2f0] sm:$0xff]
  %v341 = vld [vmem:[%s245 + $0x2f8] sm:$0xff]
  %v342 = vld [vmem:[%s245 + $0x300] sm:$0xff]
  %v343 = vld [vmem:[%s245 + $0x308] sm:$0xff]
  %v344 = vld [vmem:[%s245 + $0x310] sm:$0xff]
  %v345 = vld [vmem:[%s245 + $0x318] sm:$0xff]
  %v346 = vld [vmem:[%s245 + $0x320] sm:$0xff]
  %v347 = vld [vmem:[%s245 + $0x328] sm:$0xff]
  %v348 = vld [vmem:[%s245 + $0x330] sm:$0xff]
  %v349 = vld [vmem:[%s245 + $0x338] sm:$0xff]
  %v350 = vld [vmem:[%s245 + $0x340] sm:$0xff]
  %v351 = vld [vmem:[%s245 + $0x348] sm:$0xff]
  %v352 = vld [vmem:[%s245 + $0x350] sm:$0xff]
  %v353 = vld [vmem:[%s245 + $0x358] sm:$0xff]
  %v354 = vld [vmem:[%s245 + $0x360] sm:$0xff]
  %v355 = vld [vmem:[%s245 + $0x368] sm:$0xff]
  %v356 = vld [vmem:[%s245 + $0x370] sm:$0xff]
  %v357 = vld [vmem:[%s245 + $0x378] sm:$0xff]
  %v358 = vld [vmem:[%s245 + $0x380] sm:$0xff]
  %v359 = vld [vmem:[%s245 + $0x388] sm:$0xff]
  %v360 = vld [vmem:[%s245 + $0x390] sm:$0xff]
  %v361 = vld [vmem:[%s245 + $0x398] sm:$0xff]
  %v362 = vld [vmem:[%s245 + $0x3a0] sm:$0xff]
  %v363 = vld [vmem:[%s245 + $0x3a8] sm:$0xff]
  %v364 = vld [vmem:[%s245 + $0x3b0] sm:$0xff]
  %v365 = vld [vmem:[%s245 + $0x3b8] sm:$0xff]
  %v366 = vld [vmem:[%s245 + $0x3c0] sm:$0xff]
  %v367 = vld [vmem:[%s245 + $0x3c8] sm:$0xff]
  %v368 = vld [vmem:[%s245 + $0x3d0] sm:$0xff]
  %v369 = vld [vmem:[%s245 + $0x3d8] sm:$0xff]
  %v370 = vld [vmem:[%s245 + $0x3e0] sm:$0xff]
  %v371 = vld [vmem:[%s245 + $0x3e8] sm:$0xff]
  %v372 = vld [vmem:[%s245 + $0x3f0] sm:$0xff]
  %v373 = vld [vmem:[%s245 + $0x3f8] sm:$0xff]
  %v374 = vld [vmem:[%s245 + $0x400] sm:$0xff]
  %v375 = vld [vmem:[%s245 + $0x408] sm:$0xff]
  %v376 = vld [vmem:[%s245 + $0x410] sm:$0xff]
  %v377 = vld [vmem:[%s245 + $0x418] sm:$0xff]
  %v378 = vld [vmem:[%s245 + $0x420] sm:$0xff]
  %v379 = vld [vmem:[%s245 + $0x428] sm:$0xff]
  %v380 = vld [vmem:[%s245 + $0x430] sm:$0xff]
  %v381 = vld [vmem:[%s245 + $0x438] sm:$0xff]
  %v382 = vld [vmem:[%s245 + $0x440] sm:$0xff]
  %v383 = vld [vmem:[%s245 + $0x448] sm:$0xff]
  %v384 = vld [vmem:[%s245 + $0x450] sm:$0xff]
  %v385 = vld [vmem:[%s245 + $0x458] sm:$0xff]
  %v386 = vld [vmem:[%s245 + $0x460] sm:$0xff]
  %v387 = vld [vmem:[%s245 + $0x468] sm:$0xff]
  %v388 = vld [vmem:[%s245 + $0x470] sm:$0xff]
  %v389 = vld [vmem:[%s245 + $0x478] sm:$0xff]
  %v390 = vld [vmem:[%s245 + $0x480] sm:$0xff]
  %v391 = vld [vmem:[%s245 + $0x488] sm:$0xff]
  %v392 = vld [vmem:[%s245 + $0x490] sm:$0xff]
  %v393 = vld [vmem:[%s245 + $0x498] sm:$0xff]
  %v394 = vld [vmem:[%s245 + $0x4a0] sm:$0xff]
  %v395 = vld [vmem:[%s245 + $0x4a8] sm:$0xff]
  %v396 = vld [vmem:[%s245 + $0x4b0] sm:$0xff]
  %v397 = vld [vmem:[%s245 + $0x4b8] sm:$0xff]
  %v398 = vld [vmem:[%s245 + $0x4c0] sm:$0xff]
  %v399 = vld [vmem:[%s245 + $0x4c8] sm:$0xff]
  %v400 = vld [vmem:[%s245 + $0x4d0] sm:$0xff]
  %v401 = vld [vmem:[%s245 + $0x4d8] sm:$0xff]
  %v402 = vld [vmem:[%s245 + $0x4e0] sm:$0xff]
  %v403 = vld [vmem:[%s245 + $0x4e8] sm:$0xff]
  %v404 = vld [vmem:[%s245 + $0x4f0] sm:$0xff]
  %v405 = vld [vmem:[%s245 + $0x4f8] sm:$0xff]
  %v406 = vld [vmem:[%s245 + $0x500] sm:$0xff]
  %v407 = vld [vmem:[%s245 + $0x508] sm:$0xff]
  %v408 = vld [vmem:[%s245 + $0x510] sm:$0xff]
  %v409 = vld [vmem:[%s245 + $0x518] sm:$0xff]
  %v410 = vld [vmem:[%s245 + $0x520] sm:$0xff]
  %v411 = vld [vmem:[%s245 + $0x528] sm:$0xff]
  %v412 = vld [vmem:[%s245 + $0x530] sm:$0xff]
  %v413 = vld [vmem:[%s245 + $0x538] sm:$0xff]
  %v414 = vld [vmem:[%s245 + $0x540] sm:$0xff]
  %v415 = vld [vmem:[%s245 + $0x548] sm:$0xff]
  %v416 = vld [vmem:[%s245 + $0x550] sm:$0xff]
  %v417 = vld [vmem:[%s245 + $0x558] sm:$0xff]
  %v418 = vld [vmem:[%s245 + $0x560] sm:$0xff]
  %v419 = vld [vmem:[%s245 + $0x568] sm:$0xff]
  %v420 = vld [vmem:[%s245 + $0x570] sm:$0xff]
  %v421 = vld [vmem:[%s245 + $0x578] sm:$0xff]
  %v422 = vld [vmem:[%s245 + $0x580] sm:$0xff]
  %v423 = vld [vmem:[%s245 + $0x588] sm:$0xff]
  %v424 = vld [vmem:[%s245 + $0x590] sm:$0xff]
  %v425 = vld [vmem:[%s245 + $0x598] sm:$0xff]
  %v426 = vld [vmem:[%s245 + $0x5a0] sm:$0xff]
  %v427 = vld [vmem:[%s245 + $0x5a8] sm:$0xff]
  %v428 = vld [vmem:[%s245 + $0x5b0] sm:$0xff]
  %v429 = vld [vmem:[%s245 + $0x5b8] sm:$0xff]
  %v430 = vld [vmem:[%s245 + $0x5c0] sm:$0xff]
  %v431 = vld [vmem:[%s245 + $0x5c8] sm:$0xff]
  %v432 = vld [vmem:[%s245 + $0x5d0] sm:$0xff]
  %v433 = vld [vmem:[%s245 + $0x5d8] sm:$0xff]
  %v434 = vld [vmem:[%s245 + $0x5e0] sm:$0xff]
  %v435 = vld [vmem:[%s245 + $0x5e8] sm:$0xff]
  %v436 = vld [vmem:[%s245 + $0x5f0] sm:$0xff]
  %v437 = vld [vmem:[%s245 + $0x5f8] sm:$0xff]
  %vm477 = vcmask 1046528
  %v478 = vrot.slane %v14, 1
  %v479 = vrot.slane %v17, 1
  %v480 = vsel %vm477, %v478, %v479
  %v481 = vrot.slane %v15, 1
  %v482 = vrot.slane %v18, 1
  %v483 = vsel %vm477, %v481, %v482
  %v484 = vrot.slane %v16, 1
  %v485 = vrot.slane %v19, 1
  %v486 = vsel %vm477, %v484, %v485
  %v487 = vrot.slane %v20, 1
  %v488 = vsel %vm477, %v479, %v487
  %v489 = vrot.slane %v21, 1
  %v490 = vsel %vm477, %v482, %v489
  %v491 = vrot.slane %v22, 1
  %v492 = vsel %vm477, %v485, %v491
  %v493 = vrot.slane %v23, 1
  %v494 = vsel %vm477, %v487, %v493
  %v495 = vrot.slane %v24, 1
  %v496 = vsel %vm477, %v489, %v495
  %v497 = vrot.slane %v25, 1
  %v498 = vsel %vm477, %v491, %v497
  %v499 = vrot.slane %v26, 1
  %v500 = vsel %vm477, %v493, %v499
  %v501 = vrot.slane %v27, 1
  %v502 = vsel %vm477, %v495, %v501
  %v503 = vrot.slane %v28, 1
  %v504 = vsel %vm477, %v497, %v503
  %v505 = vrot.slane %v29, 1
  %v506 = vsel %vm477, %v499, %v505
  %v507 = vrot.slane %v30, 1
  %v508 = vsel %vm477, %v501, %v507
  %v509 = vrot.slane %v31, 1
  %v510 = vsel %vm477, %v503, %v509
  %v511 = vrot.slane %v32, 1
  %v512 = vsel %vm477, %v505, %v511
  %v513 = vrot.slane %v33, 1
  %v514 = vsel %vm477, %v507, %v513
  %v515 = vrot.slane %v34, 1
  %v516 = vsel %vm477, %v509, %v515
  %v517 = vrot.slane %v35, 1
  %v518 = vsel %vm477, %v511, %v517
  %v519 = vrot.slane %v36, 1
  %v520 = vsel %vm477, %v513, %v519
  %v521 = vrot.slane %v37, 1
  %v522 = vsel %vm477, %v515, %v521
  %v523 = vrot.slane %v38, 1
  %v524 = vsel %vm477, %v517, %v523
  %v525 = vrot.slane %v39, 1
  %v526 = vsel %vm477, %v519, %v525
  %v527 = vrot.slane %v40, 1
  %v528 = vsel %vm477, %v521, %v527
  %v529 = vrot.slane %v41, 1
  %v530 = vsel %vm477, %v523, %v529
  %v531 = vrot.slane %v42, 1
  %v532 = vsel %vm477, %v525, %v531
  %v533 = vrot.slane %v43, 1
  %v534 = vsel %vm477, %v527, %v533
  %v535 = vrot.slane %v44, 1
  %v536 = vsel %vm477, %v529, %v535
  %v537 = vrot.slane %v45, 1
  %v538 = vsel %vm477, %v531, %v537
  %v539 = vrot.slane %v46, 1
  %v540 = vsel %vm477, %v533, %v539
  %v541 = vrot.slane %v47, 1
  %v542 = vsel %vm477, %v535, %v541
  %v543 = vrot.slane %v48, 1
  %v544 = vsel %vm477, %v537, %v543
  %v545 = vrot.slane %v49, 1
  %v546 = vsel %vm477, %v539, %v545
  %v547 = vrot.slane %v50, 1
  %v548 = vsel %vm477, %v541, %v547
  %v549 = vrot.slane %v51, 1
  %v550 = vsel %vm477, %v543, %v549
  %v551 = vrot.slane %v52, 1
  %v552 = vsel %vm477, %v545, %v551
  %589 = vmatpush.msra.mxu0 %v306
  %590 = vmatpush.msra.mxu0 %v302
  %591 = vmatpush.msra.mxu0 %v298
  %592 = vmatpush.msra.mxu0 %v294
  %593 = vmatpush.msra.mxu0 %v290
  %594 = vmatpush.msra.mxu0 %v286
  %595 = vmatpush.msra.mxu0 %v282
  %596 = vmatpush.msra.mxu0 %v278
  %597 = vmatpush.msra.mxu0 %v274
  %598 = vmatpush.msra.mxu0 %v270
  %599 = vmatpush.msra.mxu0 %v266
  %600 = vmatpush.msra.mxu0 %v262
  %601 = vmatpush.msra.mxu0 %v258
  %602 = vmatpush.msra.mxu0 %v254
  %603 = vmatpush.msra.mxu0 %v250
  %604 = vmatpush.msra.mxu0 %v246
  %605 = vmatmul.f32.gmra.mxu0 %v480
  %v606 = vpop.f32.mrf.mxu0
  %v607 = vadd.f32 0.0, %v606
  %608 = vmatmul.f32.gmra.mxu0 %v488
  %v609 = vpop.f32.mrf.mxu0
  %v610 = vadd.f32 0.0, %v609
  %611 = vmatmul.f32.gmra.mxu0 %v494
  %v612 = vpop.f32.mrf.mxu0
  %v613 = vadd.f32 0.0, %v612
  %614 = vmatmul.f32.gmra.mxu0 %v500
  %v615 = vpop.f32.mrf.mxu0
  %v616 = vadd.f32 0.0, %v615
  %617 = vmatmul.f32.gmra.mxu0 %v506
  %v618 = vpop.f32.mrf.mxu0
  %v619 = vadd.f32 0.0, %v618
  %620 = vmatmul.f32.gmra.mxu0 %v512
  %v621 = vpop.f32.mrf.mxu0
  %v622 = vadd.f32 0.0, %v621
  %623 = vmatmul.f32.gmra.mxu0 %v518
  %v624 = vpop.f32.mrf.mxu0
  %v625 = vadd.f32 0.0, %v624
  %626 = vmatmul.f32.gmra.mxu0 %v524
  %v627 = vpop.f32.mrf.mxu0
  %v628 = vadd.f32 0.0, %v627
  %629 = vmatmul.f32.gmra.mxu0 %v530
  %v630 = vpop.f32.mrf.mxu0
  %v631 = vadd.f32 0.0, %v630
  %632 = vmatmul.f32.gmra.mxu0 %v536
  %v633 = vpop.f32.mrf.mxu0
  %v634 = vadd.f32 0.0, %v633
  %635 = vmatmul.f32.gmra.mxu0 %v542
  %v636 = vpop.f32.mrf.mxu0
  %v637 = vadd.f32 0.0, %v636
  %638 = vmatmul.f32.gmra.mxu0 %v548
  %v639 = vpop.f32.mrf.mxu0
  %v640 = vadd.f32 0.0, %v639
  %641 = vdwg.mxu0
  %642 = vmatpush.msra.mxu0 %v370
  %643 = vmatpush.msra.mxu0 %v366
  %644 = vmatpush.msra.mxu0 %v362
  %645 = vmatpush.msra.mxu0 %v358
  %646 = vmatpush.msra.mxu0 %v354
  %647 = vmatpush.msra.mxu0 %v350
  %648 = vmatpush.msra.mxu0 %v346
  %649 = vmatpush.msra.mxu0 %v342
  %650 = vmatpush.msra.mxu0 %v338
  %651 = vmatpush.msra.mxu0 %v334
  %652 = vmatpush.msra.mxu0 %v330
  %653 = vmatpush.msra.mxu0 %v326
  %654 = vmatpush.msra.mxu0 %v322
  %655 = vmatpush.msra.mxu0 %v318
  %656 = vmatpush.msra.mxu0 %v314
  %657 = vmatpush.msra.mxu0 %v310
  %658 = vmatmul.f32.gmra.mxu0 %v483
  %v659 = vpop.f32.mrf.mxu0
  %v660 = vadd.f32 %v607, %v659
  %661 = vmatmul.f32.gmra.mxu0 %v490
  %v662 = vpop.f32.mrf.mxu0
  %v663 = vadd.f32 %v610, %v662
  %664 = vmatmul.f32.gmra.mxu0 %v496
  %v665 = vpop.f32.mrf.mxu0
  %v666 = vadd.f32 %v613, %v665
  %667 = vmatmul.f32.gmra.mxu0 %v502
  %v668 = vpop.f32.mrf.mxu0
  %v669 = vadd.f32 %v616, %v668
  %670 = vmatmul.f32.gmra.mxu0 %v508
  %v671 = vpop.f32.mrf.mxu0
  %v672 = vadd.f32 %v619, %v671
  %673 = vmatmul.f32.gmra.mxu0 %v514
  %v674 = vpop.f32.mrf.mxu0
  %v675 = vadd.f32 %v622, %v674
  %676 = vmatmul.f32.gmra.mxu0 %v520
  %v677 = vpop.f32.mrf.mxu0
  %v678 = vadd.f32 %v625, %v677
  %679 = vmatmul.f32.gmra.mxu0 %v526
  %v680 = vpop.f32.mrf.mxu0
  %v681 = vadd.f32 %v628, %v680
  %682 = vmatmul.f32.gmra.mxu0 %v532
  %v683 = vpop.f32.mrf.mxu0
  %v684 = vadd.f32 %v631, %v683
  %685 = vmatmul.f32.gmra.mxu0 %v538
  %v686 = vpop.f32.mrf.mxu0
  %v687 = vadd.f32 %v634, %v686
  %688 = vmatmul.f32.gmra.mxu0 %v544
  %v689 = vpop.f32.mrf.mxu0
  %v690 = vadd.f32 %v637, %v689
  %691 = vmatmul.f32.gmra.mxu0 %v550
  %v692 = vpop.f32.mrf.mxu0
  %v693 = vadd.f32 %v640, %v692
  %694 = vdwg.mxu0
  %695 = vmatpush.msra.mxu0 %v434
  %696 = vmatpush.msra.mxu0 %v430
  %697 = vmatpush.msra.mxu0 %v426
  %698 = vmatpush.msra.mxu0 %v422
  %699 = vmatpush.msra.mxu0 %v418
  %700 = vmatpush.msra.mxu0 %v414
  %701 = vmatpush.msra.mxu0 %v410
  %702 = vmatpush.msra.mxu0 %v406
  %703 = vmatpush.msra.mxu0 %v402
  %704 = vmatpush.msra.mxu0 %v398
  %705 = vmatpush.msra.mxu0 %v394
  %706 = vmatpush.msra.mxu0 %v390
  %707 = vmatpush.msra.mxu0 %v386
  %708 = vmatpush.msra.mxu0 %v382
  %709 = vmatpush.msra.mxu0 %v378
  %710 = vmatpush.msra.mxu0 %v374
  %711 = vmatmul.f32.gmra.mxu0 %v486
  %v712 = vpop.f32.mrf.mxu0
  %v713 = vadd.f32 %v660, %v712
  %714 = vmatmul.f32.gmra.mxu0 %v492
  %v715 = vpop.f32.mrf.mxu0
  %v716 = vadd.f32 %v663, %v715
  %717 = vmatmul.f32.gmra.mxu0 %v498
  %v718 = vpop.f32.mrf.mxu0
  %v719 = vadd.f32 %v666, %v718
  %720 = vmatmul.f32.gmra.mxu0 %v504
  %v721 = vpop.f32.mrf.mxu0
  %v722 = vadd.f32 %v669, %v721
  %723 = vmatmul.f32.gmra.mxu0 %v510
  %v724 = vpop.f32.mrf.mxu0
  %v725 = vadd.f32 %v672, %v724
  %726 = vmatmul.f32.gmra.mxu0 %v516
  %v727 = vpop.f32.mrf.mxu0
  %v728 = vadd.f32 %v675, %v727
  %729 = vmatmul.f32.gmra.mxu0 %v522
  %v730 = vpop.f32.mrf.mxu0
  %v731 = vadd.f32 %v678, %v730
  %732 = vmatmul.f32.gmra.mxu0 %v528
  %v733 = vpop.f32.mrf.mxu0
  %v734 = vadd.f32 %v681, %v733
  %735 = vmatmul.f32.gmra.mxu0 %v534
  %v736 = vpop.f32.mrf.mxu0
  %v737 = vadd.f32 %v684, %v736
  %738 = vmatmul.f32.gmra.mxu0 %v540
  %v739 = vpop.f32.mrf.mxu0
  %v740 = vadd.f32 %v687, %v739
  %741 = vmatmul.f32.gmra.mxu0 %v546
  %v742 = vpop.f32.mrf.mxu0
  %v743 = vadd.f32 %v690, %v742
  %744 = vmatmul.f32.gmra.mxu0 %v552
  %v745 = vpop.f32.mrf.mxu0
  %v746 = vadd.f32 %v693, %v745
  %747 = vdwg.mxu0
  %748 = vmatpush.msra.mxu0 %v307
  %749 = vmatpush.msra.mxu0 %v303
  %750 = vmatpush.msra.mxu0 %v299
  %751 = vmatpush.msra.mxu0 %v295
  %752 = vmatpush.msra.mxu0 %v291
  %753 = vmatpush.msra.mxu0 %v287
  %754 = vmatpush.msra.mxu0 %v283
  %755 = vmatpush.msra.mxu0 %v279
  %756 = vmatpush.msra.mxu0 %v275
  %757 = vmatpush.msra.mxu0 %v271
  %758 = vmatpush.msra.mxu0 %v267
  %759 = vmatpush.msra.mxu0 %v263
  %760 = vmatpush.msra.mxu0 %v259
  %761 = vmatpush.msra.mxu0 %v255
  %762 = vmatpush.msra.mxu0 %v251
  %763 = vmatpush.msra.mxu0 %v247
  %764 = vmatmul.f32.gmra.mxu0 %v480
  %v765 = vpop.f32.mrf.mxu0
  %v766 = vadd.f32 0.0, %v765
  %767 = vmatmul.f32.gmra.mxu0 %v488
  %v768 = vpop.f32.mrf.mxu0
  %v769 = vadd.f32 0.0, %v768
  %770 = vmatmul.f32.gmra.mxu0 %v494
  %v771 = vpop.f32.mrf.mxu0
  %v772 = vadd.f32 0.0, %v771
  %773 = vmatmul.f32.gmra.mxu0 %v500
  %v774 = vpop.f32.mrf.mxu0
  %v775 = vadd.f32 0.0, %v774
  %776 = vmatmul.f32.gmra.mxu0 %v506
  %v777 = vpop.f32.mrf.mxu0
  %v778 = vadd.f32 0.0, %v777
  %779 = vmatmul.f32.gmra.mxu0 %v512
  %v780 = vpop.f32.mrf.mxu0
  %v781 = vadd.f32 0.0, %v780
  %782 = vmatmul.f32.gmra.mxu0 %v518
  %v783 = vpop.f32.mrf.mxu0
  %v784 = vadd.f32 0.0, %v783
  %785 = vmatmul.f32.gmra.mxu0 %v524
  %v786 = vpop.f32.mrf.mxu0
  %v787 = vadd.f32 0.0, %v786
  %788 = vmatmul.f32.gmra.mxu0 %v530
  %v789 = vpop.f32.mrf.mxu0
  %v790 = vadd.f32 0.0, %v789
  %791 = vmatmul.f32.gmra.mxu0 %v536
  %v792 = vpop.f32.mrf.mxu0
  %v793 = vadd.f32 0.0, %v792
  %794 = vmatmul.f32.gmra.mxu0 %v542
  %v795 = vpop.f32.mrf.mxu0
  %v796 = vadd.f32 0.0, %v795
  %797 = vmatmul.f32.gmra.mxu0 %v548
  %v798 = vpop.f32.mrf.mxu0
  %v799 = vadd.f32 0.0, %v798
  %800 = vdwg.mxu0
  %801 = vmatpush.msra.mxu0 %v371
  %802 = vmatpush.msra.mxu0 %v367
  %803 = vmatpush.msra.mxu0 %v363
  %804 = vmatpush.msra.mxu0 %v359
  %805 = vmatpush.msra.mxu0 %v355
  %806 = vmatpush.msra.mxu0 %v351
  %807 = vmatpush.msra.mxu0 %v347
  %808 = vmatpush.msra.mxu0 %v343
  %809 = vmatpush.msra.mxu0 %v339
  %810 = vmatpush.msra.mxu0 %v335
  %811 = vmatpush.msra.mxu0 %v331
  %812 = vmatpush.msra.mxu0 %v327
  %813 = vmatpush.msra.mxu0 %v323
  %814 = vmatpush.msra.mxu0 %v319
  %815 = vmatpush.msra.mxu0 %v315
  %816 = vmatpush.msra.mxu0 %v311
  %817 = vmatmul.f32.gmra.mxu0 %v483
  %v818 = vpop.f32.mrf.mxu0
  %v819 = vadd.f32 %v766, %v818
  %820 = vmatmul.f32.gmra.mxu0 %v490
  %v821 = vpop.f32.mrf.mxu0
  %v822 = vadd.f32 %v769, %v821
  %823 = vmatmul.f32.gmra.mxu0 %v496
  %v824 = vpop.f32.mrf.mxu0
  %v825 = vadd.f32 %v772, %v824
  %826 = vmatmul.f32.gmra.mxu0 %v502
  %v827 = vpop.f32.mrf.mxu0
  %v828 = vadd.f32 %v775, %v827
  %829 = vmatmul.f32.gmra.mxu0 %v508
  %v830 = vpop.f32.mrf.mxu0
  %v831 = vadd.f32 %v778, %v830
  %832 = vmatmul.f32.gmra.mxu0 %v514
  %v833 = vpop.f32.mrf.mxu0
  %v834 = vadd.f32 %v781, %v833
  %835 = vmatmul.f32.gmra.mxu0 %v520
  %v836 = vpop.f32.mrf.mxu0
  %v837 = vadd.f32 %v784, %v836
  %838 = vmatmul.f32.gmra.mxu0 %v526
  %v839 = vpop.f32.mrf.mxu0
  %v840 = vadd.f32 %v787, %v839
  %841 = vmatmul.f32.gmra.mxu0 %v532
  %v842 = vpop.f32.mrf.mxu0
  %v843 = vadd.f32 %v790, %v842
  %844 = vmatmul.f32.gmra.mxu0 %v538
  %v845 = vpop.f32.mrf.mxu0
  %v846 = vadd.f32 %v793, %v845
  %847 = vmatmul.f32.gmra.mxu0 %v544
  %v848 = vpop.f32.mrf.mxu0
  %v849 = vadd.f32 %v796, %v848
  %850 = vmatmul.f32.gmra.mxu0 %v550
  %v851 = vpop.f32.mrf.mxu0
  %v852 = vadd.f32 %v799, %v851
  %853 = vdwg.mxu0
  %854 = vmatpush.msra.mxu0 %v435
  %855 = vmatpush.msra.mxu0 %v431
  %856 = vmatpush.msra.mxu0 %v427
  %857 = vmatpush.msra.mxu0 %v423
  %858 = vmatpush.msra.mxu0 %v419
  %859 = vmatpush.msra.mxu0 %v415
  %860 = vmatpush.msra.mxu0 %v411
  %861 = vmatpush.msra.mxu0 %v407
  %862 = vmatpush.msra.mxu0 %v403
  %863 = vmatpush.msra.mxu0 %v399
  %864 = vmatpush.msra.mxu0 %v395
  %865 = vmatpush.msra.mxu0 %v391
  %866 = vmatpush.msra.mxu0 %v387
  %867 = vmatpush.msra.mxu0 %v383
  %868 = vmatpush.msra.mxu0 %v379
  %869 = vmatpush.msra.mxu0 %v375
  %870 = vmatmul.f32.gmra.mxu0 %v486
  %v871 = vpop.f32.mrf.mxu0
  %v872 = vadd.f32 %v819, %v871
  %873 = vmatmul.f32.gmra.mxu0 %v492
  %v874 = vpop.f32.mrf.mxu0
  %v875 = vadd.f32 %v822, %v874
  %876 = vmatmul.f32.gmra.mxu0 %v498
  %v877 = vpop.f32.mrf.mxu0
  %v878 = vadd.f32 %v825, %v877
  %879 = vmatmul.f32.gmra.mxu0 %v504
  %v880 = vpop.f32.mrf.mxu0
  %v881 = vadd.f32 %v828, %v880
  %882 = vmatmul.f32.gmra.mxu0 %v510
  %v883 = vpop.f32.mrf.mxu0
  %v884 = vadd.f32 %v831, %v883
  %885 = vmatmul.f32.gmra.mxu0 %v516
  %v886 = vpop.f32.mrf.mxu0
  %v887 = vadd.f32 %v834, %v886
  %888 = vmatmul.f32.gmra.mxu0 %v522
  %v889 = vpop.f32.mrf.mxu0
  %v890 = vadd.f32 %v837, %v889
  %891 = vmatmul.f32.gmra.mxu0 %v528
  %v892 = vpop.f32.mrf.mxu0
  %v893 = vadd.f32 %v840, %v892
  %894 = vmatmul.f32.gmra.mxu0 %v534
  %v895 = vpop.f32.mrf.mxu0
  %v896 = vadd.f32 %v843, %v895
  %897 = vmatmul.f32.gmra.mxu0 %v540
  %v898 = vpop.f32.mrf.mxu0
  %v899 = vadd.f32 %v846, %v898
  %900 = vmatmul.f32.gmra.mxu0 %v546
  %v901 = vpop.f32.mrf.mxu0
  %v902 = vadd.f32 %v849, %v901
  %903 = vmatmul.f32.gmra.mxu0 %v552
  %v904 = vpop.f32.mrf.mxu0
  %v905 = vadd.f32 %v852, %v904
  %906 = vdwg.mxu0
  %907 = vmatpush.msra.mxu0 %v308
  %908 = vmatpush.msra.mxu0 %v304
  %909 = vmatpush.msra.mxu0 %v300
  %910 = vmatpush.msra.mxu0 %v296
  %911 = vmatpush.msra.mxu0 %v292
  %912 = vmatpush.msra.mxu0 %v288
  %913 = vmatpush.msra.mxu0 %v284
  %914 = vmatpush.msra.mxu0 %v280
  %915 = vmatpush.msra.mxu0 %v276
  %916 = vmatpush.msra.mxu0 %v272
  %917 = vmatpush.msra.mxu0 %v268
  %918 = vmatpush.msra.mxu0 %v264
  %919 = vmatpush.msra.mxu0 %v260
  %920 = vmatpush.msra.mxu0 %v256
  %921 = vmatpush.msra.mxu0 %v252
  %922 = vmatpush.msra.mxu0 %v248
  %923 = vmatmul.f32.gmra.mxu0 %v480
  %v924 = vpop.f32.mrf.mxu0
  %v925 = vadd.f32 0.0, %v924
  %926 = vmatmul.f32.gmra.mxu0 %v488
  %v927 = vpop.f32.mrf.mxu0
  %v928 = vadd.f32 0.0, %v927
  %929 = vmatmul.f32.gmra.mxu0 %v494
  %v930 = vpop.f32.mrf.mxu0
  %v931 = vadd.f32 0.0, %v930
  %932 = vmatmul.f32.gmra.mxu0 %v500
  %v933 = vpop.f32.mrf.mxu0
  %v934 = vadd.f32 0.0, %v933
  %935 = vmatmul.f32.gmra.mxu0 %v506
  %v936 = vpop.f32.mrf.mxu0
  %v937 = vadd.f32 0.0, %v936
  %938 = vmatmul.f32.gmra.mxu0 %v512
  %v939 = vpop.f32.mrf.mxu0
  %v940 = vadd.f32 0.0, %v939
  %941 = vmatmul.f32.gmra.mxu0 %v518
  %v942 = vpop.f32.mrf.mxu0
  %v943 = vadd.f32 0.0, %v942
  %944 = vmatmul.f32.gmra.mxu0 %v524
  %v945 = vpop.f32.mrf.mxu0
  %v946 = vadd.f32 0.0, %v945
  %947 = vmatmul.f32.gmra.mxu0 %v530
  %v948 = vpop.f32.mrf.mxu0
  %v949 = vadd.f32 0.0, %v948
  %950 = vmatmul.f32.gmra.mxu0 %v536
  %v951 = vpop.f32.mrf.mxu0
  %v952 = vadd.f32 0.0, %v951
  %953 = vmatmul.f32.gmra.mxu0 %v542
  %v954 = vpop.f32.mrf.mxu0
  %v955 = vadd.f32 0.0, %v954
  %956 = vmatmul.f32.gmra.mxu0 %v548
  %v957 = vpop.f32.mrf.mxu0
  %v958 = vadd.f32 0.0, %v957
  %959 = vdwg.mxu0
  %960 = vmatpush.msra.mxu0 %v372
  %961 = vmatpush.msra.mxu0 %v368
  %962 = vmatpush.msra.mxu0 %v364
  %963 = vmatpush.msra.mxu0 %v360
  %964 = vmatpush.msra.mxu0 %v356
  %965 = vmatpush.msra.mxu0 %v352
  %966 = vmatpush.msra.mxu0 %v348
  %967 = vmatpush.msra.mxu0 %v344
  %968 = vmatpush.msra.mxu0 %v340
  %969 = vmatpush.msra.mxu0 %v336
  %970 = vmatpush.msra.mxu0 %v332
  %971 = vmatpush.msra.mxu0 %v328
  %972 = vmatpush.msra.mxu0 %v324
  %973 = vmatpush.msra.mxu0 %v320
  %974 = vmatpush.msra.mxu0 %v316
  %975 = vmatpush.msra.mxu0 %v312
  %976 = vmatmul.f32.gmra.mxu0 %v483
  %v977 = vpop.f32.mrf.mxu0
  %v978 = vadd.f32 %v925, %v977
  %979 = vmatmul.f32.gmra.mxu0 %v490
  %v980 = vpop.f32.mrf.mxu0
  %v981 = vadd.f32 %v928, %v980
  %982 = vmatmul.f32.gmra.mxu0 %v496
  %v983 = vpop.f32.mrf.mxu0
  %v984 = vadd.f32 %v931, %v983
  %985 = vmatmul.f32.gmra.mxu0 %v502
  %v986 = vpop.f32.mrf.mxu0
  %v987 = vadd.f32 %v934, %v986
  %988 = vmatmul.f32.gmra.mxu0 %v508
  %v989 = vpop.f32.mrf.mxu0
  %v990 = vadd.f32 %v937, %v989
  %991 = vmatmul.f32.gmra.mxu0 %v514
  %v992 = vpop.f32.mrf.mxu0
  %v993 = vadd.f32 %v940, %v992
  %994 = vmatmul.f32.gmra.mxu0 %v520
  %v995 = vpop.f32.mrf.mxu0
  %v996 = vadd.f32 %v943, %v995
  %997 = vmatmul.f32.gmra.mxu0 %v526
  %v998 = vpop.f32.mrf.mxu0
  %v999 = vadd.f32 %v946, %v998
  %1000 = vmatmul.f32.gmra.mxu0 %v532
  %v1001 = vpop.f32.mrf.mxu0
  %v1002 = vadd.f32 %v949, %v1001
  %1003 = vmatmul.f32.gmra.mxu0 %v538
  %v1004 = vpop.f32.mrf.mxu0
  %v1005 = vadd.f32 %v952, %v1004
  %1006 = vmatmul.f32.gmra.mxu0 %v544
  %v1007 = vpop.f32.mrf.mxu0
  %v1008 = vadd.f32 %v955, %v1007
  %1009 = vmatmul.f32.gmra.mxu0 %v550
  %v1010 = vpop.f32.mrf.mxu0
  %v1011 = vadd.f32 %v958, %v1010
  %1012 = vdwg.mxu0
  %1013 = vmatpush.msra.mxu0 %v436
  %1014 = vmatpush.msra.mxu0 %v432
  %1015 = vmatpush.msra.mxu0 %v428
  %1016 = vmatpush.msra.mxu0 %v424
  %1017 = vmatpush.msra.mxu0 %v420
  %1018 = vmatpush.msra.mxu0 %v416
  %1019 = vmatpush.msra.mxu0 %v412
  %1020 = vmatpush.msra.mxu0 %v408
  %1021 = vmatpush.msra.mxu0 %v404
  %1022 = vmatpush.msra.mxu0 %v400
  %1023 = vmatpush.msra.mxu0 %v396
  %1024 = vmatpush.msra.mxu0 %v392
  %1025 = vmatpush.msra.mxu0 %v388
  %1026 = vmatpush.msra.mxu0 %v384
  %1027 = vmatpush.msra.mxu0 %v380
  %1028 = vmatpush.msra.mxu0 %v376
  %1029 = vmatmul.f32.gmra.mxu0 %v486
  %v1030 = vpop.f32.mrf.mxu0
  %v1031 = vadd.f32 %v978, %v1030
  %1032 = vmatmul.f32.gmra.mxu0 %v492
  %v1033 = vpop.f32.mrf.mxu0
  %v1034 = vadd.f32 %v981, %v1033
  %1035 = vmatmul.f32.gmra.mxu0 %v498
  %v1036 = vpop.f32.mrf.mxu0
  %v1037 = vadd.f32 %v984, %v1036
  %1038 = vmatmul.f32.gmra.mxu0 %v504
  %v1039 = vpop.f32.mrf.mxu0
  %v1040 = vadd.f32 %v987, %v1039
  %1041 = vmatmul.f32.gmra.mxu0 %v510
  %v1042 = vpop.f32.mrf.mxu0
  %v1043 = vadd.f32 %v990, %v1042
  %1044 = vmatmul.f32.gmra.mxu0 %v516
  %v1045 = vpop.f32.mrf.mxu0
  %v1046 = vadd.f32 %v993, %v1045
  %1047 = vmatmul.f32.gmra.mxu0 %v522
  %v1048 = vpop.f32.mrf.mxu0
  %v1049 = vadd.f32 %v996, %v1048
  %1050 = vmatmul.f32.gmra.mxu0 %v528
  %v1051 = vpop.f32.mrf.mxu0
  %v1052 = vadd.f32 %v999, %v1051
  %1053 = vmatmul.f32.gmra.mxu0 %v534
  %v1054 = vpop.f32.mrf.mxu0
  %v1055 = vadd.f32 %v1002, %v1054
  %1056 = vmatmul.f32.gmra.mxu0 %v540
  %v1057 = vpop.f32.mrf.mxu0
  %v1058 = vadd.f32 %v1005, %v1057
  %1059 = vmatmul.f32.gmra.mxu0 %v546
  %v1060 = vpop.f32.mrf.mxu0
  %v1061 = vadd.f32 %v1008, %v1060
  %1062 = vmatmul.f32.gmra.mxu0 %v552
  %v1063 = vpop.f32.mrf.mxu0
  %v1064 = vadd.f32 %v1011, %v1063
  %1065 = vdwg.mxu0
  %1066 = vmatpush.msra.mxu0 %v309
  %1067 = vmatpush.msra.mxu0 %v305
  %1068 = vmatpush.msra.mxu0 %v301
  %1069 = vmatpush.msra.mxu0 %v297
  %1070 = vmatpush.msra.mxu0 %v293
  %1071 = vmatpush.msra.mxu0 %v289
  %1072 = vmatpush.msra.mxu0 %v285
  %1073 = vmatpush.msra.mxu0 %v281
  %1074 = vmatpush.msra.mxu0 %v277
  %1075 = vmatpush.msra.mxu0 %v273
  %1076 = vmatpush.msra.mxu0 %v269
  %1077 = vmatpush.msra.mxu0 %v265
  %1078 = vmatpush.msra.mxu0 %v261
  %1079 = vmatpush.msra.mxu0 %v257
  %1080 = vmatpush.msra.mxu0 %v253
  %1081 = vmatpush.msra.mxu0 %v249
  %1082 = vmatmul.f32.gmra.mxu0 %v480
  %v1083 = vpop.f32.mrf.mxu0
  %v1084 = vadd.f32 0.0, %v1083
  %1085 = vmatmul.f32.gmra.mxu0 %v488
  %v1086 = vpop.f32.mrf.mxu0
  %v1087 = vadd.f32 0.0, %v1086
  %1088 = vmatmul.f32.gmra.mxu0 %v494
  %v1089 = vpop.f32.mrf.mxu0
  %v1090 = vadd.f32 0.0, %v1089
  %1091 = vmatmul.f32.gmra.mxu0 %v500
  %v1092 = vpop.f32.mrf.mxu0
  %v1093 = vadd.f32 0.0, %v1092
  %1094 = vmatmul.f32.gmra.mxu0 %v506
  %v1095 = vpop.f32.mrf.mxu0
  %v1096 = vadd.f32 0.0, %v1095
  %1097 = vmatmul.f32.gmra.mxu0 %v512
  %v1098 = vpop.f32.mrf.mxu0
  %v1099 = vadd.f32 0.0, %v1098
  %1100 = vmatmul.f32.gmra.mxu0 %v518
  %v1101 = vpop.f32.mrf.mxu0
  %v1102 = vadd.f32 0.0, %v1101
  %1103 = vmatmul.f32.gmra.mxu0 %v524
  %v1104 = vpop.f32.mrf.mxu0
  %v1105 = vadd.f32 0.0, %v1104
  %1106 = vmatmul.f32.gmra.mxu0 %v530
  %v1107 = vpop.f32.mrf.mxu0
  %v1108 = vadd.f32 0.0, %v1107
  %1109 = vmatmul.f32.gmra.mxu0 %v536
  %v1110 = vpop.f32.mrf.mxu0
  %v1111 = vadd.f32 0.0, %v1110
  %1112 = vmatmul.f32.gmra.mxu0 %v542
  %v1113 = vpop.f32.mrf.mxu0
  %v1114 = vadd.f32 0.0, %v1113
  %1115 = vmatmul.f32.gmra.mxu0 %v548
  %v1116 = vpop.f32.mrf.mxu0
  %v1117 = vadd.f32 0.0, %v1116
  %1118 = vdwg.mxu0
  %1119 = vmatpush.msra.mxu0 %v373
  %1120 = vmatpush.msra.mxu0 %v369
  %1121 = vmatpush.msra.mxu0 %v365
  %1122 = vmatpush.msra.mxu0 %v361
  %1123 = vmatpush.msra.mxu0 %v357
  %1124 = vmatpush.msra.mxu0 %v353
  %1125 = vmatpush.msra.mxu0 %v349
  %1126 = vmatpush.msra.mxu0 %v345
  %1127 = vmatpush.msra.mxu0 %v341
  %1128 = vmatpush.msra.mxu0 %v337
  %1129 = vmatpush.msra.mxu0 %v333
  %1130 = vmatpush.msra.mxu0 %v329
  %1131 = vmatpush.msra.mxu0 %v325
  %1132 = vmatpush.msra.mxu0 %v321
  %1133 = vmatpush.msra.mxu0 %v317
  %1134 = vmatpush.msra.mxu0 %v313
  %1135 = vmatmul.f32.gmra.mxu0 %v483
  %v1136 = vpop.f32.mrf.mxu0
  %v1137 = vadd.f32 %v1084, %v1136
  %1138 = vmatmul.f32.gmra.mxu0 %v490
  %v1139 = vpop.f32.mrf.mxu0
  %v1140 = vadd.f32 %v1087, %v1139
  %1141 = vmatmul.f32.gmra.mxu0 %v496
  %v1142 = vpop.f32.mrf.mxu0
  %v1143 = vadd.f32 %v1090, %v1142
  %1144 = vmatmul.f32.gmra.mxu0 %v502
  %v1145 = vpop.f32.mrf.mxu0
  %v1146 = vadd.f32 %v1093, %v1145
  %1147 = vmatmul.f32.gmra.mxu0 %v508
  %v1148 = vpop.f32.mrf.mxu0
  %v1149 = vadd.f32 %v1096, %v1148
  %1150 = vmatmul.f32.gmra.mxu0 %v514
  %v1151 = vpop.f32.mrf.mxu0
  %v1152 = vadd.f32 %v1099, %v1151
  %1153 = vmatmul.f32.gmra.mxu0 %v520
  %v1154 = vpop.f32.mrf.mxu0
  %v1155 = vadd.f32 %v1102, %v1154
  %1156 = vmatmul.f32.gmra.mxu0 %v526
  %v1157 = vpop.f32.mrf.mxu0
  %v1158 = vadd.f32 %v1105, %v1157
  %1159 = vmatmul.f32.gmra.mxu0 %v532
  %v1160 = vpop.f32.mrf.mxu0
  %v1161 = vadd.f32 %v1108, %v1160
  %1162 = vmatmul.f32.gmra.mxu0 %v538
  %v1163 = vpop.f32.mrf.mxu0
  %v1164 = vadd.f32 %v1111, %v1163
  %1165 = vmatmul.f32.gmra.mxu0 %v544
  %v1166 = vpop.f32.mrf.mxu0
  %v1167 = vadd.f32 %v1114, %v1166
  %1168 = vmatmul.f32.gmra.mxu0 %v550
  %v1169 = vpop.f32.mrf.mxu0
  %v1170 = vadd.f32 %v1117, %v1169
  %1171 = vdwg.mxu0
  %1172 = vmatpush.msra.mxu0 %v437
  %1173 = vmatpush.msra.mxu0 %v433
  %1174 = vmatpush.msra.mxu0 %v429
  %1175 = vmatpush.msra.mxu0 %v425
  %1176 = vmatpush.msra.mxu0 %v421
  %1177 = vmatpush.msra.mxu0 %v417
  %1178 = vmatpush.msra.mxu0 %v413
  %1179 = vmatpush.msra.mxu0 %v409
  %1180 = vmatpush.msra.mxu0 %v405
  %1181 = vmatpush.msra.mxu0 %v401
  %1182 = vmatpush.msra.mxu0 %v397
  %1183 = vmatpush.msra.mxu0 %v393
  %1184 = vmatpush.msra.mxu0 %v389
  %1185 = vmatpush.msra.mxu0 %v385
  %1186 = vmatpush.msra.mxu0 %v381
  %1187 = vmatpush.msra.mxu0 %v377
  %1188 = vmatmul.f32.gmra.mxu0 %v486
  %v1189 = vpop.f32.mrf.mxu0
  %v1190 = vadd.f32 %v1137, %v1189
  %1191 = vmatmul.f32.gmra.mxu0 %v492
  %v1192 = vpop.f32.mrf.mxu0
  %v1193 = vadd.f32 %v1140, %v1192
  %1194 = vmatmul.f32.gmra.mxu0 %v498
  %v1195 = vpop.f32.mrf.mxu0
  %v1196 = vadd.f32 %v1143, %v1195
  %1197 = vmatmul.f32.gmra.mxu0 %v504
  %v1198 = vpop.f32.mrf.mxu0
  %v1199 = vadd.f32 %v1146, %v1198
  %1200 = vmatmul.f32.gmra.mxu0 %v510
  %v1201 = vpop.f32.mrf.mxu0
  %v1202 = vadd.f32 %v1149, %v1201
  %1203 = vmatmul.f32.gmra.mxu0 %v516
  %v1204 = vpop.f32.mrf.mxu0
  %v1205 = vadd.f32 %v1152, %v1204
  %1206 = vmatmul.f32.gmra.mxu0 %v522
  %v1207 = vpop.f32.mrf.mxu0
  %v1208 = vadd.f32 %v1155, %v1207
  %1209 = vmatmul.f32.gmra.mxu0 %v528
  %v1210 = vpop.f32.mrf.mxu0
  %v1211 = vadd.f32 %v1158, %v1210
  %1212 = vmatmul.f32.gmra.mxu0 %v534
  %v1213 = vpop.f32.mrf.mxu0
  %v1214 = vadd.f32 %v1161, %v1213
  %1215 = vmatmul.f32.gmra.mxu0 %v540
  %v1216 = vpop.f32.mrf.mxu0
  %v1217 = vadd.f32 %v1164, %v1216
  %1218 = vmatmul.f32.gmra.mxu0 %v546
  %v1219 = vpop.f32.mrf.mxu0
  %v1220 = vadd.f32 %v1167, %v1219
  %1221 = vmatmul.f32.gmra.mxu0 %v552
  %v1222 = vpop.f32.mrf.mxu0
  %v1223 = vadd.f32 %v1170, %v1222
  %1224 = vdwg.mxu0
  %1225 = vmatpush.msra.mxu0 %v113
  %1226 = vmatpush.msra.mxu0 %v109
  %1227 = vmatpush.msra.mxu0 %v105
  %1228 = vmatpush.msra.mxu0 %v101
  %1229 = vmatpush.msra.mxu0 %v97
  %1230 = vmatpush.msra.mxu0 %v93
  %1231 = vmatpush.msra.mxu0 %v89
  %1232 = vmatpush.msra.mxu0 %v85
  %1233 = vmatpush.msra.mxu0 %v81
  %1234 = vmatpush.msra.mxu0 %v77
  %1235 = vmatpush.msra.mxu0 %v73
  %1236 = vmatpush.msra.mxu0 %v69
  %1237 = vmatpush.msra.mxu0 %v65
  %1238 = vmatpush.msra.mxu0 %v61
  %1239 = vmatpush.msra.mxu0 %v57
  %1240 = vmatpush.msra.mxu0 %v53
  %1241 = vmatmul.f32.gmra.mxu0 %v14
  %v1242 = vpop.f32.mrf.mxu0
  %v1243 = vadd.f32 %v713, %v1242
  %1244 = vmatmul.f32.gmra.mxu0 %v17
  %v1245 = vpop.f32.mrf.mxu0
  %v1246 = vadd.f32 %v716, %v1245
  %1247 = vmatmul.f32.gmra.mxu0 %v20
  %v1248 = vpop.f32.mrf.mxu0
  %v1249 = vadd.f32 %v719, %v1248
  %1250 = vmatmul.f32.gmra.mxu0 %v23
  %v1251 = vpop.f32.mrf.mxu0
  %v1252 = vadd.f32 %v722, %v1251
  %1253 = vmatmul.f32.gmra.mxu0 %v26
  %v1254 = vpop.f32.mrf.mxu0
  %v1255 = vadd.f32 %v725, %v1254
  %1256 = vmatmul.f32.gmra.mxu0 %v29
  %v1257 = vpop.f32.mrf.mxu0
  %v1258 = vadd.f32 %v728, %v1257
  %1259 = vmatmul.f32.gmra.mxu0 %v32
  %v1260 = vpop.f32.mrf.mxu0
  %v1261 = vadd.f32 %v731, %v1260
  %1262 = vmatmul.f32.gmra.mxu0 %v35
  %v1263 = vpop.f32.mrf.mxu0
  %v1264 = vadd.f32 %v734, %v1263
  %1265 = vmatmul.f32.gmra.mxu0 %v38
  %v1266 = vpop.f32.mrf.mxu0
  %v1267 = vadd.f32 %v737, %v1266
  %1268 = vmatmul.f32.gmra.mxu0 %v41
  %v1269 = vpop.f32.mrf.mxu0
  %v1270 = vadd.f32 %v740, %v1269
  %1271 = vmatmul.f32.gmra.mxu0 %v44
  %v1272 = vpop.f32.mrf.mxu0
  %v1273 = vadd.f32 %v743, %v1272
  %1274 = vmatmul.f32.gmra.mxu0 %v47
  %v1275 = vpop.f32.mrf.mxu0
  %v1276 = vadd.f32 %v746, %v1275
  %1277 = vdwg.mxu0
  %1278 = vmatpush.msra.mxu0 %v177
  %1279 = vmatpush.msra.mxu0 %v173
  %1280 = vmatpush.msra.mxu0 %v169
  %1281 = vmatpush.msra.mxu0 %v165
  %1282 = vmatpush.msra.mxu0 %v161
  %1283 = vmatpush.msra.mxu0 %v157
  %1284 = vmatpush.msra.mxu0 %v153
  %1285 = vmatpush.msra.mxu0 %v149
  %1286 = vmatpush.msra.mxu0 %v145
  %1287 = vmatpush.msra.mxu0 %v141
  %1288 = vmatpush.msra.mxu0 %v137
  %1289 = vmatpush.msra.mxu0 %v133
  %1290 = vmatpush.msra.mxu0 %v129
  %1291 = vmatpush.msra.mxu0 %v125
  %1292 = vmatpush.msra.mxu0 %v121
  %1293 = vmatpush.msra.mxu0 %v117
  %1294 = vmatmul.f32.gmra.mxu0 %v15
  %v1295 = vpop.f32.mrf.mxu0
  %v1296 = vadd.f32 %v1243, %v1295
  %1297 = vmatmul.f32.gmra.mxu0 %v18
  %v1298 = vpop.f32.mrf.mxu0
  %v1299 = vadd.f32 %v1246, %v1298
  %1300 = vmatmul.f32.gmra.mxu0 %v21
  %v1301 = vpop.f32.mrf.mxu0
  %v1302 = vadd.f32 %v1249, %v1301
  %1303 = vmatmul.f32.gmra.mxu0 %v24
  %v1304 = vpop.f32.mrf.mxu0
  %v1305 = vadd.f32 %v1252, %v1304
  %1306 = vmatmul.f32.gmra.mxu0 %v27
  %v1307 = vpop.f32.mrf.mxu0
  %v1308 = vadd.f32 %v1255, %v1307
  %1309 = vmatmul.f32.gmra.mxu0 %v30
  %v1310 = vpop.f32.mrf.mxu0
  %v1311 = vadd.f32 %v1258, %v1310
  %1312 = vmatmul.f32.gmra.mxu0 %v33
  %v1313 = vpop.f32.mrf.mxu0
  %v1314 = vadd.f32 %v1261, %v1313
  %1315 = vmatmul.f32.gmra.mxu0 %v36
  %v1316 = vpop.f32.mrf.mxu0
  %v1317 = vadd.f32 %v1264, %v1316
  %1318 = vmatmul.f32.gmra.mxu0 %v39
  %v1319 = vpop.f32.mrf.mxu0
  %v1320 = vadd.f32 %v1267, %v1319
  %1321 = vmatmul.f32.gmra.mxu0 %v42
  %v1322 = vpop.f32.mrf.mxu0
  %v1323 = vadd.f32 %v1270, %v1322
  %1324 = vmatmul.f32.gmra.mxu0 %v45
  %v1325 = vpop.f32.mrf.mxu0
  %v1326 = vadd.f32 %v1273, %v1325
  %1327 = vmatmul.f32.gmra.mxu0 %v48
  %v1328 = vpop.f32.mrf.mxu0
  %v1329 = vadd.f32 %v1276, %v1328
  %1330 = vdwg.mxu0
  %1331 = vmatpush.msra.mxu0 %v241
  %1332 = vmatpush.msra.mxu0 %v237
  %1333 = vmatpush.msra.mxu0 %v233
  %1334 = vmatpush.msra.mxu0 %v229
  %1335 = vmatpush.msra.mxu0 %v225
  %1336 = vmatpush.msra.mxu0 %v221
  %1337 = vmatpush.msra.mxu0 %v217
  %1338 = vmatpush.msra.mxu0 %v213
  %1339 = vmatpush.msra.mxu0 %v209
  %1340 = vmatpush.msra.mxu0 %v205
  %1341 = vmatpush.msra.mxu0 %v201
  %1342 = vmatpush.msra.mxu0 %v197
  %1343 = vmatpush.msra.mxu0 %v193
  %1344 = vmatpush.msra.mxu0 %v189
  %1345 = vmatpush.msra.mxu0 %v185
  %1346 = vmatpush.msra.mxu0 %v181
  %1347 = vmatmul.f32.gmra.mxu0 %v16
  %v1348 = vpop.f32.mrf.mxu0
  %v1349 = vadd.f32 %v1296, %v1348
  %1350 = vmatmul.f32.gmra.mxu0 %v19
  %v1351 = vpop.f32.mrf.mxu0
  %v1352 = vadd.f32 %v1299, %v1351
  %1353 = vmatmul.f32.gmra.mxu0 %v22
  %v1354 = vpop.f32.mrf.mxu0
  %v1355 = vadd.f32 %v1302, %v1354
  %1356 = vmatmul.f32.gmra.mxu0 %v25
  %v1357 = vpop.f32.mrf.mxu0
  %v1358 = vadd.f32 %v1305, %v1357
  %1359 = vmatmul.f32.gmra.mxu0 %v28
  %v1360 = vpop.f32.mrf.mxu0
  %v1361 = vadd.f32 %v1308, %v1360
  %1362 = vmatmul.f32.gmra.mxu0 %v31
  %v1363 = vpop.f32.mrf.mxu0
  %v1364 = vadd.f32 %v1311, %v1363
  %1365 = vmatmul.f32.gmra.mxu0 %v34
  %v1366 = vpop.f32.mrf.mxu0
  %v1367 = vadd.f32 %v1314, %v1366
  %1368 = vmatmul.f32.gmra.mxu0 %v37
  %v1369 = vpop.f32.mrf.mxu0
  %v1370 = vadd.f32 %v1317, %v1369
  %1371 = vmatmul.f32.gmra.mxu0 %v40
  %v1372 = vpop.f32.mrf.mxu0
  %v1373 = vadd.f32 %v1320, %v1372
  %1374 = vmatmul.f32.gmra.mxu0 %v43
  %v1375 = vpop.f32.mrf.mxu0
  %v1376 = vadd.f32 %v1323, %v1375
  %1377 = vmatmul.f32.gmra.mxu0 %v46
  %v1378 = vpop.f32.mrf.mxu0
  %v1379 = vadd.f32 %v1326, %v1378
  %1380 = vmatmul.f32.gmra.mxu0 %v49
  %v1381 = vpop.f32.mrf.mxu0
  %v1382 = vadd.f32 %v1329, %v1381
  %1383 = vdwg.mxu0
  %1384 = vmatpush.msra.mxu0 %v114
  %1385 = vmatpush.msra.mxu0 %v110
  %1386 = vmatpush.msra.mxu0 %v106
  %1387 = vmatpush.msra.mxu0 %v102
  %1388 = vmatpush.msra.mxu0 %v98
  %1389 = vmatpush.msra.mxu0 %v94
  %1390 = vmatpush.msra.mxu0 %v90
  %1391 = vmatpush.msra.mxu0 %v86
  %1392 = vmatpush.msra.mxu0 %v82
  %1393 = vmatpush.msra.mxu0 %v78
  %1394 = vmatpush.msra.mxu0 %v74
  %1395 = vmatpush.msra.mxu0 %v70
  %1396 = vmatpush.msra.mxu0 %v66
  %1397 = vmatpush.msra.mxu0 %v62
  %1398 = vmatpush.msra.mxu0 %v58
  %1399 = vmatpush.msra.mxu0 %v54
  %1400 = vmatmul.f32.gmra.mxu0 %v14
  %v1401 = vpop.f32.mrf.mxu0
  %v1402 = vadd.f32 %v872, %v1401
  %1403 = vmatmul.f32.gmra.mxu0 %v17
  %v1404 = vpop.f32.mrf.mxu0
  %v1405 = vadd.f32 %v875, %v1404
  %1406 = vmatmul.f32.gmra.mxu0 %v20
  %v1407 = vpop.f32.mrf.mxu0
  %v1408 = vadd.f32 %v878, %v1407
  %1409 = vmatmul.f32.gmra.mxu0 %v23
  %v1410 = vpop.f32.mrf.mxu0
  %v1411 = vadd.f32 %v881, %v1410
  %1412 = vmatmul.f32.gmra.mxu0 %v26
  %v1413 = vpop.f32.mrf.mxu0
  %v1414 = vadd.f32 %v884, %v1413
  %1415 = vmatmul.f32.gmra.mxu0 %v29
  %v1416 = vpop.f32.mrf.mxu0
  %v1417 = vadd.f32 %v887, %v1416
  %1418 = vmatmul.f32.gmra.mxu0 %v32
  %v1419 = vpop.f32.mrf.mxu0
  %v1420 = vadd.f32 %v890, %v1419
  %1421 = vmatmul.f32.gmra.mxu0 %v35
  %v1422 = vpop.f32.mrf.mxu0
  %v1423 = vadd.f32 %v893, %v1422
  %1424 = vmatmul.f32.gmra.mxu0 %v38
  %v1425 = vpop.f32.mrf.mxu0
  %v1426 = vadd.f32 %v896, %v1425
  %1427 = vmatmul.f32.gmra.mxu0 %v41
  %v1428 = vpop.f32.mrf.mxu0
  %v1429 = vadd.f32 %v899, %v1428
  %1430 = vmatmul.f32.gmra.mxu0 %v44
  %v1431 = vpop.f32.mrf.mxu0
  %v1432 = vadd.f32 %v902, %v1431
  %1433 = vmatmul.f32.gmra.mxu0 %v47
  %v1434 = vpop.f32.mrf.mxu0
  %v1435 = vadd.f32 %v905, %v1434
  %1436 = vdwg.mxu0
  %1437 = vmatpush.msra.mxu0 %v178
  %1438 = vmatpush.msra.mxu0 %v174
  %1439 = vmatpush.msra.mxu0 %v170
  %1440 = vmatpush.msra.mxu0 %v166
  %1441 = vmatpush.msra.mxu0 %v162
  %1442 = vmatpush.msra.mxu0 %v158
  %1443 = vmatpush.msra.mxu0 %v154
  %1444 = vmatpush.msra.mxu0 %v150
  %1445 = vmatpush.msra.mxu0 %v146
  %1446 = vmatpush.msra.mxu0 %v142
  %1447 = vmatpush.msra.mxu0 %v138
  %1448 = vmatpush.msra.mxu0 %v134
  %1449 = vmatpush.msra.mxu0 %v130
  %1450 = vmatpush.msra.mxu0 %v126
  %1451 = vmatpush.msra.mxu0 %v122
  %1452 = vmatpush.msra.mxu0 %v118
  %1453 = vmatmul.f32.gmra.mxu0 %v15
  %v1454 = vpop.f32.mrf.mxu0
  %v1455 = vadd.f32 %v1402, %v1454
  %1456 = vmatmul.f32.gmra.mxu0 %v18
  %v1457 = vpop.f32.mrf.mxu0
  %v1458 = vadd.f32 %v1405, %v1457
  %1459 = vmatmul.f32.gmra.mxu0 %v21
  %v1460 = vpop.f32.mrf.mxu0
  %v1461 = vadd.f32 %v1408, %v1460
  %1462 = vmatmul.f32.gmra.mxu0 %v24
  %v1463 = vpop.f32.mrf.mxu0
  %v1464 = vadd.f32 %v1411, %v1463
  %1465 = vmatmul.f32.gmra.mxu0 %v27
  %v1466 = vpop.f32.mrf.mxu0
  %v1467 = vadd.f32 %v1414, %v1466
  %1468 = vmatmul.f32.gmra.mxu0 %v30
  %v1469 = vpop.f32.mrf.mxu0
  %v1470 = vadd.f32 %v1417, %v1469
  %1471 = vmatmul.f32.gmra.mxu0 %v33
  %v1472 = vpop.f32.mrf.mxu0
  %v1473 = vadd.f32 %v1420, %v1472
  %1474 = vmatmul.f32.gmra.mxu0 %v36
  %v1475 = vpop.f32.mrf.mxu0
  %v1476 = vadd.f32 %v1423, %v1475
  %1477 = vmatmul.f32.gmra.mxu0 %v39
  %v1478 = vpop.f32.mrf.mxu0
  %v1479 = vadd.f32 %v1426, %v1478
  %1480 = vmatmul.f32.gmra.mxu0 %v42
  %v1481 = vpop.f32.mrf.mxu0
  %v1482 = vadd.f32 %v1429, %v1481
  %1483 = vmatmul.f32.gmra.mxu0 %v45
  %v1484 = vpop.f32.mrf.mxu0
  %v1485 = vadd.f32 %v1432, %v1484
  %1486 = vmatmul.f32.gmra.mxu0 %v48
  %v1487 = vpop.f32.mrf.mxu0
  %v1488 = vadd.f32 %v1435, %v1487
  %1489 = vdwg.mxu0
  %1490 = vmatpush.msra.mxu0 %v242
  %1491 = vmatpush.msra.mxu0 %v238
  %1492 = vmatpush.msra.mxu0 %v234
  %1493 = vmatpush.msra.mxu0 %v230
  %1494 = vmatpush.msra.mxu0 %v226
  %1495 = vmatpush.msra.mxu0 %v222
  %1496 = vmatpush.msra.mxu0 %v218
  %1497 = vmatpush.msra.mxu0 %v214
  %1498 = vmatpush.msra.mxu0 %v210
  %1499 = vmatpush.msra.mxu0 %v206
  %1500 = vmatpush.msra.mxu0 %v202
  %1501 = vmatpush.msra.mxu0 %v198
  %1502 = vmatpush.msra.mxu0 %v194
  %1503 = vmatpush.msra.mxu0 %v190
  %1504 = vmatpush.msra.mxu0 %v186
  %1505 = vmatpush.msra.mxu0 %v182
  %1506 = vmatmul.f32.gmra.mxu0 %v16
  %v1507 = vpop.f32.mrf.mxu0
  %v1508 = vadd.f32 %v1455, %v1507
  %1509 = vmatmul.f32.gmra.mxu0 %v19
  %v1510 = vpop.f32.mrf.mxu0
  %v1511 = vadd.f32 %v1458, %v1510
  %1512 = vmatmul.f32.gmra.mxu0 %v22
  %v1513 = vpop.f32.mrf.mxu0
  %v1514 = vadd.f32 %v1461, %v1513
  %1515 = vmatmul.f32.gmra.mxu0 %v25
  %v1516 = vpop.f32.mrf.mxu0
  %v1517 = vadd.f32 %v1464, %v1516
  %1518 = vmatmul.f32.gmra.mxu0 %v28
  %v1519 = vpop.f32.mrf.mxu0
  %v1520 = vadd.f32 %v1467, %v1519
  %1521 = vmatmul.f32.gmra.mxu0 %v31
  %v1522 = vpop.f32.mrf.mxu0
  %v1523 = vadd.f32 %v1470, %v1522
  %1524 = vmatmul.f32.gmra.mxu0 %v34
  %v1525 = vpop.f32.mrf.mxu0
  %v1526 = vadd.f32 %v1473, %v1525
  %1527 = vmatmul.f32.gmra.mxu0 %v37
  %v1528 = vpop.f32.mrf.mxu0
  %v1529 = vadd.f32 %v1476, %v1528
  %1530 = vmatmul.f32.gmra.mxu0 %v40
  %v1531 = vpop.f32.mrf.mxu0
  %v1532 = vadd.f32 %v1479, %v1531
  %1533 = vmatmul.f32.gmra.mxu0 %v43
  %v1534 = vpop.f32.mrf.mxu0
  %v1535 = vadd.f32 %v1482, %v1534
  %1536 = vmatmul.f32.gmra.mxu0 %v46
  %v1537 = vpop.f32.mrf.mxu0
  %v1538 = vadd.f32 %v1485, %v1537
  %1539 = vmatmul.f32.gmra.mxu0 %v49
  %v1540 = vpop.f32.mrf.mxu0
  %v1541 = vadd.f32 %v1488, %v1540
  %1542 = vdwg.mxu0
  %1543 = vmatpush.msra.mxu0 %v115
  %1544 = vmatpush.msra.mxu0 %v111
  %1545 = vmatpush.msra.mxu0 %v107
  %1546 = vmatpush.msra.mxu0 %v103
  %1547 = vmatpush.msra.mxu0 %v99
  %1548 = vmatpush.msra.mxu0 %v95
  %1549 = vmatpush.msra.mxu0 %v91
  %1550 = vmatpush.msra.mxu0 %v87
  %1551 = vmatpush.msra.mxu0 %v83
  %1552 = vmatpush.msra.mxu0 %v79
  %1553 = vmatpush.msra.mxu0 %v75
  %1554 = vmatpush.msra.mxu0 %v71
  %1555 = vmatpush.msra.mxu0 %v67
  %1556 = vmatpush.msra.mxu0 %v63
  %1557 = vmatpush.msra.mxu0 %v59
  %1558 = vmatpush.msra.mxu0 %v55
  %1559 = vmatmul.f32.gmra.mxu0 %v14
  %v1560 = vpop.f32.mrf.mxu0
  %v1561 = vadd.f32 %v1031, %v1560
  %1562 = vmatmul.f32.gmra.mxu0 %v17
  %v1563 = vpop.f32.mrf.mxu0
  %v1564 = vadd.f32 %v1034, %v1563
  %1565 = vmatmul.f32.gmra.mxu0 %v20
  %v1566 = vpop.f32.mrf.mxu0
  %v1567 = vadd.f32 %v1037, %v1566
  %1568 = vmatmul.f32.gmra.mxu0 %v23
  %v1569 = vpop.f32.mrf.mxu0
  %v1570 = vadd.f32 %v1040, %v1569
  %1571 = vmatmul.f32.gmra.mxu0 %v26
  %v1572 = vpop.f32.mrf.mxu0
  %v1573 = vadd.f32 %v1043, %v1572
  %1574 = vmatmul.f32.gmra.mxu0 %v29
  %v1575 = vpop.f32.mrf.mxu0
  %v1576 = vadd.f32 %v1046, %v1575
  %1577 = vmatmul.f32.gmra.mxu0 %v32
  %v1578 = vpop.f32.mrf.mxu0
  %v1579 = vadd.f32 %v1049, %v1578
  %1580 = vmatmul.f32.gmra.mxu0 %v35
  %v1581 = vpop.f32.mrf.mxu0
  %v1582 = vadd.f32 %v1052, %v1581
  %1583 = vmatmul.f32.gmra.mxu0 %v38
  %v1584 = vpop.f32.mrf.mxu0
  %v1585 = vadd.f32 %v1055, %v1584
  %1586 = vmatmul.f32.gmra.mxu0 %v41
  %v1587 = vpop.f32.mrf.mxu0
  %v1588 = vadd.f32 %v1058, %v1587
  %1589 = vmatmul.f32.gmra.mxu0 %v44
  %v1590 = vpop.f32.mrf.mxu0
  %v1591 = vadd.f32 %v1061, %v1590
  %1592 = vmatmul.f32.gmra.mxu0 %v47
  %v1593 = vpop.f32.mrf.mxu0
  %v1594 = vadd.f32 %v1064, %v1593
  %1595 = vdwg.mxu0
  %1596 = vmatpush.msra.mxu0 %v179
  %1597 = vmatpush.msra.mxu0 %v175
  %1598 = vmatpush.msra.mxu0 %v171
  %1599 = vmatpush.msra.mxu0 %v167
  %1600 = vmatpush.msra.mxu0 %v163
  %1601 = vmatpush.msra.mxu0 %v159
  %1602 = vmatpush.msra.mxu0 %v155
  %1603 = vmatpush.msra.mxu0 %v151
  %1604 = vmatpush.msra.mxu0 %v147
  %1605 = vmatpush.msra.mxu0 %v143
  %1606 = vmatpush.msra.mxu0 %v139
  %1607 = vmatpush.msra.mxu0 %v135
  %1608 = vmatpush.msra.mxu0 %v131
  %1609 = vmatpush.msra.mxu0 %v127
  %1610 = vmatpush.msra.mxu0 %v123
  %1611 = vmatpush.msra.mxu0 %v119
  %1612 = vmatmul.f32.gmra.mxu0 %v15
  %v1613 = vpop.f32.mrf.mxu0
  %v1614 = vadd.f32 %v1561, %v1613
  %1615 = vmatmul.f32.gmra.mxu0 %v18
  %v1616 = vpop.f32.mrf.mxu0
  %v1617 = vadd.f32 %v1564, %v1616
  %1618 = vmatmul.f32.gmra.mxu0 %v21
  %v1619 = vpop.f32.mrf.mxu0
  %v1620 = vadd.f32 %v1567, %v1619
  %1621 = vmatmul.f32.gmra.mxu0 %v24
  %v1622 = vpop.f32.mrf.mxu0
  %v1623 = vadd.f32 %v1570, %v1622
  %1624 = vmatmul.f32.gmra.mxu0 %v27
  %v1625 = vpop.f32.mrf.mxu0
  %v1626 = vadd.f32 %v1573, %v1625
  %1627 = vmatmul.f32.gmra.mxu0 %v30
  %v1628 = vpop.f32.mrf.mxu0
  %v1629 = vadd.f32 %v1576, %v1628
  %1630 = vmatmul.f32.gmra.mxu0 %v33
  %v1631 = vpop.f32.mrf.mxu0
  %v1632 = vadd.f32 %v1579, %v1631
  %1633 = vmatmul.f32.gmra.mxu0 %v36
  %v1634 = vpop.f32.mrf.mxu0
  %v1635 = vadd.f32 %v1582, %v1634
  %1636 = vmatmul.f32.gmra.mxu0 %v39
  %v1637 = vpop.f32.mrf.mxu0
  %v1638 = vadd.f32 %v1585, %v1637
  %1639 = vmatmul.f32.gmra.mxu0 %v42
  %v1640 = vpop.f32.mrf.mxu0
  %v1641 = vadd.f32 %v1588, %v1640
  %1642 = vmatmul.f32.gmra.mxu0 %v45
  %v1643 = vpop.f32.mrf.mxu0
  %v1644 = vadd.f32 %v1591, %v1643
  %1645 = vmatmul.f32.gmra.mxu0 %v48
  %v1646 = vpop.f32.mrf.mxu0
  %v1647 = vadd.f32 %v1594, %v1646
  %1648 = vdwg.mxu0
  %1649 = vmatpush.msra.mxu0 %v243
  %1650 = vmatpush.msra.mxu0 %v239
  %1651 = vmatpush.msra.mxu0 %v235
  %1652 = vmatpush.msra.mxu0 %v231
  %1653 = vmatpush.msra.mxu0 %v227
  %1654 = vmatpush.msra.mxu0 %v223
  %1655 = vmatpush.msra.mxu0 %v219
  %1656 = vmatpush.msra.mxu0 %v215
  %1657 = vmatpush.msra.mxu0 %v211
  %1658 = vmatpush.msra.mxu0 %v207
  %1659 = vmatpush.msra.mxu0 %v203
  %1660 = vmatpush.msra.mxu0 %v199
  %1661 = vmatpush.msra.mxu0 %v195
  %1662 = vmatpush.msra.mxu0 %v191
  %1663 = vmatpush.msra.mxu0 %v187
  %1664 = vmatpush.msra.mxu0 %v183
  %1665 = vmatmul.f32.gmra.mxu0 %v16
  %v1666 = vpop.f32.mrf.mxu0
  %v1667 = vadd.f32 %v1614, %v1666
  %1668 = vmatmul.f32.gmra.mxu0 %v19
  %v1669 = vpop.f32.mrf.mxu0
  %v1670 = vadd.f32 %v1617, %v1669
  %1671 = vmatmul.f32.gmra.mxu0 %v22
  %v1672 = vpop.f32.mrf.mxu0
  %v1673 = vadd.f32 %v1620, %v1672
  %1674 = vmatmul.f32.gmra.mxu0 %v25
  %v1675 = vpop.f32.mrf.mxu0
  %v1676 = vadd.f32 %v1623, %v1675
  %1677 = vmatmul.f32.gmra.mxu0 %v28
  %v1678 = vpop.f32.mrf.mxu0
  %v1679 = vadd.f32 %v1626, %v1678
  %1680 = vmatmul.f32.gmra.mxu0 %v31
  %v1681 = vpop.f32.mrf.mxu0
  %v1682 = vadd.f32 %v1629, %v1681
  %1683 = vmatmul.f32.gmra.mxu0 %v34
  %v1684 = vpop.f32.mrf.mxu0
  %v1685 = vadd.f32 %v1632, %v1684
  %1686 = vmatmul.f32.gmra.mxu0 %v37
  %v1687 = vpop.f32.mrf.mxu0
  %v1688 = vadd.f32 %v1635, %v1687
  %1689 = vmatmul.f32.gmra.mxu0 %v40
  %v1690 = vpop.f32.mrf.mxu0
  %v1691 = vadd.f32 %v1638, %v1690
  %1692 = vmatmul.f32.gmra.mxu0 %v43
  %v1693 = vpop.f32.mrf.mxu0
  %v1694 = vadd.f32 %v1641, %v1693
  %1695 = vmatmul.f32.gmra.mxu0 %v46
  %v1696 = vpop.f32.mrf.mxu0
  %v1697 = vadd.f32 %v1644, %v1696
  %1698 = vmatmul.f32.gmra.mxu0 %v49
  %v1699 = vpop.f32.mrf.mxu0
  %v1700 = vadd.f32 %v1647, %v1699
  %1701 = vdwg.mxu0
  %1702 = vmatpush.msra.mxu0 %v116
  %1703 = vmatpush.msra.mxu0 %v112
  %1704 = vmatpush.msra.mxu0 %v108
  %1705 = vmatpush.msra.mxu0 %v104
  %1706 = vmatpush.msra.mxu0 %v100
  %1707 = vmatpush.msra.mxu0 %v96
  %1708 = vmatpush.msra.mxu0 %v92
  %1709 = vmatpush.msra.mxu0 %v88
  %1710 = vmatpush.msra.mxu0 %v84
  %1711 = vmatpush.msra.mxu0 %v80
  %1712 = vmatpush.msra.mxu0 %v76
  %1713 = vmatpush.msra.mxu0 %v72
  %1714 = vmatpush.msra.mxu0 %v68
  %1715 = vmatpush.msra.mxu0 %v64
  %1716 = vmatpush.msra.mxu0 %v60
  %1717 = vmatpush.msra.mxu0 %v56
  %1718 = vmatmul.f32.gmra.mxu0 %v14
  %v1719 = vpop.f32.mrf.mxu0
  %v1720 = vadd.f32 %v1190, %v1719
  %1721 = vmatmul.f32.gmra.mxu0 %v17
  %v1722 = vpop.f32.mrf.mxu0
  %v1723 = vadd.f32 %v1193, %v1722
  %1724 = vmatmul.f32.gmra.mxu0 %v20
  %v1725 = vpop.f32.mrf.mxu0
  %v1726 = vadd.f32 %v1196, %v1725
  %1727 = vmatmul.f32.gmra.mxu0 %v23
  %v1728 = vpop.f32.mrf.mxu0
  %v1729 = vadd.f32 %v1199, %v1728
  %1730 = vmatmul.f32.gmra.mxu0 %v26
  %v1731 = vpop.f32.mrf.mxu0
  %v1732 = vadd.f32 %v1202, %v1731
  %1733 = vmatmul.f32.gmra.mxu0 %v29
  %v1734 = vpop.f32.mrf.mxu0
  %v1735 = vadd.f32 %v1205, %v1734
  %1736 = vmatmul.f32.gmra.mxu0 %v32
  %v1737 = vpop.f32.mrf.mxu0
  %v1738 = vadd.f32 %v1208, %v1737
  %1739 = vmatmul.f32.gmra.mxu0 %v35
  %v1740 = vpop.f32.mrf.mxu0
  %v1741 = vadd.f32 %v1211, %v1740
  %1742 = vmatmul.f32.gmra.mxu0 %v38
  %v1743 = vpop.f32.mrf.mxu0
  %v1744 = vadd.f32 %v1214, %v1743
  %1745 = vmatmul.f32.gmra.mxu0 %v41
  %v1746 = vpop.f32.mrf.mxu0
  %v1747 = vadd.f32 %v1217, %v1746
  %1748 = vmatmul.f32.gmra.mxu0 %v44
  %v1749 = vpop.f32.mrf.mxu0
  %v1750 = vadd.f32 %v1220, %v1749
  %1751 = vmatmul.f32.gmra.mxu0 %v47
  %v1752 = vpop.f32.mrf.mxu0
  %v1753 = vadd.f32 %v1223, %v1752
  %1754 = vdwg.mxu0
  %1755 = vmatpush.msra.mxu0 %v180
  %1756 = vmatpush.msra.mxu0 %v176
  %1757 = vmatpush.msra.mxu0 %v172
  %1758 = vmatpush.msra.mxu0 %v168
  %1759 = vmatpush.msra.mxu0 %v164
  %1760 = vmatpush.msra.mxu0 %v160
  %1761 = vmatpush.msra.mxu0 %v156
  %1762 = vmatpush.msra.mxu0 %v152
  %1763 = vmatpush.msra.mxu0 %v148
  %1764 = vmatpush.msra.mxu0 %v144
  %1765 = vmatpush.msra.mxu0 %v140
  %1766 = vmatpush.msra.mxu0 %v136
  %1767 = vmatpush.msra.mxu0 %v132
  %1768 = vmatpush.msra.mxu0 %v128
  %1769 = vmatpush.msra.mxu0 %v124
  %1770 = vmatpush.msra.mxu0 %v120
  %1771 = vmatmul.f32.gmra.mxu0 %v15
  %v1772 = vpop.f32.mrf.mxu0
  %v1773 = vadd.f32 %v1720, %v1772
  %1774 = vmatmul.f32.gmra.mxu0 %v18
  %v1775 = vpop.f32.mrf.mxu0
  %v1776 = vadd.f32 %v1723, %v1775
  %1777 = vmatmul.f32.gmra.mxu0 %v21
  %v1778 = vpop.f32.mrf.mxu0
  %v1779 = vadd.f32 %v1726, %v1778
  %1780 = vmatmul.f32.gmra.mxu0 %v24
  %v1781 = vpop.f32.mrf.mxu0
  %v1782 = vadd.f32 %v1729, %v1781
  %1783 = vmatmul.f32.gmra.mxu0 %v27
  %v1784 = vpop.f32.mrf.mxu0
  %v1785 = vadd.f32 %v1732, %v1784
  %1786 = vmatmul.f32.gmra.mxu0 %v30
  %v1787 = vpop.f32.mrf.mxu0
  %v1788 = vadd.f32 %v1735, %v1787
  %1789 = vmatmul.f32.gmra.mxu0 %v33
  %v1790 = vpop.f32.mrf.mxu0
  %v1791 = vadd.f32 %v1738, %v1790
  %1792 = vmatmul.f32.gmra.mxu0 %v36
  %v1793 = vpop.f32.mrf.mxu0
  %v1794 = vadd.f32 %v1741, %v1793
  %1795 = vmatmul.f32.gmra.mxu0 %v39
  %v1796 = vpop.f32.mrf.mxu0
  %v1797 = vadd.f32 %v1744, %v1796
  %1798 = vmatmul.f32.gmra.mxu0 %v42
  %v1799 = vpop.f32.mrf.mxu0
  %v1800 = vadd.f32 %v1747, %v1799
  %1801 = vmatmul.f32.gmra.mxu0 %v45
  %v1802 = vpop.f32.mrf.mxu0
  %v1803 = vadd.f32 %v1750, %v1802
  %1804 = vmatmul.f32.gmra.mxu0 %v48
  %v1805 = vpop.f32.mrf.mxu0
  %v1806 = vadd.f32 %v1753, %v1805
  %1807 = vdwg.mxu0
  %1808 = vmatpush.msra.mxu0 %v244
  %1809 = vmatpush.msra.mxu0 %v240
  %1810 = vmatpush.msra.mxu0 %v236
  %1811 = vmatpush.msra.mxu0 %v232
  %1812 = vmatpush.msra.mxu0 %v228
  %1813 = vmatpush.msra.mxu0 %v224
  %1814 = vmatpush.msra.mxu0 %v220
  %1815 = vmatpush.msra.mxu0 %v216
  %1816 = vmatpush.msra.mxu0 %v212
  %1817 = vmatpush.msra.mxu0 %v208
  %1818 = vmatpush.msra.mxu0 %v204
  %1819 = vmatpush.msra.mxu0 %v200
  %1820 = vmatpush.msra.mxu0 %v196
  %1821 = vmatpush.msra.mxu0 %v192
  %1822 = vmatpush.msra.mxu0 %v188
  %1823 = vmatpush.msra.mxu0 %v184
  %1824 = vmatmul.f32.gmra.mxu0 %v16
  %v1825 = vpop.f32.mrf.mxu0
  %v1826 = vadd.f32 %v1773, %v1825
  %1827 = vmatmul.f32.gmra.mxu0 %v19
  %v1828 = vpop.f32.mrf.mxu0
  %v1829 = vadd.f32 %v1776, %v1828
  %1830 = vmatmul.f32.gmra.mxu0 %v22
  %v1831 = vpop.f32.mrf.mxu0
  %v1832 = vadd.f32 %v1779, %v1831
  %1833 = vmatmul.f32.gmra.mxu0 %v25
  %v1834 = vpop.f32.mrf.mxu0
  %v1835 = vadd.f32 %v1782, %v1834
  %1836 = vmatmul.f32.gmra.mxu0 %v28
  %v1837 = vpop.f32.mrf.mxu0
  %v1838 = vadd.f32 %v1785, %v1837
  %1839 = vmatmul.f32.gmra.mxu0 %v31
  %v1840 = vpop.f32.mrf.mxu0
  %v1841 = vadd.f32 %v1788, %v1840
  %1842 = vmatmul.f32.gmra.mxu0 %v34
  %v1843 = vpop.f32.mrf.mxu0
  %v1844 = vadd.f32 %v1791, %v1843
  %1845 = vmatmul.f32.gmra.mxu0 %v37
  %v1846 = vpop.f32.mrf.mxu0
  %v1847 = vadd.f32 %v1794, %v1846
  %1848 = vmatmul.f32.gmra.mxu0 %v40
  %v1849 = vpop.f32.mrf.mxu0
  %v1850 = vadd.f32 %v1797, %v1849
  %1851 = vmatmul.f32.gmra.mxu0 %v43
  %v1852 = vpop.f32.mrf.mxu0
  %v1853 = vadd.f32 %v1800, %v1852
  %1854 = vmatmul.f32.gmra.mxu0 %v46
  %v1855 = vpop.f32.mrf.mxu0
  %v1856 = vadd.f32 %v1803, %v1855
  %1857 = vmatmul.f32.gmra.mxu0 %v49
  %v1858 = vpop.f32.mrf.mxu0
  %v1859 = vadd.f32 %v1806, %v1858
  %1860 = vdwg.mxu0
  %s1861 = scalar_lea.vmem %s1, 3072
  %v1862 = vld [vmem:[%s1861] sm:$0xff]
  %v1863 = vld [vmem:[%s1861 + $0x8] sm:$0xff]
  %v1864 = vld [vmem:[%s1861 + $0x10] sm:$0xff]
  %v1865 = vld [vmem:[%s1861 + $0x18] sm:$0xff]
  %v1866 = vld [vmem:[%s1861 + $0x20] sm:$0xff]
  %v1867 = vld [vmem:[%s1861 + $0x28] sm:$0xff]
  %v1868 = vld [vmem:[%s1861 + $0x30] sm:$0xff]
  %v1869 = vld [vmem:[%s1861 + $0x38] sm:$0xff]
  %v1870 = vld [vmem:[%s1861 + $0x40] sm:$0xff]
  %v1871 = vld [vmem:[%s1861 + $0x48] sm:$0xff]
  %v1872 = vld [vmem:[%s1861 + $0x50] sm:$0xff]
  %v1873 = vld [vmem:[%s1861 + $0x58] sm:$0xff]
  %v1874 = vld [vmem:[%s1861 + $0x60] sm:$0xff]
  %v1875 = vld [vmem:[%s1861 + $0x68] sm:$0xff]
  %v1876 = vld [vmem:[%s1861 + $0x70] sm:$0xff]
  %v1877 = vld [vmem:[%s1861 + $0x78] sm:$0xff]
  %v1878 = vld [vmem:[%s1861 + $0x80] sm:$0xff]
  %v1879 = vld [vmem:[%s1861 + $0x88] sm:$0xff]
  %v1880 = vld [vmem:[%s1861 + $0x90] sm:$0xff]
  %v1881 = vld [vmem:[%s1861 + $0x98] sm:$0xff]
  %v1882 = vld [vmem:[%s1861 + $0xa0] sm:$0xff]
  %v1883 = vld [vmem:[%s1861 + $0xa8] sm:$0xff]
  %v1884 = vld [vmem:[%s1861 + $0xb0] sm:$0xff]
  %v1885 = vld [vmem:[%s1861 + $0xb8] sm:$0xff]
  %v1886 = vld [vmem:[%s1861 + $0xc0] sm:$0xff]
  %v1887 = vld [vmem:[%s1861 + $0xc8] sm:$0xff]
  %v1888 = vld [vmem:[%s1861 + $0xd0] sm:$0xff]
  %v1889 = vld [vmem:[%s1861 + $0xd8] sm:$0xff]
  %v1890 = vld [vmem:[%s1861 + $0xe0] sm:$0xff]
  %v1891 = vld [vmem:[%s1861 + $0xe8] sm:$0xff]
  %v1892 = vld [vmem:[%s1861 + $0xf0] sm:$0xff]
  %v1893 = vld [vmem:[%s1861 + $0xf8] sm:$0xff]
  %v1894 = vld [vmem:[%s1861 + $0x100] sm:$0xff]
  %v1895 = vld [vmem:[%s1861 + $0x108] sm:$0xff]
  %v1896 = vld [vmem:[%s1861 + $0x110] sm:$0xff]
  %v1897 = vld [vmem:[%s1861 + $0x118] sm:$0xff]
  %v1898 = vld [vmem:[%s1861 + $0x120] sm:$0xff]
  %v1899 = vld [vmem:[%s1861 + $0x128] sm:$0xff]
  %v1900 = vld [vmem:[%s1861 + $0x130] sm:$0xff]
  %v1901 = vld [vmem:[%s1861 + $0x138] sm:$0xff]
  %v1902 = vld [vmem:[%s1861 + $0x140] sm:$0xff]
  %v1903 = vld [vmem:[%s1861 + $0x148] sm:$0xff]
  %v1904 = vld [vmem:[%s1861 + $0x150] sm:$0xff]
  %v1905 = vld [vmem:[%s1861 + $0x158] sm:$0xff]
  %v1906 = vld [vmem:[%s1861 + $0x160] sm:$0xff]
  %v1907 = vld [vmem:[%s1861 + $0x168] sm:$0xff]
  %v1908 = vld [vmem:[%s1861 + $0x170] sm:$0xff]
  %v1909 = vld [vmem:[%s1861 + $0x178] sm:$0xff]
  %v1910 = vld [vmem:[%s1861 + $0x180] sm:$0xff]
  %v1911 = vld [vmem:[%s1861 + $0x188] sm:$0xff]
  %v1912 = vld [vmem:[%s1861 + $0x190] sm:$0xff]
  %v1913 = vld [vmem:[%s1861 + $0x198] sm:$0xff]
  %v1914 = vld [vmem:[%s1861 + $0x1a0] sm:$0xff]
  %v1915 = vld [vmem:[%s1861 + $0x1a8] sm:$0xff]
  %v1916 = vld [vmem:[%s1861 + $0x1b0] sm:$0xff]
  %v1917 = vld [vmem:[%s1861 + $0x1b8] sm:$0xff]
  %v1918 = vld [vmem:[%s1861 + $0x1c0] sm:$0xff]
  %v1919 = vld [vmem:[%s1861 + $0x1c8] sm:$0xff]
  %v1920 = vld [vmem:[%s1861 + $0x1d0] sm:$0xff]
  %v1921 = vld [vmem:[%s1861 + $0x1d8] sm:$0xff]
  %v1922 = vld [vmem:[%s1861 + $0x1e0] sm:$0xff]
  %v1923 = vld [vmem:[%s1861 + $0x1e8] sm:$0xff]
  %v1924 = vld [vmem:[%s1861 + $0x1f0] sm:$0xff]
  %v1925 = vld [vmem:[%s1861 + $0x1f8] sm:$0xff]
  %v1926 = vld [vmem:[%s1861 + $0x200] sm:$0xff]
  %v1927 = vld [vmem:[%s1861 + $0x208] sm:$0xff]
  %v1928 = vld [vmem:[%s1861 + $0x210] sm:$0xff]
  %v1929 = vld [vmem:[%s1861 + $0x218] sm:$0xff]
  %v1930 = vld [vmem:[%s1861 + $0x220] sm:$0xff]
  %v1931 = vld [vmem:[%s1861 + $0x228] sm:$0xff]
  %v1932 = vld [vmem:[%s1861 + $0x230] sm:$0xff]
  %v1933 = vld [vmem:[%s1861 + $0x238] sm:$0xff]
  %v1934 = vld [vmem:[%s1861 + $0x240] sm:$0xff]
  %v1935 = vld [vmem:[%s1861 + $0x248] sm:$0xff]
  %v1936 = vld [vmem:[%s1861 + $0x250] sm:$0xff]
  %v1937 = vld [vmem:[%s1861 + $0x258] sm:$0xff]
  %v1938 = vld [vmem:[%s1861 + $0x260] sm:$0xff]
  %v1939 = vld [vmem:[%s1861 + $0x268] sm:$0xff]
  %v1940 = vld [vmem:[%s1861 + $0x270] sm:$0xff]
  %v1941 = vld [vmem:[%s1861 + $0x278] sm:$0xff]
  %v1942 = vld [vmem:[%s1861 + $0x280] sm:$0xff]
  %v1943 = vld [vmem:[%s1861 + $0x288] sm:$0xff]
  %v1944 = vld [vmem:[%s1861 + $0x290] sm:$0xff]
  %v1945 = vld [vmem:[%s1861 + $0x298] sm:$0xff]
  %v1946 = vld [vmem:[%s1861 + $0x2a0] sm:$0xff]
  %v1947 = vld [vmem:[%s1861 + $0x2a8] sm:$0xff]
  %v1948 = vld [vmem:[%s1861 + $0x2b0] sm:$0xff]
  %v1949 = vld [vmem:[%s1861 + $0x2b8] sm:$0xff]
  %v1950 = vld [vmem:[%s1861 + $0x2c0] sm:$0xff]
  %v1951 = vld [vmem:[%s1861 + $0x2c8] sm:$0xff]
  %v1952 = vld [vmem:[%s1861 + $0x2d0] sm:$0xff]
  %v1953 = vld [vmem:[%s1861 + $0x2d8] sm:$0xff]
  %v1954 = vld [vmem:[%s1861 + $0x2e0] sm:$0xff]
  %v1955 = vld [vmem:[%s1861 + $0x2e8] sm:$0xff]
  %v1956 = vld [vmem:[%s1861 + $0x2f0] sm:$0xff]
  %v1957 = vld [vmem:[%s1861 + $0x2f8] sm:$0xff]
  %v1958 = vld [vmem:[%s1861 + $0x300] sm:$0xff]
  %v1959 = vld [vmem:[%s1861 + $0x308] sm:$0xff]
  %v1960 = vld [vmem:[%s1861 + $0x310] sm:$0xff]
  %v1961 = vld [vmem:[%s1861 + $0x318] sm:$0xff]
  %v1962 = vld [vmem:[%s1861 + $0x320] sm:$0xff]
  %v1963 = vld [vmem:[%s1861 + $0x328] sm:$0xff]
  %v1964 = vld [vmem:[%s1861 + $0x330] sm:$0xff]
  %v1965 = vld [vmem:[%s1861 + $0x338] sm:$0xff]
  %v1966 = vld [vmem:[%s1861 + $0x340] sm:$0xff]
  %v1967 = vld [vmem:[%s1861 + $0x348] sm:$0xff]
  %v1968 = vld [vmem:[%s1861 + $0x350] sm:$0xff]
  %v1969 = vld [vmem:[%s1861 + $0x358] sm:$0xff]
  %v1970 = vld [vmem:[%s1861 + $0x360] sm:$0xff]
  %v1971 = vld [vmem:[%s1861 + $0x368] sm:$0xff]
  %v1972 = vld [vmem:[%s1861 + $0x370] sm:$0xff]
  %v1973 = vld [vmem:[%s1861 + $0x378] sm:$0xff]
  %v1974 = vld [vmem:[%s1861 + $0x380] sm:$0xff]
  %v1975 = vld [vmem:[%s1861 + $0x388] sm:$0xff]
  %v1976 = vld [vmem:[%s1861 + $0x390] sm:$0xff]
  %v1977 = vld [vmem:[%s1861 + $0x398] sm:$0xff]
  %v1978 = vld [vmem:[%s1861 + $0x3a0] sm:$0xff]
  %v1979 = vld [vmem:[%s1861 + $0x3a8] sm:$0xff]
  %v1980 = vld [vmem:[%s1861 + $0x3b0] sm:$0xff]
  %v1981 = vld [vmem:[%s1861 + $0x3b8] sm:$0xff]
  %v1982 = vld [vmem:[%s1861 + $0x3c0] sm:$0xff]
  %v1983 = vld [vmem:[%s1861 + $0x3c8] sm:$0xff]
  %v1984 = vld [vmem:[%s1861 + $0x3d0] sm:$0xff]
  %v1985 = vld [vmem:[%s1861 + $0x3d8] sm:$0xff]
  %v1986 = vld [vmem:[%s1861 + $0x3e0] sm:$0xff]
  %v1987 = vld [vmem:[%s1861 + $0x3e8] sm:$0xff]
  %v1988 = vld [vmem:[%s1861 + $0x3f0] sm:$0xff]
  %v1989 = vld [vmem:[%s1861 + $0x3f8] sm:$0xff]
  %v1990 = vld [vmem:[%s1861 + $0x400] sm:$0xff]
  %v1991 = vld [vmem:[%s1861 + $0x408] sm:$0xff]
  %v1992 = vld [vmem:[%s1861 + $0x410] sm:$0xff]
  %v1993 = vld [vmem:[%s1861 + $0x418] sm:$0xff]
  %v1994 = vld [vmem:[%s1861 + $0x420] sm:$0xff]
  %v1995 = vld [vmem:[%s1861 + $0x428] sm:$0xff]
  %v1996 = vld [vmem:[%s1861 + $0x430] sm:$0xff]
  %v1997 = vld [vmem:[%s1861 + $0x438] sm:$0xff]
  %v1998 = vld [vmem:[%s1861 + $0x440] sm:$0xff]
  %v1999 = vld [vmem:[%s1861 + $0x448] sm:$0xff]
  %v2000 = vld [vmem:[%s1861 + $0x450] sm:$0xff]
  %v2001 = vld [vmem:[%s1861 + $0x458] sm:$0xff]
  %v2002 = vld [vmem:[%s1861 + $0x460] sm:$0xff]
  %v2003 = vld [vmem:[%s1861 + $0x468] sm:$0xff]
  %v2004 = vld [vmem:[%s1861 + $0x470] sm:$0xff]
  %v2005 = vld [vmem:[%s1861 + $0x478] sm:$0xff]
  %v2006 = vld [vmem:[%s1861 + $0x480] sm:$0xff]
  %v2007 = vld [vmem:[%s1861 + $0x488] sm:$0xff]
  %v2008 = vld [vmem:[%s1861 + $0x490] sm:$0xff]
  %v2009 = vld [vmem:[%s1861 + $0x498] sm:$0xff]
  %v2010 = vld [vmem:[%s1861 + $0x4a0] sm:$0xff]
  %v2011 = vld [vmem:[%s1861 + $0x4a8] sm:$0xff]
  %v2012 = vld [vmem:[%s1861 + $0x4b0] sm:$0xff]
  %v2013 = vld [vmem:[%s1861 + $0x4b8] sm:$0xff]
  %v2014 = vld [vmem:[%s1861 + $0x4c0] sm:$0xff]
  %v2015 = vld [vmem:[%s1861 + $0x4c8] sm:$0xff]
  %v2016 = vld [vmem:[%s1861 + $0x4d0] sm:$0xff]
  %v2017 = vld [vmem:[%s1861 + $0x4d8] sm:$0xff]
  %v2018 = vld [vmem:[%s1861 + $0x4e0] sm:$0xff]
  %v2019 = vld [vmem:[%s1861 + $0x4e8] sm:$0xff]
  %v2020 = vld [vmem:[%s1861 + $0x4f0] sm:$0xff]
  %v2021 = vld [vmem:[%s1861 + $0x4f8] sm:$0xff]
  %v2022 = vld [vmem:[%s1861 + $0x500] sm:$0xff]
  %v2023 = vld [vmem:[%s1861 + $0x508] sm:$0xff]
  %v2024 = vld [vmem:[%s1861 + $0x510] sm:$0xff]
  %v2025 = vld [vmem:[%s1861 + $0x518] sm:$0xff]
  %v2026 = vld [vmem:[%s1861 + $0x520] sm:$0xff]
  %v2027 = vld [vmem:[%s1861 + $0x528] sm:$0xff]
  %v2028 = vld [vmem:[%s1861 + $0x530] sm:$0xff]
  %v2029 = vld [vmem:[%s1861 + $0x538] sm:$0xff]
  %v2030 = vld [vmem:[%s1861 + $0x540] sm:$0xff]
  %v2031 = vld [vmem:[%s1861 + $0x548] sm:$0xff]
  %v2032 = vld [vmem:[%s1861 + $0x550] sm:$0xff]
  %v2033 = vld [vmem:[%s1861 + $0x558] sm:$0xff]
  %v2034 = vld [vmem:[%s1861 + $0x560] sm:$0xff]
  %v2035 = vld [vmem:[%s1861 + $0x568] sm:$0xff]
  %v2036 = vld [vmem:[%s1861 + $0x570] sm:$0xff]
  %v2037 = vld [vmem:[%s1861 + $0x578] sm:$0xff]
  %v2038 = vld [vmem:[%s1861 + $0x580] sm:$0xff]
  %v2039 = vld [vmem:[%s1861 + $0x588] sm:$0xff]
  %v2040 = vld [vmem:[%s1861 + $0x590] sm:$0xff]
  %v2041 = vld [vmem:[%s1861 + $0x598] sm:$0xff]
  %v2042 = vld [vmem:[%s1861 + $0x5a0] sm:$0xff]
  %v2043 = vld [vmem:[%s1861 + $0x5a8] sm:$0xff]
  %v2044 = vld [vmem:[%s1861 + $0x5b0] sm:$0xff]
  %v2045 = vld [vmem:[%s1861 + $0x5b8] sm:$0xff]
  %v2046 = vld [vmem:[%s1861 + $0x5c0] sm:$0xff]
  %v2047 = vld [vmem:[%s1861 + $0x5c8] sm:$0xff]
  %v2048 = vld [vmem:[%s1861 + $0x5d0] sm:$0xff]
  %v2049 = vld [vmem:[%s1861 + $0x5d8] sm:$0xff]
  %v2050 = vld [vmem:[%s1861 + $0x5e0] sm:$0xff]
  %v2051 = vld [vmem:[%s1861 + $0x5e8] sm:$0xff]
  %v2052 = vld [vmem:[%s1861 + $0x5f0] sm:$0xff]
  %v2053 = vld [vmem:[%s1861 + $0x5f8] sm:$0xff]
  %vm2054 = vcmask 1045504
  %v2055 = vrot.slane %v14, 2
  %v2056 = vrot.slane %v17, 2
  %v2057 = vsel %vm2054, %v2055, %v2056
  %v2058 = vrot.slane %v15, 2
  %v2059 = vrot.slane %v18, 2
  %v2060 = vsel %vm2054, %v2058, %v2059
  %v2061 = vrot.slane %v16, 2
  %v2062 = vrot.slane %v19, 2
  %v2063 = vsel %vm2054, %v2061, %v2062
  %v2064 = vrot.slane %v20, 2
  %v2065 = vsel %vm2054, %v2056, %v2064
  %v2066 = vrot.slane %v21, 2
  %v2067 = vsel %vm2054, %v2059, %v2066
  %v2068 = vrot.slane %v22, 2
  %v2069 = vsel %vm2054, %v2062, %v2068
  %v2070 = vrot.slane %v23, 2
  %v2071 = vsel %vm2054, %v2064, %v2070
  %v2072 = vrot.slane %v24, 2
  %v2073 = vsel %vm2054, %v2066, %v2072
  %v2074 = vrot.slane %v25, 2
  %v2075 = vsel %vm2054, %v2068, %v2074
  %v2076 = vrot.slane %v26, 2
  %v2077 = vsel %vm2054, %v2070, %v2076
  %v2078 = vrot.slane %v27, 2
  %v2079 = vsel %vm2054, %v2072, %v2078
  %v2080 = vrot.slane %v28, 2
  %v2081 = vsel %vm2054, %v2074, %v2080
  %v2082 = vrot.slane %v29, 2
  %v2083 = vsel %vm2054, %v2076, %v2082
  %v2084 = vrot.slane %v30, 2
  %v2085 = vsel %vm2054, %v2078, %v2084
  %v2086 = vrot.slane %v31, 2
  %v2087 = vsel %vm2054, %v2080, %v2086
  %v2088 = vrot.slane %v32, 2
  %v2089 = vsel %vm2054, %v2082, %v2088
  %v2090 = vrot.slane %v33, 2
  %v2091 = vsel %vm2054, %v2084, %v2090
  %v2092 = vrot.slane %v34, 2
  %v2093 = vsel %vm2054, %v2086, %v2092
  %v2094 = vrot.slane %v35, 2
  %v2095 = vsel %vm2054, %v2088, %v2094
  %v2096 = vrot.slane %v36, 2
  %v2097 = vsel %vm2054, %v2090, %v2096
  %v2098 = vrot.slane %v37, 2
  %v2099 = vsel %vm2054, %v2092, %v2098
  %v2100 = vrot.slane %v38, 2
  %v2101 = vsel %vm2054, %v2094, %v2100
  %v2102 = vrot.slane %v39, 2
  %v2103 = vsel %vm2054, %v2096, %v2102
  %v2104 = vrot.slane %v40, 2
  %v2105 = vsel %vm2054, %v2098, %v2104
  %v2106 = vrot.slane %v41, 2
  %v2107 = vsel %vm2054, %v2100, %v2106
  %v2108 = vrot.slane %v42, 2
  %v2109 = vsel %vm2054, %v2102, %v2108
  %v2110 = vrot.slane %v43, 2
  %v2111 = vsel %vm2054, %v2104, %v2110
  %v2112 = vrot.slane %v44, 2
  %v2113 = vsel %vm2054, %v2106, %v2112
  %v2114 = vrot.slane %v45, 2
  %v2115 = vsel %vm2054, %v2108, %v2114
  %v2116 = vrot.slane %v46, 2
  %v2117 = vsel %vm2054, %v2110, %v2116
  %v2118 = vrot.slane %v47, 2
  %v2119 = vsel %vm2054, %v2112, %v2118
  %v2120 = vrot.slane %v48, 2
  %v2121 = vsel %vm2054, %v2114, %v2120
  %v2122 = vrot.slane %v49, 2
  %v2123 = vsel %vm2054, %v2116, %v2122
  %v2124 = vrot.slane %v50, 2
  %v2125 = vsel %vm2054, %v2118, %v2124
  %v2126 = vrot.slane %v51, 2
  %v2127 = vsel %vm2054, %v2120, %v2126
  %v2128 = vrot.slane %v52, 2
  %v2129 = vsel %vm2054, %v2122, %v2128
  %2166 = vmatpush.msra.mxu0 %v1922
  %2167 = vmatpush.msra.mxu0 %v1918
  %2168 = vmatpush.msra.mxu0 %v1914
  %2169 = vmatpush.msra.mxu0 %v1910
  %2170 = vmatpush.msra.mxu0 %v1906
  %2171 = vmatpush.msra.mxu0 %v1902
  %2172 = vmatpush.msra.mxu0 %v1898
  %2173 = vmatpush.msra.mxu0 %v1894
  %2174 = vmatpush.msra.mxu0 %v1890
  %2175 = vmatpush.msra.mxu0 %v1886
  %2176 = vmatpush.msra.mxu0 %v1882
  %2177 = vmatpush.msra.mxu0 %v1878
  %2178 = vmatpush.msra.mxu0 %v1874
  %2179 = vmatpush.msra.mxu0 %v1870
  %2180 = vmatpush.msra.mxu0 %v1866
  %2181 = vmatpush.msra.mxu0 %v1862
  %2182 = vmatmul.f32.gmra.mxu0 %v2057
  %v2183 = vpop.f32.mrf.mxu0
  %v2184 = vadd.f32 0.0, %v2183
  %2185 = vmatmul.f32.gmra.mxu0 %v2065
  %v2186 = vpop.f32.mrf.mxu0
  %v2187 = vadd.f32 0.0, %v2186
  %2188 = vmatmul.f32.gmra.mxu0 %v2071
  %v2189 = vpop.f32.mrf.mxu0
  %v2190 = vadd.f32 0.0, %v2189
  %2191 = vmatmul.f32.gmra.mxu0 %v2077
  %v2192 = vpop.f32.mrf.mxu0
  %v2193 = vadd.f32 0.0, %v2192
  %2194 = vmatmul.f32.gmra.mxu0 %v2083
  %v2195 = vpop.f32.mrf.mxu0
  %v2196 = vadd.f32 0.0, %v2195
  %2197 = vmatmul.f32.gmra.mxu0 %v2089
  %v2198 = vpop.f32.mrf.mxu0
  %v2199 = vadd.f32 0.0, %v2198
  %2200 = vmatmul.f32.gmra.mxu0 %v2095
  %v2201 = vpop.f32.mrf.mxu0
  %v2202 = vadd.f32 0.0, %v2201
  %2203 = vmatmul.f32.gmra.mxu0 %v2101
  %v2204 = vpop.f32.mrf.mxu0
  %v2205 = vadd.f32 0.0, %v2204
  %2206 = vmatmul.f32.gmra.mxu0 %v2107
  %v2207 = vpop.f32.mrf.mxu0
  %v2208 = vadd.f32 0.0, %v2207
  %2209 = vmatmul.f32.gmra.mxu0 %v2113
  %v2210 = vpop.f32.mrf.mxu0
  %v2211 = vadd.f32 0.0, %v2210
  %2212 = vmatmul.f32.gmra.mxu0 %v2119
  %v2213 = vpop.f32.mrf.mxu0
  %v2214 = vadd.f32 0.0, %v2213
  %2215 = vmatmul.f32.gmra.mxu0 %v2125
  %v2216 = vpop.f32.mrf.mxu0
  %v2217 = vadd.f32 0.0, %v2216
  %2218 = vdwg.mxu0
  %2219 = vmatpush.msra.mxu0 %v1986
  %2220 = vmatpush.msra.mxu0 %v1982
  %2221 = vmatpush.msra.mxu0 %v1978
  %2222 = vmatpush.msra.mxu0 %v1974
  %2223 = vmatpush.msra.mxu0 %v1970
  %2224 = vmatpush.msra.mxu0 %v1966
  %2225 = vmatpush.msra.mxu0 %v1962
  %2226 = vmatpush.msra.mxu0 %v1958
  %2227 = vmatpush.msra.mxu0 %v1954
  %2228 = vmatpush.msra.mxu0 %v1950
  %2229 = vmatpush.msra.mxu0 %v1946
  %2230 = vmatpush.msra.mxu0 %v1942
  %2231 = vmatpush.msra.mxu0 %v1938
  %2232 = vmatpush.msra.mxu0 %v1934
  %2233 = vmatpush.msra.mxu0 %v1930
  %2234 = vmatpush.msra.mxu0 %v1926
  %2235 = vmatmul.f32.gmra.mxu0 %v2060
  %v2236 = vpop.f32.mrf.mxu0
  %v2237 = vadd.f32 %v2184, %v2236
  %2238 = vmatmul.f32.gmra.mxu0 %v2067
  %v2239 = vpop.f32.mrf.mxu0
  %v2240 = vadd.f32 %v2187, %v2239
  %2241 = vmatmul.f32.gmra.mxu0 %v2073
  %v2242 = vpop.f32.mrf.mxu0
  %v2243 = vadd.f32 %v2190, %v2242
  %2244 = vmatmul.f32.gmra.mxu0 %v2079
  %v2245 = vpop.f32.mrf.mxu0
  %v2246 = vadd.f32 %v2193, %v2245
  %2247 = vmatmul.f32.gmra.mxu0 %v2085
  %v2248 = vpop.f32.mrf.mxu0
  %v2249 = vadd.f32 %v2196, %v2248
  %2250 = vmatmul.f32.gmra.mxu0 %v2091
  %v2251 = vpop.f32.mrf.mxu0
  %v2252 = vadd.f32 %v2199, %v2251
  %2253 = vmatmul.f32.gmra.mxu0 %v2097
  %v2254 = vpop.f32.mrf.mxu0
  %v2255 = vadd.f32 %v2202, %v2254
  %2256 = vmatmul.f32.gmra.mxu0 %v2103
  %v2257 = vpop.f32.mrf.mxu0
  %v2258 = vadd.f32 %v2205, %v2257
  %2259 = vmatmul.f32.gmra.mxu0 %v2109
  %v2260 = vpop.f32.mrf.mxu0
  %v2261 = vadd.f32 %v2208, %v2260
  %2262 = vmatmul.f32.gmra.mxu0 %v2115
  %v2263 = vpop.f32.mrf.mxu0
  %v2264 = vadd.f32 %v2211, %v2263
  %2265 = vmatmul.f32.gmra.mxu0 %v2121
  %v2266 = vpop.f32.mrf.mxu0
  %v2267 = vadd.f32 %v2214, %v2266
  %2268 = vmatmul.f32.gmra.mxu0 %v2127
  %v2269 = vpop.f32.mrf.mxu0
  %v2270 = vadd.f32 %v2217, %v2269
  %2271 = vdwg.mxu0
  %2272 = vmatpush.msra.mxu0 %v2050
  %2273 = vmatpush.msra.mxu0 %v2046
  %2274 = vmatpush.msra.mxu0 %v2042
  %2275 = vmatpush.msra.mxu0 %v2038
  %2276 = vmatpush.msra.mxu0 %v2034
  %2277 = vmatpush.msra.mxu0 %v2030
  %2278 = vmatpush.msra.mxu0 %v2026
  %2279 = vmatpush.msra.mxu0 %v2022
  %2280 = vmatpush.msra.mxu0 %v2018
  %2281 = vmatpush.msra.mxu0 %v2014
  %2282 = vmatpush.msra.mxu0 %v2010
  %2283 = vmatpush.msra.mxu0 %v2006
  %2284 = vmatpush.msra.mxu0 %v2002
  %2285 = vmatpush.msra.mxu0 %v1998
  %2286 = vmatpush.msra.mxu0 %v1994
  %2287 = vmatpush.msra.mxu0 %v1990
  %2288 = vmatmul.f32.gmra.mxu0 %v2063
  %v2289 = vpop.f32.mrf.mxu0
  %v2290 = vadd.f32 %v2237, %v2289
  %2291 = vmatmul.f32.gmra.mxu0 %v2069
  %v2292 = vpop.f32.mrf.mxu0
  %v2293 = vadd.f32 %v2240, %v2292
  %2294 = vmatmul.f32.gmra.mxu0 %v2075
  %v2295 = vpop.f32.mrf.mxu0
  %v2296 = vadd.f32 %v2243, %v2295
  %2297 = vmatmul.f32.gmra.mxu0 %v2081
  %v2298 = vpop.f32.mrf.mxu0
  %v2299 = vadd.f32 %v2246, %v2298
  %2300 = vmatmul.f32.gmra.mxu0 %v2087
  %v2301 = vpop.f32.mrf.mxu0
  %v2302 = vadd.f32 %v2249, %v2301
  %2303 = vmatmul.f32.gmra.mxu0 %v2093
  %v2304 = vpop.f32.mrf.mxu0
  %v2305 = vadd.f32 %v2252, %v2304
  %2306 = vmatmul.f32.gmra.mxu0 %v2099
  %v2307 = vpop.f32.mrf.mxu0
  %v2308 = vadd.f32 %v2255, %v2307
  %2309 = vmatmul.f32.gmra.mxu0 %v2105
  %v2310 = vpop.f32.mrf.mxu0
  %v2311 = vadd.f32 %v2258, %v2310
  %2312 = vmatmul.f32.gmra.mxu0 %v2111
  %v2313 = vpop.f32.mrf.mxu0
  %v2314 = vadd.f32 %v2261, %v2313
  %2315 = vmatmul.f32.gmra.mxu0 %v2117
  %v2316 = vpop.f32.mrf.mxu0
  %v2317 = vadd.f32 %v2264, %v2316
  %2318 = vmatmul.f32.gmra.mxu0 %v2123
  %v2319 = vpop.f32.mrf.mxu0
  %v2320 = vadd.f32 %v2267, %v2319
  %2321 = vmatmul.f32.gmra.mxu0 %v2129
  %v2322 = vpop.f32.mrf.mxu0
  %v2323 = vadd.f32 %v2270, %v2322
  %2324 = vdwg.mxu0
  %2325 = vmatpush.msra.mxu0 %v1923
  %2326 = vmatpush.msra.mxu0 %v1919
  %2327 = vmatpush.msra.mxu0 %v1915
  %2328 = vmatpush.msra.mxu0 %v1911
  %2329 = vmatpush.msra.mxu0 %v1907
  %2330 = vmatpush.msra.mxu0 %v1903
  %2331 = vmatpush.msra.mxu0 %v1899
  %2332 = vmatpush.msra.mxu0 %v1895
  %2333 = vmatpush.msra.mxu0 %v1891
  %2334 = vmatpush.msra.mxu0 %v1887
  %2335 = vmatpush.msra.mxu0 %v1883
  %2336 = vmatpush.msra.mxu0 %v1879
  %2337 = vmatpush.msra.mxu0 %v1875
  %2338 = vmatpush.msra.mxu0 %v1871
  %2339 = vmatpush.msra.mxu0 %v1867
  %2340 = vmatpush.msra.mxu0 %v1863
  %2341 = vmatmul.f32.gmra.mxu0 %v2057
  %v2342 = vpop.f32.mrf.mxu0
  %v2343 = vadd.f32 0.0, %v2342
  %2344 = vmatmul.f32.gmra.mxu0 %v2065
  %v2345 = vpop.f32.mrf.mxu0
  %v2346 = vadd.f32 0.0, %v2345
  %2347 = vmatmul.f32.gmra.mxu0 %v2071
  %v2348 = vpop.f32.mrf.mxu0
  %v2349 = vadd.f32 0.0, %v2348
  %2350 = vmatmul.f32.gmra.mxu0 %v2077
  %v2351 = vpop.f32.mrf.mxu0
  %v2352 = vadd.f32 0.0, %v2351
  %2353 = vmatmul.f32.gmra.mxu0 %v2083
  %v2354 = vpop.f32.mrf.mxu0
  %v2355 = vadd.f32 0.0, %v2354
  %2356 = vmatmul.f32.gmra.mxu0 %v2089
  %v2357 = vpop.f32.mrf.mxu0
  %v2358 = vadd.f32 0.0, %v2357
  %2359 = vmatmul.f32.gmra.mxu0 %v2095
  %v2360 = vpop.f32.mrf.mxu0
  %v2361 = vadd.f32 0.0, %v2360
  %2362 = vmatmul.f32.gmra.mxu0 %v2101
  %v2363 = vpop.f32.mrf.mxu0
  %v2364 = vadd.f32 0.0, %v2363
  %2365 = vmatmul.f32.gmra.mxu0 %v2107
  %v2366 = vpop.f32.mrf.mxu0
  %v2367 = vadd.f32 0.0, %v2366
  %2368 = vmatmul.f32.gmra.mxu0 %v2113
  %v2369 = vpop.f32.mrf.mxu0
  %v2370 = vadd.f32 0.0, %v2369
  %2371 = vmatmul.f32.gmra.mxu0 %v2119
  %v2372 = vpop.f32.mrf.mxu0
  %v2373 = vadd.f32 0.0, %v2372
  %2374 = vmatmul.f32.gmra.mxu0 %v2125
  %v2375 = vpop.f32.mrf.mxu0
  %v2376 = vadd.f32 0.0, %v2375
  %2377 = vdwg.mxu0
  %2378 = vmatpush.msra.mxu0 %v1987
  %2379 = vmatpush.msra.mxu0 %v1983
  %2380 = vmatpush.msra.mxu0 %v1979
  %2381 = vmatpush.msra.mxu0 %v1975
  %2382 = vmatpush.msra.mxu0 %v1971
  %2383 = vmatpush.msra.mxu0 %v1967
  %2384 = vmatpush.msra.mxu0 %v1963
  %2385 = vmatpush.msra.mxu0 %v1959
  %2386 = vmatpush.msra.mxu0 %v1955
  %2387 = vmatpush.msra.mxu0 %v1951
  %2388 = vmatpush.msra.mxu0 %v1947
  %2389 = vmatpush.msra.mxu0 %v1943
  %2390 = vmatpush.msra.mxu0 %v1939
  %2391 = vmatpush.msra.mxu0 %v1935
  %2392 = vmatpush.msra.mxu0 %v1931
  %2393 = vmatpush.msra.mxu0 %v1927
  %2394 = vmatmul.f32.gmra.mxu0 %v2060
  %v2395 = vpop.f32.mrf.mxu0
  %v2396 = vadd.f32 %v2343, %v2395
  %2397 = vmatmul.f32.gmra.mxu0 %v2067
  %v2398 = vpop.f32.mrf.mxu0
  %v2399 = vadd.f32 %v2346, %v2398
  %2400 = vmatmul.f32.gmra.mxu0 %v2073
  %v2401 = vpop.f32.mrf.mxu0
  %v2402 = vadd.f32 %v2349, %v2401
  %2403 = vmatmul.f32.gmra.mxu0 %v2079
  %v2404 = vpop.f32.mrf.mxu0
  %v2405 = vadd.f32 %v2352, %v2404
  %2406 = vmatmul.f32.gmra.mxu0 %v2085
  %v2407 = vpop.f32.mrf.mxu0
  %v2408 = vadd.f32 %v2355, %v2407
  %2409 = vmatmul.f32.gmra.mxu0 %v2091
  %v2410 = vpop.f32.mrf.mxu0
  %v2411 = vadd.f32 %v2358, %v2410
  %2412 = vmatmul.f32.gmra.mxu0 %v2097
  %v2413 = vpop.f32.mrf.mxu0
  %v2414 = vadd.f32 %v2361, %v2413
  %2415 = vmatmul.f32.gmra.mxu0 %v2103
  %v2416 = vpop.f32.mrf.mxu0
  %v2417 = vadd.f32 %v2364, %v2416
  %2418 = vmatmul.f32.gmra.mxu0 %v2109
  %v2419 = vpop.f32.mrf.mxu0
  %v2420 = vadd.f32 %v2367, %v2419
  %2421 = vmatmul.f32.gmra.mxu0 %v2115
  %v2422 = vpop.f32.mrf.mxu0
  %v2423 = vadd.f32 %v2370, %v2422
  %2424 = vmatmul.f32.gmra.mxu0 %v2121
  %v2425 = vpop.f32.mrf.mxu0
  %v2426 = vadd.f32 %v2373, %v2425
  %2427 = vmatmul.f32.gmra.mxu0 %v2127
  %v2428 = vpop.f32.mrf.mxu0
  %v2429 = vadd.f32 %v2376, %v2428
  %2430 = vdwg.mxu0
  %2431 = vmatpush.msra.mxu0 %v2051
  %2432 = vmatpush.msra.mxu0 %v2047
  %2433 = vmatpush.msra.mxu0 %v2043
  %2434 = vmatpush.msra.mxu0 %v2039
  %2435 = vmatpush.msra.mxu0 %v2035
  %2436 = vmatpush.msra.mxu0 %v2031
  %2437 = vmatpush.msra.mxu0 %v2027
  %2438 = vmatpush.msra.mxu0 %v2023
  %2439 = vmatpush.msra.mxu0 %v2019
  %2440 = vmatpush.msra.mxu0 %v2015
  %2441 = vmatpush.msra.mxu0 %v2011
  %2442 = vmatpush.msra.mxu0 %v2007
  %2443 = vmatpush.msra.mxu0 %v2003
  %2444 = vmatpush.msra.mxu0 %v1999
  %2445 = vmatpush.msra.mxu0 %v1995
  %2446 = vmatpush.msra.mxu0 %v1991
  %2447 = vmatmul.f32.gmra.mxu0 %v2063
  %v2448 = vpop.f32.mrf.mxu0
  %v2449 = vadd.f32 %v2396, %v2448
  %2450 = vmatmul.f32.gmra.mxu0 %v2069
  %v2451 = vpop.f32.mrf.mxu0
  %v2452 = vadd.f32 %v2399, %v2451
  %2453 = vmatmul.f32.gmra.mxu0 %v2075
  %v2454 = vpop.f32.mrf.mxu0
  %v2455 = vadd.f32 %v2402, %v2454
  %2456 = vmatmul.f32.gmra.mxu0 %v2081
  %v2457 = vpop.f32.mrf.mxu0
  %v2458 = vadd.f32 %v2405, %v2457
  %2459 = vmatmul.f32.gmra.mxu0 %v2087
  %v2460 = vpop.f32.mrf.mxu0
  %v2461 = vadd.f32 %v2408, %v2460
  %2462 = vmatmul.f32.gmra.mxu0 %v2093
  %v2463 = vpop.f32.mrf.mxu0
  %v2464 = vadd.f32 %v2411, %v2463
  %2465 = vmatmul.f32.gmra.mxu0 %v2099
  %v2466 = vpop.f32.mrf.mxu0
  %v2467 = vadd.f32 %v2414, %v2466
  %2468 = vmatmul.f32.gmra.mxu0 %v2105
  %v2469 = vpop.f32.mrf.mxu0
  %v2470 = vadd.f32 %v2417, %v2469
  %2471 = vmatmul.f32.gmra.mxu0 %v2111
  %v2472 = vpop.f32.mrf.mxu0
  %v2473 = vadd.f32 %v2420, %v2472
  %2474 = vmatmul.f32.gmra.mxu0 %v2117
  %v2475 = vpop.f32.mrf.mxu0
  %v2476 = vadd.f32 %v2423, %v2475
  %2477 = vmatmul.f32.gmra.mxu0 %v2123
  %v2478 = vpop.f32.mrf.mxu0
  %v2479 = vadd.f32 %v2426, %v2478
  %2480 = vmatmul.f32.gmra.mxu0 %v2129
  %v2481 = vpop.f32.mrf.mxu0
  %v2482 = vadd.f32 %v2429, %v2481
  %2483 = vdwg.mxu0
  %2484 = vmatpush.msra.mxu0 %v1924
  %2485 = vmatpush.msra.mxu0 %v1920
  %2486 = vmatpush.msra.mxu0 %v1916
  %2487 = vmatpush.msra.mxu0 %v1912
  %2488 = vmatpush.msra.mxu0 %v1908
  %2489 = vmatpush.msra.mxu0 %v1904
  %2490 = vmatpush.msra.mxu0 %v1900
  %2491 = vmatpush.msra.mxu0 %v1896
  %2492 = vmatpush.msra.mxu0 %v1892
  %2493 = vmatpush.msra.mxu0 %v1888
  %2494 = vmatpush.msra.mxu0 %v1884
  %2495 = vmatpush.msra.mxu0 %v1880
  %2496 = vmatpush.msra.mxu0 %v1876
  %2497 = vmatpush.msra.mxu0 %v1872
  %2498 = vmatpush.msra.mxu0 %v1868
  %2499 = vmatpush.msra.mxu0 %v1864
  %2500 = vmatmul.f32.gmra.mxu0 %v2057
  %v2501 = vpop.f32.mrf.mxu0
  %v2502 = vadd.f32 0.0, %v2501
  %2503 = vmatmul.f32.gmra.mxu0 %v2065
  %v2504 = vpop.f32.mrf.mxu0
  %v2505 = vadd.f32 0.0, %v2504
  %2506 = vmatmul.f32.gmra.mxu0 %v2071
  %v2507 = vpop.f32.mrf.mxu0
  %v2508 = vadd.f32 0.0, %v2507
  %2509 = vmatmul.f32.gmra.mxu0 %v2077
  %v2510 = vpop.f32.mrf.mxu0
  %v2511 = vadd.f32 0.0, %v2510
  %2512 = vmatmul.f32.gmra.mxu0 %v2083
  %v2513 = vpop.f32.mrf.mxu0
  %v2514 = vadd.f32 0.0, %v2513
  %2515 = vmatmul.f32.gmra.mxu0 %v2089
  %v2516 = vpop.f32.mrf.mxu0
  %v2517 = vadd.f32 0.0, %v2516
  %2518 = vmatmul.f32.gmra.mxu0 %v2095
  %v2519 = vpop.f32.mrf.mxu0
  %v2520 = vadd.f32 0.0, %v2519
  %2521 = vmatmul.f32.gmra.mxu0 %v2101
  %v2522 = vpop.f32.mrf.mxu0
  %v2523 = vadd.f32 0.0, %v2522
  %2524 = vmatmul.f32.gmra.mxu0 %v2107
  %v2525 = vpop.f32.mrf.mxu0
  %v2526 = vadd.f32 0.0, %v2525
  %2527 = vmatmul.f32.gmra.mxu0 %v2113
  %v2528 = vpop.f32.mrf.mxu0
  %v2529 = vadd.f32 0.0, %v2528
  %2530 = vmatmul.f32.gmra.mxu0 %v2119
  %v2531 = vpop.f32.mrf.mxu0
  %v2532 = vadd.f32 0.0, %v2531
  %2533 = vmatmul.f32.gmra.mxu0 %v2125
  %v2534 = vpop.f32.mrf.mxu0
  %v2535 = vadd.f32 0.0, %v2534
  %2536 = vdwg.mxu0
  %2537 = vmatpush.msra.mxu0 %v1988
  %2538 = vmatpush.msra.mxu0 %v1984
  %2539 = vmatpush.msra.mxu0 %v1980
  %2540 = vmatpush.msra.mxu0 %v1976
  %2541 = vmatpush.msra.mxu0 %v1972
  %2542 = vmatpush.msra.mxu0 %v1968
  %2543 = vmatpush.msra.mxu0 %v1964
  %2544 = vmatpush.msra.mxu0 %v1960
  %2545 = vmatpush.msra.mxu0 %v1956
  %2546 = vmatpush.msra.mxu0 %v1952
  %2547 = vmatpush.msra.mxu0 %v1948
  %2548 = vmatpush.msra.mxu0 %v1944
  %2549 = vmatpush.msra.mxu0 %v1940
  %2550 = vmatpush.msra.mxu0 %v1936
  %2551 = vmatpush.msra.mxu0 %v1932
  %2552 = vmatpush.msra.mxu0 %v1928
  %2553 = vmatmul.f32.gmra.mxu0 %v2060
  %v2554 = vpop.f32.mrf.mxu0
  %v2555 = vadd.f32 %v2502, %v2554
  %2556 = vmatmul.f32.gmra.mxu0 %v2067
  %v2557 = vpop.f32.mrf.mxu0
  %v2558 = vadd.f32 %v2505, %v2557
  %2559 = vmatmul.f32.gmra.mxu0 %v2073
  %v2560 = vpop.f32.mrf.mxu0
  %v2561 = vadd.f32 %v2508, %v2560
  %2562 = vmatmul.f32.gmra.mxu0 %v2079
  %v2563 = vpop.f32.mrf.mxu0
  %v2564 = vadd.f32 %v2511, %v2563
  %2565 = vmatmul.f32.gmra.mxu0 %v2085
  %v2566 = vpop.f32.mrf.mxu0
  %v2567 = vadd.f32 %v2514, %v2566
  %2568 = vmatmul.f32.gmra.mxu0 %v2091
  %v2569 = vpop.f32.mrf.mxu0
  %v2570 = vadd.f32 %v2517, %v2569
  %2571 = vmatmul.f32.gmra.mxu0 %v2097
  %v2572 = vpop.f32.mrf.mxu0
  %v2573 = vadd.f32 %v2520, %v2572
  %2574 = vmatmul.f32.gmra.mxu0 %v2103
  %v2575 = vpop.f32.mrf.mxu0
  %v2576 = vadd.f32 %v2523, %v2575
  %2577 = vmatmul.f32.gmra.mxu0 %v2109
  %v2578 = vpop.f32.mrf.mxu0
  %v2579 = vadd.f32 %v2526, %v2578
  %2580 = vmatmul.f32.gmra.mxu0 %v2115
  %v2581 = vpop.f32.mrf.mxu0
  %v2582 = vadd.f32 %v2529, %v2581
  %2583 = vmatmul.f32.gmra.mxu0 %v2121
  %v2584 = vpop.f32.mrf.mxu0
  %v2585 = vadd.f32 %v2532, %v2584
  %2586 = vmatmul.f32.gmra.mxu0 %v2127
  %v2587 = vpop.f32.mrf.mxu0
  %v2588 = vadd.f32 %v2535, %v2587
  %2589 = vdwg.mxu0
  %2590 = vmatpush.msra.mxu0 %v2052
  %2591 = vmatpush.msra.mxu0 %v2048
  %2592 = vmatpush.msra.mxu0 %v2044
  %2593 = vmatpush.msra.mxu0 %v2040
  %2594 = vmatpush.msra.mxu0 %v2036
  %2595 = vmatpush.msra.mxu0 %v2032
  %2596 = vmatpush.msra.mxu0 %v2028
  %2597 = vmatpush.msra.mxu0 %v2024
  %2598 = vmatpush.msra.mxu0 %v2020
  %2599 = vmatpush.msra.mxu0 %v2016
  %2600 = vmatpush.msra.mxu0 %v2012
  %2601 = vmatpush.msra.mxu0 %v2008
  %2602 = vmatpush.msra.mxu0 %v2004
  %2603 = vmatpush.msra.mxu0 %v2000
  %2604 = vmatpush.msra.mxu0 %v1996
  %2605 = vmatpush.msra.mxu0 %v1992
  %2606 = vmatmul.f32.gmra.mxu0 %v2063
  %v2607 = vpop.f32.mrf.mxu0
  %v2608 = vadd.f32 %v2555, %v2607
  %2609 = vmatmul.f32.gmra.mxu0 %v2069
  %v2610 = vpop.f32.mrf.mxu0
  %v2611 = vadd.f32 %v2558, %v2610
  %2612 = vmatmul.f32.gmra.mxu0 %v2075
  %v2613 = vpop.f32.mrf.mxu0
  %v2614 = vadd.f32 %v2561, %v2613
  %2615 = vmatmul.f32.gmra.mxu0 %v2081
  %v2616 = vpop.f32.mrf.mxu0
  %v2617 = vadd.f32 %v2564, %v2616
  %2618 = vmatmul.f32.gmra.mxu0 %v2087
  %v2619 = vpop.f32.mrf.mxu0
  %v2620 = vadd.f32 %v2567, %v2619
  %2621 = vmatmul.f32.gmra.mxu0 %v2093
  %v2622 = vpop.f32.mrf.mxu0
  %v2623 = vadd.f32 %v2570, %v2622
  %2624 = vmatmul.f32.gmra.mxu0 %v2099
  %v2625 = vpop.f32.mrf.mxu0
  %v2626 = vadd.f32 %v2573, %v2625
  %2627 = vmatmul.f32.gmra.mxu0 %v2105
  %v2628 = vpop.f32.mrf.mxu0
  %v2629 = vadd.f32 %v2576, %v2628
  %2630 = vmatmul.f32.gmra.mxu0 %v2111
  %v2631 = vpop.f32.mrf.mxu0
  %v2632 = vadd.f32 %v2579, %v2631
  %2633 = vmatmul.f32.gmra.mxu0 %v2117
  %v2634 = vpop.f32.mrf.mxu0
  %v2635 = vadd.f32 %v2582, %v2634
  %2636 = vmatmul.f32.gmra.mxu0 %v2123
  %v2637 = vpop.f32.mrf.mxu0
  %v2638 = vadd.f32 %v2585, %v2637
  %2639 = vmatmul.f32.gmra.mxu0 %v2129
  %v2640 = vpop.f32.mrf.mxu0
  %v2641 = vadd.f32 %v2588, %v2640
  %2642 = vdwg.mxu0
  %2643 = vmatpush.msra.mxu0 %v1925
  %2644 = vmatpush.msra.mxu0 %v1921
  %2645 = vmatpush.msra.mxu0 %v1917
  %2646 = vmatpush.msra.mxu0 %v1913
  %2647 = vmatpush.msra.mxu0 %v1909
  %2648 = vmatpush.msra.mxu0 %v1905
  %2649 = vmatpush.msra.mxu0 %v1901
  %2650 = vmatpush.msra.mxu0 %v1897
  %2651 = vmatpush.msra.mxu0 %v1893
  %2652 = vmatpush.msra.mxu0 %v1889
  %2653 = vmatpush.msra.mxu0 %v1885
  %2654 = vmatpush.msra.mxu0 %v1881
  %2655 = vmatpush.msra.mxu0 %v1877
  %2656 = vmatpush.msra.mxu0 %v1873
  %2657 = vmatpush.msra.mxu0 %v1869
  %2658 = vmatpush.msra.mxu0 %v1865
  %2659 = vmatmul.f32.gmra.mxu0 %v2057
  %v2660 = vpop.f32.mrf.mxu0
  %v2661 = vadd.f32 0.0, %v2660
  %2662 = vmatmul.f32.gmra.mxu0 %v2065
  %v2663 = vpop.f32.mrf.mxu0
  %v2664 = vadd.f32 0.0, %v2663
  %2665 = vmatmul.f32.gmra.mxu0 %v2071
  %v2666 = vpop.f32.mrf.mxu0
  %v2667 = vadd.f32 0.0, %v2666
  %2668 = vmatmul.f32.gmra.mxu0 %v2077
  %v2669 = vpop.f32.mrf.mxu0
  %v2670 = vadd.f32 0.0, %v2669
  %2671 = vmatmul.f32.gmra.mxu0 %v2083
  %v2672 = vpop.f32.mrf.mxu0
  %v2673 = vadd.f32 0.0, %v2672
  %2674 = vmatmul.f32.gmra.mxu0 %v2089
  %v2675 = vpop.f32.mrf.mxu0
  %v2676 = vadd.f32 0.0, %v2675
  %2677 = vmatmul.f32.gmra.mxu0 %v2095
  %v2678 = vpop.f32.mrf.mxu0
  %v2679 = vadd.f32 0.0, %v2678
  %2680 = vmatmul.f32.gmra.mxu0 %v2101
  %v2681 = vpop.f32.mrf.mxu0
  %v2682 = vadd.f32 0.0, %v2681
  %2683 = vmatmul.f32.gmra.mxu0 %v2107
  %v2684 = vpop.f32.mrf.mxu0
  %v2685 = vadd.f32 0.0, %v2684
  %2686 = vmatmul.f32.gmra.mxu0 %v2113
  %v2687 = vpop.f32.mrf.mxu0
  %v2688 = vadd.f32 0.0, %v2687
  %2689 = vmatmul.f32.gmra.mxu0 %v2119
  %v2690 = vpop.f32.mrf.mxu0
  %v2691 = vadd.f32 0.0, %v2690
  %2692 = vmatmul.f32.gmra.mxu0 %v2125
  %v2693 = vpop.f32.mrf.mxu0
  %v2694 = vadd.f32 0.0, %v2693
  %2695 = vdwg.mxu0
  %2696 = vmatpush.msra.mxu0 %v1989
  %2697 = vmatpush.msra.mxu0 %v1985
  %2698 = vmatpush.msra.mxu0 %v1981
  %2699 = vmatpush.msra.mxu0 %v1977
  %2700 = vmatpush.msra.mxu0 %v1973
  %2701 = vmatpush.msra.mxu0 %v1969
  %2702 = vmatpush.msra.mxu0 %v1965
  %2703 = vmatpush.msra.mxu0 %v1961
  %2704 = vmatpush.msra.mxu0 %v1957
  %2705 = vmatpush.msra.mxu0 %v1953
  %2706 = vmatpush.msra.mxu0 %v1949
  %2707 = vmatpush.msra.mxu0 %v1945
  %2708 = vmatpush.msra.mxu0 %v1941
  %2709 = vmatpush.msra.mxu0 %v1937
  %2710 = vmatpush.msra.mxu0 %v1933
  %2711 = vmatpush.msra.mxu0 %v1929
  %2712 = vmatmul.f32.gmra.mxu0 %v2060
  %v2713 = vpop.f32.mrf.mxu0
  %v2714 = vadd.f32 %v2661, %v2713
  %2715 = vmatmul.f32.gmra.mxu0 %v2067
  %v2716 = vpop.f32.mrf.mxu0
  %v2717 = vadd.f32 %v2664, %v2716
  %2718 = vmatmul.f32.gmra.mxu0 %v2073
  %v2719 = vpop.f32.mrf.mxu0
  %v2720 = vadd.f32 %v2667, %v2719
  %2721 = vmatmul.f32.gmra.mxu0 %v2079
  %v2722 = vpop.f32.mrf.mxu0
  %v2723 = vadd.f32 %v2670, %v2722
  %2724 = vmatmul.f32.gmra.mxu0 %v2085
  %v2725 = vpop.f32.mrf.mxu0
  %v2726 = vadd.f32 %v2673, %v2725
  %2727 = vmatmul.f32.gmra.mxu0 %v2091
  %v2728 = vpop.f32.mrf.mxu0
  %v2729 = vadd.f32 %v2676, %v2728
  %2730 = vmatmul.f32.gmra.mxu0 %v2097
  %v2731 = vpop.f32.mrf.mxu0
  %v2732 = vadd.f32 %v2679, %v2731
  %2733 = vmatmul.f32.gmra.mxu0 %v2103
  %v2734 = vpop.f32.mrf.mxu0
  %v2735 = vadd.f32 %v2682, %v2734
  %2736 = vmatmul.f32.gmra.mxu0 %v2109
  %v2737 = vpop.f32.mrf.mxu0
  %v2738 = vadd.f32 %v2685, %v2737
  %2739 = vmatmul.f32.gmra.mxu0 %v2115
  %v2740 = vpop.f32.mrf.mxu0
  %v2741 = vadd.f32 %v2688, %v2740
  %2742 = vmatmul.f32.gmra.mxu0 %v2121
  %v2743 = vpop.f32.mrf.mxu0
  %v2744 = vadd.f32 %v2691, %v2743
  %2745 = vmatmul.f32.gmra.mxu0 %v2127
  %v2746 = vpop.f32.mrf.mxu0
  %v2747 = vadd.f32 %v2694, %v2746
  %2748 = vdwg.mxu0
  %2749 = vmatpush.msra.mxu0 %v2053
  %2750 = vmatpush.msra.mxu0 %v2049
  %2751 = vmatpush.msra.mxu0 %v2045
  %2752 = vmatpush.msra.mxu0 %v2041
  %2753 = vmatpush.msra.mxu0 %v2037
  %2754 = vmatpush.msra.mxu0 %v2033
  %2755 = vmatpush.msra.mxu0 %v2029
  %2756 = vmatpush.msra.mxu0 %v2025
  %2757 = vmatpush.msra.mxu0 %v2021
  %2758 = vmatpush.msra.mxu0 %v2017
  %2759 = vmatpush.msra.mxu0 %v2013
  %2760 = vmatpush.msra.mxu0 %v2009
  %2761 = vmatpush.msra.mxu0 %v2005
  %2762 = vmatpush.msra.mxu0 %v2001
  %2763 = vmatpush.msra.mxu0 %v1997
  %2764 = vmatpush.msra.mxu0 %v1993
  %2765 = vmatmul.f32.gmra.mxu0 %v2063
  %v2766 = vpop.f32.mrf.mxu0
  %v2767 = vadd.f32 %v2714, %v2766
  %2768 = vmatmul.f32.gmra.mxu0 %v2069
  %v2769 = vpop.f32.mrf.mxu0
  %v2770 = vadd.f32 %v2717, %v2769
  %2771 = vmatmul.f32.gmra.mxu0 %v2075
  %v2772 = vpop.f32.mrf.mxu0
  %v2773 = vadd.f32 %v2720, %v2772
  %2774 = vmatmul.f32.gmra.mxu0 %v2081
  %v2775 = vpop.f32.mrf.mxu0
  %v2776 = vadd.f32 %v2723, %v2775
  %2777 = vmatmul.f32.gmra.mxu0 %v2087
  %v2778 = vpop.f32.mrf.mxu0
  %v2779 = vadd.f32 %v2726, %v2778
  %2780 = vmatmul.f32.gmra.mxu0 %v2093
  %v2781 = vpop.f32.mrf.mxu0
  %v2782 = vadd.f32 %v2729, %v2781
  %2783 = vmatmul.f32.gmra.mxu0 %v2099
  %v2784 = vpop.f32.mrf.mxu0
  %v2785 = vadd.f32 %v2732, %v2784
  %2786 = vmatmul.f32.gmra.mxu0 %v2105
  %v2787 = vpop.f32.mrf.mxu0
  %v2788 = vadd.f32 %v2735, %v2787
  %2789 = vmatmul.f32.gmra.mxu0 %v2111
  %v2790 = vpop.f32.mrf.mxu0
  %v2791 = vadd.f32 %v2738, %v2790
  %2792 = vmatmul.f32.gmra.mxu0 %v2117
  %v2793 = vpop.f32.mrf.mxu0
  %v2794 = vadd.f32 %v2741, %v2793
  %2795 = vmatmul.f32.gmra.mxu0 %v2123
  %v2796 = vpop.f32.mrf.mxu0
  %v2797 = vadd.f32 %v2744, %v2796
  %2798 = vmatmul.f32.gmra.mxu0 %v2129
  %v2799 = vpop.f32.mrf.mxu0
  %v2800 = vadd.f32 %v2747, %v2799
  %2801 = vdwg.mxu0
  %v2802 = vadd.f32 %v1349, %v2290
  %v2803 = vadd.f32 %v1508, %v2449
  %v2804 = vadd.f32 %v1667, %v2608
  %v2805 = vadd.f32 %v1826, %v2767
  %v2806 = vadd.f32 %v1352, %v2293
  %v2807 = vadd.f32 %v1511, %v2452
  %v2808 = vadd.f32 %v1670, %v2611
  %v2809 = vadd.f32 %v1829, %v2770
  %v2810 = vadd.f32 %v1355, %v2296
  %v2811 = vadd.f32 %v1514, %v2455
  %v2812 = vadd.f32 %v1673, %v2614
  %v2813 = vadd.f32 %v1832, %v2773
  %v2814 = vadd.f32 %v1358, %v2299
  %v2815 = vadd.f32 %v1517, %v2458
  %v2816 = vadd.f32 %v1676, %v2617
  %v2817 = vadd.f32 %v1835, %v2776
  %v2818 = vadd.f32 %v1361, %v2302
  %v2819 = vadd.f32 %v1520, %v2461
  %v2820 = vadd.f32 %v1679, %v2620
  %v2821 = vadd.f32 %v1838, %v2779
  %v2822 = vadd.f32 %v1364, %v2305
  %v2823 = vadd.f32 %v1523, %v2464
  %v2824 = vadd.f32 %v1682, %v2623
  %v2825 = vadd.f32 %v1841, %v2782
  %v2826 = vadd.f32 %v1367, %v2308
  %v2827 = vadd.f32 %v1526, %v2467
  %v2828 = vadd.f32 %v1685, %v2626
  %v2829 = vadd.f32 %v1844, %v2785
  %v2830 = vadd.f32 %v1370, %v2311
  %v2831 = vadd.f32 %v1529, %v2470
  %v2832 = vadd.f32 %v1688, %v2629
  %v2833 = vadd.f32 %v1847, %v2788
  %v2834 = vadd.f32 %v1373, %v2314
  %v2835 = vadd.f32 %v1532, %v2473
  %v2836 = vadd.f32 %v1691, %v2632
  %v2837 = vadd.f32 %v1850, %v2791
  %v2838 = vadd.f32 %v1376, %v2317
  %v2839 = vadd.f32 %v1535, %v2476
  %v2840 = vadd.f32 %v1694, %v2635
  %v2841 = vadd.f32 %v1853, %v2794
  %v2842 = vadd.f32 %v1379, %v2320
  %v2843 = vadd.f32 %v1538, %v2479
  %v2844 = vadd.f32 %v1697, %v2638
  %v2845 = vadd.f32 %v1856, %v2797
  %v2846 = vadd.f32 %v1382, %v2323
  %v2847 = vadd.f32 %v1541, %v2482
  %v2848 = vadd.f32 %v1700, %v2641
  %v2849 = vadd.f32 %v1859, %v2800
  %s2850 = scalar_lea.vmem %s1, 4608
  %v2851 = vld [vmem:[%s2850] sm:$0xff]
  %v2852 = vld [vmem:[%s2850 + $0x8] sm:$0xff]
  %v2853 = vld [vmem:[%s2850 + $0x10] sm:$0xff]
  %v2854 = vld [vmem:[%s2850 + $0x18] sm:$0xff]
  %v2855 = vld [vmem:[%s2850 + $0x20] sm:$0xff]
  %v2856 = vld [vmem:[%s2850 + $0x28] sm:$0xff]
  %v2857 = vld [vmem:[%s2850 + $0x30] sm:$0xff]
  %v2858 = vld [vmem:[%s2850 + $0x38] sm:$0xff]
  %v2859 = vld [vmem:[%s2850 + $0x40] sm:$0xff]
  %v2860 = vld [vmem:[%s2850 + $0x48] sm:$0xff]
  %v2861 = vld [vmem:[%s2850 + $0x50] sm:$0xff]
  %v2862 = vld [vmem:[%s2850 + $0x58] sm:$0xff]
  %v2863 = vld [vmem:[%s2850 + $0x60] sm:$0xff]
  %v2864 = vld [vmem:[%s2850 + $0x68] sm:$0xff]
  %v2865 = vld [vmem:[%s2850 + $0x70] sm:$0xff]
  %v2866 = vld [vmem:[%s2850 + $0x78] sm:$0xff]
  %v2867 = vld [vmem:[%s2850 + $0x80] sm:$0xff]
  %v2868 = vld [vmem:[%s2850 + $0x88] sm:$0xff]
  %v2869 = vld [vmem:[%s2850 + $0x90] sm:$0xff]
  %v2870 = vld [vmem:[%s2850 + $0x98] sm:$0xff]
  %v2871 = vld [vmem:[%s2850 + $0xa0] sm:$0xff]
  %v2872 = vld [vmem:[%s2850 + $0xa8] sm:$0xff]
  %v2873 = vld [vmem:[%s2850 + $0xb0] sm:$0xff]
  %v2874 = vld [vmem:[%s2850 + $0xb8] sm:$0xff]
  %v2875 = vld [vmem:[%s2850 + $0xc0] sm:$0xff]
  %v2876 = vld [vmem:[%s2850 + $0xc8] sm:$0xff]
  %v2877 = vld [vmem:[%s2850 + $0xd0] sm:$0xff]
  %v2878 = vld [vmem:[%s2850 + $0xd8] sm:$0xff]
  %v2879 = vld [vmem:[%s2850 + $0xe0] sm:$0xff]
  %v2880 = vld [vmem:[%s2850 + $0xe8] sm:$0xff]
  %v2881 = vld [vmem:[%s2850 + $0xf0] sm:$0xff]
  %v2882 = vld [vmem:[%s2850 + $0xf8] sm:$0xff]
  %v2883 = vld [vmem:[%s2850 + $0x100] sm:$0xff]
  %v2884 = vld [vmem:[%s2850 + $0x108] sm:$0xff]
  %v2885 = vld [vmem:[%s2850 + $0x110] sm:$0xff]
  %v2886 = vld [vmem:[%s2850 + $0x118] sm:$0xff]
  %v2887 = vld [vmem:[%s2850 + $0x120] sm:$0xff]
  %v2888 = vld [vmem:[%s2850 + $0x128] sm:$0xff]
  %v2889 = vld [vmem:[%s2850 + $0x130] sm:$0xff]
  %v2890 = vld [vmem:[%s2850 + $0x138] sm:$0xff]
  %v2891 = vld [vmem:[%s2850 + $0x140] sm:$0xff]
  %v2892 = vld [vmem:[%s2850 + $0x148] sm:$0xff]
  %v2893 = vld [vmem:[%s2850 + $0x150] sm:$0xff]
  %v2894 = vld [vmem:[%s2850 + $0x158] sm:$0xff]
  %v2895 = vld [vmem:[%s2850 + $0x160] sm:$0xff]
  %v2896 = vld [vmem:[%s2850 + $0x168] sm:$0xff]
  %v2897 = vld [vmem:[%s2850 + $0x170] sm:$0xff]
  %v2898 = vld [vmem:[%s2850 + $0x178] sm:$0xff]
  %v2899 = vld [vmem:[%s2850 + $0x180] sm:$0xff]
  %v2900 = vld [vmem:[%s2850 + $0x188] sm:$0xff]
  %v2901 = vld [vmem:[%s2850 + $0x190] sm:$0xff]
  %v2902 = vld [vmem:[%s2850 + $0x198] sm:$0xff]
  %v2903 = vld [vmem:[%s2850 + $0x1a0] sm:$0xff]
  %v2904 = vld [vmem:[%s2850 + $0x1a8] sm:$0xff]
  %v2905 = vld [vmem:[%s2850 + $0x1b0] sm:$0xff]
  %v2906 = vld [vmem:[%s2850 + $0x1b8] sm:$0xff]
  %v2907 = vld [vmem:[%s2850 + $0x1c0] sm:$0xff]
  %v2908 = vld [vmem:[%s2850 + $0x1c8] sm:$0xff]
  %v2909 = vld [vmem:[%s2850 + $0x1d0] sm:$0xff]
  %v2910 = vld [vmem:[%s2850 + $0x1d8] sm:$0xff]
  %v2911 = vld [vmem:[%s2850 + $0x1e0] sm:$0xff]
  %v2912 = vld [vmem:[%s2850 + $0x1e8] sm:$0xff]
  %v2913 = vld [vmem:[%s2850 + $0x1f0] sm:$0xff]
  %v2914 = vld [vmem:[%s2850 + $0x1f8] sm:$0xff]
  %v2915 = vld [vmem:[%s2850 + $0x200] sm:$0xff]
  %v2916 = vld [vmem:[%s2850 + $0x208] sm:$0xff]
  %v2917 = vld [vmem:[%s2850 + $0x210] sm:$0xff]
  %v2918 = vld [vmem:[%s2850 + $0x218] sm:$0xff]
  %v2919 = vld [vmem:[%s2850 + $0x220] sm:$0xff]
  %v2920 = vld [vmem:[%s2850 + $0x228] sm:$0xff]
  %v2921 = vld [vmem:[%s2850 + $0x230] sm:$0xff]
  %v2922 = vld [vmem:[%s2850 + $0x238] sm:$0xff]
  %v2923 = vld [vmem:[%s2850 + $0x240] sm:$0xff]
  %v2924 = vld [vmem:[%s2850 + $0x248] sm:$0xff]
  %v2925 = vld [vmem:[%s2850 + $0x250] sm:$0xff]
  %v2926 = vld [vmem:[%s2850 + $0x258] sm:$0xff]
  %v2927 = vld [vmem:[%s2850 + $0x260] sm:$0xff]
  %v2928 = vld [vmem:[%s2850 + $0x268] sm:$0xff]
  %v2929 = vld [vmem:[%s2850 + $0x270] sm:$0xff]
  %v2930 = vld [vmem:[%s2850 + $0x278] sm:$0xff]
  %v2931 = vld [vmem:[%s2850 + $0x280] sm:$0xff]
  %v2932 = vld [vmem:[%s2850 + $0x288] sm:$0xff]
  %v2933 = vld [vmem:[%s2850 + $0x290] sm:$0xff]
  %v2934 = vld [vmem:[%s2850 + $0x298] sm:$0xff]
  %v2935 = vld [vmem:[%s2850 + $0x2a0] sm:$0xff]
  %v2936 = vld [vmem:[%s2850 + $0x2a8] sm:$0xff]
  %v2937 = vld [vmem:[%s2850 + $0x2b0] sm:$0xff]
  %v2938 = vld [vmem:[%s2850 + $0x2b8] sm:$0xff]
  %v2939 = vld [vmem:[%s2850 + $0x2c0] sm:$0xff]
  %v2940 = vld [vmem:[%s2850 + $0x2c8] sm:$0xff]
  %v2941 = vld [vmem:[%s2850 + $0x2d0] sm:$0xff]
  %v2942 = vld [vmem:[%s2850 + $0x2d8] sm:$0xff]
  %v2943 = vld [vmem:[%s2850 + $0x2e0] sm:$0xff]
  %v2944 = vld [vmem:[%s2850 + $0x2e8] sm:$0xff]
  %v2945 = vld [vmem:[%s2850 + $0x2f0] sm:$0xff]
  %v2946 = vld [vmem:[%s2850 + $0x2f8] sm:$0xff]
  %v2947 = vld [vmem:[%s2850 + $0x300] sm:$0xff]
  %v2948 = vld [vmem:[%s2850 + $0x308] sm:$0xff]
  %v2949 = vld [vmem:[%s2850 + $0x310] sm:$0xff]
  %v2950 = vld [vmem:[%s2850 + $0x318] sm:$0xff]
  %v2951 = vld [vmem:[%s2850 + $0x320] sm:$0xff]
  %v2952 = vld [vmem:[%s2850 + $0x328] sm:$0xff]
  %v2953 = vld [vmem:[%s2850 + $0x330] sm:$0xff]
  %v2954 = vld [vmem:[%s2850 + $0x338] sm:$0xff]
  %v2955 = vld [vmem:[%s2850 + $0x340] sm:$0xff]
  %v2956 = vld [vmem:[%s2850 + $0x348] sm:$0xff]
  %v2957 = vld [vmem:[%s2850 + $0x350] sm:$0xff]
  %v2958 = vld [vmem:[%s2850 + $0x358] sm:$0xff]
  %v2959 = vld [vmem:[%s2850 + $0x360] sm:$0xff]
  %v2960 = vld [vmem:[%s2850 + $0x368] sm:$0xff]
  %v2961 = vld [vmem:[%s2850 + $0x370] sm:$0xff]
  %v2962 = vld [vmem:[%s2850 + $0x378] sm:$0xff]
  %v2963 = vld [vmem:[%s2850 + $0x380] sm:$0xff]
  %v2964 = vld [vmem:[%s2850 + $0x388] sm:$0xff]
  %v2965 = vld [vmem:[%s2850 + $0x390] sm:$0xff]
  %v2966 = vld [vmem:[%s2850 + $0x398] sm:$0xff]
  %v2967 = vld [vmem:[%s2850 + $0x3a0] sm:$0xff]
  %v2968 = vld [vmem:[%s2850 + $0x3a8] sm:$0xff]
  %v2969 = vld [vmem:[%s2850 + $0x3b0] sm:$0xff]
  %v2970 = vld [vmem:[%s2850 + $0x3b8] sm:$0xff]
  %v2971 = vld [vmem:[%s2850 + $0x3c0] sm:$0xff]
  %v2972 = vld [vmem:[%s2850 + $0x3c8] sm:$0xff]
  %v2973 = vld [vmem:[%s2850 + $0x3d0] sm:$0xff]
  %v2974 = vld [vmem:[%s2850 + $0x3d8] sm:$0xff]
  %v2975 = vld [vmem:[%s2850 + $0x3e0] sm:$0xff]
  %v2976 = vld [vmem:[%s2850 + $0x3e8] sm:$0xff]
  %v2977 = vld [vmem:[%s2850 + $0x3f0] sm:$0xff]
  %v2978 = vld [vmem:[%s2850 + $0x3f8] sm:$0xff]
  %v2979 = vld [vmem:[%s2850 + $0x400] sm:$0xff]
  %v2980 = vld [vmem:[%s2850 + $0x408] sm:$0xff]
  %v2981 = vld [vmem:[%s2850 + $0x410] sm:$0xff]
  %v2982 = vld [vmem:[%s2850 + $0x418] sm:$0xff]
  %v2983 = vld [vmem:[%s2850 + $0x420] sm:$0xff]
  %v2984 = vld [vmem:[%s2850 + $0x428] sm:$0xff]
  %v2985 = vld [vmem:[%s2850 + $0x430] sm:$0xff]
  %v2986 = vld [vmem:[%s2850 + $0x438] sm:$0xff]
  %v2987 = vld [vmem:[%s2850 + $0x440] sm:$0xff]
  %v2988 = vld [vmem:[%s2850 + $0x448] sm:$0xff]
  %v2989 = vld [vmem:[%s2850 + $0x450] sm:$0xff]
  %v2990 = vld [vmem:[%s2850 + $0x458] sm:$0xff]
  %v2991 = vld [vmem:[%s2850 + $0x460] sm:$0xff]
  %v2992 = vld [vmem:[%s2850 + $0x468] sm:$0xff]
  %v2993 = vld [vmem:[%s2850 + $0x470] sm:$0xff]
  %v2994 = vld [vmem:[%s2850 + $0x478] sm:$0xff]
  %v2995 = vld [vmem:[%s2850 + $0x480] sm:$0xff]
  %v2996 = vld [vmem:[%s2850 + $0x488] sm:$0xff]
  %v2997 = vld [vmem:[%s2850 + $0x490] sm:$0xff]
  %v2998 = vld [vmem:[%s2850 + $0x498] sm:$0xff]
  %v2999 = vld [vmem:[%s2850 + $0x4a0] sm:$0xff]
  %v3000 = vld [vmem:[%s2850 + $0x4a8] sm:$0xff]
  %v3001 = vld [vmem:[%s2850 + $0x4b0] sm:$0xff]
  %v3002 = vld [vmem:[%s2850 + $0x4b8] sm:$0xff]
  %v3003 = vld [vmem:[%s2850 + $0x4c0] sm:$0xff]
  %v3004 = vld [vmem:[%s2850 + $0x4c8] sm:$0xff]
  %v3005 = vld [vmem:[%s2850 + $0x4d0] sm:$0xff]
  %v3006 = vld [vmem:[%s2850 + $0x4d8] sm:$0xff]
  %v3007 = vld [vmem:[%s2850 + $0x4e0] sm:$0xff]
  %v3008 = vld [vmem:[%s2850 + $0x4e8] sm:$0xff]
  %v3009 = vld [vmem:[%s2850 + $0x4f0] sm:$0xff]
  %v3010 = vld [vmem:[%s2850 + $0x4f8] sm:$0xff]
  %v3011 = vld [vmem:[%s2850 + $0x500] sm:$0xff]
  %v3012 = vld [vmem:[%s2850 + $0x508] sm:$0xff]
  %v3013 = vld [vmem:[%s2850 + $0x510] sm:$0xff]
  %v3014 = vld [vmem:[%s2850 + $0x518] sm:$0xff]
  %v3015 = vld [vmem:[%s2850 + $0x520] sm:$0xff]
  %v3016 = vld [vmem:[%s2850 + $0x528] sm:$0xff]
  %v3017 = vld [vmem:[%s2850 + $0x530] sm:$0xff]
  %v3018 = vld [vmem:[%s2850 + $0x538] sm:$0xff]
  %v3019 = vld [vmem:[%s2850 + $0x540] sm:$0xff]
  %v3020 = vld [vmem:[%s2850 + $0x548] sm:$0xff]
  %v3021 = vld [vmem:[%s2850 + $0x550] sm:$0xff]
  %v3022 = vld [vmem:[%s2850 + $0x558] sm:$0xff]
  %v3023 = vld [vmem:[%s2850 + $0x560] sm:$0xff]
  %v3024 = vld [vmem:[%s2850 + $0x568] sm:$0xff]
  %v3025 = vld [vmem:[%s2850 + $0x570] sm:$0xff]
  %v3026 = vld [vmem:[%s2850 + $0x578] sm:$0xff]
  %v3027 = vld [vmem:[%s2850 + $0x580] sm:$0xff]
  %v3028 = vld [vmem:[%s2850 + $0x588] sm:$0xff]
  %v3029 = vld [vmem:[%s2850 + $0x590] sm:$0xff]
  %v3030 = vld [vmem:[%s2850 + $0x598] sm:$0xff]
  %v3031 = vld [vmem:[%s2850 + $0x5a0] sm:$0xff]
  %v3032 = vld [vmem:[%s2850 + $0x5a8] sm:$0xff]
  %v3033 = vld [vmem:[%s2850 + $0x5b0] sm:$0xff]
  %v3034 = vld [vmem:[%s2850 + $0x5b8] sm:$0xff]
  %v3035 = vld [vmem:[%s2850 + $0x5c0] sm:$0xff]
  %v3036 = vld [vmem:[%s2850 + $0x5c8] sm:$0xff]
  %v3037 = vld [vmem:[%s2850 + $0x5d0] sm:$0xff]
  %v3038 = vld [vmem:[%s2850 + $0x5d8] sm:$0xff]
  %v3039 = vld [vmem:[%s2850 + $0x5e0] sm:$0xff]
  %v3040 = vld [vmem:[%s2850 + $0x5e8] sm:$0xff]
  %v3041 = vld [vmem:[%s2850 + $0x5f0] sm:$0xff]
  %v3042 = vld [vmem:[%s2850 + $0x5f8] sm:$0xff]
  %vm3043 = vcmask 1044480
  %v3044 = vrot.slane %v14, 3
  %v3045 = vrot.slane %v17, 3
  %v3046 = vsel %vm3043, %v3044, %v3045
  %v3047 = vrot.slane %v15, 3
  %v3048 = vrot.slane %v18, 3
  %v3049 = vsel %vm3043, %v3047, %v3048
  %v3050 = vrot.slane %v16, 3
  %v3051 = vrot.slane %v19, 3
  %v3052 = vsel %vm3043, %v3050, %v3051
  %v3053 = vrot.slane %v20, 3
  %v3054 = vsel %vm3043, %v3045, %v3053
  %v3055 = vrot.slane %v21, 3
  %v3056 = vsel %vm3043, %v3048, %v3055
  %v3057 = vrot.slane %v22, 3
  %v3058 = vsel %vm3043, %v3051, %v3057
  %v3059 = vrot.slane %v23, 3
  %v3060 = vsel %vm3043, %v3053, %v3059
  %v3061 = vrot.slane %v24, 3
  %v3062 = vsel %vm3043, %v3055, %v3061
  %v3063 = vrot.slane %v25, 3
  %v3064 = vsel %vm3043, %v3057, %v3063
  %v3065 = vrot.slane %v26, 3
  %v3066 = vsel %vm3043, %v3059, %v3065
  %v3067 = vrot.slane %v27, 3
  %v3068 = vsel %vm3043, %v3061, %v3067
  %v3069 = vrot.slane %v28, 3
  %v3070 = vsel %vm3043, %v3063, %v3069
  %v3071 = vrot.slane %v29, 3
  %v3072 = vsel %vm3043, %v3065, %v3071
  %v3073 = vrot.slane %v30, 3
  %v3074 = vsel %vm3043, %v3067, %v3073
  %v3075 = vrot.slane %v31, 3
  %v3076 = vsel %vm3043, %v3069, %v3075
  %v3077 = vrot.slane %v32, 3
  %v3078 = vsel %vm3043, %v3071, %v3077
  %v3079 = vrot.slane %v33, 3
  %v3080 = vsel %vm3043, %v3073, %v3079
  %v3081 = vrot.slane %v34, 3
  %v3082 = vsel %vm3043, %v3075, %v3081
  %v3083 = vrot.slane %v35, 3
  %v3084 = vsel %vm3043, %v3077, %v3083
  %v3085 = vrot.slane %v36, 3
  %v3086 = vsel %vm3043, %v3079, %v3085
  %v3087 = vrot.slane %v37, 3
  %v3088 = vsel %vm3043, %v3081, %v3087
  %v3089 = vrot.slane %v38, 3
  %v3090 = vsel %vm3043, %v3083, %v3089
  %v3091 = vrot.slane %v39, 3
  %v3092 = vsel %vm3043, %v3085, %v3091
  %v3093 = vrot.slane %v40, 3
  %v3094 = vsel %vm3043, %v3087, %v3093
  %v3095 = vrot.slane %v41, 3
  %v3096 = vsel %vm3043, %v3089, %v3095
  %v3097 = vrot.slane %v42, 3
  %v3098 = vsel %vm3043, %v3091, %v3097
  %v3099 = vrot.slane %v43, 3
  %v3100 = vsel %vm3043, %v3093, %v3099
  %v3101 = vrot.slane %v44, 3
  %v3102 = vsel %vm3043, %v3095, %v3101
  %v3103 = vrot.slane %v45, 3
  %v3104 = vsel %vm3043, %v3097, %v3103
  %v3105 = vrot.slane %v46, 3
  %v3106 = vsel %vm3043, %v3099, %v3105
  %v3107 = vrot.slane %v47, 3
  %v3108 = vsel %vm3043, %v3101, %v3107
  %v3109 = vrot.slane %v48, 3
  %v3110 = vsel %vm3043, %v3103, %v3109
  %v3111 = vrot.slane %v49, 3
  %v3112 = vsel %vm3043, %v3105, %v3111
  %v3113 = vrot.slane %v50, 3
  %v3114 = vsel %vm3043, %v3107, %v3113
  %v3115 = vrot.slane %v51, 3
  %v3116 = vsel %vm3043, %v3109, %v3115
  %v3117 = vrot.slane %v52, 3
  %v3118 = vsel %vm3043, %v3111, %v3117
  %3155 = vmatpush.msra.mxu0 %v2911
  %3156 = vmatpush.msra.mxu0 %v2907
  %3157 = vmatpush.msra.mxu0 %v2903
  %3158 = vmatpush.msra.mxu0 %v2899
  %3159 = vmatpush.msra.mxu0 %v2895
  %3160 = vmatpush.msra.mxu0 %v2891
  %3161 = vmatpush.msra.mxu0 %v2887
  %3162 = vmatpush.msra.mxu0 %v2883
  %3163 = vmatpush.msra.mxu0 %v2879
  %3164 = vmatpush.msra.mxu0 %v2875
  %3165 = vmatpush.msra.mxu0 %v2871
  %3166 = vmatpush.msra.mxu0 %v2867
  %3167 = vmatpush.msra.mxu0 %v2863
  %3168 = vmatpush.msra.mxu0 %v2859
  %3169 = vmatpush.msra.mxu0 %v2855
  %3170 = vmatpush.msra.mxu0 %v2851
  %3171 = vmatmul.f32.gmra.mxu0 %v3046
  %v3172 = vpop.f32.mrf.mxu0
  %v3173 = vadd.f32 0.0, %v3172
  %3174 = vmatmul.f32.gmra.mxu0 %v3054
  %v3175 = vpop.f32.mrf.mxu0
  %v3176 = vadd.f32 0.0, %v3175
  %3177 = vmatmul.f32.gmra.mxu0 %v3060
  %v3178 = vpop.f32.mrf.mxu0
  %v3179 = vadd.f32 0.0, %v3178
  %3180 = vmatmul.f32.gmra.mxu0 %v3066
  %v3181 = vpop.f32.mrf.mxu0
  %v3182 = vadd.f32 0.0, %v3181
  %3183 = vmatmul.f32.gmra.mxu0 %v3072
  %v3184 = vpop.f32.mrf.mxu0
  %v3185 = vadd.f32 0.0, %v3184
  %3186 = vmatmul.f32.gmra.mxu0 %v3078
  %v3187 = vpop.f32.mrf.mxu0
  %v3188 = vadd.f32 0.0, %v3187
  %3189 = vmatmul.f32.gmra.mxu0 %v3084
  %v3190 = vpop.f32.mrf.mxu0
  %v3191 = vadd.f32 0.0, %v3190
  %3192 = vmatmul.f32.gmra.mxu0 %v3090
  %v3193 = vpop.f32.mrf.mxu0
  %v3194 = vadd.f32 0.0, %v3193
  %3195 = vmatmul.f32.gmra.mxu0 %v3096
  %v3196 = vpop.f32.mrf.mxu0
  %v3197 = vadd.f32 0.0, %v3196
  %3198 = vmatmul.f32.gmra.mxu0 %v3102
  %v3199 = vpop.f32.mrf.mxu0
  %v3200 = vadd.f32 0.0, %v3199
  %3201 = vmatmul.f32.gmra.mxu0 %v3108
  %v3202 = vpop.f32.mrf.mxu0
  %v3203 = vadd.f32 0.0, %v3202
  %3204 = vmatmul.f32.gmra.mxu0 %v3114
  %v3205 = vpop.f32.mrf.mxu0
  %v3206 = vadd.f32 0.0, %v3205
  %3207 = vdwg.mxu0
  %3208 = vmatpush.msra.mxu0 %v2975
  %3209 = vmatpush.msra.mxu0 %v2971
  %3210 = vmatpush.msra.mxu0 %v2967
  %3211 = vmatpush.msra.mxu0 %v2963
  %3212 = vmatpush.msra.mxu0 %v2959
  %3213 = vmatpush.msra.mxu0 %v2955
  %3214 = vmatpush.msra.mxu0 %v2951
  %3215 = vmatpush.msra.mxu0 %v2947
  %3216 = vmatpush.msra.mxu0 %v2943
  %3217 = vmatpush.msra.mxu0 %v2939
  %3218 = vmatpush.msra.mxu0 %v2935
  %3219 = vmatpush.msra.mxu0 %v2931
  %3220 = vmatpush.msra.mxu0 %v2927
  %3221 = vmatpush.msra.mxu0 %v2923
  %3222 = vmatpush.msra.mxu0 %v2919
  %3223 = vmatpush.msra.mxu0 %v2915
  %3224 = vmatmul.f32.gmra.mxu0 %v3049
  %v3225 = vpop.f32.mrf.mxu0
  %v3226 = vadd.f32 %v3173, %v3225
  %3227 = vmatmul.f32.gmra.mxu0 %v3056
  %v3228 = vpop.f32.mrf.mxu0
  %v3229 = vadd.f32 %v3176, %v3228
  %3230 = vmatmul.f32.gmra.mxu0 %v3062
  %v3231 = vpop.f32.mrf.mxu0
  %v3232 = vadd.f32 %v3179, %v3231
  %3233 = vmatmul.f32.gmra.mxu0 %v3068
  %v3234 = vpop.f32.mrf.mxu0
  %v3235 = vadd.f32 %v3182, %v3234
  %3236 = vmatmul.f32.gmra.mxu0 %v3074
  %v3237 = vpop.f32.mrf.mxu0
  %v3238 = vadd.f32 %v3185, %v3237
  %3239 = vmatmul.f32.gmra.mxu0 %v3080
  %v3240 = vpop.f32.mrf.mxu0
  %v3241 = vadd.f32 %v3188, %v3240
  %3242 = vmatmul.f32.gmra.mxu0 %v3086
  %v3243 = vpop.f32.mrf.mxu0
  %v3244 = vadd.f32 %v3191, %v3243
  %3245 = vmatmul.f32.gmra.mxu0 %v3092
  %v3246 = vpop.f32.mrf.mxu0
  %v3247 = vadd.f32 %v3194, %v3246
  %3248 = vmatmul.f32.gmra.mxu0 %v3098
  %v3249 = vpop.f32.mrf.mxu0
  %v3250 = vadd.f32 %v3197, %v3249
  %3251 = vmatmul.f32.gmra.mxu0 %v3104
  %v3252 = vpop.f32.mrf.mxu0
  %v3253 = vadd.f32 %v3200, %v3252
  %3254 = vmatmul.f32.gmra.mxu0 %v3110
  %v3255 = vpop.f32.mrf.mxu0
  %v3256 = vadd.f32 %v3203, %v3255
  %3257 = vmatmul.f32.gmra.mxu0 %v3116
  %v3258 = vpop.f32.mrf.mxu0
  %v3259 = vadd.f32 %v3206, %v3258
  %3260 = vdwg.mxu0
  %3261 = vmatpush.msra.mxu0 %v3039
  %3262 = vmatpush.msra.mxu0 %v3035
  %3263 = vmatpush.msra.mxu0 %v3031
  %3264 = vmatpush.msra.mxu0 %v3027
  %3265 = vmatpush.msra.mxu0 %v3023
  %3266 = vmatpush.msra.mxu0 %v3019
  %3267 = vmatpush.msra.mxu0 %v3015
  %3268 = vmatpush.msra.mxu0 %v3011
  %3269 = vmatpush.msra.mxu0 %v3007
  %3270 = vmatpush.msra.mxu0 %v3003
  %3271 = vmatpush.msra.mxu0 %v2999
  %3272 = vmatpush.msra.mxu0 %v2995
  %3273 = vmatpush.msra.mxu0 %v2991
  %3274 = vmatpush.msra.mxu0 %v2987
  %3275 = vmatpush.msra.mxu0 %v2983
  %3276 = vmatpush.msra.mxu0 %v2979
  %3277 = vmatmul.f32.gmra.mxu0 %v3052
  %v3278 = vpop.f32.mrf.mxu0
  %v3279 = vadd.f32 %v3226, %v3278
  %3280 = vmatmul.f32.gmra.mxu0 %v3058
  %v3281 = vpop.f32.mrf.mxu0
  %v3282 = vadd.f32 %v3229, %v3281
  %3283 = vmatmul.f32.gmra.mxu0 %v3064
  %v3284 = vpop.f32.mrf.mxu0
  %v3285 = vadd.f32 %v3232, %v3284
  %3286 = vmatmul.f32.gmra.mxu0 %v3070
  %v3287 = vpop.f32.mrf.mxu0
  %v3288 = vadd.f32 %v3235, %v3287
  %3289 = vmatmul.f32.gmra.mxu0 %v3076
  %v3290 = vpop.f32.mrf.mxu0
  %v3291 = vadd.f32 %v3238, %v3290
  %3292 = vmatmul.f32.gmra.mxu0 %v3082
  %v3293 = vpop.f32.mrf.mxu0
  %v3294 = vadd.f32 %v3241, %v3293
  %3295 = vmatmul.f32.gmra.mxu0 %v3088
  %v3296 = vpop.f32.mrf.mxu0
  %v3297 = vadd.f32 %v3244, %v3296
  %3298 = vmatmul.f32.gmra.mxu0 %v3094
  %v3299 = vpop.f32.mrf.mxu0
  %v3300 = vadd.f32 %v3247, %v3299
  %3301 = vmatmul.f32.gmra.mxu0 %v3100
  %v3302 = vpop.f32.mrf.mxu0
  %v3303 = vadd.f32 %v3250, %v3302
  %3304 = vmatmul.f32.gmra.mxu0 %v3106
  %v3305 = vpop.f32.mrf.mxu0
  %v3306 = vadd.f32 %v3253, %v3305
  %3307 = vmatmul.f32.gmra.mxu0 %v3112
  %v3308 = vpop.f32.mrf.mxu0
  %v3309 = vadd.f32 %v3256, %v3308
  %3310 = vmatmul.f32.gmra.mxu0 %v3118
  %v3311 = vpop.f32.mrf.mxu0
  %v3312 = vadd.f32 %v3259, %v3311
  %3313 = vdwg.mxu0
  %3314 = vmatpush.msra.mxu0 %v2912
  %3315 = vmatpush.msra.mxu0 %v2908
  %3316 = vmatpush.msra.mxu0 %v2904
  %3317 = vmatpush.msra.mxu0 %v2900
  %3318 = vmatpush.msra.mxu0 %v2896
  %3319 = vmatpush.msra.mxu0 %v2892
  %3320 = vmatpush.msra.mxu0 %v2888
  %3321 = vmatpush.msra.mxu0 %v2884
  %3322 = vmatpush.msra.mxu0 %v2880
  %3323 = vmatpush.msra.mxu0 %v2876
  %3324 = vmatpush.msra.mxu0 %v2872
  %3325 = vmatpush.msra.mxu0 %v2868
  %3326 = vmatpush.msra.mxu0 %v2864
  %3327 = vmatpush.msra.mxu0 %v2860
  %3328 = vmatpush.msra.mxu0 %v2856
  %3329 = vmatpush.msra.mxu0 %v2852
  %3330 = vmatmul.f32.gmra.mxu0 %v3046
  %v3331 = vpop.f32.mrf.mxu0
  %v3332 = vadd.f32 0.0, %v3331
  %3333 = vmatmul.f32.gmra.mxu0 %v3054
  %v3334 = vpop.f32.mrf.mxu0
  %v3335 = vadd.f32 0.0, %v3334
  %3336 = vmatmul.f32.gmra.mxu0 %v3060
  %v3337 = vpop.f32.mrf.mxu0
  %v3338 = vadd.f32 0.0, %v3337
  %3339 = vmatmul.f32.gmra.mxu0 %v3066
  %v3340 = vpop.f32.mrf.mxu0
  %v3341 = vadd.f32 0.0, %v3340
  %3342 = vmatmul.f32.gmra.mxu0 %v3072
  %v3343 = vpop.f32.mrf.mxu0
  %v3344 = vadd.f32 0.0, %v3343
  %3345 = vmatmul.f32.gmra.mxu0 %v3078
  %v3346 = vpop.f32.mrf.mxu0
  %v3347 = vadd.f32 0.0, %v3346
  %3348 = vmatmul.f32.gmra.mxu0 %v3084
  %v3349 = vpop.f32.mrf.mxu0
  %v3350 = vadd.f32 0.0, %v3349
  %3351 = vmatmul.f32.gmra.mxu0 %v3090
  %v3352 = vpop.f32.mrf.mxu0
  %v3353 = vadd.f32 0.0, %v3352
  %3354 = vmatmul.f32.gmra.mxu0 %v3096
  %v3355 = vpop.f32.mrf.mxu0
  %v3356 = vadd.f32 0.0, %v3355
  %3357 = vmatmul.f32.gmra.mxu0 %v3102
  %v3358 = vpop.f32.mrf.mxu0
  %v3359 = vadd.f32 0.0, %v3358
  %3360 = vmatmul.f32.gmra.mxu0 %v3108
  %v3361 = vpop.f32.mrf.mxu0
  %v3362 = vadd.f32 0.0, %v3361
  %3363 = vmatmul.f32.gmra.mxu0 %v3114
  %v3364 = vpop.f32.mrf.mxu0
  %v3365 = vadd.f32 0.0, %v3364
  %3366 = vdwg.mxu0
  %3367 = vmatpush.msra.mxu0 %v2976
  %3368 = vmatpush.msra.mxu0 %v2972
  %3369 = vmatpush.msra.mxu0 %v2968
  %3370 = vmatpush.msra.mxu0 %v2964
  %3371 = vmatpush.msra.mxu0 %v2960
  %3372 = vmatpush.msra.mxu0 %v2956
  %3373 = vmatpush.msra.mxu0 %v2952
  %3374 = vmatpush.msra.mxu0 %v2948
  %3375 = vmatpush.msra.mxu0 %v2944
  %3376 = vmatpush.msra.mxu0 %v2940
  %3377 = vmatpush.msra.mxu0 %v2936
  %3378 = vmatpush.msra.mxu0 %v2932
  %3379 = vmatpush.msra.mxu0 %v2928
  %3380 = vmatpush.msra.mxu0 %v2924
  %3381 = vmatpush.msra.mxu0 %v2920
  %3382 = vmatpush.msra.mxu0 %v2916
  %3383 = vmatmul.f32.gmra.mxu0 %v3049
  %v3384 = vpop.f32.mrf.mxu0
  %v3385 = vadd.f32 %v3332, %v3384
  %3386 = vmatmul.f32.gmra.mxu0 %v3056
  %v3387 = vpop.f32.mrf.mxu0
  %v3388 = vadd.f32 %v3335, %v3387
  %3389 = vmatmul.f32.gmra.mxu0 %v3062
  %v3390 = vpop.f32.mrf.mxu0
  %v3391 = vadd.f32 %v3338, %v3390
  %3392 = vmatmul.f32.gmra.mxu0 %v3068
  %v3393 = vpop.f32.mrf.mxu0
  %v3394 = vadd.f32 %v3341, %v3393
  %3395 = vmatmul.f32.gmra.mxu0 %v3074
  %v3396 = vpop.f32.mrf.mxu0
  %v3397 = vadd.f32 %v3344, %v3396
  %3398 = vmatmul.f32.gmra.mxu0 %v3080
  %v3399 = vpop.f32.mrf.mxu0
  %v3400 = vadd.f32 %v3347, %v3399
  %3401 = vmatmul.f32.gmra.mxu0 %v3086
  %v3402 = vpop.f32.mrf.mxu0
  %v3403 = vadd.f32 %v3350, %v3402
  %3404 = vmatmul.f32.gmra.mxu0 %v3092
  %v3405 = vpop.f32.mrf.mxu0
  %v3406 = vadd.f32 %v3353, %v3405
  %3407 = vmatmul.f32.gmra.mxu0 %v3098
  %v3408 = vpop.f32.mrf.mxu0
  %v3409 = vadd.f32 %v3356, %v3408
  %3410 = vmatmul.f32.gmra.mxu0 %v3104
  %v3411 = vpop.f32.mrf.mxu0
  %v3412 = vadd.f32 %v3359, %v3411
  %3413 = vmatmul.f32.gmra.mxu0 %v3110
  %v3414 = vpop.f32.mrf.mxu0
  %v3415 = vadd.f32 %v3362, %v3414
  %3416 = vmatmul.f32.gmra.mxu0 %v3116
  %v3417 = vpop.f32.mrf.mxu0
  %v3418 = vadd.f32 %v3365, %v3417
  %3419 = vdwg.mxu0
  %3420 = vmatpush.msra.mxu0 %v3040
  %3421 = vmatpush.msra.mxu0 %v3036
  %3422 = vmatpush.msra.mxu0 %v3032
  %3423 = vmatpush.msra.mxu0 %v3028
  %3424 = vmatpush.msra.mxu0 %v3024
  %3425 = vmatpush.msra.mxu0 %v3020
  %3426 = vmatpush.msra.mxu0 %v3016
  %3427 = vmatpush.msra.mxu0 %v3012
  %3428 = vmatpush.msra.mxu0 %v3008
  %3429 = vmatpush.msra.mxu0 %v3004
  %3430 = vmatpush.msra.mxu0 %v3000
  %3431 = vmatpush.msra.mxu0 %v2996
  %3432 = vmatpush.msra.mxu0 %v2992
  %3433 = vmatpush.msra.mxu0 %v2988
  %3434 = vmatpush.msra.mxu0 %v2984
  %3435 = vmatpush.msra.mxu0 %v2980
  %3436 = vmatmul.f32.gmra.mxu0 %v3052
  %v3437 = vpop.f32.mrf.mxu0
  %v3438 = vadd.f32 %v3385, %v3437
  %3439 = vmatmul.f32.gmra.mxu0 %v3058
  %v3440 = vpop.f32.mrf.mxu0
  %v3441 = vadd.f32 %v3388, %v3440
  %3442 = vmatmul.f32.gmra.mxu0 %v3064
  %v3443 = vpop.f32.mrf.mxu0
  %v3444 = vadd.f32 %v3391, %v3443
  %3445 = vmatmul.f32.gmra.mxu0 %v3070
  %v3446 = vpop.f32.mrf.mxu0
  %v3447 = vadd.f32 %v3394, %v3446
  %3448 = vmatmul.f32.gmra.mxu0 %v3076
  %v3449 = vpop.f32.mrf.mxu0
  %v3450 = vadd.f32 %v3397, %v3449
  %3451 = vmatmul.f32.gmra.mxu0 %v3082
  %v3452 = vpop.f32.mrf.mxu0
  %v3453 = vadd.f32 %v3400, %v3452
  %3454 = vmatmul.f32.gmra.mxu0 %v3088
  %v3455 = vpop.f32.mrf.mxu0
  %v3456 = vadd.f32 %v3403, %v3455
  %3457 = vmatmul.f32.gmra.mxu0 %v3094
  %v3458 = vpop.f32.mrf.mxu0
  %v3459 = vadd.f32 %v3406, %v3458
  %3460 = vmatmul.f32.gmra.mxu0 %v3100
  %v3461 = vpop.f32.mrf.mxu0
  %v3462 = vadd.f32 %v3409, %v3461
  %3463 = vmatmul.f32.gmra.mxu0 %v3106
  %v3464 = vpop.f32.mrf.mxu0
  %v3465 = vadd.f32 %v3412, %v3464
  %3466 = vmatmul.f32.gmra.mxu0 %v3112
  %v3467 = vpop.f32.mrf.mxu0
  %v3468 = vadd.f32 %v3415, %v3467
  %3469 = vmatmul.f32.gmra.mxu0 %v3118
  %v3470 = vpop.f32.mrf.mxu0
  %v3471 = vadd.f32 %v3418, %v3470
  %3472 = vdwg.mxu0
  %3473 = vmatpush.msra.mxu0 %v2913
  %3474 = vmatpush.msra.mxu0 %v2909
  %3475 = vmatpush.msra.mxu0 %v2905
  %3476 = vmatpush.msra.mxu0 %v2901
  %3477 = vmatpush.msra.mxu0 %v2897
  %3478 = vmatpush.msra.mxu0 %v2893
  %3479 = vmatpush.msra.mxu0 %v2889
  %3480 = vmatpush.msra.mxu0 %v2885
  %3481 = vmatpush.msra.mxu0 %v2881
  %3482 = vmatpush.msra.mxu0 %v2877
  %3483 = vmatpush.msra.mxu0 %v2873
  %3484 = vmatpush.msra.mxu0 %v2869
  %3485 = vmatpush.msra.mxu0 %v2865
  %3486 = vmatpush.msra.mxu0 %v2861
  %3487 = vmatpush.msra.mxu0 %v2857
  %3488 = vmatpush.msra.mxu0 %v2853
  %3489 = vmatmul.f32.gmra.mxu0 %v3046
  %v3490 = vpop.f32.mrf.mxu0
  %v3491 = vadd.f32 0.0, %v3490
  %3492 = vmatmul.f32.gmra.mxu0 %v3054
  %v3493 = vpop.f32.mrf.mxu0
  %v3494 = vadd.f32 0.0, %v3493
  %3495 = vmatmul.f32.gmra.mxu0 %v3060
  %v3496 = vpop.f32.mrf.mxu0
  %v3497 = vadd.f32 0.0, %v3496
  %3498 = vmatmul.f32.gmra.mxu0 %v3066
  %v3499 = vpop.f32.mrf.mxu0
  %v3500 = vadd.f32 0.0, %v3499
  %3501 = vmatmul.f32.gmra.mxu0 %v3072
  %v3502 = vpop.f32.mrf.mxu0
  %v3503 = vadd.f32 0.0, %v3502
  %3504 = vmatmul.f32.gmra.mxu0 %v3078
  %v3505 = vpop.f32.mrf.mxu0
  %v3506 = vadd.f32 0.0, %v3505
  %3507 = vmatmul.f32.gmra.mxu0 %v3084
  %v3508 = vpop.f32.mrf.mxu0
  %v3509 = vadd.f32 0.0, %v3508
  %3510 = vmatmul.f32.gmra.mxu0 %v3090
  %v3511 = vpop.f32.mrf.mxu0
  %v3512 = vadd.f32 0.0, %v3511
  %3513 = vmatmul.f32.gmra.mxu0 %v3096
  %v3514 = vpop.f32.mrf.mxu0
  %v3515 = vadd.f32 0.0, %v3514
  %3516 = vmatmul.f32.gmra.mxu0 %v3102
  %v3517 = vpop.f32.mrf.mxu0
  %v3518 = vadd.f32 0.0, %v3517
  %3519 = vmatmul.f32.gmra.mxu0 %v3108
  %v3520 = vpop.f32.mrf.mxu0
  %v3521 = vadd.f32 0.0, %v3520
  %3522 = vmatmul.f32.gmra.mxu0 %v3114
  %v3523 = vpop.f32.mrf.mxu0
  %v3524 = vadd.f32 0.0, %v3523
  %3525 = vdwg.mxu0
  %3526 = vmatpush.msra.mxu0 %v2977
  %3527 = vmatpush.msra.mxu0 %v2973
  %3528 = vmatpush.msra.mxu0 %v2969
  %3529 = vmatpush.msra.mxu0 %v2965
  %3530 = vmatpush.msra.mxu0 %v2961
  %3531 = vmatpush.msra.mxu0 %v2957
  %3532 = vmatpush.msra.mxu0 %v2953
  %3533 = vmatpush.msra.mxu0 %v2949
  %3534 = vmatpush.msra.mxu0 %v2945
  %3535 = vmatpush.msra.mxu0 %v2941
  %3536 = vmatpush.msra.mxu0 %v2937
  %3537 = vmatpush.msra.mxu0 %v2933
  %3538 = vmatpush.msra.mxu0 %v2929
  %3539 = vmatpush.msra.mxu0 %v2925
  %3540 = vmatpush.msra.mxu0 %v2921
  %3541 = vmatpush.msra.mxu0 %v2917
  %3542 = vmatmul.f32.gmra.mxu0 %v3049
  %v3543 = vpop.f32.mrf.mxu0
  %v3544 = vadd.f32 %v3491, %v3543
  %3545 = vmatmul.f32.gmra.mxu0 %v3056
  %v3546 = vpop.f32.mrf.mxu0
  %v3547 = vadd.f32 %v3494, %v3546
  %3548 = vmatmul.f32.gmra.mxu0 %v3062
  %v3549 = vpop.f32.mrf.mxu0
  %v3550 = vadd.f32 %v3497, %v3549
  %3551 = vmatmul.f32.gmra.mxu0 %v3068
  %v3552 = vpop.f32.mrf.mxu0
  %v3553 = vadd.f32 %v3500, %v3552
  %3554 = vmatmul.f32.gmra.mxu0 %v3074
  %v3555 = vpop.f32.mrf.mxu0
  %v3556 = vadd.f32 %v3503, %v3555
  %3557 = vmatmul.f32.gmra.mxu0 %v3080
  %v3558 = vpop.f32.mrf.mxu0
  %v3559 = vadd.f32 %v3506, %v3558
  %3560 = vmatmul.f32.gmra.mxu0 %v3086
  %v3561 = vpop.f32.mrf.mxu0
  %v3562 = vadd.f32 %v3509, %v3561
  %3563 = vmatmul.f32.gmra.mxu0 %v3092
  %v3564 = vpop.f32.mrf.mxu0
  %v3565 = vadd.f32 %v3512, %v3564
  %3566 = vmatmul.f32.gmra.mxu0 %v3098
  %v3567 = vpop.f32.mrf.mxu0
  %v3568 = vadd.f32 %v3515, %v3567
  %3569 = vmatmul.f32.gmra.mxu0 %v3104
  %v3570 = vpop.f32.mrf.mxu0
  %v3571 = vadd.f32 %v3518, %v3570
  %3572 = vmatmul.f32.gmra.mxu0 %v3110
  %v3573 = vpop.f32.mrf.mxu0
  %v3574 = vadd.f32 %v3521, %v3573
  %3575 = vmatmul.f32.gmra.mxu0 %v3116
  %v3576 = vpop.f32.mrf.mxu0
  %v3577 = vadd.f32 %v3524, %v3576
  %3578 = vdwg.mxu0
  %3579 = vmatpush.msra.mxu0 %v3041
  %3580 = vmatpush.msra.mxu0 %v3037
  %3581 = vmatpush.msra.mxu0 %v3033
  %3582 = vmatpush.msra.mxu0 %v3029
  %3583 = vmatpush.msra.mxu0 %v3025
  %3584 = vmatpush.msra.mxu0 %v3021
  %3585 = vmatpush.msra.mxu0 %v3017
  %3586 = vmatpush.msra.mxu0 %v3013
  %3587 = vmatpush.msra.mxu0 %v3009
  %3588 = vmatpush.msra.mxu0 %v3005
  %3589 = vmatpush.msra.mxu0 %v3001
  %3590 = vmatpush.msra.mxu0 %v2997
  %3591 = vmatpush.msra.mxu0 %v2993
  %3592 = vmatpush.msra.mxu0 %v2989
  %3593 = vmatpush.msra.mxu0 %v2985
  %3594 = vmatpush.msra.mxu0 %v2981
  %3595 = vmatmul.f32.gmra.mxu0 %v3052
  %v3596 = vpop.f32.mrf.mxu0
  %v3597 = vadd.f32 %v3544, %v3596
  %3598 = vmatmul.f32.gmra.mxu0 %v3058
  %v3599 = vpop.f32.mrf.mxu0
  %v3600 = vadd.f32 %v3547, %v3599
  %3601 = vmatmul.f32.gmra.mxu0 %v3064
  %v3602 = vpop.f32.mrf.mxu0
  %v3603 = vadd.f32 %v3550, %v3602
  %3604 = vmatmul.f32.gmra.mxu0 %v3070
  %v3605 = vpop.f32.mrf.mxu0
  %v3606 = vadd.f32 %v3553, %v3605
  %3607 = vmatmul.f32.gmra.mxu0 %v3076
  %v3608 = vpop.f32.mrf.mxu0
  %v3609 = vadd.f32 %v3556, %v3608
  %3610 = vmatmul.f32.gmra.mxu0 %v3082
  %v3611 = vpop.f32.mrf.mxu0
  %v3612 = vadd.f32 %v3559, %v3611
  %3613 = vmatmul.f32.gmra.mxu0 %v3088
  %v3614 = vpop.f32.mrf.mxu0
  %v3615 = vadd.f32 %v3562, %v3614
  %3616 = vmatmul.f32.gmra.mxu0 %v3094
  %v3617 = vpop.f32.mrf.mxu0
  %v3618 = vadd.f32 %v3565, %v3617
  %3619 = vmatmul.f32.gmra.mxu0 %v3100
  %v3620 = vpop.f32.mrf.mxu0
  %v3621 = vadd.f32 %v3568, %v3620
  %3622 = vmatmul.f32.gmra.mxu0 %v3106
  %v3623 = vpop.f32.mrf.mxu0
  %v3624 = vadd.f32 %v3571, %v3623
  %3625 = vmatmul.f32.gmra.mxu0 %v3112
  %v3626 = vpop.f32.mrf.mxu0
  %v3627 = vadd.f32 %v3574, %v3626
  %3628 = vmatmul.f32.gmra.mxu0 %v3118
  %v3629 = vpop.f32.mrf.mxu0
  %v3630 = vadd.f32 %v3577, %v3629
  %3631 = vdwg.mxu0
  %3632 = vmatpush.msra.mxu0 %v2914
  %3633 = vmatpush.msra.mxu0 %v2910
  %3634 = vmatpush.msra.mxu0 %v2906
  %3635 = vmatpush.msra.mxu0 %v2902
  %3636 = vmatpush.msra.mxu0 %v2898
  %3637 = vmatpush.msra.mxu0 %v2894
  %3638 = vmatpush.msra.mxu0 %v2890
  %3639 = vmatpush.msra.mxu0 %v2886
  %3640 = vmatpush.msra.mxu0 %v2882
  %3641 = vmatpush.msra.mxu0 %v2878
  %3642 = vmatpush.msra.mxu0 %v2874
  %3643 = vmatpush.msra.mxu0 %v2870
  %3644 = vmatpush.msra.mxu0 %v2866
  %3645 = vmatpush.msra.mxu0 %v2862
  %3646 = vmatpush.msra.mxu0 %v2858
  %3647 = vmatpush.msra.mxu0 %v2854
  %3648 = vmatmul.f32.gmra.mxu0 %v3046
  %v3649 = vpop.f32.mrf.mxu0
  %v3650 = vadd.f32 0.0, %v3649
  %3651 = vmatmul.f32.gmra.mxu0 %v3054
  %v3652 = vpop.f32.mrf.mxu0
  %v3653 = vadd.f32 0.0, %v3652
  %3654 = vmatmul.f32.gmra.mxu0 %v3060
  %v3655 = vpop.f32.mrf.mxu0
  %v3656 = vadd.f32 0.0, %v3655
  %3657 = vmatmul.f32.gmra.mxu0 %v3066
  %v3658 = vpop.f32.mrf.mxu0
  %v3659 = vadd.f32 0.0, %v3658
  %3660 = vmatmul.f32.gmra.mxu0 %v3072
  %v3661 = vpop.f32.mrf.mxu0
  %v3662 = vadd.f32 0.0, %v3661
  %3663 = vmatmul.f32.gmra.mxu0 %v3078
  %v3664 = vpop.f32.mrf.mxu0
  %v3665 = vadd.f32 0.0, %v3664
  %3666 = vmatmul.f32.gmra.mxu0 %v3084
  %v3667 = vpop.f32.mrf.mxu0
  %v3668 = vadd.f32 0.0, %v3667
  %3669 = vmatmul.f32.gmra.mxu0 %v3090
  %v3670 = vpop.f32.mrf.mxu0
  %v3671 = vadd.f32 0.0, %v3670
  %3672 = vmatmul.f32.gmra.mxu0 %v3096
  %v3673 = vpop.f32.mrf.mxu0
  %v3674 = vadd.f32 0.0, %v3673
  %3675 = vmatmul.f32.gmra.mxu0 %v3102
  %v3676 = vpop.f32.mrf.mxu0
  %v3677 = vadd.f32 0.0, %v3676
  %3678 = vmatmul.f32.gmra.mxu0 %v3108
  %v3679 = vpop.f32.mrf.mxu0
  %v3680 = vadd.f32 0.0, %v3679
  %3681 = vmatmul.f32.gmra.mxu0 %v3114
  %v3682 = vpop.f32.mrf.mxu0
  %v3683 = vadd.f32 0.0, %v3682
  %3684 = vdwg.mxu0
  %3685 = vmatpush.msra.mxu0 %v2978
  %3686 = vmatpush.msra.mxu0 %v2974
  %3687 = vmatpush.msra.mxu0 %v2970
  %3688 = vmatpush.msra.mxu0 %v2966
  %3689 = vmatpush.msra.mxu0 %v2962
  %3690 = vmatpush.msra.mxu0 %v2958
  %3691 = vmatpush.msra.mxu0 %v2954
  %3692 = vmatpush.msra.mxu0 %v2950
  %3693 = vmatpush.msra.mxu0 %v2946
  %3694 = vmatpush.msra.mxu0 %v2942
  %3695 = vmatpush.msra.mxu0 %v2938
  %3696 = vmatpush.msra.mxu0 %v2934
  %3697 = vmatpush.msra.mxu0 %v2930
  %3698 = vmatpush.msra.mxu0 %v2926
  %3699 = vmatpush.msra.mxu0 %v2922
  %3700 = vmatpush.msra.mxu0 %v2918
  %3701 = vmatmul.f32.gmra.mxu0 %v3049
  %v3702 = vpop.f32.mrf.mxu0
  %v3703 = vadd.f32 %v3650, %v3702
  %3704 = vmatmul.f32.gmra.mxu0 %v3056
  %v3705 = vpop.f32.mrf.mxu0
  %v3706 = vadd.f32 %v3653, %v3705
  %3707 = vmatmul.f32.gmra.mxu0 %v3062
  %v3708 = vpop.f32.mrf.mxu0
  %v3709 = vadd.f32 %v3656, %v3708
  %3710 = vmatmul.f32.gmra.mxu0 %v3068
  %v3711 = vpop.f32.mrf.mxu0
  %v3712 = vadd.f32 %v3659, %v3711
  %3713 = vmatmul.f32.gmra.mxu0 %v3074
  %v3714 = vpop.f32.mrf.mxu0
  %v3715 = vadd.f32 %v3662, %v3714
  %3716 = vmatmul.f32.gmra.mxu0 %v3080
  %v3717 = vpop.f32.mrf.mxu0
  %v3718 = vadd.f32 %v3665, %v3717
  %3719 = vmatmul.f32.gmra.mxu0 %v3086
  %v3720 = vpop.f32.mrf.mxu0
  %v3721 = vadd.f32 %v3668, %v3720
  %3722 = vmatmul.f32.gmra.mxu0 %v3092
  %v3723 = vpop.f32.mrf.mxu0
  %v3724 = vadd.f32 %v3671, %v3723
  %3725 = vmatmul.f32.gmra.mxu0 %v3098
  %v3726 = vpop.f32.mrf.mxu0
  %v3727 = vadd.f32 %v3674, %v3726
  %3728 = vmatmul.f32.gmra.mxu0 %v3104
  %v3729 = vpop.f32.mrf.mxu0
  %v3730 = vadd.f32 %v3677, %v3729
  %3731 = vmatmul.f32.gmra.mxu0 %v3110
  %v3732 = vpop.f32.mrf.mxu0
  %v3733 = vadd.f32 %v3680, %v3732
  %3734 = vmatmul.f32.gmra.mxu0 %v3116
  %v3735 = vpop.f32.mrf.mxu0
  %v3736 = vadd.f32 %v3683, %v3735
  %3737 = vdwg.mxu0
  %3738 = vmatpush.msra.mxu0 %v3042
  %3739 = vmatpush.msra.mxu0 %v3038
  %3740 = vmatpush.msra.mxu0 %v3034
  %3741 = vmatpush.msra.mxu0 %v3030
  %3742 = vmatpush.msra.mxu0 %v3026
  %3743 = vmatpush.msra.mxu0 %v3022
  %3744 = vmatpush.msra.mxu0 %v3018
  %3745 = vmatpush.msra.mxu0 %v3014
  %3746 = vmatpush.msra.mxu0 %v3010
  %3747 = vmatpush.msra.mxu0 %v3006
  %3748 = vmatpush.msra.mxu0 %v3002
  %3749 = vmatpush.msra.mxu0 %v2998
  %3750 = vmatpush.msra.mxu0 %v2994
  %3751 = vmatpush.msra.mxu0 %v2990
  %3752 = vmatpush.msra.mxu0 %v2986
  %3753 = vmatpush.msra.mxu0 %v2982
  %3754 = vmatmul.f32.gmra.mxu0 %v3052
  %v3755 = vpop.f32.mrf.mxu0
  %v3756 = vadd.f32 %v3703, %v3755
  %3757 = vmatmul.f32.gmra.mxu0 %v3058
  %v3758 = vpop.f32.mrf.mxu0
  %v3759 = vadd.f32 %v3706, %v3758
  %3760 = vmatmul.f32.gmra.mxu0 %v3064
  %v3761 = vpop.f32.mrf.mxu0
  %v3762 = vadd.f32 %v3709, %v3761
  %3763 = vmatmul.f32.gmra.mxu0 %v3070
  %v3764 = vpop.f32.mrf.mxu0
  %v3765 = vadd.f32 %v3712, %v3764
  %3766 = vmatmul.f32.gmra.mxu0 %v3076
  %v3767 = vpop.f32.mrf.mxu0
  %v3768 = vadd.f32 %v3715, %v3767
  %3769 = vmatmul.f32.gmra.mxu0 %v3082
  %v3770 = vpop.f32.mrf.mxu0
  %v3771 = vadd.f32 %v3718, %v3770
  %3772 = vmatmul.f32.gmra.mxu0 %v3088
  %v3773 = vpop.f32.mrf.mxu0
  %v3774 = vadd.f32 %v3721, %v3773
  %3775 = vmatmul.f32.gmra.mxu0 %v3094
  %v3776 = vpop.f32.mrf.mxu0
  %v3777 = vadd.f32 %v3724, %v3776
  %3778 = vmatmul.f32.gmra.mxu0 %v3100
  %v3779 = vpop.f32.mrf.mxu0
  %v3780 = vadd.f32 %v3727, %v3779
  %3781 = vmatmul.f32.gmra.mxu0 %v3106
  %v3782 = vpop.f32.mrf.mxu0
  %v3783 = vadd.f32 %v3730, %v3782
  %3784 = vmatmul.f32.gmra.mxu0 %v3112
  %v3785 = vpop.f32.mrf.mxu0
  %v3786 = vadd.f32 %v3733, %v3785
  %3787 = vmatmul.f32.gmra.mxu0 %v3118
  %v3788 = vpop.f32.mrf.mxu0
  %v3789 = vadd.f32 %v3736, %v3788
  %3790 = vdwg.mxu0
  %v3791 = vadd.f32 %v2802, %v3279
  %v3792 = vadd.f32 %v2803, %v3438
  %v3793 = vadd.f32 %v2804, %v3597
  %v3794 = vadd.f32 %v2805, %v3756
  %v3795 = vadd.f32 %v2806, %v3282
  %v3796 = vadd.f32 %v2807, %v3441
  %v3797 = vadd.f32 %v2808, %v3600
  %v3798 = vadd.f32 %v2809, %v3759
  %v3799 = vadd.f32 %v2810, %v3285
  %v3800 = vadd.f32 %v2811, %v3444
  %v3801 = vadd.f32 %v2812, %v3603
  %v3802 = vadd.f32 %v2813, %v3762
  %v3803 = vadd.f32 %v2814, %v3288
  %v3804 = vadd.f32 %v2815, %v3447
  %v3805 = vadd.f32 %v2816, %v3606
  %v3806 = vadd.f32 %v2817, %v3765
  %v3807 = vadd.f32 %v2818, %v3291
  %v3808 = vadd.f32 %v2819, %v3450
  %v3809 = vadd.f32 %v2820, %v3609
  %v3810 = vadd.f32 %v2821, %v3768
  %v3811 = vadd.f32 %v2822, %v3294
  %v3812 = vadd.f32 %v2823, %v3453
  %v3813 = vadd.f32 %v2824, %v3612
  %v3814 = vadd.f32 %v2825, %v3771
  %v3815 = vadd.f32 %v2826, %v3297
  %v3816 = vadd.f32 %v2827, %v3456
  %v3817 = vadd.f32 %v2828, %v3615
  %v3818 = vadd.f32 %v2829, %v3774
  %v3819 = vadd.f32 %v2830, %v3300
  %v3820 = vadd.f32 %v2831, %v3459
  %v3821 = vadd.f32 %v2832, %v3618
  %v3822 = vadd.f32 %v2833, %v3777
  %v3823 = vadd.f32 %v2834, %v3303
  %v3824 = vadd.f32 %v2835, %v3462
  %v3825 = vadd.f32 %v2836, %v3621
  %v3826 = vadd.f32 %v2837, %v3780
  %v3827 = vadd.f32 %v2838, %v3306
  %v3828 = vadd.f32 %v2839, %v3465
  %v3829 = vadd.f32 %v2840, %v3624
  %v3830 = vadd.f32 %v2841, %v3783
  %v3831 = vadd.f32 %v2842, %v3309
  %v3832 = vadd.f32 %v2843, %v3468
  %v3833 = vadd.f32 %v2844, %v3627
  %v3834 = vadd.f32 %v2845, %v3786
  %v3835 = vadd.f32 %v2846, %v3312
  %v3836 = vadd.f32 %v2847, %v3471
  %v3837 = vadd.f32 %v2848, %v3630
  %v3838 = vadd.f32 %v2849, %v3789
  %s3839 = scalar_lea.vmem %s1, 6144
  %v3840 = vld [vmem:[%s3839] sm:$0xff]
  %v3841 = vld [vmem:[%s3839 + $0x8] sm:$0xff]
  %v3842 = vld [vmem:[%s3839 + $0x10] sm:$0xff]
  %v3843 = vld [vmem:[%s3839 + $0x18] sm:$0xff]
  %v3844 = vld [vmem:[%s3839 + $0x20] sm:$0xff]
  %v3845 = vld [vmem:[%s3839 + $0x28] sm:$0xff]
  %v3846 = vld [vmem:[%s3839 + $0x30] sm:$0xff]
  %v3847 = vld [vmem:[%s3839 + $0x38] sm:$0xff]
  %v3848 = vld [vmem:[%s3839 + $0x40] sm:$0xff]
  %v3849 = vld [vmem:[%s3839 + $0x48] sm:$0xff]
  %v3850 = vld [vmem:[%s3839 + $0x50] sm:$0xff]
  %v3851 = vld [vmem:[%s3839 + $0x58] sm:$0xff]
  %v3852 = vld [vmem:[%s3839 + $0x60] sm:$0xff]
  %v3853 = vld [vmem:[%s3839 + $0x68] sm:$0xff]
  %v3854 = vld [vmem:[%s3839 + $0x70] sm:$0xff]
  %v3855 = vld [vmem:[%s3839 + $0x78] sm:$0xff]
  %v3856 = vld [vmem:[%s3839 + $0x80] sm:$0xff]
  %v3857 = vld [vmem:[%s3839 + $0x88] sm:$0xff]
  %v3858 = vld [vmem:[%s3839 + $0x90] sm:$0xff]
  %v3859 = vld [vmem:[%s3839 + $0x98] sm:$0xff]
  %v3860 = vld [vmem:[%s3839 + $0xa0] sm:$0xff]
  %v3861 = vld [vmem:[%s3839 + $0xa8] sm:$0xff]
  %v3862 = vld [vmem:[%s3839 + $0xb0] sm:$0xff]
  %v3863 = vld [vmem:[%s3839 + $0xb8] sm:$0xff]
  %v3864 = vld [vmem:[%s3839 + $0xc0] sm:$0xff]
  %v3865 = vld [vmem:[%s3839 + $0xc8] sm:$0xff]
  %v3866 = vld [vmem:[%s3839 + $0xd0] sm:$0xff]
  %v3867 = vld [vmem:[%s3839 + $0xd8] sm:$0xff]
  %v3868 = vld [vmem:[%s3839 + $0xe0] sm:$0xff]
  %v3869 = vld [vmem:[%s3839 + $0xe8] sm:$0xff]
  %v3870 = vld [vmem:[%s3839 + $0xf0] sm:$0xff]
  %v3871 = vld [vmem:[%s3839 + $0xf8] sm:$0xff]
  %v3872 = vld [vmem:[%s3839 + $0x100] sm:$0xff]
  %v3873 = vld [vmem:[%s3839 + $0x108] sm:$0xff]
  %v3874 = vld [vmem:[%s3839 + $0x110] sm:$0xff]
  %v3875 = vld [vmem:[%s3839 + $0x118] sm:$0xff]
  %v3876 = vld [vmem:[%s3839 + $0x120] sm:$0xff]
  %v3877 = vld [vmem:[%s3839 + $0x128] sm:$0xff]
  %v3878 = vld [vmem:[%s3839 + $0x130] sm:$0xff]
  %v3879 = vld [vmem:[%s3839 + $0x138] sm:$0xff]
  %v3880 = vld [vmem:[%s3839 + $0x140] sm:$0xff]
  %v3881 = vld [vmem:[%s3839 + $0x148] sm:$0xff]
  %v3882 = vld [vmem:[%s3839 + $0x150] sm:$0xff]
  %v3883 = vld [vmem:[%s3839 + $0x158] sm:$0xff]
  %v3884 = vld [vmem:[%s3839 + $0x160] sm:$0xff]
  %v3885 = vld [vmem:[%s3839 + $0x168] sm:$0xff]
  %v3886 = vld [vmem:[%s3839 + $0x170] sm:$0xff]
  %v3887 = vld [vmem:[%s3839 + $0x178] sm:$0xff]
  %v3888 = vld [vmem:[%s3839 + $0x180] sm:$0xff]
  %v3889 = vld [vmem:[%s3839 + $0x188] sm:$0xff]
  %v3890 = vld [vmem:[%s3839 + $0x190] sm:$0xff]
  %v3891 = vld [vmem:[%s3839 + $0x198] sm:$0xff]
  %v3892 = vld [vmem:[%s3839 + $0x1a0] sm:$0xff]
  %v3893 = vld [vmem:[%s3839 + $0x1a8] sm:$0xff]
  %v3894 = vld [vmem:[%s3839 + $0x1b0] sm:$0xff]
  %v3895 = vld [vmem:[%s3839 + $0x1b8] sm:$0xff]
  %v3896 = vld [vmem:[%s3839 + $0x1c0] sm:$0xff]
  %v3897 = vld [vmem:[%s3839 + $0x1c8] sm:$0xff]
  %v3898 = vld [vmem:[%s3839 + $0x1d0] sm:$0xff]
  %v3899 = vld [vmem:[%s3839 + $0x1d8] sm:$0xff]
  %v3900 = vld [vmem:[%s3839 + $0x1e0] sm:$0xff]
  %v3901 = vld [vmem:[%s3839 + $0x1e8] sm:$0xff]
  %v3902 = vld [vmem:[%s3839 + $0x1f0] sm:$0xff]
  %v3903 = vld [vmem:[%s3839 + $0x1f8] sm:$0xff]
  %v3904 = vld [vmem:[%s3839 + $0x200] sm:$0xff]
  %v3905 = vld [vmem:[%s3839 + $0x208] sm:$0xff]
  %v3906 = vld [vmem:[%s3839 + $0x210] sm:$0xff]
  %v3907 = vld [vmem:[%s3839 + $0x218] sm:$0xff]
  %v3908 = vld [vmem:[%s3839 + $0x220] sm:$0xff]
  %v3909 = vld [vmem:[%s3839 + $0x228] sm:$0xff]
  %v3910 = vld [vmem:[%s3839 + $0x230] sm:$0xff]
  %v3911 = vld [vmem:[%s3839 + $0x238] sm:$0xff]
  %v3912 = vld [vmem:[%s3839 + $0x240] sm:$0xff]
  %v3913 = vld [vmem:[%s3839 + $0x248] sm:$0xff]
  %v3914 = vld [vmem:[%s3839 + $0x250] sm:$0xff]
  %v3915 = vld [vmem:[%s3839 + $0x258] sm:$0xff]
  %v3916 = vld [vmem:[%s3839 + $0x260] sm:$0xff]
  %v3917 = vld [vmem:[%s3839 + $0x268] sm:$0xff]
  %v3918 = vld [vmem:[%s3839 + $0x270] sm:$0xff]
  %v3919 = vld [vmem:[%s3839 + $0x278] sm:$0xff]
  %v3920 = vld [vmem:[%s3839 + $0x280] sm:$0xff]
  %v3921 = vld [vmem:[%s3839 + $0x288] sm:$0xff]
  %v3922 = vld [vmem:[%s3839 + $0x290] sm:$0xff]
  %v3923 = vld [vmem:[%s3839 + $0x298] sm:$0xff]
  %v3924 = vld [vmem:[%s3839 + $0x2a0] sm:$0xff]
  %v3925 = vld [vmem:[%s3839 + $0x2a8] sm:$0xff]
  %v3926 = vld [vmem:[%s3839 + $0x2b0] sm:$0xff]
  %v3927 = vld [vmem:[%s3839 + $0x2b8] sm:$0xff]
  %v3928 = vld [vmem:[%s3839 + $0x2c0] sm:$0xff]
  %v3929 = vld [vmem:[%s3839 + $0x2c8] sm:$0xff]
  %v3930 = vld [vmem:[%s3839 + $0x2d0] sm:$0xff]
  %v3931 = vld [vmem:[%s3839 + $0x2d8] sm:$0xff]
  %v3932 = vld [vmem:[%s3839 + $0x2e0] sm:$0xff]
  %v3933 = vld [vmem:[%s3839 + $0x2e8] sm:$0xff]
  %v3934 = vld [vmem:[%s3839 + $0x2f0] sm:$0xff]
  %v3935 = vld [vmem:[%s3839 + $0x2f8] sm:$0xff]
  %v3936 = vld [vmem:[%s3839 + $0x300] sm:$0xff]
  %v3937 = vld [vmem:[%s3839 + $0x308] sm:$0xff]
  %v3938 = vld [vmem:[%s3839 + $0x310] sm:$0xff]
  %v3939 = vld [vmem:[%s3839 + $0x318] sm:$0xff]
  %v3940 = vld [vmem:[%s3839 + $0x320] sm:$0xff]
  %v3941 = vld [vmem:[%s3839 + $0x328] sm:$0xff]
  %v3942 = vld [vmem:[%s3839 + $0x330] sm:$0xff]
  %v3943 = vld [vmem:[%s3839 + $0x338] sm:$0xff]
  %v3944 = vld [vmem:[%s3839 + $0x340] sm:$0xff]
  %v3945 = vld [vmem:[%s3839 + $0x348] sm:$0xff]
  %v3946 = vld [vmem:[%s3839 + $0x350] sm:$0xff]
  %v3947 = vld [vmem:[%s3839 + $0x358] sm:$0xff]
  %v3948 = vld [vmem:[%s3839 + $0x360] sm:$0xff]
  %v3949 = vld [vmem:[%s3839 + $0x368] sm:$0xff]
  %v3950 = vld [vmem:[%s3839 + $0x370] sm:$0xff]
  %v3951 = vld [vmem:[%s3839 + $0x378] sm:$0xff]
  %v3952 = vld [vmem:[%s3839 + $0x380] sm:$0xff]
  %v3953 = vld [vmem:[%s3839 + $0x388] sm:$0xff]
  %v3954 = vld [vmem:[%s3839 + $0x390] sm:$0xff]
  %v3955 = vld [vmem:[%s3839 + $0x398] sm:$0xff]
  %v3956 = vld [vmem:[%s3839 + $0x3a0] sm:$0xff]
  %v3957 = vld [vmem:[%s3839 + $0x3a8] sm:$0xff]
  %v3958 = vld [vmem:[%s3839 + $0x3b0] sm:$0xff]
  %v3959 = vld [vmem:[%s3839 + $0x3b8] sm:$0xff]
  %v3960 = vld [vmem:[%s3839 + $0x3c0] sm:$0xff]
  %v3961 = vld [vmem:[%s3839 + $0x3c8] sm:$0xff]
  %v3962 = vld [vmem:[%s3839 + $0x3d0] sm:$0xff]
  %v3963 = vld [vmem:[%s3839 + $0x3d8] sm:$0xff]
  %v3964 = vld [vmem:[%s3839 + $0x3e0] sm:$0xff]
  %v3965 = vld [vmem:[%s3839 + $0x3e8] sm:$0xff]
  %v3966 = vld [vmem:[%s3839 + $0x3f0] sm:$0xff]
  %v3967 = vld [vmem:[%s3839 + $0x3f8] sm:$0xff]
  %v3968 = vld [vmem:[%s3839 + $0x400] sm:$0xff]
  %v3969 = vld [vmem:[%s3839 + $0x408] sm:$0xff]
  %v3970 = vld [vmem:[%s3839 + $0x410] sm:$0xff]
  %v3971 = vld [vmem:[%s3839 + $0x418] sm:$0xff]
  %v3972 = vld [vmem:[%s3839 + $0x420] sm:$0xff]
  %v3973 = vld [vmem:[%s3839 + $0x428] sm:$0xff]
  %v3974 = vld [vmem:[%s3839 + $0x430] sm:$0xff]
  %v3975 = vld [vmem:[%s3839 + $0x438] sm:$0xff]
  %v3976 = vld [vmem:[%s3839 + $0x440] sm:$0xff]
  %v3977 = vld [vmem:[%s3839 + $0x448] sm:$0xff]
  %v3978 = vld [vmem:[%s3839 + $0x450] sm:$0xff]
  %v3979 = vld [vmem:[%s3839 + $0x458] sm:$0xff]
  %v3980 = vld [vmem:[%s3839 + $0x460] sm:$0xff]
  %v3981 = vld [vmem:[%s3839 + $0x468] sm:$0xff]
  %v3982 = vld [vmem:[%s3839 + $0x470] sm:$0xff]
  %v3983 = vld [vmem:[%s3839 + $0x478] sm:$0xff]
  %v3984 = vld [vmem:[%s3839 + $0x480] sm:$0xff]
  %v3985 = vld [vmem:[%s3839 + $0x488] sm:$0xff]
  %v3986 = vld [vmem:[%s3839 + $0x490] sm:$0xff]
  %v3987 = vld [vmem:[%s3839 + $0x498] sm:$0xff]
  %v3988 = vld [vmem:[%s3839 + $0x4a0] sm:$0xff]
  %v3989 = vld [vmem:[%s3839 + $0x4a8] sm:$0xff]
  %v3990 = vld [vmem:[%s3839 + $0x4b0] sm:$0xff]
  %v3991 = vld [vmem:[%s3839 + $0x4b8] sm:$0xff]
  %v3992 = vld [vmem:[%s3839 + $0x4c0] sm:$0xff]
  %v3993 = vld [vmem:[%s3839 + $0x4c8] sm:$0xff]
  %v3994 = vld [vmem:[%s3839 + $0x4d0] sm:$0xff]
  %v3995 = vld [vmem:[%s3839 + $0x4d8] sm:$0xff]
  %v3996 = vld [vmem:[%s3839 + $0x4e0] sm:$0xff]
  %v3997 = vld [vmem:[%s3839 + $0x4e8] sm:$0xff]
  %v3998 = vld [vmem:[%s3839 + $0x4f0] sm:$0xff]
  %v3999 = vld [vmem:[%s3839 + $0x4f8] sm:$0xff]
  %v4000 = vld [vmem:[%s3839 + $0x500] sm:$0xff]
  %v4001 = vld [vmem:[%s3839 + $0x508] sm:$0xff]
  %v4002 = vld [vmem:[%s3839 + $0x510] sm:$0xff]
  %v4003 = vld [vmem:[%s3839 + $0x518] sm:$0xff]
  %v4004 = vld [vmem:[%s3839 + $0x520] sm:$0xff]
  %v4005 = vld [vmem:[%s3839 + $0x528] sm:$0xff]
  %v4006 = vld [vmem:[%s3839 + $0x530] sm:$0xff]
  %v4007 = vld [vmem:[%s3839 + $0x538] sm:$0xff]
  %v4008 = vld [vmem:[%s3839 + $0x540] sm:$0xff]
  %v4009 = vld [vmem:[%s3839 + $0x548] sm:$0xff]
  %v4010 = vld [vmem:[%s3839 + $0x550] sm:$0xff]
  %v4011 = vld [vmem:[%s3839 + $0x558] sm:$0xff]
  %v4012 = vld [vmem:[%s3839 + $0x560] sm:$0xff]
  %v4013 = vld [vmem:[%s3839 + $0x568] sm:$0xff]
  %v4014 = vld [vmem:[%s3839 + $0x570] sm:$0xff]
  %v4015 = vld [vmem:[%s3839 + $0x578] sm:$0xff]
  %v4016 = vld [vmem:[%s3839 + $0x580] sm:$0xff]
  %v4017 = vld [vmem:[%s3839 + $0x588] sm:$0xff]
  %v4018 = vld [vmem:[%s3839 + $0x590] sm:$0xff]
  %v4019 = vld [vmem:[%s3839 + $0x598] sm:$0xff]
  %v4020 = vld [vmem:[%s3839 + $0x5a0] sm:$0xff]
  %v4021 = vld [vmem:[%s3839 + $0x5a8] sm:$0xff]
  %v4022 = vld [vmem:[%s3839 + $0x5b0] sm:$0xff]
  %v4023 = vld [vmem:[%s3839 + $0x5b8] sm:$0xff]
  %v4024 = vld [vmem:[%s3839 + $0x5c0] sm:$0xff]
  %v4025 = vld [vmem:[%s3839 + $0x5c8] sm:$0xff]
  %v4026 = vld [vmem:[%s3839 + $0x5d0] sm:$0xff]
  %v4027 = vld [vmem:[%s3839 + $0x5d8] sm:$0xff]
  %v4028 = vld [vmem:[%s3839 + $0x5e0] sm:$0xff]
  %v4029 = vld [vmem:[%s3839 + $0x5e8] sm:$0xff]
  %v4030 = vld [vmem:[%s3839 + $0x5f0] sm:$0xff]
  %v4031 = vld [vmem:[%s3839 + $0x5f8] sm:$0xff]
  %vm4032 = vcmask 1043456
  %v4033 = vrot.slane %v14, 4
  %v4034 = vrot.slane %v17, 4
  %v4035 = vsel %vm4032, %v4033, %v4034
  %v4036 = vrot.slane %v15, 4
  %v4037 = vrot.slane %v18, 4
  %v4038 = vsel %vm4032, %v4036, %v4037
  %v4039 = vrot.slane %v16, 4
  %v4040 = vrot.slane %v19, 4
  %v4041 = vsel %vm4032, %v4039, %v4040
  %v4042 = vrot.slane %v20, 4
  %v4043 = vsel %vm4032, %v4034, %v4042
  %v4044 = vrot.slane %v21, 4
  %v4045 = vsel %vm4032, %v4037, %v4044
  %v4046 = vrot.slane %v22, 4
  %v4047 = vsel %vm4032, %v4040, %v4046
  %v4048 = vrot.slane %v23, 4
  %v4049 = vsel %vm4032, %v4042, %v4048
  %v4050 = vrot.slane %v24, 4
  %v4051 = vsel %vm4032, %v4044, %v4050
  %v4052 = vrot.slane %v25, 4
  %v4053 = vsel %vm4032, %v4046, %v4052
  %v4054 = vrot.slane %v26, 4
  %v4055 = vsel %vm4032, %v4048, %v4054
  %v4056 = vrot.slane %v27, 4
  %v4057 = vsel %vm4032, %v4050, %v4056
  %v4058 = vrot.slane %v28, 4
  %v4059 = vsel %vm4032, %v4052, %v4058
  %v4060 = vrot.slane %v29, 4
  %v4061 = vsel %vm4032, %v4054, %v4060
  %v4062 = vrot.slane %v30, 4
  %v4063 = vsel %vm4032, %v4056, %v4062
  %v4064 = vrot.slane %v31, 4
  %v4065 = vsel %vm4032, %v4058, %v4064
  %v4066 = vrot.slane %v32, 4
  %v4067 = vsel %vm4032, %v4060, %v4066
  %v4068 = vrot.slane %v33, 4
  %v4069 = vsel %vm4032, %v4062, %v4068
  %v4070 = vrot.slane %v34, 4
  %v4071 = vsel %vm4032, %v4064, %v4070
  %v4072 = vrot.slane %v35, 4
  %v4073 = vsel %vm4032, %v4066, %v4072
  %v4074 = vrot.slane %v36, 4
  %v4075 = vsel %vm4032, %v4068, %v4074
  %v4076 = vrot.slane %v37, 4
  %v4077 = vsel %vm4032, %v4070, %v4076
  %v4078 = vrot.slane %v38, 4
  %v4079 = vsel %vm4032, %v4072, %v4078
  %v4080 = vrot.slane %v39, 4
  %v4081 = vsel %vm4032, %v4074, %v4080
  %v4082 = vrot.slane %v40, 4
  %v4083 = vsel %vm4032, %v4076, %v4082
  %v4084 = vrot.slane %v41, 4
  %v4085 = vsel %vm4032, %v4078, %v4084
  %v4086 = vrot.slane %v42, 4
  %v4087 = vsel %vm4032, %v4080, %v4086
  %v4088 = vrot.slane %v43, 4
  %v4089 = vsel %vm4032, %v4082, %v4088
  %v4090 = vrot.slane %v44, 4
  %v4091 = vsel %vm4032, %v4084, %v4090
  %v4092 = vrot.slane %v45, 4
  %v4093 = vsel %vm4032, %v4086, %v4092
  %v4094 = vrot.slane %v46, 4
  %v4095 = vsel %vm4032, %v4088, %v4094
  %v4096 = vrot.slane %v47, 4
  %v4097 = vsel %vm4032, %v4090, %v4096
  %v4098 = vrot.slane %v48, 4
  %v4099 = vsel %vm4032, %v4092, %v4098
  %v4100 = vrot.slane %v49, 4
  %v4101 = vsel %vm4032, %v4094, %v4100
  %v4102 = vrot.slane %v50, 4
  %v4103 = vsel %vm4032, %v4096, %v4102
  %v4104 = vrot.slane %v51, 4
  %v4105 = vsel %vm4032, %v4098, %v4104
  %v4106 = vrot.slane %v52, 4
  %v4107 = vsel %vm4032, %v4100, %v4106
  %4144 = vmatpush.msra.mxu0 %v3900
  %4145 = vmatpush.msra.mxu0 %v3896
  %4146 = vmatpush.msra.mxu0 %v3892
  %4147 = vmatpush.msra.mxu0 %v3888
  %4148 = vmatpush.msra.mxu0 %v3884
  %4149 = vmatpush.msra.mxu0 %v3880
  %4150 = vmatpush.msra.mxu0 %v3876
  %4151 = vmatpush.msra.mxu0 %v3872
  %4152 = vmatpush.msra.mxu0 %v3868
  %4153 = vmatpush.msra.mxu0 %v3864
  %4154 = vmatpush.msra.mxu0 %v3860
  %4155 = vmatpush.msra.mxu0 %v3856
  %4156 = vmatpush.msra.mxu0 %v3852
  %4157 = vmatpush.msra.mxu0 %v3848
  %4158 = vmatpush.msra.mxu0 %v3844
  %4159 = vmatpush.msra.mxu0 %v3840
  %4160 = vmatmul.f32.gmra.mxu0 %v4035
  %v4161 = vpop.f32.mrf.mxu0
  %v4162 = vadd.f32 0.0, %v4161
  %4163 = vmatmul.f32.gmra.mxu0 %v4043
  %v4164 = vpop.f32.mrf.mxu0
  %v4165 = vadd.f32 0.0, %v4164
  %4166 = vmatmul.f32.gmra.mxu0 %v4049
  %v4167 = vpop.f32.mrf.mxu0
  %v4168 = vadd.f32 0.0, %v4167
  %4169 = vmatmul.f32.gmra.mxu0 %v4055
  %v4170 = vpop.f32.mrf.mxu0
  %v4171 = vadd.f32 0.0, %v4170
  %4172 = vmatmul.f32.gmra.mxu0 %v4061
  %v4173 = vpop.f32.mrf.mxu0
  %v4174 = vadd.f32 0.0, %v4173
  %4175 = vmatmul.f32.gmra.mxu0 %v4067
  %v4176 = vpop.f32.mrf.mxu0
  %v4177 = vadd.f32 0.0, %v4176
  %4178 = vmatmul.f32.gmra.mxu0 %v4073
  %v4179 = vpop.f32.mrf.mxu0
  %v4180 = vadd.f32 0.0, %v4179
  %4181 = vmatmul.f32.gmra.mxu0 %v4079
  %v4182 = vpop.f32.mrf.mxu0
  %v4183 = vadd.f32 0.0, %v4182
  %4184 = vmatmul.f32.gmra.mxu0 %v4085
  %v4185 = vpop.f32.mrf.mxu0
  %v4186 = vadd.f32 0.0, %v4185
  %4187 = vmatmul.f32.gmra.mxu0 %v4091
  %v4188 = vpop.f32.mrf.mxu0
  %v4189 = vadd.f32 0.0, %v4188
  %4190 = vmatmul.f32.gmra.mxu0 %v4097
  %v4191 = vpop.f32.mrf.mxu0
  %v4192 = vadd.f32 0.0, %v4191
  %4193 = vmatmul.f32.gmra.mxu0 %v4103
  %v4194 = vpop.f32.mrf.mxu0
  %v4195 = vadd.f32 0.0, %v4194
  %4196 = vdwg.mxu0
  %4197 = vmatpush.msra.mxu0 %v3964
  %4198 = vmatpush.msra.mxu0 %v3960
  %4199 = vmatpush.msra.mxu0 %v3956
  %4200 = vmatpush.msra.mxu0 %v3952
  %4201 = vmatpush.msra.mxu0 %v3948
  %4202 = vmatpush.msra.mxu0 %v3944
  %4203 = vmatpush.msra.mxu0 %v3940
  %4204 = vmatpush.msra.mxu0 %v3936
  %4205 = vmatpush.msra.mxu0 %v3932
  %4206 = vmatpush.msra.mxu0 %v3928
  %4207 = vmatpush.msra.mxu0 %v3924
  %4208 = vmatpush.msra.mxu0 %v3920
  %4209 = vmatpush.msra.mxu0 %v3916
  %4210 = vmatpush.msra.mxu0 %v3912
  %4211 = vmatpush.msra.mxu0 %v3908
  %4212 = vmatpush.msra.mxu0 %v3904
  %4213 = vmatmul.f32.gmra.mxu0 %v4038
  %v4214 = vpop.f32.mrf.mxu0
  %v4215 = vadd.f32 %v4162, %v4214
  %4216 = vmatmul.f32.gmra.mxu0 %v4045
  %v4217 = vpop.f32.mrf.mxu0
  %v4218 = vadd.f32 %v4165, %v4217
  %4219 = vmatmul.f32.gmra.mxu0 %v4051
  %v4220 = vpop.f32.mrf.mxu0
  %v4221 = vadd.f32 %v4168, %v4220
  %4222 = vmatmul.f32.gmra.mxu0 %v4057
  %v4223 = vpop.f32.mrf.mxu0
  %v4224 = vadd.f32 %v4171, %v4223
  %4225 = vmatmul.f32.gmra.mxu0 %v4063
  %v4226 = vpop.f32.mrf.mxu0
  %v4227 = vadd.f32 %v4174, %v4226
  %4228 = vmatmul.f32.gmra.mxu0 %v4069
  %v4229 = vpop.f32.mrf.mxu0
  %v4230 = vadd.f32 %v4177, %v4229
  %4231 = vmatmul.f32.gmra.mxu0 %v4075
  %v4232 = vpop.f32.mrf.mxu0
  %v4233 = vadd.f32 %v4180, %v4232
  %4234 = vmatmul.f32.gmra.mxu0 %v4081
  %v4235 = vpop.f32.mrf.mxu0
  %v4236 = vadd.f32 %v4183, %v4235
  %4237 = vmatmul.f32.gmra.mxu0 %v4087
  %v4238 = vpop.f32.mrf.mxu0
  %v4239 = vadd.f32 %v4186, %v4238
  %4240 = vmatmul.f32.gmra.mxu0 %v4093
  %v4241 = vpop.f32.mrf.mxu0
  %v4242 = vadd.f32 %v4189, %v4241
  %4243 = vmatmul.f32.gmra.mxu0 %v4099
  %v4244 = vpop.f32.mrf.mxu0
  %v4245 = vadd.f32 %v4192, %v4244
  %4246 = vmatmul.f32.gmra.mxu0 %v4105
  %v4247 = vpop.f32.mrf.mxu0
  %v4248 = vadd.f32 %v4195, %v4247
  %4249 = vdwg.mxu0
  %4250 = vmatpush.msra.mxu0 %v4028
  %4251 = vmatpush.msra.mxu0 %v4024
  %4252 = vmatpush.msra.mxu0 %v4020
  %4253 = vmatpush.msra.mxu0 %v4016
  %4254 = vmatpush.msra.mxu0 %v4012
  %4255 = vmatpush.msra.mxu0 %v4008
  %4256 = vmatpush.msra.mxu0 %v4004
  %4257 = vmatpush.msra.mxu0 %v4000
  %4258 = vmatpush.msra.mxu0 %v3996
  %4259 = vmatpush.msra.mxu0 %v3992
  %4260 = vmatpush.msra.mxu0 %v3988
  %4261 = vmatpush.msra.mxu0 %v3984
  %4262 = vmatpush.msra.mxu0 %v3980
  %4263 = vmatpush.msra.mxu0 %v3976
  %4264 = vmatpush.msra.mxu0 %v3972
  %4265 = vmatpush.msra.mxu0 %v3968
  %4266 = vmatmul.f32.gmra.mxu0 %v4041
  %v4267 = vpop.f32.mrf.mxu0
  %v4268 = vadd.f32 %v4215, %v4267
  %4269 = vmatmul.f32.gmra.mxu0 %v4047
  %v4270 = vpop.f32.mrf.mxu0
  %v4271 = vadd.f32 %v4218, %v4270
  %4272 = vmatmul.f32.gmra.mxu0 %v4053
  %v4273 = vpop.f32.mrf.mxu0
  %v4274 = vadd.f32 %v4221, %v4273
  %4275 = vmatmul.f32.gmra.mxu0 %v4059
  %v4276 = vpop.f32.mrf.mxu0
  %v4277 = vadd.f32 %v4224, %v4276
  %4278 = vmatmul.f32.gmra.mxu0 %v4065
  %v4279 = vpop.f32.mrf.mxu0
  %v4280 = vadd.f32 %v4227, %v4279
  %4281 = vmatmul.f32.gmra.mxu0 %v4071
  %v4282 = vpop.f32.mrf.mxu0
  %v4283 = vadd.f32 %v4230, %v4282
  %4284 = vmatmul.f32.gmra.mxu0 %v4077
  %v4285 = vpop.f32.mrf.mxu0
  %v4286 = vadd.f32 %v4233, %v4285
  %4287 = vmatmul.f32.gmra.mxu0 %v4083
  %v4288 = vpop.f32.mrf.mxu0
  %v4289 = vadd.f32 %v4236, %v4288
  %4290 = vmatmul.f32.gmra.mxu0 %v4089
  %v4291 = vpop.f32.mrf.mxu0
  %v4292 = vadd.f32 %v4239, %v4291
  %4293 = vmatmul.f32.gmra.mxu0 %v4095
  %v4294 = vpop.f32.mrf.mxu0
  %v4295 = vadd.f32 %v4242, %v4294
  %4296 = vmatmul.f32.gmra.mxu0 %v4101
  %v4297 = vpop.f32.mrf.mxu0
  %v4298 = vadd.f32 %v4245, %v4297
  %4299 = vmatmul.f32.gmra.mxu0 %v4107
  %v4300 = vpop.f32.mrf.mxu0
  %v4301 = vadd.f32 %v4248, %v4300
  %4302 = vdwg.mxu0
  %4303 = vmatpush.msra.mxu0 %v3901
  %4304 = vmatpush.msra.mxu0 %v3897
  %4305 = vmatpush.msra.mxu0 %v3893
  %4306 = vmatpush.msra.mxu0 %v3889
  %4307 = vmatpush.msra.mxu0 %v3885
  %4308 = vmatpush.msra.mxu0 %v3881
  %4309 = vmatpush.msra.mxu0 %v3877
  %4310 = vmatpush.msra.mxu0 %v3873
  %4311 = vmatpush.msra.mxu0 %v3869
  %4312 = vmatpush.msra.mxu0 %v3865
  %4313 = vmatpush.msra.mxu0 %v3861
  %4314 = vmatpush.msra.mxu0 %v3857
  %4315 = vmatpush.msra.mxu0 %v3853
  %4316 = vmatpush.msra.mxu0 %v3849
  %4317 = vmatpush.msra.mxu0 %v3845
  %4318 = vmatpush.msra.mxu0 %v3841
  %4319 = vmatmul.f32.gmra.mxu0 %v4035
  %v4320 = vpop.f32.mrf.mxu0
  %v4321 = vadd.f32 0.0, %v4320
  %4322 = vmatmul.f32.gmra.mxu0 %v4043
  %v4323 = vpop.f32.mrf.mxu0
  %v4324 = vadd.f32 0.0, %v4323
  %4325 = vmatmul.f32.gmra.mxu0 %v4049
  %v4326 = vpop.f32.mrf.mxu0
  %v4327 = vadd.f32 0.0, %v4326
  %4328 = vmatmul.f32.gmra.mxu0 %v4055
  %v4329 = vpop.f32.mrf.mxu0
  %v4330 = vadd.f32 0.0, %v4329
  %4331 = vmatmul.f32.gmra.mxu0 %v4061
  %v4332 = vpop.f32.mrf.mxu0
  %v4333 = vadd.f32 0.0, %v4332
  %4334 = vmatmul.f32.gmra.mxu0 %v4067
  %v4335 = vpop.f32.mrf.mxu0
  %v4336 = vadd.f32 0.0, %v4335
  %4337 = vmatmul.f32.gmra.mxu0 %v4073
  %v4338 = vpop.f32.mrf.mxu0
  %v4339 = vadd.f32 0.0, %v4338
  %4340 = vmatmul.f32.gmra.mxu0 %v4079
  %v4341 = vpop.f32.mrf.mxu0
  %v4342 = vadd.f32 0.0, %v4341
  %4343 = vmatmul.f32.gmra.mxu0 %v4085
  %v4344 = vpop.f32.mrf.mxu0
  %v4345 = vadd.f32 0.0, %v4344
  %4346 = vmatmul.f32.gmra.mxu0 %v4091
  %v4347 = vpop.f32.mrf.mxu0
  %v4348 = vadd.f32 0.0, %v4347
  %4349 = vmatmul.f32.gmra.mxu0 %v4097
  %v4350 = vpop.f32.mrf.mxu0
  %v4351 = vadd.f32 0.0, %v4350
  %4352 = vmatmul.f32.gmra.mxu0 %v4103
  %v4353 = vpop.f32.mrf.mxu0
  %v4354 = vadd.f32 0.0, %v4353
  %4355 = vdwg.mxu0
  %4356 = vmatpush.msra.mxu0 %v3965
  %4357 = vmatpush.msra.mxu0 %v3961
  %4358 = vmatpush.msra.mxu0 %v3957
  %4359 = vmatpush.msra.mxu0 %v3953
  %4360 = vmatpush.msra.mxu0 %v3949
  %4361 = vmatpush.msra.mxu0 %v3945
  %4362 = vmatpush.msra.mxu0 %v3941
  %4363 = vmatpush.msra.mxu0 %v3937
  %4364 = vmatpush.msra.mxu0 %v3933
  %4365 = vmatpush.msra.mxu0 %v3929
  %4366 = vmatpush.msra.mxu0 %v3925
  %4367 = vmatpush.msra.mxu0 %v3921
  %4368 = vmatpush.msra.mxu0 %v3917
  %4369 = vmatpush.msra.mxu0 %v3913
  %4370 = vmatpush.msra.mxu0 %v3909
  %4371 = vmatpush.msra.mxu0 %v3905
  %4372 = vmatmul.f32.gmra.mxu0 %v4038
  %v4373 = vpop.f32.mrf.mxu0
  %v4374 = vadd.f32 %v4321, %v4373
  %4375 = vmatmul.f32.gmra.mxu0 %v4045
  %v4376 = vpop.f32.mrf.mxu0
  %v4377 = vadd.f32 %v4324, %v4376
  %4378 = vmatmul.f32.gmra.mxu0 %v4051
  %v4379 = vpop.f32.mrf.mxu0
  %v4380 = vadd.f32 %v4327, %v4379
  %4381 = vmatmul.f32.gmra.mxu0 %v4057
  %v4382 = vpop.f32.mrf.mxu0
  %v4383 = vadd.f32 %v4330, %v4382
  %4384 = vmatmul.f32.gmra.mxu0 %v4063
  %v4385 = vpop.f32.mrf.mxu0
  %v4386 = vadd.f32 %v4333, %v4385
  %4387 = vmatmul.f32.gmra.mxu0 %v4069
  %v4388 = vpop.f32.mrf.mxu0
  %v4389 = vadd.f32 %v4336, %v4388
  %4390 = vmatmul.f32.gmra.mxu0 %v4075
  %v4391 = vpop.f32.mrf.mxu0
  %v4392 = vadd.f32 %v4339, %v4391
  %4393 = vmatmul.f32.gmra.mxu0 %v4081
  %v4394 = vpop.f32.mrf.mxu0
  %v4395 = vadd.f32 %v4342, %v4394
  %4396 = vmatmul.f32.gmra.mxu0 %v4087
  %v4397 = vpop.f32.mrf.mxu0
  %v4398 = vadd.f32 %v4345, %v4397
  %4399 = vmatmul.f32.gmra.mxu0 %v4093
  %v4400 = vpop.f32.mrf.mxu0
  %v4401 = vadd.f32 %v4348, %v4400
  %4402 = vmatmul.f32.gmra.mxu0 %v4099
  %v4403 = vpop.f32.mrf.mxu0
  %v4404 = vadd.f32 %v4351, %v4403
  %4405 = vmatmul.f32.gmra.mxu0 %v4105
  %v4406 = vpop.f32.mrf.mxu0
  %v4407 = vadd.f32 %v4354, %v4406
  %4408 = vdwg.mxu0
  %4409 = vmatpush.msra.mxu0 %v4029
  %4410 = vmatpush.msra.mxu0 %v4025
  %4411 = vmatpush.msra.mxu0 %v4021
  %4412 = vmatpush.msra.mxu0 %v4017
  %4413 = vmatpush.msra.mxu0 %v4013
  %4414 = vmatpush.msra.mxu0 %v4009
  %4415 = vmatpush.msra.mxu0 %v4005
  %4416 = vmatpush.msra.mxu0 %v4001
  %4417 = vmatpush.msra.mxu0 %v3997
  %4418 = vmatpush.msra.mxu0 %v3993
  %4419 = vmatpush.msra.mxu0 %v3989
  %4420 = vmatpush.msra.mxu0 %v3985
  %4421 = vmatpush.msra.mxu0 %v3981
  %4422 = vmatpush.msra.mxu0 %v3977
  %4423 = vmatpush.msra.mxu0 %v3973
  %4424 = vmatpush.msra.mxu0 %v3969
  %4425 = vmatmul.f32.gmra.mxu0 %v4041
  %v4426 = vpop.f32.mrf.mxu0
  %v4427 = vadd.f32 %v4374, %v4426
  %4428 = vmatmul.f32.gmra.mxu0 %v4047
  %v4429 = vpop.f32.mrf.mxu0
  %v4430 = vadd.f32 %v4377, %v4429
  %4431 = vmatmul.f32.gmra.mxu0 %v4053
  %v4432 = vpop.f32.mrf.mxu0
  %v4433 = vadd.f32 %v4380, %v4432
  %4434 = vmatmul.f32.gmra.mxu0 %v4059
  %v4435 = vpop.f32.mrf.mxu0
  %v4436 = vadd.f32 %v4383, %v4435
  %4437 = vmatmul.f32.gmra.mxu0 %v4065
  %v4438 = vpop.f32.mrf.mxu0
  %v4439 = vadd.f32 %v4386, %v4438
  %4440 = vmatmul.f32.gmra.mxu0 %v4071
  %v4441 = vpop.f32.mrf.mxu0
  %v4442 = vadd.f32 %v4389, %v4441
  %4443 = vmatmul.f32.gmra.mxu0 %v4077
  %v4444 = vpop.f32.mrf.mxu0
  %v4445 = vadd.f32 %v4392, %v4444
  %4446 = vmatmul.f32.gmra.mxu0 %v4083
  %v4447 = vpop.f32.mrf.mxu0
  %v4448 = vadd.f32 %v4395, %v4447
  %4449 = vmatmul.f32.gmra.mxu0 %v4089
  %v4450 = vpop.f32.mrf.mxu0
  %v4451 = vadd.f32 %v4398, %v4450
  %4452 = vmatmul.f32.gmra.mxu0 %v4095
  %v4453 = vpop.f32.mrf.mxu0
  %v4454 = vadd.f32 %v4401, %v4453
  %4455 = vmatmul.f32.gmra.mxu0 %v4101
  %v4456 = vpop.f32.mrf.mxu0
  %v4457 = vadd.f32 %v4404, %v4456
  %4458 = vmatmul.f32.gmra.mxu0 %v4107
  %v4459 = vpop.f32.mrf.mxu0
  %v4460 = vadd.f32 %v4407, %v4459
  %4461 = vdwg.mxu0
  %4462 = vmatpush.msra.mxu0 %v3902
  %4463 = vmatpush.msra.mxu0 %v3898
  %4464 = vmatpush.msra.mxu0 %v3894
  %4465 = vmatpush.msra.mxu0 %v3890
  %4466 = vmatpush.msra.mxu0 %v3886
  %4467 = vmatpush.msra.mxu0 %v3882
  %4468 = vmatpush.msra.mxu0 %v3878
  %4469 = vmatpush.msra.mxu0 %v3874
  %4470 = vmatpush.msra.mxu0 %v3870
  %4471 = vmatpush.msra.mxu0 %v3866
  %4472 = vmatpush.msra.mxu0 %v3862
  %4473 = vmatpush.msra.mxu0 %v3858
  %4474 = vmatpush.msra.mxu0 %v3854
  %4475 = vmatpush.msra.mxu0 %v3850
  %4476 = vmatpush.msra.mxu0 %v3846
  %4477 = vmatpush.msra.mxu0 %v3842
  %4478 = vmatmul.f32.gmra.mxu0 %v4035
  %v4479 = vpop.f32.mrf.mxu0
  %v4480 = vadd.f32 0.0, %v4479
  %4481 = vmatmul.f32.gmra.mxu0 %v4043
  %v4482 = vpop.f32.mrf.mxu0
  %v4483 = vadd.f32 0.0, %v4482
  %4484 = vmatmul.f32.gmra.mxu0 %v4049
  %v4485 = vpop.f32.mrf.mxu0
  %v4486 = vadd.f32 0.0, %v4485
  %4487 = vmatmul.f32.gmra.mxu0 %v4055
  %v4488 = vpop.f32.mrf.mxu0
  %v4489 = vadd.f32 0.0, %v4488
  %4490 = vmatmul.f32.gmra.mxu0 %v4061
  %v4491 = vpop.f32.mrf.mxu0
  %v4492 = vadd.f32 0.0, %v4491
  %4493 = vmatmul.f32.gmra.mxu0 %v4067
  %v4494 = vpop.f32.mrf.mxu0
  %v4495 = vadd.f32 0.0, %v4494
  %4496 = vmatmul.f32.gmra.mxu0 %v4073
  %v4497 = vpop.f32.mrf.mxu0
  %v4498 = vadd.f32 0.0, %v4497
  %4499 = vmatmul.f32.gmra.mxu0 %v4079
  %v4500 = vpop.f32.mrf.mxu0
  %v4501 = vadd.f32 0.0, %v4500
  %4502 = vmatmul.f32.gmra.mxu0 %v4085
  %v4503 = vpop.f32.mrf.mxu0
  %v4504 = vadd.f32 0.0, %v4503
  %4505 = vmatmul.f32.gmra.mxu0 %v4091
  %v4506 = vpop.f32.mrf.mxu0
  %v4507 = vadd.f32 0.0, %v4506
  %4508 = vmatmul.f32.gmra.mxu0 %v4097
  %v4509 = vpop.f32.mrf.mxu0
  %v4510 = vadd.f32 0.0, %v4509
  %4511 = vmatmul.f32.gmra.mxu0 %v4103
  %v4512 = vpop.f32.mrf.mxu0
  %v4513 = vadd.f32 0.0, %v4512
  %4514 = vdwg.mxu0
  %4515 = vmatpush.msra.mxu0 %v3966
  %4516 = vmatpush.msra.mxu0 %v3962
  %4517 = vmatpush.msra.mxu0 %v3958
  %4518 = vmatpush.msra.mxu0 %v3954
  %4519 = vmatpush.msra.mxu0 %v3950
  %4520 = vmatpush.msra.mxu0 %v3946
  %4521 = vmatpush.msra.mxu0 %v3942
  %4522 = vmatpush.msra.mxu0 %v3938
  %4523 = vmatpush.msra.mxu0 %v3934
  %4524 = vmatpush.msra.mxu0 %v3930
  %4525 = vmatpush.msra.mxu0 %v3926
  %4526 = vmatpush.msra.mxu0 %v3922
  %4527 = vmatpush.msra.mxu0 %v3918
  %4528 = vmatpush.msra.mxu0 %v3914
  %4529 = vmatpush.msra.mxu0 %v3910
  %4530 = vmatpush.msra.mxu0 %v3906
  %4531 = vmatmul.f32.gmra.mxu0 %v4038
  %v4532 = vpop.f32.mrf.mxu0
  %v4533 = vadd.f32 %v4480, %v4532
  %4534 = vmatmul.f32.gmra.mxu0 %v4045
  %v4535 = vpop.f32.mrf.mxu0
  %v4536 = vadd.f32 %v4483, %v4535
  %4537 = vmatmul.f32.gmra.mxu0 %v4051
  %v4538 = vpop.f32.mrf.mxu0
  %v4539 = vadd.f32 %v4486, %v4538
  %4540 = vmatmul.f32.gmra.mxu0 %v4057
  %v4541 = vpop.f32.mrf.mxu0
  %v4542 = vadd.f32 %v4489, %v4541
  %4543 = vmatmul.f32.gmra.mxu0 %v4063
  %v4544 = vpop.f32.mrf.mxu0
  %v4545 = vadd.f32 %v4492, %v4544
  %4546 = vmatmul.f32.gmra.mxu0 %v4069
  %v4547 = vpop.f32.mrf.mxu0
  %v4548 = vadd.f32 %v4495, %v4547
  %4549 = vmatmul.f32.gmra.mxu0 %v4075
  %v4550 = vpop.f32.mrf.mxu0
  %v4551 = vadd.f32 %v4498, %v4550
  %4552 = vmatmul.f32.gmra.mxu0 %v4081
  %v4553 = vpop.f32.mrf.mxu0
  %v4554 = vadd.f32 %v4501, %v4553
  %4555 = vmatmul.f32.gmra.mxu0 %v4087
  %v4556 = vpop.f32.mrf.mxu0
  %v4557 = vadd.f32 %v4504, %v4556
  %4558 = vmatmul.f32.gmra.mxu0 %v4093
  %v4559 = vpop.f32.mrf.mxu0
  %v4560 = vadd.f32 %v4507, %v4559
  %4561 = vmatmul.f32.gmra.mxu0 %v4099
  %v4562 = vpop.f32.mrf.mxu0
  %v4563 = vadd.f32 %v4510, %v4562
  %4564 = vmatmul.f32.gmra.mxu0 %v4105
  %v4565 = vpop.f32.mrf.mxu0
  %v4566 = vadd.f32 %v4513, %v4565
  %4567 = vdwg.mxu0
  %4568 = vmatpush.msra.mxu0 %v4030
  %4569 = vmatpush.msra.mxu0 %v4026
  %4570 = vmatpush.msra.mxu0 %v4022
  %4571 = vmatpush.msra.mxu0 %v4018
  %4572 = vmatpush.msra.mxu0 %v4014
  %4573 = vmatpush.msra.mxu0 %v4010
  %4574 = vmatpush.msra.mxu0 %v4006
  %4575 = vmatpush.msra.mxu0 %v4002
  %4576 = vmatpush.msra.mxu0 %v3998
  %4577 = vmatpush.msra.mxu0 %v3994
  %4578 = vmatpush.msra.mxu0 %v3990
  %4579 = vmatpush.msra.mxu0 %v3986
  %4580 = vmatpush.msra.mxu0 %v3982
  %4581 = vmatpush.msra.mxu0 %v3978
  %4582 = vmatpush.msra.mxu0 %v3974
  %4583 = vmatpush.msra.mxu0 %v3970
  %4584 = vmatmul.f32.gmra.mxu0 %v4041
  %v4585 = vpop.f32.mrf.mxu0
  %v4586 = vadd.f32 %v4533, %v4585
  %4587 = vmatmul.f32.gmra.mxu0 %v4047
  %v4588 = vpop.f32.mrf.mxu0
  %v4589 = vadd.f32 %v4536, %v4588
  %4590 = vmatmul.f32.gmra.mxu0 %v4053
  %v4591 = vpop.f32.mrf.mxu0
  %v4592 = vadd.f32 %v4539, %v4591
  %4593 = vmatmul.f32.gmra.mxu0 %v4059
  %v4594 = vpop.f32.mrf.mxu0
  %v4595 = vadd.f32 %v4542, %v4594
  %4596 = vmatmul.f32.gmra.mxu0 %v4065
  %v4597 = vpop.f32.mrf.mxu0
  %v4598 = vadd.f32 %v4545, %v4597
  %4599 = vmatmul.f32.gmra.mxu0 %v4071
  %v4600 = vpop.f32.mrf.mxu0
  %v4601 = vadd.f32 %v4548, %v4600
  %4602 = vmatmul.f32.gmra.mxu0 %v4077
  %v4603 = vpop.f32.mrf.mxu0
  %v4604 = vadd.f32 %v4551, %v4603
  %4605 = vmatmul.f32.gmra.mxu0 %v4083
  %v4606 = vpop.f32.mrf.mxu0
  %v4607 = vadd.f32 %v4554, %v4606
  %4608 = vmatmul.f32.gmra.mxu0 %v4089
  %v4609 = vpop.f32.mrf.mxu0
  %v4610 = vadd.f32 %v4557, %v4609
  %4611 = vmatmul.f32.gmra.mxu0 %v4095
  %v4612 = vpop.f32.mrf.mxu0
  %v4613 = vadd.f32 %v4560, %v4612
  %4614 = vmatmul.f32.gmra.mxu0 %v4101
  %v4615 = vpop.f32.mrf.mxu0
  %v4616 = vadd.f32 %v4563, %v4615
  %4617 = vmatmul.f32.gmra.mxu0 %v4107
  %v4618 = vpop.f32.mrf.mxu0
  %v4619 = vadd.f32 %v4566, %v4618
  %4620 = vdwg.mxu0
  %4621 = vmatpush.msra.mxu0 %v3903
  %4622 = vmatpush.msra.mxu0 %v3899
  %4623 = vmatpush.msra.mxu0 %v3895
  %4624 = vmatpush.msra.mxu0 %v3891
  %4625 = vmatpush.msra.mxu0 %v3887
  %4626 = vmatpush.msra.mxu0 %v3883
  %4627 = vmatpush.msra.mxu0 %v3879
  %4628 = vmatpush.msra.mxu0 %v3875
  %4629 = vmatpush.msra.mxu0 %v3871
  %4630 = vmatpush.msra.mxu0 %v3867
  %4631 = vmatpush.msra.mxu0 %v3863
  %4632 = vmatpush.msra.mxu0 %v3859
  %4633 = vmatpush.msra.mxu0 %v3855
  %4634 = vmatpush.msra.mxu0 %v3851
  %4635 = vmatpush.msra.mxu0 %v3847
  %4636 = vmatpush.msra.mxu0 %v3843
  %4637 = vmatmul.f32.gmra.mxu0 %v4035
  %v4638 = vpop.f32.mrf.mxu0
  %v4639 = vadd.f32 0.0, %v4638
  %4640 = vmatmul.f32.gmra.mxu0 %v4043
  %v4641 = vpop.f32.mrf.mxu0
  %v4642 = vadd.f32 0.0, %v4641
  %4643 = vmatmul.f32.gmra.mxu0 %v4049
  %v4644 = vpop.f32.mrf.mxu0
  %v4645 = vadd.f32 0.0, %v4644
  %4646 = vmatmul.f32.gmra.mxu0 %v4055
  %v4647 = vpop.f32.mrf.mxu0
  %v4648 = vadd.f32 0.0, %v4647
  %4649 = vmatmul.f32.gmra.mxu0 %v4061
  %v4650 = vpop.f32.mrf.mxu0
  %v4651 = vadd.f32 0.0, %v4650
  %4652 = vmatmul.f32.gmra.mxu0 %v4067
  %v4653 = vpop.f32.mrf.mxu0
  %v4654 = vadd.f32 0.0, %v4653
  %4655 = vmatmul.f32.gmra.mxu0 %v4073
  %v4656 = vpop.f32.mrf.mxu0
  %v4657 = vadd.f32 0.0, %v4656
  %4658 = vmatmul.f32.gmra.mxu0 %v4079
  %v4659 = vpop.f32.mrf.mxu0
  %v4660 = vadd.f32 0.0, %v4659
  %4661 = vmatmul.f32.gmra.mxu0 %v4085
  %v4662 = vpop.f32.mrf.mxu0
  %v4663 = vadd.f32 0.0, %v4662
  %4664 = vmatmul.f32.gmra.mxu0 %v4091
  %v4665 = vpop.f32.mrf.mxu0
  %v4666 = vadd.f32 0.0, %v4665
  %4667 = vmatmul.f32.gmra.mxu0 %v4097
  %v4668 = vpop.f32.mrf.mxu0
  %v4669 = vadd.f32 0.0, %v4668
  %4670 = vmatmul.f32.gmra.mxu0 %v4103
  %v4671 = vpop.f32.mrf.mxu0
  %v4672 = vadd.f32 0.0, %v4671
  %4673 = vdwg.mxu0
  %4674 = vmatpush.msra.mxu0 %v3967
  %4675 = vmatpush.msra.mxu0 %v3963
  %4676 = vmatpush.msra.mxu0 %v3959
  %4677 = vmatpush.msra.mxu0 %v3955
  %4678 = vmatpush.msra.mxu0 %v3951
  %4679 = vmatpush.msra.mxu0 %v3947
  %4680 = vmatpush.msra.mxu0 %v3943
  %4681 = vmatpush.msra.mxu0 %v3939
  %4682 = vmatpush.msra.mxu0 %v3935
  %4683 = vmatpush.msra.mxu0 %v3931
  %4684 = vmatpush.msra.mxu0 %v3927
  %4685 = vmatpush.msra.mxu0 %v3923
  %4686 = vmatpush.msra.mxu0 %v3919
  %4687 = vmatpush.msra.mxu0 %v3915
  %4688 = vmatpush.msra.mxu0 %v3911
  %4689 = vmatpush.msra.mxu0 %v3907
  %4690 = vmatmul.f32.gmra.mxu0 %v4038
  %v4691 = vpop.f32.mrf.mxu0
  %v4692 = vadd.f32 %v4639, %v4691
  %4693 = vmatmul.f32.gmra.mxu0 %v4045
  %v4694 = vpop.f32.mrf.mxu0
  %v4695 = vadd.f32 %v4642, %v4694
  %4696 = vmatmul.f32.gmra.mxu0 %v4051
  %v4697 = vpop.f32.mrf.mxu0
  %v4698 = vadd.f32 %v4645, %v4697
  %4699 = vmatmul.f32.gmra.mxu0 %v4057
  %v4700 = vpop.f32.mrf.mxu0
  %v4701 = vadd.f32 %v4648, %v4700
  %4702 = vmatmul.f32.gmra.mxu0 %v4063
  %v4703 = vpop.f32.mrf.mxu0
  %v4704 = vadd.f32 %v4651, %v4703
  %4705 = vmatmul.f32.gmra.mxu0 %v4069
  %v4706 = vpop.f32.mrf.mxu0
  %v4707 = vadd.f32 %v4654, %v4706
  %4708 = vmatmul.f32.gmra.mxu0 %v4075
  %v4709 = vpop.f32.mrf.mxu0
  %v4710 = vadd.f32 %v4657, %v4709
  %4711 = vmatmul.f32.gmra.mxu0 %v4081
  %v4712 = vpop.f32.mrf.mxu0
  %v4713 = vadd.f32 %v4660, %v4712
  %4714 = vmatmul.f32.gmra.mxu0 %v4087
  %v4715 = vpop.f32.mrf.mxu0
  %v4716 = vadd.f32 %v4663, %v4715
  %4717 = vmatmul.f32.gmra.mxu0 %v4093
  %v4718 = vpop.f32.mrf.mxu0
  %v4719 = vadd.f32 %v4666, %v4718
  %4720 = vmatmul.f32.gmra.mxu0 %v4099
  %v4721 = vpop.f32.mrf.mxu0
  %v4722 = vadd.f32 %v4669, %v4721
  %4723 = vmatmul.f32.gmra.mxu0 %v4105
  %v4724 = vpop.f32.mrf.mxu0
  %v4725 = vadd.f32 %v4672, %v4724
  %4726 = vdwg.mxu0
  %4727 = vmatpush.msra.mxu0 %v4031
  %4728 = vmatpush.msra.mxu0 %v4027
  %4729 = vmatpush.msra.mxu0 %v4023
  %4730 = vmatpush.msra.mxu0 %v4019
  %4731 = vmatpush.msra.mxu0 %v4015
  %4732 = vmatpush.msra.mxu0 %v4011
  %4733 = vmatpush.msra.mxu0 %v4007
  %4734 = vmatpush.msra.mxu0 %v4003
  %4735 = vmatpush.msra.mxu0 %v3999
  %4736 = vmatpush.msra.mxu0 %v3995
  %4737 = vmatpush.msra.mxu0 %v3991
  %4738 = vmatpush.msra.mxu0 %v3987
  %4739 = vmatpush.msra.mxu0 %v3983
  %4740 = vmatpush.msra.mxu0 %v3979
  %4741 = vmatpush.msra.mxu0 %v3975
  %4742 = vmatpush.msra.mxu0 %v3971
  %4743 = vmatmul.f32.gmra.mxu0 %v4041
  %v4744 = vpop.f32.mrf.mxu0
  %v4745 = vadd.f32 %v4692, %v4744
  %4746 = vmatmul.f32.gmra.mxu0 %v4047
  %v4747 = vpop.f32.mrf.mxu0
  %v4748 = vadd.f32 %v4695, %v4747
  %4749 = vmatmul.f32.gmra.mxu0 %v4053
  %v4750 = vpop.f32.mrf.mxu0
  %v4751 = vadd.f32 %v4698, %v4750
  %4752 = vmatmul.f32.gmra.mxu0 %v4059
  %v4753 = vpop.f32.mrf.mxu0
  %v4754 = vadd.f32 %v4701, %v4753
  %4755 = vmatmul.f32.gmra.mxu0 %v4065
  %v4756 = vpop.f32.mrf.mxu0
  %v4757 = vadd.f32 %v4704, %v4756
  %4758 = vmatmul.f32.gmra.mxu0 %v4071
  %v4759 = vpop.f32.mrf.mxu0
  %v4760 = vadd.f32 %v4707, %v4759
  %4761 = vmatmul.f32.gmra.mxu0 %v4077
  %v4762 = vpop.f32.mrf.mxu0
  %v4763 = vadd.f32 %v4710, %v4762
  %4764 = vmatmul.f32.gmra.mxu0 %v4083
  %v4765 = vpop.f32.mrf.mxu0
  %v4766 = vadd.f32 %v4713, %v4765
  %4767 = vmatmul.f32.gmra.mxu0 %v4089
  %v4768 = vpop.f32.mrf.mxu0
  %v4769 = vadd.f32 %v4716, %v4768
  %4770 = vmatmul.f32.gmra.mxu0 %v4095
  %v4771 = vpop.f32.mrf.mxu0
  %v4772 = vadd.f32 %v4719, %v4771
  %4773 = vmatmul.f32.gmra.mxu0 %v4101
  %v4774 = vpop.f32.mrf.mxu0
  %v4775 = vadd.f32 %v4722, %v4774
  %4776 = vmatmul.f32.gmra.mxu0 %v4107
  %v4777 = vpop.f32.mrf.mxu0
  %v4778 = vadd.f32 %v4725, %v4777
  %4779 = vdwg.mxu0
  %v4780 = vadd.f32 %v3791, %v4268
  %v4781 = vadd.f32 %v3792, %v4427
  %v4782 = vadd.f32 %v3793, %v4586
  %v4783 = vadd.f32 %v3794, %v4745
  %v4784 = vadd.f32 %v3795, %v4271
  %v4785 = vadd.f32 %v3796, %v4430
  %v4786 = vadd.f32 %v3797, %v4589
  %v4787 = vadd.f32 %v3798, %v4748
  %v4788 = vadd.f32 %v3799, %v4274
  %v4789 = vadd.f32 %v3800, %v4433
  %v4790 = vadd.f32 %v3801, %v4592
  %v4791 = vadd.f32 %v3802, %v4751
  %v4792 = vadd.f32 %v3803, %v4277
  %v4793 = vadd.f32 %v3804, %v4436
  %v4794 = vadd.f32 %v3805, %v4595
  %v4795 = vadd.f32 %v3806, %v4754
  %v4796 = vadd.f32 %v3807, %v4280
  %v4797 = vadd.f32 %v3808, %v4439
  %v4798 = vadd.f32 %v3809, %v4598
  %v4799 = vadd.f32 %v3810, %v4757
  %v4800 = vadd.f32 %v3811, %v4283
  %v4801 = vadd.f32 %v3812, %v4442
  %v4802 = vadd.f32 %v3813, %v4601
  %v4803 = vadd.f32 %v3814, %v4760
  %v4804 = vadd.f32 %v3815, %v4286
  %v4805 = vadd.f32 %v3816, %v4445
  %v4806 = vadd.f32 %v3817, %v4604
  %v4807 = vadd.f32 %v3818, %v4763
  %v4808 = vadd.f32 %v3819, %v4289
  %v4809 = vadd.f32 %v3820, %v4448
  %v4810 = vadd.f32 %v3821, %v4607
  %v4811 = vadd.f32 %v3822, %v4766
  %v4812 = vadd.f32 %v3823, %v4292
  %v4813 = vadd.f32 %v3824, %v4451
  %v4814 = vadd.f32 %v3825, %v4610
  %v4815 = vadd.f32 %v3826, %v4769
  %v4816 = vadd.f32 %v3827, %v4295
  %v4817 = vadd.f32 %v3828, %v4454
  %v4818 = vadd.f32 %v3829, %v4613
  %v4819 = vadd.f32 %v3830, %v4772
  %v4820 = vadd.f32 %v3831, %v4298
  %v4821 = vadd.f32 %v3832, %v4457
  %v4822 = vadd.f32 %v3833, %v4616
  %v4823 = vadd.f32 %v3834, %v4775
  %v4824 = vadd.f32 %v3835, %v4301
  %v4825 = vadd.f32 %v3836, %v4460
  %v4826 = vadd.f32 %v3837, %v4619
  %v4827 = vadd.f32 %v3838, %v4778
  %v4828 = vld [vmem:[%s2] sm:$0xf]
  %v4830 = vperm.slane %v4828, 0
  %v4831 = vperm.slane %v4828, 1
  %v4832 = vperm.slane %v4828, 2
  %v4833 = vperm.slane %v4828, 3
  %v4838 = vadd.f32 %v4780, %v4830
  %v4839 = vadd.f32 %v4781, %v4831
  %v4840 = vadd.f32 %v4782, %v4832
  %v4841 = vadd.f32 %v4783, %v4833
  %v4842 = vadd.f32 %v4784, %v4830
  %v4843 = vadd.f32 %v4785, %v4831
  %v4844 = vadd.f32 %v4786, %v4832
  %v4845 = vadd.f32 %v4787, %v4833
  %v4846 = vadd.f32 %v4788, %v4830
  %v4847 = vadd.f32 %v4789, %v4831
  %v4848 = vadd.f32 %v4790, %v4832
  %v4849 = vadd.f32 %v4791, %v4833
  %v4850 = vadd.f32 %v4792, %v4830
  %v4851 = vadd.f32 %v4793, %v4831
  %v4852 = vadd.f32 %v4794, %v4832
  %v4853 = vadd.f32 %v4795, %v4833
  %v4854 = vadd.f32 %v4796, %v4830
  %v4855 = vadd.f32 %v4797, %v4831
  %v4856 = vadd.f32 %v4798, %v4832
  %v4857 = vadd.f32 %v4799, %v4833
  %v4858 = vadd.f32 %v4800, %v4830
  %v4859 = vadd.f32 %v4801, %v4831
  %v4860 = vadd.f32 %v4802, %v4832
  %v4861 = vadd.f32 %v4803, %v4833
  %v4862 = vadd.f32 %v4804, %v4830
  %v4863 = vadd.f32 %v4805, %v4831
  %v4864 = vadd.f32 %v4806, %v4832
  %v4865 = vadd.f32 %v4807, %v4833
  %v4866 = vadd.f32 %v4808, %v4830
  %v4867 = vadd.f32 %v4809, %v4831
  %v4868 = vadd.f32 %v4810, %v4832
  %v4869 = vadd.f32 %v4811, %v4833
  %v4870 = vadd.f32 %v4812, %v4830
  %v4871 = vadd.f32 %v4813, %v4831
  %v4872 = vadd.f32 %v4814, %v4832
  %v4873 = vadd.f32 %v4815, %v4833
  %v4874 = vadd.f32 %v4816, %v4830
  %v4875 = vadd.f32 %v4817, %v4831
  %v4876 = vadd.f32 %v4818, %v4832
  %v4877 = vadd.f32 %v4819, %v4833
  %v4878 = vadd.f32 %v4820, %v4830
  %v4879 = vadd.f32 %v4821, %v4831
  %v4880 = vadd.f32 %v4822, %v4832
  %v4881 = vadd.f32 %v4823, %v4833
  %v4882 = vadd.f32 %v4824, %v4830
  %v4883 = vadd.f32 %v4825, %v4831
  %v4884 = vadd.f32 %v4826, %v4832
  %v4885 = vadd.f32 %v4827, %v4833
  %v4886 = vmax.f32 %v4838, 0.0
  %v4887 = vmax.f32 %v4839, 0.0
  %v4888 = vmax.f32 %v4840, 0.0
  %v4889 = vmax.f32 %v4841, 0.0
  %v4890 = vmax.f32 %v4842, 0.0
  %v4891 = vmax.f32 %v4843, 0.0
  %v4892 = vmax.f32 %v4844, 0.0
  %v4893 = vmax.f32 %v4845, 0.0
  %v4894 = vmax.f32 %v4846, 0.0
  %v4895 = vmax.f32 %v4847, 0.0
  %v4896 = vmax.f32 %v4848, 0.0
  %v4897 = vmax.f32 %v4849, 0.0
  %v4898 = vmax.f32 %v4850, 0.0
  %v4899 = vmax.f32 %v4851, 0.0
  %v4900 = vmax.f32 %v4852, 0.0
  %v4901 = vmax.f32 %v4853, 0.0
  %v4902 = vmax.f32 %v4854, 0.0
  %v4903 = vmax.f32 %v4855, 0.0
  %v4904 = vmax.f32 %v4856, 0.0
  %v4905 = vmax.f32 %v4857, 0.0
  %v4906 = vmax.f32 %v4858, 0.0
  %v4907 = vmax.f32 %v4859, 0.0
  %v4908 = vmax.f32 %v4860, 0.0
  %v4909 = vmax.f32 %v4861, 0.0
  %v4910 = vmax.f32 %v4862, 0.0
  %v4911 = vmax.f32 %v4863, 0.0
  %v4912 = vmax.f32 %v4864, 0.0
  %v4913 = vmax.f32 %v4865, 0.0
  %v4914 = vmax.f32 %v4866, 0.0
  %v4915 = vmax.f32 %v4867, 0.0
  %v4916 = vmax.f32 %v4868, 0.0
  %v4917 = vmax.f32 %v4869, 0.0
  %v4918 = vmax.f32 %v4870, 0.0
  %v4919 = vmax.f32 %v4871, 0.0
  %v4920 = vmax.f32 %v4872, 0.0
  %v4921 = vmax.f32 %v4873, 0.0
  %v4922 = vmax.f32 %v4874, 0.0
  %v4923 = vmax.f32 %v4875, 0.0
  %v4924 = vmax.f32 %v4876, 0.0
  %v4925 = vmax.f32 %v4877, 0.0
  %v4926 = vmax.f32 %v4878, 0.0
  %v4927 = vmax.f32 %v4879, 0.0
  %v4928 = vmax.f32 %v4880, 0.0
  %v4929 = vmax.f32 %v4881, 0.0
  %v4930 = vmax.f32 %v4882, 0.0
  %v4931 = vmax.f32 %v4883, 0.0
  %v4932 = vmax.f32 %v4884, 0.0
  %v4933 = vmax.f32 %v4885, 0.0
  %4934 = vst [vmem:[%s3] sm:$0xff] %v4886
  %4935 = vst [vmem:[%s3 + $0x8] sm:$0xff] %v4887
  %4936 = vst [vmem:[%s3 + $0x10] sm:$0xff] %v4888
  %4937 = vst [vmem:[%s3 + $0x18] sm:$0xff] %v4889
  %4938 = vst [vmem:[%s3 + $0x20] sm:$0xff] %v4890
  %4939 = vst [vmem:[%s3 + $0x28] sm:$0xff] %v4891
  %4940 = vst [vmem:[%s3 + $0x30] sm:$0xff] %v4892
  %4941 = vst [vmem:[%s3 + $0x38] sm:$0xff] %v4893
  %4942 = vst [vmem:[%s3 + $0x40] sm:$0xff] %v4894
  %4943 = vst [vmem:[%s3 + $0x48] sm:$0xff] %v4895
  %4944 = vst [vmem:[%s3 + $0x50] sm:$0xff] %v4896
  %4945 = vst [vmem:[%s3 + $0x58] sm:$0xff] %v4897
  %4946 = vst [vmem:[%s3 + $0x60] sm:$0xff] %v4898
  %4947 = vst [vmem:[%s3 + $0x68] sm:$0xff] %v4899
  %4948 = vst [vmem:[%s3 + $0x70] sm:$0xff] %v4900
  %4949 = vst [vmem:[%s3 + $0x78] sm:$0xff] %v4901
  %4950 = vst [vmem:[%s3 + $0x80] sm:$0xff] %v4902
  %4951 = vst [vmem:[%s3 + $0x88] sm:$0xff] %v4903
  %4952 = vst [vmem:[%s3 + $0x90] sm:$0xff] %v4904
  %4953 = vst [vmem:[%s3 + $0x98] sm:$0xff] %v4905
  %4954 = vst [vmem:[%s3 + $0xa0] sm:$0xff] %v4906
  %4955 = vst [vmem:[%s3 + $0xa8] sm:$0xff] %v4907
  %4956 = vst [vmem:[%s3 + $0xb0] sm:$0xff] %v4908
  %4957 = vst [vmem:[%s3 + $0xb8] sm:$0xff] %v4909
  %4958 = vst [vmem:[%s3 + $0xc0] sm:$0xff] %v4910
  %4959 = vst [vmem:[%s3 + $0xc8] sm:$0xff] %v4911
  %4960 = vst [vmem:[%s3 + $0xd0] sm:$0xff] %v4912
  %4961 = vst [vmem:[%s3 + $0xd8] sm:$0xff] %v4913
  %4962 = vst [vmem:[%s3 + $0xe0] sm:$0xff] %v4914
  %4963 = vst [vmem:[%s3 + $0xe8] sm:$0xff] %v4915
  %4964 = vst [vmem:[%s3 + $0xf0] sm:$0xff] %v4916
  %4965 = vst [vmem:[%s3 + $0xf8] sm:$0xff] %v4917
  %4966 = vst [vmem:[%s3 + $0x100] sm:$0xff] %v4918
  %4967 = vst [vmem:[%s3 + $0x108] sm:$0xff] %v4919
  %4968 = vst [vmem:[%s3 + $0x110] sm:$0xff] %v4920
  %4969 = vst [vmem:[%s3 + $0x118] sm:$0xff] %v4921
  %4970 = vst [vmem:[%s3 + $0x120] sm:$0xff] %v4922
  %4971 = vst [vmem:[%s3 + $0x128] sm:$0xff] %v4923
  %4972 = vst [vmem:[%s3 + $0x130] sm:$0xff] %v4924
  %4973 = vst [vmem:[%s3 + $0x138] sm:$0xff] %v4925
  %4974 = vst [vmem:[%s3 + $0x140] sm:$0xff] %v4926
  %4975 = vst [vmem:[%s3 + $0x148] sm:$0xff] %v4927
  %4976 = vst [vmem:[%s3 + $0x150] sm:$0xff] %v4928
  %4977 = vst [vmem:[%s3 + $0x158] sm:$0xff] %v4929
  %4978 = vst [vmem:[%s3 + $0x160] sm:$0xff] %v4930
  %4979 = vst [vmem:[%s3 + $0x168] sm:$0xff] %v4931
  %4980 = vst [vmem:[%s3 + $0x170] sm:$0xff] %v4932
  %4981 = vst [vmem:[%s3 + $0x178] sm:$0xff] %v4933
  // Predicated region
  $region14: #{net_forward.7} parent=0 // pred_check
    _
  $region15: #{net_forward.7} parent=0 // pred_check_branch
    %4983 = sbr.rel (0) target = $region17
  $region16: #{net_forward.7} parent=0 // pred_region
    _
  $region17: #{net_forward.7} parent=0 // pred_fallthru
    _
  // Predicated region
  $region18: #{net_forward.7} parent=0 // pred_check
    _
  $region19: #{net_forward.7} parent=0 // pred_check_branch
    %4985 = sbr.rel (0) target = $region21
  $region20: #{net_forward.7} parent=0 // pred_region
    _
  $region21: #{net_forward.7} parent=0 // pred_fallthru
    _

</llo_original>
